<compile_context>
chip_gen: v5e
topology: v5e:2x2
jax: 0.10.0
libtpu: 0.0.40
codegen_flags: <defaults>
</compile_context>

<pallas_src>
import jax
import jax.numpy as jnp
import numpy as np
from jax import lax
from jax.experimental import pallas as pl
from jax.experimental.pallas import tpu as pltpu


# ----------------------------------------------------------------------------
# Fused Inception kernel (per image)
# ----------------------------------------------------------------------------
def _make_inception_kernel(H, W, c1, c2a, c3a):
    HW = H * W
    NEG = -1e30  # max-pool border fill; every 3x3/s1/p1 window has a real element

    def shift_rows(v, off, fill):
        # Value of row-flattened image at index p+off; rows shifted past
        # [0, HW) are filled with `fill`.  Contiguous sublane slices only.
        if off == 0:
            return v
        pad = jnp.full((abs(off), v.shape[1]), fill, v.dtype)
        if off > 0:
            return jnp.concatenate([v[off:, :], pad], axis=0)
        return jnp.concatenate([pad, v[:HW + off, :]], axis=0)

    def kernel(col_ref, x_ref, wcat_ref, bcat_ref, w2_ref, b2_ref,
               w3_ref, b3_ref, w4_ref, b4_ref, o_ref):
        # col_ref:  (HW, 1) int32  pixel column index (p % W)
        # x_ref:    (1, HW, Cin) f32
        # wcat_ref: (Cin, c1+c2a+c3a) bf16   bcat_ref: (1, c1+c2a+c3a) f32
        # w2_ref:   (9,  c2a, c2b) bf16      b2_ref:   (1, c2b) f32
        # w3_ref:   (25, c3a, c3b) bf16      b3_ref:   (1, c3b) f32
        # w4_ref:   (Cin, c4) bf16           b4_ref:   (1, c4) f32
        # o_ref:    (1, HW, c1+c2b+c3b+c4) f32
        col = col_ref[...]                                  # (HW, 1) int32
        x = x_ref[0]                                        # (HW, Cin) f32

        # ---- stage 1: fused 1x1 convs (b1_1 | b2_1 | b3_1), one bf16 matmul
        y1 = jnp.dot(x.astype(jnp.bfloat16), wcat_ref[...],
                     preferred_element_type=jnp.float32)
        y1 = jnp.maximum(y1 + bcat_ref[...], 0.0)           # (HW, csum1) f32

        def conv_same(t, w_ref_, K):
            # 'same' KxK conv of row-flattened t (HW, Ci) with (K*K, Ci, Co)
            # weights; taps are contiguous sublane-offset shifts, wrapped
            # columns are zeroed so they contribute nothing.
            pad = (K - 1) // 2
            acc = None
            for dy in range(-pad, pad + 1):
                for dx in range(-pad, pad + 1):
                    tap = shift_rows(t, dy * W + dx, 0)
                    if dx > 0:
                        tap = jnp.where(col < W - dx, tap, jnp.zeros_like(tap))
                    elif dx < 0:
                        tap = jnp.where(col >= -dx, tap, jnp.zeros_like(tap))
                    k = (dy + pad) * K + (dx + pad)
                    d = jnp.dot(tap, w_ref_[k],
                                preferred_element_type=jnp.float32)
                    acc = d if acc is None else acc + d
            return acc

        # ---- branch 1: pass-through of the first 1x1 conv ----
        b1v = y1[:, :c1]

        # ---- branch 2: 3x3 'same' conv + bias + relu ----
        t2 = y1[:, c1:c1 + c2a].astype(jnp.bfloat16)
        b2v = jnp.maximum(conv_same(t2, w2_ref, 3) + b2_ref[...], 0.0)

        # ---- branch 3: 5x5 'same' conv + bias + relu ----
        t3 = y1[:, c1 + c2a:c1 + c2a + c3a].astype(jnp.bfloat16)
        b3v = jnp.maximum(conv_same(t3, w3_ref, 5) + b3_ref[...], 0.0)

        # ---- branch 4: 3x3/s1/p1 max-pool (separable) + 1x1 conv + relu ----
        up = shift_rows(x, W, NEG)                          # value at (y+1, x)
        dn = shift_rows(x, -W, NEG)                         # value at (y-1, x)
        mv = jnp.maximum(jnp.maximum(x, up), dn)            # vertical 3-max
        lf = jnp.where(col == W - 1, NEG, shift_rows(mv, 1, NEG))
        rt = jnp.where(col == 0, NEG, shift_rows(mv, -1, NEG))
        mp = jnp.maximum(jnp.maximum(mv, lf), rt)           # full 3x3 max
        b4v = jnp.dot(mp.astype(jnp.bfloat16), w4_ref[...],
                      preferred_element_type=jnp.float32)
        b4v = jnp.maximum(b4v + b4_ref[...], 0.0)

        # ---- single lane-dense concatenated store ----
        o_ref[0] = jnp.concatenate([b1v, b2v, b3v, b4v],
                                   axis=-1).astype(o_ref.dtype)

    return kernel


# ----------------------------------------------------------------------------
# Wrappers
# ----------------------------------------------------------------------------
def _conv_weight_taps(w_oihw):
    # (Cout, Cin, K, K) -> (K*K, Cin, Cout), tap order ky-major / kx-minor.
    cout, cin, K, _ = w_oihw.shape
    return jnp.transpose(w_oihw, (2, 3, 1, 0)).reshape(K * K, cin, cout)


def inception_forward_nhwc(params, x_nhwc):
    """NHWC entry point (preferred; no layout transposes)."""
    N, H, W, cin = x_nhwc.shape
    HW = H * W

    w1, bb1 = params["b1_1"]
    w21, bb21 = params["b2_1"]
    w22, bb22 = params["b2_2"]
    w31, bb31 = params["b3_1"]
    w32, bb32 = params["b3_2"]
    w42, bb42 = params["b4_2"]

    c1, c2a, c2b = w1.shape[0], w21.shape[0], w22.shape[0]
    c3a, c3b, c4 = w31.shape[0], w32.shape[0], w42.shape[0]
    csum1 = c1 + c2a + c3a
    ctot = c1 + c2b + c3b + c4

    f32, bf16 = jnp.float32, jnp.bfloat16
    # Fused first-stage 1x1 weights -> (Cin, c1 | c2a | c3a), bf16 for the MXU.
    w_cat = jnp.concatenate(
        [jnp.transpose(w1.reshape(c1, cin)),
         jnp.transpose(w21.reshape(c2a, cin)),
         jnp.transpose(w31.reshape(c3a, cin))], axis=1).astype(bf16)
    b_cat = jnp.concatenate([bb1, bb21, bb31]).reshape(1, csum1).astype(f32)

    w2 = _conv_weight_taps(w22).astype(bf16)                   # (9,  c2a, c2b)
    w3 = _conv_weight_taps(w32).astype(bf16)                   # (25, c3a, c3b)
    w4 = jnp.transpose(w42.reshape(c4, cin)).astype(bf16)      # (Cin, c4)
    b2 = bb22.reshape(1, c2b).astype(f32)
    b3 = bb32.reshape(1, c3b).astype(f32)
    b4 = bb42.reshape(1, c4).astype(f32)

    col = (jnp.arange(HW, dtype=jnp.int32) % W).reshape(HW, 1)
    x_img = x_nhwc.reshape(N, HW, cin)                         # free dim-merge

    kernel = _make_inception_kernel(H, W, c1, c2a, c3a)
    out = pl.pallas_call(
        kernel,
        out_shape=jax.ShapeDtypeStruct((N, HW, ctot), x_nhwc.dtype),
        grid=(N,),
        in_specs=[
            pl.BlockSpec((HW, 1), lambda n: (0, 0)),           # col index
            pl.BlockSpec((1, HW, cin), lambda n: (n, 0, 0)),   # x (per image)
            pl.BlockSpec((cin, csum1), lambda n: (0, 0)),      # w_cat
            pl.BlockSpec((1, csum1), lambda n: (0, 0)),        # b_cat
            pl.BlockSpec((9, c2a, c2b), lambda n: (0, 0, 0)),  # w2
            pl.BlockSpec((1, c2b), lambda n: (0, 0)),          # b2
            pl.BlockSpec((25, c3a, c3b), lambda n: (0, 0, 0)), # w3
            pl.BlockSpec((1, c3b), lambda n: (0, 0)),          # b3
            pl.BlockSpec((cin, c4), lambda n: (0, 0)),         # w4
            pl.BlockSpec((1, c4), lambda n: (0, 0)),           # b4
        ],
        out_specs=pl.BlockSpec((1, HW, ctot), lambda n: (n, 0, 0)),
        compiler_params=pltpu.CompilerParams(
            dimension_semantics=("parallel",),
            vmem_limit_bytes=32 * 1024 * 1024),
    )(col, x_img, w_cat, b_cat, w2, b2, w3, b3, w4, b4)

    return out.reshape(N, H, W, ctot)


def inception_forward(params, x_nchw):
    """NCHW wrapper for PyTorch interface parity (transposes at the boundary)."""
    x = jnp.transpose(x_nchw, (0, 2, 3, 1))
    y = inception_forward_nhwc(params, x)
    return jnp.transpose(y, (0, 3, 1, 2))


# ----------------------------------------------------------------------------
# Parameter init (shapes matching nn.LazyConv2d after first call)
# ----------------------------------------------------------------------------
def init_inception_params(key, in_channels, c1, c2, c3, c4, dtype=jnp.float32):
    def conv_params(k, cout, cin, ksize):
        kw, kb = jax.random.split(k)
        bound = 1.0 / np.sqrt(cin * ksize * ksize)
        w = jax.random.uniform(kw, (cout, cin, ksize, ksize), dtype, -bound, bound)
        b = jax.random.uniform(kb, (cout,), dtype, -bound, bound)
        return w, b

    keys = jax.random.split(key, 6)
    return {
        "b1_1": conv_params(keys[0], c1, in_channels, 1),
        "b2_1": conv_params(keys[1], c2[0], in_channels, 1),
        "b2_2": conv_params(keys[2], c2[1], c2[0], 3),
        "b3_1": conv_params(keys[3], c3[0], in_channels, 1),
        "b3_2": conv_params(keys[4], c3[1], c3[0], 5),
        "b4_2": conv_params(keys[5], c4, in_channels, 1),
    }


# ----------------------------------------------------------------------------
# Pure-JAX reference (full f32) for the correctness check
# ----------------------------------------------------------------------------
def _reference_forward(params, x_nchw):
    def conv(x, w, b, pad):
        y = lax.conv_general_dilated(
            x, w, window_strides=(1, 1), padding=[(pad, pad), (pad, pad)],
            dimension_numbers=("NCHW", "OIHW", "NCHW"),
            precision=lax.Precision.HIGHEST)
        return y + b.reshape(1, -1, 1, 1)

    relu = lambda v: jnp.maximum(v, 0.0)
    b1 = relu(conv(x_nchw, *params["b1_1"], 0))
    b2 = relu(conv(relu(conv(x_nchw, *params["b2_1"], 0)), *params["b2_2"], 1))
    b3 = relu(conv(relu(conv(x_nchw, *params["b3_1"], 0)), *params["b3_2"], 2))
    pooled = lax.reduce_window(x_nchw, -jnp.inf, lax.max,
                               (1, 1, 3, 3), (1, 1, 1, 1),
                               [(0, 0), (0, 0), (1, 1), (1, 1)])
    b4 = relu(conv(pooled, *params["b4_2"], 0))
    return jnp.concatenate([b1, b2, b3, b4], axis=1)


# ----------------------------------------------------------------------------
if __name__ == "__main__":
    key = jax.random.PRNGKey(0)
    kx, kp = jax.random.split(key)

    N, Cin, H, W = 2, 4, 16, 16
    c1, c2, c3, c4 = 8, (4, 8), (4, 8), 8

    x = jax.random.normal(kx, (N, Cin, H, W), jnp.float32)
    params = init_inception_params(kp, Cin, c1, c2, c3, c4)

    y = jax.jit(inception_forward)(params, x)
    y = jax.block_until_ready(y)

    assert y.shape == (N, c1 + c2[1] + c3[1] + c4, H, W), y.shape

    # bf16 MXU operands with f32 accumulation -> bf16-level tolerance.
    y_ref = _reference_forward(params, x)
    np.testing.assert_allclose(np.asarray(y), np.asarray(y_ref),
                               rtol=3e-2, atol=3e-2)
    print("KERNEL_OK")
</pallas_src>

<mosaic_0001>
module attributes {stable_mosaic.version = 11 : i64} {
  func.func @kernel(%arg0: i32, %arg1: memref<256x1xi32, #tpu.memory_space<vmem>>, %arg2: memref<1x256x4xf32, #tpu.memory_space<vmem>>, %arg3: memref<4x16xbf16, #tpu.memory_space<vmem>>, %arg4: memref<1x16xf32, #tpu.memory_space<vmem>>, %arg5: memref<9x4x8xbf16, #tpu.memory_space<vmem>>, %arg6: memref<1x8xf32, #tpu.memory_space<vmem>>, %arg7: memref<25x4x8xbf16, #tpu.memory_space<vmem>>, %arg8: memref<1x8xf32, #tpu.memory_space<vmem>>, %arg9: memref<4x8xbf16, #tpu.memory_space<vmem>>, %arg10: memref<1x8xf32, #tpu.memory_space<vmem>>, %arg11: memref<1x256x32xf32, #tpu.memory_space<vmem>>) attributes {dimension_semantics = [#tpu.dimension_semantics<parallel>], iteration_bounds = array<i64: 2>, scalar_prefetch = 0 : i64, scratch_operands = 0 : i64, tpu.core_type = #tpu.core_type<tc>, window_params = [{pipeline_mode = #tpu.pipeline_mode<synchronous>, transform_indices = @transform_0, window_bounds = array<i64: 256, 1>}, {transform_indices = @transform_1, window_bounds = array<i64: 1, 256, 4>}, {pipeline_mode = #tpu.pipeline_mode<synchronous>, transform_indices = @transform_2, window_bounds = array<i64: 4, 16>}, {pipeline_mode = #tpu.pipeline_mode<synchronous>, transform_indices = @transform_3, window_bounds = array<i64: 1, 16>}, {pipeline_mode = #tpu.pipeline_mode<synchronous>, transform_indices = @transform_4, window_bounds = array<i64: 9, 4, 8>}, {pipeline_mode = #tpu.pipeline_mode<synchronous>, transform_indices = @transform_5, window_bounds = array<i64: 1, 8>}, {pipeline_mode = #tpu.pipeline_mode<synchronous>, transform_indices = @transform_6, window_bounds = array<i64: 25, 4, 8>}, {pipeline_mode = #tpu.pipeline_mode<synchronous>, transform_indices = @transform_7, window_bounds = array<i64: 1, 8>}, {pipeline_mode = #tpu.pipeline_mode<synchronous>, transform_indices = @transform_8, window_bounds = array<i64: 4, 8>}, {pipeline_mode = #tpu.pipeline_mode<synchronous>, transform_indices = @transform_9, window_bounds = array<i64: 1, 8>}, {transform_indices = @transform_10, window_bounds = array<i64: 1, 256, 32>}]} {
    %c0 = arith.constant 0 : index
    %c0_0 = arith.constant 0 : index
    %0 = vector.load %arg1[%c0, %c0_0] : memref<256x1xi32, #tpu.memory_space<vmem>>, vector<256x1xi32>
    %c0_1 = arith.constant 0 : index
    %c0_2 = arith.constant 0 : index
    %c0_3 = arith.constant 0 : index
    %1 = vector.load %arg2[%c0_1, %c0_2, %c0_3] : memref<1x256x4xf32, #tpu.memory_space<vmem>>, vector<1x256x4xf32>
    %2 = vector.shape_cast %1 : vector<1x256x4xf32> to vector<256x4xf32>
    %3 = arith.truncf %2 : vector<256x4xf32> to vector<256x4xbf16>
    %c0_4 = arith.constant 0 : index
    %c0_5 = arith.constant 0 : index
    %4 = vector.load %arg3[%c0_4, %c0_5] : memref<4x16xbf16, #tpu.memory_space<vmem>>, vector<4x16xbf16>
    %cst = arith.constant dense<0.000000e+00> : vector<256x16xf32>
    %5 = tpu.matmul %3, %4, %cst {dimension_numbers = #tpu.dot_dimension_numbers<[1], [0], [0], [1], [0, 0, 1, 1], [], []>} : vector<256x4xbf16>, vector<4x16xbf16>, vector<256x16xf32> -> vector<256x16xf32>
    %c0_6 = arith.constant 0 : index
    %c0_7 = arith.constant 0 : index
    %6 = vector.load %arg4[%c0_6, %c0_7] : memref<1x16xf32, #tpu.memory_space<vmem>>, vector<1x16xf32>
    %7 = vector.broadcast %6 : vector<1x16xf32> to vector<256x16xf32>
    %8 = arith.addf %5, %7 : vector<256x16xf32>
    %cst_8 = arith.constant 0.000000e+00 : f32
    %9 = vector.broadcast %cst_8 : f32 to vector<256x16xf32>
    %10 = arith.maximumf %8, %9 : vector<256x16xf32>
    %11 = vector.extract_strided_slice %10 {offsets = [0, 0], sizes = [256, 8], strides = [1, 1]} : vector<256x16xf32> to vector<256x8xf32>
    %12 = vector.extract_strided_slice %10 {offsets = [0, 8], sizes = [256, 4], strides = [1, 1]} : vector<256x16xf32> to vector<256x4xf32>
    %13 = arith.truncf %12 : vector<256x4xf32> to vector<256x4xbf16>
    %cst_9 = arith.constant 0.000000e+00 : bf16
    %14 = vector.broadcast %cst_9 : bf16 to vector<17x4xbf16>
    %15 = vector.extract_strided_slice %13 {offsets = [0, 0], sizes = [239, 4], strides = [1, 1]} : vector<256x4xbf16> to vector<239x4xbf16>
    %16 = tpu.concatenate %14, %15 in 0 : vector<17x4xbf16>, vector<239x4xbf16> -> vector<256x4xbf16>
    %c1_i32 = arith.constant 1 : i32
    %17 = vector.broadcast %c1_i32 : i32 to vector<256x1xi32>
    %18 = arith.cmpi sge, %0, %17 : vector<256x1xi32>
    %cst_10 = arith.constant 0.000000e+00 : bf16
    %19 = vector.broadcast %cst_10 : bf16 to vector<256x4xbf16>
    %20 = vector.shape_cast %18 : vector<256x1xi1> to vector<256x1xi1>
    %21 = vector.broadcast %20 : vector<256x1xi1> to vector<256x4xi1>
    %22 = arith.select %21, %16, %19 : vector<256x4xi1>, vector<256x4xbf16>
    %c0_11 = arith.constant 0 : index
    %c0_12 = arith.constant 0 : index
    %c0_13 = arith.constant 0 : index
    %23 = vector.load %arg5[%c0_11, %c0_12, %c0_13] : memref<9x4x8xbf16, #tpu.memory_space<vmem>>, vector<1x4x8xbf16>
    %24 = vector.shape_cast %23 : vector<1x4x8xbf16> to vector<4x8xbf16>
    %cst_14 = arith.constant dense<0.000000e+00> : vector<256x8xf32>
    %25 = tpu.matmul %22, %24, %cst_14 {dimension_numbers = #tpu.dot_dimension_numbers<[1], [0], [0], [1], [0, 0, 1, 1], [], []>} : vector<256x4xbf16>, vector<4x8xbf16>, vector<256x8xf32> -> vector<256x8xf32>
    %cst_15 = arith.constant 0.000000e+00 : bf16
    %26 = vector.broadcast %cst_15 : bf16 to vector<16x4xbf16>
    %27 = vector.extract_strided_slice %13 {offsets = [0, 0], sizes = [240, 4], strides = [1, 1]} : vector<256x4xbf16> to vector<240x4xbf16>
    %28 = tpu.concatenate %26, %27 in 0 : vector<16x4xbf16>, vector<240x4xbf16> -> vector<256x4xbf16>
    %c1 = arith.constant 1 : index
    %c0_16 = arith.constant 0 : index
    %c0_17 = arith.constant 0 : index
    %29 = vector.load %arg5[%c1, %c0_16, %c0_17] : memref<9x4x8xbf16, #tpu.memory_space<vmem>>, vector<1x4x8xbf16>
    %30 = vector.shape_cast %29 : vector<1x4x8xbf16> to vector<4x8xbf16>
    %cst_18 = arith.constant dense<0.000000e+00> : vector<256x8xf32>
    %31 = tpu.matmul %28, %30, %cst_18 {dimension_numbers = #tpu.dot_dimension_numbers<[1], [0], [0], [1], [0, 0, 1, 1], [], []>} : vector<256x4xbf16>, vector<4x8xbf16>, vector<256x8xf32> -> vector<256x8xf32>
    %32 = arith.addf %25, %31 : vector<256x8xf32>
    %cst_19 = arith.constant 0.000000e+00 : bf16
    %33 = vector.broadcast %cst_19 : bf16 to vector<15x4xbf16>
    %34 = vector.extract_strided_slice %13 {offsets = [0, 0], sizes = [241, 4], strides = [1, 1]} : vector<256x4xbf16> to vector<241x4xbf16>
    %35 = tpu.concatenate %33, %34 in 0 : vector<15x4xbf16>, vector<241x4xbf16> -> vector<256x4xbf16>
    %c15_i32 = arith.constant 15 : i32
    %36 = vector.broadcast %c15_i32 : i32 to vector<256x1xi32>
    %37 = arith.cmpi slt, %0, %36 : vector<256x1xi32>
    %cst_20 = arith.constant 0.000000e+00 : bf16
    %38 = vector.broadcast %cst_20 : bf16 to vector<256x4xbf16>
    %39 = vector.shape_cast %37 : vector<256x1xi1> to vector<256x1xi1>
    %40 = vector.broadcast %39 : vector<256x1xi1> to vector<256x4xi1>
    %41 = arith.select %40, %35, %38 : vector<256x4xi1>, vector<256x4xbf16>
    %c2 = arith.constant 2 : index
    %c0_21 = arith.constant 0 : index
    %c0_22 = arith.constant 0 : index
    %42 = vector.load %arg5[%c2, %c0_21, %c0_22] : memref<9x4x8xbf16, #tpu.memory_space<vmem>>, vector<1x4x8xbf16>
    %43 = vector.shape_cast %42 : vector<1x4x8xbf16> to vector<4x8xbf16>
    %cst_23 = arith.constant dense<0.000000e+00> : vector<256x8xf32>
    %44 = tpu.matmul %41, %43, %cst_23 {dimension_numbers = #tpu.dot_dimension_numbers<[1], [0], [0], [1], [0, 0, 1, 1], [], []>} : vector<256x4xbf16>, vector<4x8xbf16>, vector<256x8xf32> -> vector<256x8xf32>
    %45 = arith.addf %32, %44 : vector<256x8xf32>
    %cst_24 = arith.constant 0.000000e+00 : bf16
    %46 = vector.broadcast %cst_24 : bf16 to vector<1x4xbf16>
    %47 = vector.extract_strided_slice %13 {offsets = [0, 0], sizes = [255, 4], strides = [1, 1]} : vector<256x4xbf16> to vector<255x4xbf16>
    %48 = tpu.concatenate %46, %47 in 0 : vector<1x4xbf16>, vector<255x4xbf16> -> vector<256x4xbf16>
    %c1_i32_25 = arith.constant 1 : i32
    %49 = vector.broadcast %c1_i32_25 : i32 to vector<256x1xi32>
    %50 = arith.cmpi sge, %0, %49 : vector<256x1xi32>
    %cst_26 = arith.constant 0.000000e+00 : bf16
    %51 = vector.broadcast %cst_26 : bf16 to vector<256x4xbf16>
    %52 = vector.shape_cast %50 : vector<256x1xi1> to vector<256x1xi1>
    %53 = vector.broadcast %52 : vector<256x1xi1> to vector<256x4xi1>
    %54 = arith.select %53, %48, %51 : vector<256x4xi1>, vector<256x4xbf16>
    %c3 = arith.constant 3 : index
    %c0_27 = arith.constant 0 : index
    %c0_28 = arith.constant 0 : index
    %55 = vector.load %arg5[%c3, %c0_27, %c0_28] : memref<9x4x8xbf16, #tpu.memory_space<vmem>>, vector<1x4x8xbf16>
    %56 = vector.shape_cast %55 : vector<1x4x8xbf16> to vector<4x8xbf16>
    %cst_29 = arith.constant dense<0.000000e+00> : vector<256x8xf32>
    %57 = tpu.matmul %54, %56, %cst_29 {dimension_numbers = #tpu.dot_dimension_numbers<[1], [0], [0], [1], [0, 0, 1, 1], [], []>} : vector<256x4xbf16>, vector<4x8xbf16>, vector<256x8xf32> -> vector<256x8xf32>
    %58 = arith.addf %45, %57 : vector<256x8xf32>
    %c4 = arith.constant 4 : index
    %c0_30 = arith.constant 0 : index
    %c0_31 = arith.constant 0 : index
    %59 = vector.load %arg5[%c4, %c0_30, %c0_31] : memref<9x4x8xbf16, #tpu.memory_space<vmem>>, vector<1x4x8xbf16>
    %60 = vector.shape_cast %59 : vector<1x4x8xbf16> to vector<4x8xbf16>
    %cst_32 = arith.constant dense<0.000000e+00> : vector<256x8xf32>
    %61 = tpu.matmul %13, %60, %cst_32 {dimension_numbers = #tpu.dot_dimension_numbers<[1], [0], [0], [1], [0, 0, 1, 1], [], []>} : vector<256x4xbf16>, vector<4x8xbf16>, vector<256x8xf32> -> vector<256x8xf32>
    %62 = arith.addf %58, %61 : vector<256x8xf32>
    %cst_33 = arith.constant 0.000000e+00 : bf16
    %63 = vector.broadcast %cst_33 : bf16 to vector<1x4xbf16>
    %64 = vector.extract_strided_slice %13 {offsets = [1, 0], sizes = [255, 4], strides = [1, 1]} : vector<256x4xbf16> to vector<255x4xbf16>
    %65 = tpu.concatenate %64, %63 in 0 : vector<255x4xbf16>, vector<1x4xbf16> -> vector<256x4xbf16>
    %c15_i32_34 = arith.constant 15 : i32
    %66 = vector.broadcast %c15_i32_34 : i32 to vector<256x1xi32>
    %67 = arith.cmpi slt, %0, %66 : vector<256x1xi32>
    %cst_35 = arith.constant 0.000000e+00 : bf16
    %68 = vector.broadcast %cst_35 : bf16 to vector<256x4xbf16>
    %69 = vector.shape_cast %67 : vector<256x1xi1> to vector<256x1xi1>
    %70 = vector.broadcast %69 : vector<256x1xi1> to vector<256x4xi1>
    %71 = arith.select %70, %65, %68 : vector<256x4xi1>, vector<256x4xbf16>
    %c5 = arith.constant 5 : index
    %c0_36 = arith.constant 0 : index
    %c0_37 = arith.constant 0 : index
    %72 = vector.load %arg5[%c5, %c0_36, %c0_37] : memref<9x4x8xbf16, #tpu.memory_space<vmem>>, vector<1x4x8xbf16>
    %73 = vector.shape_cast %72 : vector<1x4x8xbf16> to vector<4x8xbf16>
    %cst_38 = arith.constant dense<0.000000e+00> : vector<256x8xf32>
    %74 = tpu.matmul %71, %73, %cst_38 {dimension_numbers = #tpu.dot_dimension_numbers<[1], [0], [0], [1], [0, 0, 1, 1], [], []>} : vector<256x4xbf16>, vector<4x8xbf16>, vector<256x8xf32> -> vector<256x8xf32>
    %75 = arith.addf %62, %74 : vector<256x8xf32>
    %cst_39 = arith.constant 0.000000e+00 : bf16
    %76 = vector.broadcast %cst_39 : bf16 to vector<15x4xbf16>
    %77 = vector.extract_strided_slice %13 {offsets = [15, 0], sizes = [241, 4], strides = [1, 1]} : vector<256x4xbf16> to vector<241x4xbf16>
    %78 = tpu.concatenate %77, %76 in 0 : vector<241x4xbf16>, vector<15x4xbf16> -> vector<256x4xbf16>
    %c1_i32_40 = arith.constant 1 : i32
    %79 = vector.broadcast %c1_i32_40 : i32 to vector<256x1xi32>
    %80 = arith.cmpi sge, %0, %79 : vector<256x1xi32>
    %cst_41 = arith.constant 0.000000e+00 : bf16
    %81 = vector.broadcast %cst_41 : bf16 to vector<256x4xbf16>
    %82 = vector.shape_cast %80 : vector<256x1xi1> to vector<256x1xi1>
    %83 = vector.broadcast %82 : vector<256x1xi1> to vector<256x4xi1>
    %84 = arith.select %83, %78, %81 : vector<256x4xi1>, vector<256x4xbf16>
    %c6 = arith.constant 6 : index
    %c0_42 = arith.constant 0 : index
    %c0_43 = arith.constant 0 : index
    %85 = vector.load %arg5[%c6, %c0_42, %c0_43] : memref<9x4x8xbf16, #tpu.memory_space<vmem>>, vector<1x4x8xbf16>
    %86 = vector.shape_cast %85 : vector<1x4x8xbf16> to vector<4x8xbf16>
    %cst_44 = arith.constant dense<0.000000e+00> : vector<256x8xf32>
    %87 = tpu.matmul %84, %86, %cst_44 {dimension_numbers = #tpu.dot_dimension_numbers<[1], [0], [0], [1], [0, 0, 1, 1], [], []>} : vector<256x4xbf16>, vector<4x8xbf16>, vector<256x8xf32> -> vector<256x8xf32>
    %88 = arith.addf %75, %87 : vector<256x8xf32>
    %cst_45 = arith.constant 0.000000e+00 : bf16
    %89 = vector.broadcast %cst_45 : bf16 to vector<16x4xbf16>
    %90 = vector.extract_strided_slice %13 {offsets = [16, 0], sizes = [240, 4], strides = [1, 1]} : vector<256x4xbf16> to vector<240x4xbf16>
    %91 = tpu.concatenate %90, %89 in 0 : vector<240x4xbf16>, vector<16x4xbf16> -> vector<256x4xbf16>
    %c7 = arith.constant 7 : index
    %c0_46 = arith.constant 0 : index
    %c0_47 = arith.constant 0 : index
    %92 = vector.load %arg5[%c7, %c0_46, %c0_47] : memref<9x4x8xbf16, #tpu.memory_space<vmem>>, vector<1x4x8xbf16>
    %93 = vector.shape_cast %92 : vector<1x4x8xbf16> to vector<4x8xbf16>
    %cst_48 = arith.constant dense<0.000000e+00> : vector<256x8xf32>
    %94 = tpu.matmul %91, %93, %cst_48 {dimension_numbers = #tpu.dot_dimension_numbers<[1], [0], [0], [1], [0, 0, 1, 1], [], []>} : vector<256x4xbf16>, vector<4x8xbf16>, vector<256x8xf32> -> vector<256x8xf32>
    %95 = arith.addf %88, %94 : vector<256x8xf32>
    %cst_49 = arith.constant 0.000000e+00 : bf16
    %96 = vector.broadcast %cst_49 : bf16 to vector<17x4xbf16>
    %97 = vector.extract_strided_slice %13 {offsets = [17, 0], sizes = [239, 4], strides = [1, 1]} : vector<256x4xbf16> to vector<239x4xbf16>
    %98 = tpu.concatenate %97, %96 in 0 : vector<239x4xbf16>, vector<17x4xbf16> -> vector<256x4xbf16>
    %c15_i32_50 = arith.constant 15 : i32
    %99 = vector.broadcast %c15_i32_50 : i32 to vector<256x1xi32>
    %100 = arith.cmpi slt, %0, %99 : vector<256x1xi32>
    %cst_51 = arith.constant 0.000000e+00 : bf16
    %101 = vector.broadcast %cst_51 : bf16 to vector<256x4xbf16>
    %102 = vector.shape_cast %100 : vector<256x1xi1> to vector<256x1xi1>
    %103 = vector.broadcast %102 : vector<256x1xi1> to vector<256x4xi1>
    %104 = arith.select %103, %98, %101 : vector<256x4xi1>, vector<256x4xbf16>
    %c8 = arith.constant 8 : index
    %c0_52 = arith.constant 0 : index
    %c0_53 = arith.constant 0 : index
    %105 = vector.load %arg5[%c8, %c0_52, %c0_53] : memref<9x4x8xbf16, #tpu.memory_space<vmem>>, vector<1x4x8xbf16>
    %106 = vector.shape_cast %105 : vector<1x4x8xbf16> to vector<4x8xbf16>
    %cst_54 = arith.constant dense<0.000000e+00> : vector<256x8xf32>
    %107 = tpu.matmul %104, %106, %cst_54 {dimension_numbers = #tpu.dot_dimension_numbers<[1], [0], [0], [1], [0, 0, 1, 1], [], []>} : vector<256x4xbf16>, vector<4x8xbf16>, vector<256x8xf32> -> vector<256x8xf32>
    %108 = arith.addf %95, %107 : vector<256x8xf32>
    %c0_55 = arith.constant 0 : index
    %c0_56 = arith.constant 0 : index
    %109 = vector.load %arg6[%c0_55, %c0_56] : memref<1x8xf32, #tpu.memory_space<vmem>>, vector<1x8xf32>
    %110 = vector.broadcast %109 : vector<1x8xf32> to vector<256x8xf32>
    %111 = arith.addf %108, %110 : vector<256x8xf32>
    %cst_57 = arith.constant 0.000000e+00 : f32
    %112 = vector.broadcast %cst_57 : f32 to vector<256x8xf32>
    %113 = arith.maximumf %111, %112 : vector<256x8xf32>
    %114 = vector.extract_strided_slice %10 {offsets = [0, 12], sizes = [256, 4], strides = [1, 1]} : vector<256x16xf32> to vector<256x4xf32>
    %115 = arith.truncf %114 : vector<256x4xf32> to vector<256x4xbf16>
    %cst_58 = arith.constant 0.000000e+00 : bf16
    %116 = vector.broadcast %cst_58 : bf16 to vector<34x4xbf16>
    %117 = vector.extract_strided_slice %115 {offsets = [0, 0], sizes = [222, 4], strides = [1, 1]} : vector<256x4xbf16> to vector<222x4xbf16>
    %118 = tpu.concatenate %116, %117 in 0 : vector<34x4xbf16>, vector<222x4xbf16> -> vector<256x4xbf16>
    %c2_i32 = arith.constant 2 : i32
    %119 = vector.broadcast %c2_i32 : i32 to vector<256x1xi32>
    %120 = arith.cmpi sge, %0, %119 : vector<256x1xi32>
    %cst_59 = arith.constant 0.000000e+00 : bf16
    %121 = vector.broadcast %cst_59 : bf16 to vector<256x4xbf16>
    %122 = vector.shape_cast %120 : vector<256x1xi1> to vector<256x1xi1>
    %123 = vector.broadcast %122 : vector<256x1xi1> to vector<256x4xi1>
    %124 = arith.select %123, %118, %121 : vector<256x4xi1>, vector<256x4xbf16>
    %c0_60 = arith.constant 0 : index
    %c0_61 = arith.constant 0 : index
    %c0_62 = arith.constant 0 : index
    %125 = vector.load %arg7[%c0_60, %c0_61, %c0_62] : memref<25x4x8xbf16, #tpu.memory_space<vmem>>, vector<1x4x8xbf16>
    %126 = vector.shape_cast %125 : vector<1x4x8xbf16> to vector<4x8xbf16>
    %cst_63 = arith.constant dense<0.000000e+00> : vector<256x8xf32>
    %127 = tpu.matmul %124, %126, %cst_63 {dimension_numbers = #tpu.dot_dimension_numbers<[1], [0], [0], [1], [0, 0, 1, 1], [], []>} : vector<256x4xbf16>, vector<4x8xbf16>, vector<256x8xf32> -> vector<256x8xf32>
    %cst_64 = arith.constant 0.000000e+00 : bf16
    %128 = vector.broadcast %cst_64 : bf16 to vector<33x4xbf16>
    %129 = vector.extract_strided_slice %115 {offsets = [0, 0], sizes = [223, 4], strides = [1, 1]} : vector<256x4xbf16> to vector<223x4xbf16>
    %130 = tpu.concatenate %128, %129 in 0 : vector<33x4xbf16>, vector<223x4xbf16> -> vector<256x4xbf16>
    %c1_i32_65 = arith.constant 1 : i32
    %131 = vector.broadcast %c1_i32_65 : i32 to vector<256x1xi32>
    %132 = arith.cmpi sge, %0, %131 : vector<256x1xi32>
    %cst_66 = arith.constant 0.000000e+00 : bf16
    %133 = vector.broadcast %cst_66 : bf16 to vector<256x4xbf16>
    %134 = vector.shape_cast %132 : vector<256x1xi1> to vector<256x1xi1>
    %135 = vector.broadcast %134 : vector<256x1xi1> to vector<256x4xi1>
    %136 = arith.select %135, %130, %133 : vector<256x4xi1>, vector<256x4xbf16>
    %c1_67 = arith.constant 1 : index
    %c0_68 = arith.constant 0 : index
    %c0_69 = arith.constant 0 : index
    %137 = vector.load %arg7[%c1_67, %c0_68, %c0_69] : memref<25x4x8xbf16, #tpu.memory_space<vmem>>, vector<1x4x8xbf16>
    %138 = vector.shape_cast %137 : vector<1x4x8xbf16> to vector<4x8xbf16>
    %cst_70 = arith.constant dense<0.000000e+00> : vector<256x8xf32>
    %139 = tpu.matmul %136, %138, %cst_70 {dimension_numbers = #tpu.dot_dimension_numbers<[1], [0], [0], [1], [0, 0, 1, 1], [], []>} : vector<256x4xbf16>, vector<4x8xbf16>, vector<256x8xf32> -> vector<256x8xf32>
    %140 = arith.addf %127, %139 : vector<256x8xf32>
    %cst_71 = arith.constant 0.000000e+00 : bf16
    %141 = vector.broadcast %cst_71 : bf16 to vector<32x4xbf16>
    %142 = vector.extract_strided_slice %115 {offsets = [0, 0], sizes = [224, 4], strides = [1, 1]} : vector<256x4xbf16> to vector<224x4xbf16>
    %143 = tpu.concatenate %141, %142 in 0 : vector<32x4xbf16>, vector<224x4xbf16> -> vector<256x4xbf16>
    %c2_72 = arith.constant 2 : index
    %c0_73 = arith.constant 0 : index
    %c0_74 = arith.constant 0 : index
    %144 = vector.load %arg7[%c2_72, %c0_73, %c0_74] : memref<25x4x8xbf16, #tpu.memory_space<vmem>>, vector<1x4x8xbf16>
    %145 = vector.shape_cast %144 : vector<1x4x8xbf16> to vector<4x8xbf16>
    %cst_75 = arith.constant dense<0.000000e+00> : vector<256x8xf32>
    %146 = tpu.matmul %143, %145, %cst_75 {dimension_numbers = #tpu.dot_dimension_numbers<[1], [0], [0], [1], [0, 0, 1, 1], [], []>} : vector<256x4xbf16>, vector<4x8xbf16>, vector<256x8xf32> -> vector<256x8xf32>
    %147 = arith.addf %140, %146 : vector<256x8xf32>
    %cst_76 = arith.constant 0.000000e+00 : bf16
    %148 = vector.broadcast %cst_76 : bf16 to vector<31x4xbf16>
    %149 = vector.extract_strided_slice %115 {offsets = [0, 0], sizes = [225, 4], strides = [1, 1]} : vector<256x4xbf16> to vector<225x4xbf16>
    %150 = tpu.concatenate %148, %149 in 0 : vector<31x4xbf16>, vector<225x4xbf16> -> vector<256x4xbf16>
    %c15_i32_77 = arith.constant 15 : i32
    %151 = vector.broadcast %c15_i32_77 : i32 to vector<256x1xi32>
    %152 = arith.cmpi slt, %0, %151 : vector<256x1xi32>
    %cst_78 = arith.constant 0.000000e+00 : bf16
    %153 = vector.broadcast %cst_78 : bf16 to vector<256x4xbf16>
    %154 = vector.shape_cast %152 : vector<256x1xi1> to vector<256x1xi1>
    %155 = vector.broadcast %154 : vector<256x1xi1> to vector<256x4xi1>
    %156 = arith.select %155, %150, %153 : vector<256x4xi1>, vector<256x4xbf16>
    %c3_79 = arith.constant 3 : index
    %c0_80 = arith.constant 0 : index
    %c0_81 = arith.constant 0 : index
    %157 = vector.load %arg7[%c3_79, %c0_80, %c0_81] : memref<25x4x8xbf16, #tpu.memory_space<vmem>>, vector<1x4x8xbf16>
    %158 = vector.shape_cast %157 : vector<1x4x8xbf16> to vector<4x8xbf16>
    %cst_82 = arith.constant dense<0.000000e+00> : vector<256x8xf32>
    %159 = tpu.matmul %156, %158, %cst_82 {dimension_numbers = #tpu.dot_dimension_numbers<[1], [0], [0], [1], [0, 0, 1, 1], [], []>} : vector<256x4xbf16>, vector<4x8xbf16>, vector<256x8xf32> -> vector<256x8xf32>
    %160 = arith.addf %147, %159 : vector<256x8xf32>
    %cst_83 = arith.constant 0.000000e+00 : bf16
    %161 = vector.broadcast %cst_83 : bf16 to vector<30x4xbf16>
    %162 = vector.extract_strided_slice %115 {offsets = [0, 0], sizes = [226, 4], strides = [1, 1]} : vector<256x4xbf16> to vector<226x4xbf16>
    %163 = tpu.concatenate %161, %162 in 0 : vector<30x4xbf16>, vector<226x4xbf16> -> vector<256x4xbf16>
    %c14_i32 = arith.constant 14 : i32
    %164 = vector.broadcast %c14_i32 : i32 to vector<256x1xi32>
    %165 = arith.cmpi slt, %0, %164 : vector<256x1xi32>
    %cst_84 = arith.constant 0.000000e+00 : bf16
    %166 = vector.broadcast %cst_84 : bf16 to vector<256x4xbf16>
    %167 = vector.shape_cast %165 : vector<256x1xi1> to vector<256x1xi1>
    %168 = vector.broadcast %167 : vector<256x1xi1> to vector<256x4xi1>
    %169 = arith.select %168, %163, %166 : vector<256x4xi1>, vector<256x4xbf16>
    %c4_85 = arith.constant 4 : index
    %c0_86 = arith.constant 0 : index
    %c0_87 = arith.constant 0 : index
    %170 = vector.load %arg7[%c4_85, %c0_86, %c0_87] : memref<25x4x8xbf16, #tpu.memory_space<vmem>>, vector<1x4x8xbf16>
    %171 = vector.shape_cast %170 : vector<1x4x8xbf16> to vector<4x8xbf16>
    %cst_88 = arith.constant dense<0.000000e+00> : vector<256x8xf32>
    %172 = tpu.matmul %169, %171, %cst_88 {dimension_numbers = #tpu.dot_dimension_numbers<[1], [0], [0], [1], [0, 0, 1, 1], [], []>} : vector<256x4xbf16>, vector<4x8xbf16>, vector<256x8xf32> -> vector<256x8xf32>
    %173 = arith.addf %160, %172 : vector<256x8xf32>
    %cst_89 = arith.constant 0.000000e+00 : bf16
    %174 = vector.broadcast %cst_89 : bf16 to vector<18x4xbf16>
    %175 = vector.extract_strided_slice %115 {offsets = [0, 0], sizes = [238, 4], strides = [1, 1]} : vector<256x4xbf16> to vector<238x4xbf16>
    %176 = tpu.concatenate %174, %175 in 0 : vector<18x4xbf16>, vector<238x4xbf16> -> vector<256x4xbf16>
    %c2_i32_90 = arith.constant 2 : i32
    %177 = vector.broadcast %c2_i32_90 : i32 to vector<256x1xi32>
    %178 = arith.cmpi sge, %0, %177 : vector<256x1xi32>
    %cst_91 = arith.constant 0.000000e+00 : bf16
    %179 = vector.broadcast %cst_91 : bf16 to vector<256x4xbf16>
    %180 = vector.shape_cast %178 : vector<256x1xi1> to vector<256x1xi1>
    %181 = vector.broadcast %180 : vector<256x1xi1> to vector<256x4xi1>
    %182 = arith.select %181, %176, %179 : vector<256x4xi1>, vector<256x4xbf16>
    %c5_92 = arith.constant 5 : index
    %c0_93 = arith.constant 0 : index
    %c0_94 = arith.constant 0 : index
    %183 = vector.load %arg7[%c5_92, %c0_93, %c0_94] : memref<25x4x8xbf16, #tpu.memory_space<vmem>>, vector<1x4x8xbf16>
    %184 = vector.shape_cast %183 : vector<1x4x8xbf16> to vector<4x8xbf16>
    %cst_95 = arith.constant dense<0.000000e+00> : vector<256x8xf32>
    %185 = tpu.matmul %182, %184, %cst_95 {dimension_numbers = #tpu.dot_dimension_numbers<[1], [0], [0], [1], [0, 0, 1, 1], [], []>} : vector<256x4xbf16>, vector<4x8xbf16>, vector<256x8xf32> -> vector<256x8xf32>
    %186 = arith.addf %173, %185 : vector<256x8xf32>
    %cst_96 = arith.constant 0.000000e+00 : bf16
    %187 = vector.broadcast %cst_96 : bf16 to vector<17x4xbf16>
    %188 = vector.extract_strided_slice %115 {offsets = [0, 0], sizes = [239, 4], strides = [1, 1]} : vector<256x4xbf16> to vector<239x4xbf16>
    %189 = tpu.concatenate %187, %188 in 0 : vector<17x4xbf16>, vector<239x4xbf16> -> vector<256x4xbf16>
    %c1_i32_97 = arith.constant 1 : i32
    %190 = vector.broadcast %c1_i32_97 : i32 to vector<256x1xi32>
    %191 = arith.cmpi sge, %0, %190 : vector<256x1xi32>
    %cst_98 = arith.constant 0.000000e+00 : bf16
    %192 = vector.broadcast %cst_98 : bf16 to vector<256x4xbf16>
    %193 = vector.shape_cast %191 : vector<256x1xi1> to vector<256x1xi1>
    %194 = vector.broadcast %193 : vector<256x1xi1> to vector<256x4xi1>
    %195 = arith.select %194, %189, %192 : vector<256x4xi1>, vector<256x4xbf16>
    %c6_99 = arith.constant 6 : index
    %c0_100 = arith.constant 0 : index
    %c0_101 = arith.constant 0 : index
    %196 = vector.load %arg7[%c6_99, %c0_100, %c0_101] : memref<25x4x8xbf16, #tpu.memory_space<vmem>>, vector<1x4x8xbf16>
    %197 = vector.shape_cast %196 : vector<1x4x8xbf16> to vector<4x8xbf16>
    %cst_102 = arith.constant dense<0.000000e+00> : vector<256x8xf32>
    %198 = tpu.matmul %195, %197, %cst_102 {dimension_numbers = #tpu.dot_dimension_numbers<[1], [0], [0], [1], [0, 0, 1, 1], [], []>} : vector<256x4xbf16>, vector<4x8xbf16>, vector<256x8xf32> -> vector<256x8xf32>
    %199 = arith.addf %186, %198 : vector<256x8xf32>
    %cst_103 = arith.constant 0.000000e+00 : bf16
    %200 = vector.broadcast %cst_103 : bf16 to vector<16x4xbf16>
    %201 = vector.extract_strided_slice %115 {offsets = [0, 0], sizes = [240, 4], strides = [1, 1]} : vector<256x4xbf16> to vector<240x4xbf16>
    %202 = tpu.concatenate %200, %201 in 0 : vector<16x4xbf16>, vector<240x4xbf16> -> vector<256x4xbf16>
    %c7_104 = arith.constant 7 : index
    %c0_105 = arith.constant 0 : index
    %c0_106 = arith.constant 0 : index
    %203 = vector.load %arg7[%c7_104, %c0_105, %c0_106] : memref<25x4x8xbf16, #tpu.memory_space<vmem>>, vector<1x4x8xbf16>
    %204 = vector.shape_cast %203 : vector<1x4x8xbf16> to vector<4x8xbf16>
    %cst_107 = arith.constant dense<0.000000e+00> : vector<256x8xf32>
    %205 = tpu.matmul %202, %204, %cst_107 {dimension_numbers = #tpu.dot_dimension_numbers<[1], [0], [0], [1], [0, 0, 1, 1], [], []>} : vector<256x4xbf16>, vector<4x8xbf16>, vector<256x8xf32> -> vector<256x8xf32>
    %206 = arith.addf %199, %205 : vector<256x8xf32>
    %cst_108 = arith.constant 0.000000e+00 : bf16
    %207 = vector.broadcast %cst_108 : bf16 to vector<15x4xbf16>
    %208 = vector.extract_strided_slice %115 {offsets = [0, 0], sizes = [241, 4], strides = [1, 1]} : vector<256x4xbf16> to vector<241x4xbf16>
    %209 = tpu.concatenate %207, %208 in 0 : vector<15x4xbf16>, vector<241x4xbf16> -> vector<256x4xbf16>
    %c15_i32_109 = arith.constant 15 : i32
    %210 = vector.broadcast %c15_i32_109 : i32 to vector<256x1xi32>
    %211 = arith.cmpi slt, %0, %210 : vector<256x1xi32>
    %cst_110 = arith.constant 0.000000e+00 : bf16
    %212 = vector.broadcast %cst_110 : bf16 to vector<256x4xbf16>
    %213 = vector.shape_cast %211 : vector<256x1xi1> to vector<256x1xi1>
    %214 = vector.broadcast %213 : vector<256x1xi1> to vector<256x4xi1>
    %215 = arith.select %214, %209, %212 : vector<256x4xi1>, vector<256x4xbf16>
    %c8_111 = arith.constant 8 : index
    %c0_112 = arith.constant 0 : index
    %c0_113 = arith.constant 0 : index
    %216 = vector.load %arg7[%c8_111, %c0_112, %c0_113] : memref<25x4x8xbf16, #tpu.memory_space<vmem>>, vector<1x4x8xbf16>
    %217 = vector.shape_cast %216 : vector<1x4x8xbf16> to vector<4x8xbf16>
    %cst_114 = arith.constant dense<0.000000e+00> : vector<256x8xf32>
    %218 = tpu.matmul %215, %217, %cst_114 {dimension_numbers = #tpu.dot_dimension_numbers<[1], [0], [0], [1], [0, 0, 1, 1], [], []>} : vector<256x4xbf16>, vector<4x8xbf16>, vector<256x8xf32> -> vector<256x8xf32>
    %219 = arith.addf %206, %218 : vector<256x8xf32>
    %cst_115 = arith.constant 0.000000e+00 : bf16
    %220 = vector.broadcast %cst_115 : bf16 to vector<14x4xbf16>
    %221 = vector.extract_strided_slice %115 {offsets = [0, 0], sizes = [242, 4], strides = [1, 1]} : vector<256x4xbf16> to vector<242x4xbf16>
    %222 = tpu.concatenate %220, %221 in 0 : vector<14x4xbf16>, vector<242x4xbf16> -> vector<256x4xbf16>
    %c14_i32_116 = arith.constant 14 : i32
    %223 = vector.broadcast %c14_i32_116 : i32 to vector<256x1xi32>
    %224 = arith.cmpi slt, %0, %223 : vector<256x1xi32>
    %cst_117 = arith.constant 0.000000e+00 : bf16
    %225 = vector.broadcast %cst_117 : bf16 to vector<256x4xbf16>
    %226 = vector.shape_cast %224 : vector<256x1xi1> to vector<256x1xi1>
    %227 = vector.broadcast %226 : vector<256x1xi1> to vector<256x4xi1>
    %228 = arith.select %227, %222, %225 : vector<256x4xi1>, vector<256x4xbf16>
    %c9 = arith.constant 9 : index
    %c0_118 = arith.constant 0 : index
    %c0_119 = arith.constant 0 : index
    %229 = vector.load %arg7[%c9, %c0_118, %c0_119] : memref<25x4x8xbf16, #tpu.memory_space<vmem>>, vector<1x4x8xbf16>
    %230 = vector.shape_cast %229 : vector<1x4x8xbf16> to vector<4x8xbf16>
    %cst_120 = arith.constant dense<0.000000e+00> : vector<256x8xf32>
    %231 = tpu.matmul %228, %230, %cst_120 {dimension_numbers = #tpu.dot_dimension_numbers<[1], [0], [0], [1], [0, 0, 1, 1], [], []>} : vector<256x4xbf16>, vector<4x8xbf16>, vector<256x8xf32> -> vector<256x8xf32>
    %232 = arith.addf %219, %231 : vector<256x8xf32>
    %cst_121 = arith.constant 0.000000e+00 : bf16
    %233 = vector.broadcast %cst_121 : bf16 to vector<2x4xbf16>
    %234 = vector.extract_strided_slice %115 {offsets = [0, 0], sizes = [254, 4], strides = [1, 1]} : vector<256x4xbf16> to vector<254x4xbf16>
    %235 = tpu.concatenate %233, %234 in 0 : vector<2x4xbf16>, vector<254x4xbf16> -> vector<256x4xbf16>
    %c2_i32_122 = arith.constant 2 : i32
    %236 = vector.broadcast %c2_i32_122 : i32 to vector<256x1xi32>
    %237 = arith.cmpi sge, %0, %236 : vector<256x1xi32>
    %cst_123 = arith.constant 0.000000e+00 : bf16
    %238 = vector.broadcast %cst_123 : bf16 to vector<256x4xbf16>
    %239 = vector.shape_cast %237 : vector<256x1xi1> to vector<256x1xi1>
    %240 = vector.broadcast %239 : vector<256x1xi1> to vector<256x4xi1>
    %241 = arith.select %240, %235, %238 : vector<256x4xi1>, vector<256x4xbf16>
    %c10 = arith.constant 10 : index
    %c0_124 = arith.constant 0 : index
    %c0_125 = arith.constant 0 : index
    %242 = vector.load %arg7[%c10, %c0_124, %c0_125] : memref<25x4x8xbf16, #tpu.memory_space<vmem>>, vector<1x4x8xbf16>
    %243 = vector.shape_cast %242 : vector<1x4x8xbf16> to vector<4x8xbf16>
    %cst_126 = arith.constant dense<0.000000e+00> : vector<256x8xf32>
    %244 = tpu.matmul %241, %243, %cst_126 {dimension_numbers = #tpu.dot_dimension_numbers<[1], [0], [0], [1], [0, 0, 1, 1], [], []>} : vector<256x4xbf16>, vector<4x8xbf16>, vector<256x8xf32> -> vector<256x8xf32>
    %245 = arith.addf %232, %244 : vector<256x8xf32>
    %cst_127 = arith.constant 0.000000e+00 : bf16
    %246 = vector.broadcast %cst_127 : bf16 to vector<1x4xbf16>
    %247 = vector.extract_strided_slice %115 {offsets = [0, 0], sizes = [255, 4], strides = [1, 1]} : vector<256x4xbf16> to vector<255x4xbf16>
    %248 = tpu.concatenate %246, %247 in 0 : vector<1x4xbf16>, vector<255x4xbf16> -> vector<256x4xbf16>
    %c1_i32_128 = arith.constant 1 : i32
    %249 = vector.broadcast %c1_i32_128 : i32 to vector<256x1xi32>
    %250 = arith.cmpi sge, %0, %249 : vector<256x1xi32>
    %cst_129 = arith.constant 0.000000e+00 : bf16
    %251 = vector.broadcast %cst_129 : bf16 to vector<256x4xbf16>
    %252 = vector.shape_cast %250 : vector<256x1xi1> to vector<256x1xi1>
    %253 = vector.broadcast %252 : vector<256x1xi1> to vector<256x4xi1>
    %254 = arith.select %253, %248, %251 : vector<256x4xi1>, vector<256x4xbf16>
    %c11 = arith.constant 11 : index
    %c0_130 = arith.constant 0 : index
    %c0_131 = arith.constant 0 : index
    %255 = vector.load %arg7[%c11, %c0_130, %c0_131] : memref<25x4x8xbf16, #tpu.memory_space<vmem>>, vector<1x4x8xbf16>
    %256 = vector.shape_cast %255 : vector<1x4x8xbf16> to vector<4x8xbf16>
    %cst_132 = arith.constant dense<0.000000e+00> : vector<256x8xf32>
    %257 = tpu.matmul %254, %256, %cst_132 {dimension_numbers = #tpu.dot_dimension_numbers<[1], [0], [0], [1], [0, 0, 1, 1], [], []>} : vector<256x4xbf16>, vector<4x8xbf16>, vector<256x8xf32> -> vector<256x8xf32>
    %258 = arith.addf %245, %257 : vector<256x8xf32>
    %c12 = arith.constant 12 : index
    %c0_133 = arith.constant 0 : index
    %c0_134 = arith.constant 0 : index
    %259 = vector.load %arg7[%c12, %c0_133, %c0_134] : memref<25x4x8xbf16, #tpu.memory_space<vmem>>, vector<1x4x8xbf16>
    %260 = vector.shape_cast %259 : vector<1x4x8xbf16> to vector<4x8xbf16>
    %cst_135 = arith.constant dense<0.000000e+00> : vector<256x8xf32>
    %261 = tpu.matmul %115, %260, %cst_135 {dimension_numbers = #tpu.dot_dimension_numbers<[1], [0], [0], [1], [0, 0, 1, 1], [], []>} : vector<256x4xbf16>, vector<4x8xbf16>, vector<256x8xf32> -> vector<256x8xf32>
    %262 = arith.addf %258, %261 : vector<256x8xf32>
    %cst_136 = arith.constant 0.000000e+00 : bf16
    %263 = vector.broadcast %cst_136 : bf16 to vector<1x4xbf16>
    %264 = vector.extract_strided_slice %115 {offsets = [1, 0], sizes = [255, 4], strides = [1, 1]} : vector<256x4xbf16> to vector<255x4xbf16>
    %265 = tpu.concatenate %264, %263 in 0 : vector<255x4xbf16>, vector<1x4xbf16> -> vector<256x4xbf16>
    %c15_i32_137 = arith.constant 15 : i32
    %266 = vector.broadcast %c15_i32_137 : i32 to vector<256x1xi32>
    %267 = arith.cmpi slt, %0, %266 : vector<256x1xi32>
    %cst_138 = arith.constant 0.000000e+00 : bf16
    %268 = vector.broadcast %cst_138 : bf16 to vector<256x4xbf16>
    %269 = vector.shape_cast %267 : vector<256x1xi1> to vector<256x1xi1>
    %270 = vector.broadcast %269 : vector<256x1xi1> to vector<256x4xi1>
    %271 = arith.select %270, %265, %268 : vector<256x4xi1>, vector<256x4xbf16>
    %c13 = arith.constant 13 : index
    %c0_139 = arith.constant 0 : index
    %c0_140 = arith.constant 0 : index
    %272 = vector.load %arg7[%c13, %c0_139, %c0_140] : memref<25x4x8xbf16, #tpu.memory_space<vmem>>, vector<1x4x8xbf16>
    %273 = vector.shape_cast %272 : vector<1x4x8xbf16> to vector<4x8xbf16>
    %cst_141 = arith.constant dense<0.000000e+00> : vector<256x8xf32>
    %274 = tpu.matmul %271, %273, %cst_141 {dimension_numbers = #tpu.dot_dimension_numbers<[1], [0], [0], [1], [0, 0, 1, 1], [], []>} : vector<256x4xbf16>, vector<4x8xbf16>, vector<256x8xf32> -> vector<256x8xf32>
    %275 = arith.addf %262, %274 : vector<256x8xf32>
    %cst_142 = arith.constant 0.000000e+00 : bf16
    %276 = vector.broadcast %cst_142 : bf16 to vector<2x4xbf16>
    %277 = vector.extract_strided_slice %115 {offsets = [2, 0], sizes = [254, 4], strides = [1, 1]} : vector<256x4xbf16> to vector<254x4xbf16>
    %278 = tpu.concatenate %277, %276 in 0 : vector<254x4xbf16>, vector<2x4xbf16> -> vector<256x4xbf16>
    %c14_i32_143 = arith.constant 14 : i32
    %279 = vector.broadcast %c14_i32_143 : i32 to vector<256x1xi32>
    %280 = arith.cmpi slt, %0, %279 : vector<256x1xi32>
    %cst_144 = arith.constant 0.000000e+00 : bf16
    %281 = vector.broadcast %cst_144 : bf16 to vector<256x4xbf16>
    %282 = vector.shape_cast %280 : vector<256x1xi1> to vector<256x1xi1>
    %283 = vector.broadcast %282 : vector<256x1xi1> to vector<256x4xi1>
    %284 = arith.select %283, %278, %281 : vector<256x4xi1>, vector<256x4xbf16>
    %c14 = arith.constant 14 : index
    %c0_145 = arith.constant 0 : index
    %c0_146 = arith.constant 0 : index
    %285 = vector.load %arg7[%c14, %c0_145, %c0_146] : memref<25x4x8xbf16, #tpu.memory_space<vmem>>, vector<1x4x8xbf16>
    %286 = vector.shape_cast %285 : vector<1x4x8xbf16> to vector<4x8xbf16>
    %cst_147 = arith.constant dense<0.000000e+00> : vector<256x8xf32>
    %287 = tpu.matmul %284, %286, %cst_147 {dimension_numbers = #tpu.dot_dimension_numbers<[1], [0], [0], [1], [0, 0, 1, 1], [], []>} : vector<256x4xbf16>, vector<4x8xbf16>, vector<256x8xf32> -> vector<256x8xf32>
    %288 = arith.addf %275, %287 : vector<256x8xf32>
    %cst_148 = arith.constant 0.000000e+00 : bf16
    %289 = vector.broadcast %cst_148 : bf16 to vector<14x4xbf16>
    %290 = vector.extract_strided_slice %115 {offsets = [14, 0], sizes = [242, 4], strides = [1, 1]} : vector<256x4xbf16> to vector<242x4xbf16>
    %291 = tpu.concatenate %290, %289 in 0 : vector<242x4xbf16>, vector<14x4xbf16> -> vector<256x4xbf16>
    %c2_i32_149 = arith.constant 2 : i32
    %292 = vector.broadcast %c2_i32_149 : i32 to vector<256x1xi32>
    %293 = arith.cmpi sge, %0, %292 : vector<256x1xi32>
    %cst_150 = arith.constant 0.000000e+00 : bf16
    %294 = vector.broadcast %cst_150 : bf16 to vector<256x4xbf16>
    %295 = vector.shape_cast %293 : vector<256x1xi1> to vector<256x1xi1>
    %296 = vector.broadcast %295 : vector<256x1xi1> to vector<256x4xi1>
    %297 = arith.select %296, %291, %294 : vector<256x4xi1>, vector<256x4xbf16>
    %c15 = arith.constant 15 : index
    %c0_151 = arith.constant 0 : index
    %c0_152 = arith.constant 0 : index
    %298 = vector.load %arg7[%c15, %c0_151, %c0_152] : memref<25x4x8xbf16, #tpu.memory_space<vmem>>, vector<1x4x8xbf16>
    %299 = vector.shape_cast %298 : vector<1x4x8xbf16> to vector<4x8xbf16>
    %cst_153 = arith.constant dense<0.000000e+00> : vector<256x8xf32>
    %300 = tpu.matmul %297, %299, %cst_153 {dimension_numbers = #tpu.dot_dimension_numbers<[1], [0], [0], [1], [0, 0, 1, 1], [], []>} : vector<256x4xbf16>, vector<4x8xbf16>, vector<256x8xf32> -> vector<256x8xf32>
    %301 = arith.addf %288, %300 : vector<256x8xf32>
    %cst_154 = arith.constant 0.000000e+00 : bf16
    %302 = vector.broadcast %cst_154 : bf16 to vector<15x4xbf16>
    %303 = vector.extract_strided_slice %115 {offsets = [15, 0], sizes = [241, 4], strides = [1, 1]} : vector<256x4xbf16> to vector<241x4xbf16>
    %304 = tpu.concatenate %303, %302 in 0 : vector<241x4xbf16>, vector<15x4xbf16> -> vector<256x4xbf16>
    %c1_i32_155 = arith.constant 1 : i32
    %305 = vector.broadcast %c1_i32_155 : i32 to vector<256x1xi32>
    %306 = arith.cmpi sge, %0, %305 : vector<256x1xi32>
    %cst_156 = arith.constant 0.000000e+00 : bf16
    %307 = vector.broadcast %cst_156 : bf16 to vector<256x4xbf16>
    %308 = vector.shape_cast %306 : vector<256x1xi1> to vector<256x1xi1>
    %309 = vector.broadcast %308 : vector<256x1xi1> to vector<256x4xi1>
    %310 = arith.select %309, %304, %307 : vector<256x4xi1>, vector<256x4xbf16>
    %c16 = arith.constant 16 : index
    %c0_157 = arith.constant 0 : index
    %c0_158 = arith.constant 0 : index
    %311 = vector.load %arg7[%c16, %c0_157, %c0_158] : memref<25x4x8xbf16, #tpu.memory_space<vmem>>, vector<1x4x8xbf16>
    %312 = vector.shape_cast %311 : vector<1x4x8xbf16> to vector<4x8xbf16>
    %cst_159 = arith.constant dense<0.000000e+00> : vector<256x8xf32>
    %313 = tpu.matmul %310, %312, %cst_159 {dimension_numbers = #tpu.dot_dimension_numbers<[1], [0], [0], [1], [0, 0, 1, 1], [], []>} : vector<256x4xbf16>, vector<4x8xbf16>, vector<256x8xf32> -> vector<256x8xf32>
    %314 = arith.addf %301, %313 : vector<256x8xf32>
    %cst_160 = arith.constant 0.000000e+00 : bf16
    %315 = vector.broadcast %cst_160 : bf16 to vector<16x4xbf16>
    %316 = vector.extract_strided_slice %115 {offsets = [16, 0], sizes = [240, 4], strides = [1, 1]} : vector<256x4xbf16> to vector<240x4xbf16>
    %317 = tpu.concatenate %316, %315 in 0 : vector<240x4xbf16>, vector<16x4xbf16> -> vector<256x4xbf16>
    %c17 = arith.constant 17 : index
    %c0_161 = arith.constant 0 : index
    %c0_162 = arith.constant 0 : index
    %318 = vector.load %arg7[%c17, %c0_161, %c0_162] : memref<25x4x8xbf16, #tpu.memory_space<vmem>>, vector<1x4x8xbf16>
    %319 = vector.shape_cast %318 : vector<1x4x8xbf16> to vector<4x8xbf16>
    %cst_163 = arith.constant dense<0.000000e+00> : vector<256x8xf32>
    %320 = tpu.matmul %317, %319, %cst_163 {dimension_numbers = #tpu.dot_dimension_numbers<[1], [0], [0], [1], [0, 0, 1, 1], [], []>} : vector<256x4xbf16>, vector<4x8xbf16>, vector<256x8xf32> -> vector<256x8xf32>
    %321 = arith.addf %314, %320 : vector<256x8xf32>
    %cst_164 = arith.constant 0.000000e+00 : bf16
    %322 = vector.broadcast %cst_164 : bf16 to vector<17x4xbf16>
    %323 = vector.extract_strided_slice %115 {offsets = [17, 0], sizes = [239, 4], strides = [1, 1]} : vector<256x4xbf16> to vector<239x4xbf16>
    %324 = tpu.concatenate %323, %322 in 0 : vector<239x4xbf16>, vector<17x4xbf16> -> vector<256x4xbf16>
    %c15_i32_165 = arith.constant 15 : i32
    %325 = vector.broadcast %c15_i32_165 : i32 to vector<256x1xi32>
    %326 = arith.cmpi slt, %0, %325 : vector<256x1xi32>
    %cst_166 = arith.constant 0.000000e+00 : bf16
    %327 = vector.broadcast %cst_166 : bf16 to vector<256x4xbf16>
    %328 = vector.shape_cast %326 : vector<256x1xi1> to vector<256x1xi1>
    %329 = vector.broadcast %328 : vector<256x1xi1> to vector<256x4xi1>
    %330 = arith.select %329, %324, %327 : vector<256x4xi1>, vector<256x4xbf16>
    %c18 = arith.constant 18 : index
    %c0_167 = arith.constant 0 : index
    %c0_168 = arith.constant 0 : index
    %331 = vector.load %arg7[%c18, %c0_167, %c0_168] : memref<25x4x8xbf16, #tpu.memory_space<vmem>>, vector<1x4x8xbf16>
    %332 = vector.shape_cast %331 : vector<1x4x8xbf16> to vector<4x8xbf16>
    %cst_169 = arith.constant dense<0.000000e+00> : vector<256x8xf32>
    %333 = tpu.matmul %330, %332, %cst_169 {dimension_numbers = #tpu.dot_dimension_numbers<[1], [0], [0], [1], [0, 0, 1, 1], [], []>} : vector<256x4xbf16>, vector<4x8xbf16>, vector<256x8xf32> -> vector<256x8xf32>
    %334 = arith.addf %321, %333 : vector<256x8xf32>
    %cst_170 = arith.constant 0.000000e+00 : bf16
    %335 = vector.broadcast %cst_170 : bf16 to vector<18x4xbf16>
    %336 = vector.extract_strided_slice %115 {offsets = [18, 0], sizes = [238, 4], strides = [1, 1]} : vector<256x4xbf16> to vector<238x4xbf16>
    %337 = tpu.concatenate %336, %335 in 0 : vector<238x4xbf16>, vector<18x4xbf16> -> vector<256x4xbf16>
    %c14_i32_171 = arith.constant 14 : i32
    %338 = vector.broadcast %c14_i32_171 : i32 to vector<256x1xi32>
    %339 = arith.cmpi slt, %0, %338 : vector<256x1xi32>
    %cst_172 = arith.constant 0.000000e+00 : bf16
    %340 = vector.broadcast %cst_172 : bf16 to vector<256x4xbf16>
    %341 = vector.shape_cast %339 : vector<256x1xi1> to vector<256x1xi1>
    %342 = vector.broadcast %341 : vector<256x1xi1> to vector<256x4xi1>
    %343 = arith.select %342, %337, %340 : vector<256x4xi1>, vector<256x4xbf16>
    %c19 = arith.constant 19 : index
    %c0_173 = arith.constant 0 : index
    %c0_174 = arith.constant 0 : index
    %344 = vector.load %arg7[%c19, %c0_173, %c0_174] : memref<25x4x8xbf16, #tpu.memory_space<vmem>>, vector<1x4x8xbf16>
    %345 = vector.shape_cast %344 : vector<1x4x8xbf16> to vector<4x8xbf16>
    %cst_175 = arith.constant dense<0.000000e+00> : vector<256x8xf32>
    %346 = tpu.matmul %343, %345, %cst_175 {dimension_numbers = #tpu.dot_dimension_numbers<[1], [0], [0], [1], [0, 0, 1, 1], [], []>} : vector<256x4xbf16>, vector<4x8xbf16>, vector<256x8xf32> -> vector<256x8xf32>
    %347 = arith.addf %334, %346 : vector<256x8xf32>
    %cst_176 = arith.constant 0.000000e+00 : bf16
    %348 = vector.broadcast %cst_176 : bf16 to vector<30x4xbf16>
    %349 = vector.extract_strided_slice %115 {offsets = [30, 0], sizes = [226, 4], strides = [1, 1]} : vector<256x4xbf16> to vector<226x4xbf16>
    %350 = tpu.concatenate %349, %348 in 0 : vector<226x4xbf16>, vector<30x4xbf16> -> vector<256x4xbf16>
    %c2_i32_177 = arith.constant 2 : i32
    %351 = vector.broadcast %c2_i32_177 : i32 to vector<256x1xi32>
    %352 = arith.cmpi sge, %0, %351 : vector<256x1xi32>
    %cst_178 = arith.constant 0.000000e+00 : bf16
    %353 = vector.broadcast %cst_178 : bf16 to vector<256x4xbf16>
    %354 = vector.shape_cast %352 : vector<256x1xi1> to vector<256x1xi1>
    %355 = vector.broadcast %354 : vector<256x1xi1> to vector<256x4xi1>
    %356 = arith.select %355, %350, %353 : vector<256x4xi1>, vector<256x4xbf16>
    %c20 = arith.constant 20 : index
    %c0_179 = arith.constant 0 : index
    %c0_180 = arith.constant 0 : index
    %357 = vector.load %arg7[%c20, %c0_179, %c0_180] : memref<25x4x8xbf16, #tpu.memory_space<vmem>>, vector<1x4x8xbf16>
    %358 = vector.shape_cast %357 : vector<1x4x8xbf16> to vector<4x8xbf16>
    %cst_181 = arith.constant dense<0.000000e+00> : vector<256x8xf32>
    %359 = tpu.matmul %356, %358, %cst_181 {dimension_numbers = #tpu.dot_dimension_numbers<[1], [0], [0], [1], [0, 0, 1, 1], [], []>} : vector<256x4xbf16>, vector<4x8xbf16>, vector<256x8xf32> -> vector<256x8xf32>
    %360 = arith.addf %347, %359 : vector<256x8xf32>
    %cst_182 = arith.constant 0.000000e+00 : bf16
    %361 = vector.broadcast %cst_182 : bf16 to vector<31x4xbf16>
    %362 = vector.extract_strided_slice %115 {offsets = [31, 0], sizes = [225, 4], strides = [1, 1]} : vector<256x4xbf16> to vector<225x4xbf16>
    %363 = tpu.concatenate %362, %361 in 0 : vector<225x4xbf16>, vector<31x4xbf16> -> vector<256x4xbf16>
    %c1_i32_183 = arith.constant 1 : i32
    %364 = vector.broadcast %c1_i32_183 : i32 to vector<256x1xi32>
    %365 = arith.cmpi sge, %0, %364 : vector<256x1xi32>
    %cst_184 = arith.constant 0.000000e+00 : bf16
    %366 = vector.broadcast %cst_184 : bf16 to vector<256x4xbf16>
    %367 = vector.shape_cast %365 : vector<256x1xi1> to vector<256x1xi1>
    %368 = vector.broadcast %367 : vector<256x1xi1> to vector<256x4xi1>
    %369 = arith.select %368, %363, %366 : vector<256x4xi1>, vector<256x4xbf16>
    %c21 = arith.constant 21 : index
    %c0_185 = arith.constant 0 : index
    %c0_186 = arith.constant 0 : index
    %370 = vector.load %arg7[%c21, %c0_185, %c0_186] : memref<25x4x8xbf16, #tpu.memory_space<vmem>>, vector<1x4x8xbf16>
    %371 = vector.shape_cast %370 : vector<1x4x8xbf16> to vector<4x8xbf16>
    %cst_187 = arith.constant dense<0.000000e+00> : vector<256x8xf32>
    %372 = tpu.matmul %369, %371, %cst_187 {dimension_numbers = #tpu.dot_dimension_numbers<[1], [0], [0], [1], [0, 0, 1, 1], [], []>} : vector<256x4xbf16>, vector<4x8xbf16>, vector<256x8xf32> -> vector<256x8xf32>
    %373 = arith.addf %360, %372 : vector<256x8xf32>
    %cst_188 = arith.constant 0.000000e+00 : bf16
    %374 = vector.broadcast %cst_188 : bf16 to vector<32x4xbf16>
    %375 = vector.extract_strided_slice %115 {offsets = [32, 0], sizes = [224, 4], strides = [1, 1]} : vector<256x4xbf16> to vector<224x4xbf16>
    %376 = tpu.concatenate %375, %374 in 0 : vector<224x4xbf16>, vector<32x4xbf16> -> vector<256x4xbf16>
    %c22 = arith.constant 22 : index
    %c0_189 = arith.constant 0 : index
    %c0_190 = arith.constant 0 : index
    %377 = vector.load %arg7[%c22, %c0_189, %c0_190] : memref<25x4x8xbf16, #tpu.memory_space<vmem>>, vector<1x4x8xbf16>
    %378 = vector.shape_cast %377 : vector<1x4x8xbf16> to vector<4x8xbf16>
    %cst_191 = arith.constant dense<0.000000e+00> : vector<256x8xf32>
    %379 = tpu.matmul %376, %378, %cst_191 {dimension_numbers = #tpu.dot_dimension_numbers<[1], [0], [0], [1], [0, 0, 1, 1], [], []>} : vector<256x4xbf16>, vector<4x8xbf16>, vector<256x8xf32> -> vector<256x8xf32>
    %380 = arith.addf %373, %379 : vector<256x8xf32>
    %cst_192 = arith.constant 0.000000e+00 : bf16
    %381 = vector.broadcast %cst_192 : bf16 to vector<33x4xbf16>
    %382 = vector.extract_strided_slice %115 {offsets = [33, 0], sizes = [223, 4], strides = [1, 1]} : vector<256x4xbf16> to vector<223x4xbf16>
    %383 = tpu.concatenate %382, %381 in 0 : vector<223x4xbf16>, vector<33x4xbf16> -> vector<256x4xbf16>
    %c15_i32_193 = arith.constant 15 : i32
    %384 = vector.broadcast %c15_i32_193 : i32 to vector<256x1xi32>
    %385 = arith.cmpi slt, %0, %384 : vector<256x1xi32>
    %cst_194 = arith.constant 0.000000e+00 : bf16
    %386 = vector.broadcast %cst_194 : bf16 to vector<256x4xbf16>
    %387 = vector.shape_cast %385 : vector<256x1xi1> to vector<256x1xi1>
    %388 = vector.broadcast %387 : vector<256x1xi1> to vector<256x4xi1>
    %389 = arith.select %388, %383, %386 : vector<256x4xi1>, vector<256x4xbf16>
    %c23 = arith.constant 23 : index
    %c0_195 = arith.constant 0 : index
    %c0_196 = arith.constant 0 : index
    %390 = vector.load %arg7[%c23, %c0_195, %c0_196] : memref<25x4x8xbf16, #tpu.memory_space<vmem>>, vector<1x4x8xbf16>
    %391 = vector.shape_cast %390 : vector<1x4x8xbf16> to vector<4x8xbf16>
    %cst_197 = arith.constant dense<0.000000e+00> : vector<256x8xf32>
    %392 = tpu.matmul %389, %391, %cst_197 {dimension_numbers = #tpu.dot_dimension_numbers<[1], [0], [0], [1], [0, 0, 1, 1], [], []>} : vector<256x4xbf16>, vector<4x8xbf16>, vector<256x8xf32> -> vector<256x8xf32>
    %393 = arith.addf %380, %392 : vector<256x8xf32>
    %cst_198 = arith.constant 0.000000e+00 : bf16
    %394 = vector.broadcast %cst_198 : bf16 to vector<34x4xbf16>
    %395 = vector.extract_strided_slice %115 {offsets = [34, 0], sizes = [222, 4], strides = [1, 1]} : vector<256x4xbf16> to vector<222x4xbf16>
    %396 = tpu.concatenate %395, %394 in 0 : vector<222x4xbf16>, vector<34x4xbf16> -> vector<256x4xbf16>
    %c14_i32_199 = arith.constant 14 : i32
    %397 = vector.broadcast %c14_i32_199 : i32 to vector<256x1xi32>
    %398 = arith.cmpi slt, %0, %397 : vector<256x1xi32>
    %cst_200 = arith.constant 0.000000e+00 : bf16
    %399 = vector.broadcast %cst_200 : bf16 to vector<256x4xbf16>
    %400 = vector.shape_cast %398 : vector<256x1xi1> to vector<256x1xi1>
    %401 = vector.broadcast %400 : vector<256x1xi1> to vector<256x4xi1>
    %402 = arith.select %401, %396, %399 : vector<256x4xi1>, vector<256x4xbf16>
    %c24 = arith.constant 24 : index
    %c0_201 = arith.constant 0 : index
    %c0_202 = arith.constant 0 : index
    %403 = vector.load %arg7[%c24, %c0_201, %c0_202] : memref<25x4x8xbf16, #tpu.memory_space<vmem>>, vector<1x4x8xbf16>
    %404 = vector.shape_cast %403 : vector<1x4x8xbf16> to vector<4x8xbf16>
    %cst_203 = arith.constant dense<0.000000e+00> : vector<256x8xf32>
    %405 = tpu.matmul %402, %404, %cst_203 {dimension_numbers = #tpu.dot_dimension_numbers<[1], [0], [0], [1], [0, 0, 1, 1], [], []>} : vector<256x4xbf16>, vector<4x8xbf16>, vector<256x8xf32> -> vector<256x8xf32>
    %406 = arith.addf %393, %405 : vector<256x8xf32>
    %c0_204 = arith.constant 0 : index
    %c0_205 = arith.constant 0 : index
    %407 = vector.load %arg8[%c0_204, %c0_205] : memref<1x8xf32, #tpu.memory_space<vmem>>, vector<1x8xf32>
    %408 = vector.broadcast %407 : vector<1x8xf32> to vector<256x8xf32>
    %409 = arith.addf %406, %408 : vector<256x8xf32>
    %cst_206 = arith.constant 0.000000e+00 : f32
    %410 = vector.broadcast %cst_206 : f32 to vector<256x8xf32>
    %411 = arith.maximumf %409, %410 : vector<256x8xf32>
    %cst_207 = arith.constant -1.000000e+30 : f32
    %412 = vector.broadcast %cst_207 : f32 to vector<16x4xf32>
    %413 = vector.extract_strided_slice %2 {offsets = [16, 0], sizes = [240, 4], strides = [1, 1]} : vector<256x4xf32> to vector<240x4xf32>
    %414 = tpu.concatenate %413, %412 in 0 : vector<240x4xf32>, vector<16x4xf32> -> vector<256x4xf32>
    %cst_208 = arith.constant -1.000000e+30 : f32
    %415 = vector.broadcast %cst_208 : f32 to vector<16x4xf32>
    %416 = vector.extract_strided_slice %2 {offsets = [0, 0], sizes = [240, 4], strides = [1, 1]} : vector<256x4xf32> to vector<240x4xf32>
    %417 = tpu.concatenate %415, %416 in 0 : vector<16x4xf32>, vector<240x4xf32> -> vector<256x4xf32>
    %418 = arith.maximumf %2, %414 : vector<256x4xf32>
    %419 = arith.maximumf %418, %417 : vector<256x4xf32>
    %c15_i32_209 = arith.constant 15 : i32
    %420 = vector.broadcast %c15_i32_209 : i32 to vector<256x1xi32>
    %421 = arith.cmpi eq, %0, %420 : vector<256x1xi32>
    %cst_210 = arith.constant -1.000000e+30 : f32
    %422 = vector.broadcast %cst_210 : f32 to vector<1x4xf32>
    %423 = vector.extract_strided_slice %419 {offsets = [1, 0], sizes = [255, 4], strides = [1, 1]} : vector<256x4xf32> to vector<255x4xf32>
    %424 = tpu.concatenate %423, %422 in 0 : vector<255x4xf32>, vector<1x4xf32> -> vector<256x4xf32>
    %cst_211 = arith.constant -1.000000e+30 : f32
    %425 = vector.shape_cast %421 : vector<256x1xi1> to vector<256x1xi1>
    %426 = vector.broadcast %425 : vector<256x1xi1> to vector<256x4xi1>
    %427 = vector.broadcast %cst_211 : f32 to vector<256x4xf32>
    %428 = arith.select %426, %427, %424 : vector<256x4xi1>, vector<256x4xf32>
    %c0_i32 = arith.constant 0 : i32
    %429 = vector.broadcast %c0_i32 : i32 to vector<256x1xi32>
    %430 = arith.cmpi eq, %0, %429 : vector<256x1xi32>
    %cst_212 = arith.constant -1.000000e+30 : f32
    %431 = vector.broadcast %cst_212 : f32 to vector<1x4xf32>
    %432 = vector.extract_strided_slice %419 {offsets = [0, 0], sizes = [255, 4], strides = [1, 1]} : vector<256x4xf32> to vector<255x4xf32>
    %433 = tpu.concatenate %431, %432 in 0 : vector<1x4xf32>, vector<255x4xf32> -> vector<256x4xf32>
    %cst_213 = arith.constant -1.000000e+30 : f32
    %434 = vector.shape_cast %430 : vector<256x1xi1> to vector<256x1xi1>
    %435 = vector.broadcast %434 : vector<256x1xi1> to vector<256x4xi1>
    %436 = vector.broadcast %cst_213 : f32 to vector<256x4xf32>
    %437 = arith.select %435, %436, %433 : vector<256x4xi1>, vector<256x4xf32>
    %438 = arith.maximumf %419, %428 : vector<256x4xf32>
    %439 = arith.maximumf %438, %437 : vector<256x4xf32>
    %440 = arith.truncf %439 : vector<256x4xf32> to vector<256x4xbf16>
    %c0_214 = arith.constant 0 : index
    %c0_215 = arith.constant 0 : index
    %441 = vector.load %arg9[%c0_214, %c0_215] : memref<4x8xbf16, #tpu.memory_space<vmem>>, vector<4x8xbf16>
    %cst_216 = arith.constant dense<0.000000e+00> : vector<256x8xf32>
    %442 = tpu.matmul %440, %441, %cst_216 {dimension_numbers = #tpu.dot_dimension_numbers<[1], [0], [0], [1], [0, 0, 1, 1], [], []>} : vector<256x4xbf16>, vector<4x8xbf16>, vector<256x8xf32> -> vector<256x8xf32>
    %c0_217 = arith.constant 0 : index
    %c0_218 = arith.constant 0 : index
    %443 = vector.load %arg10[%c0_217, %c0_218] : memref<1x8xf32, #tpu.memory_space<vmem>>, vector<1x8xf32>
    %444 = vector.broadcast %443 : vector<1x8xf32> to vector<256x8xf32>
    %445 = arith.addf %442, %444 : vector<256x8xf32>
    %cst_219 = arith.constant 0.000000e+00 : f32
    %446 = vector.broadcast %cst_219 : f32 to vector<256x8xf32>
    %447 = arith.maximumf %445, %446 : vector<256x8xf32>
    %448 = tpu.concatenate %11, %113, %411, %447 in 1 : vector<256x8xf32>, vector<256x8xf32>, vector<256x8xf32>, vector<256x8xf32> -> vector<256x32xf32>
    %c0_220 = arith.constant 0 : index
    %c0_221 = arith.constant 0 : index
    %c0_222 = arith.constant 0 : index
    %449 = vector.load %arg11[%c0_220, %c0_221, %c0_222] : memref<1x256x32xf32, #tpu.memory_space<vmem>>, vector<1x256x32xf32>
    %450 = vector.shape_cast %449 : vector<1x256x32xf32> to vector<256x32xf32>
    %451 = vector.shape_cast %448 : vector<256x32xf32> to vector<1x256x32xf32>
    tpu.vector_store %arg11[%c0_220, %c0_221, %c0_222], %451 {strides = array<i32>} : memref<1x256x32xf32, #tpu.memory_space<vmem>>, vector<1x256x32xf32>,
    return
  }
  func.func @transform_0(%arg0: i32) -> (i32, i32) {
    %c0_i32 = arith.constant 0 : i32
    %c0_i32_0 = arith.constant 0 : i32
    %c0_i32_1 = arith.constant 0 : i32
    return %c0_i32, %c0_i32_0 : i32, i32
  }
  func.func @transform_1(%arg0: i32) -> (i32, i32, i32) {
    %c0_i32 = arith.constant 0 : i32
    %c0_i32_0 = arith.constant 0 : i32
    %c0_i32_1 = arith.constant 0 : i32
    return %arg0, %c0_i32, %c0_i32_0 : i32, i32, i32
  }
  func.func @transform_2(%arg0: i32) -> (i32, i32) {
    %c0_i32 = arith.constant 0 : i32
    %c0_i32_0 = arith.constant 0 : i32
    %c0_i32_1 = arith.constant 0 : i32
    return %c0_i32, %c0_i32_0 : i32, i32
  }
  func.func @transform_3(%arg0: i32) -> (i32, i32) {
    %c0_i32 = arith.constant 0 : i32
    %c0_i32_0 = arith.constant 0 : i32
    %c0_i32_1 = arith.constant 0 : i32
    return %c0_i32, %c0_i32_0 : i32, i32
  }
  func.func @transform_4(%arg0: i32) -> (i32, i32, i32) {
    %c0_i32 = arith.constant 0 : i32
    %c0_i32_0 = arith.constant 0 : i32
    %c0_i32_1 = arith.constant 0 : i32
    %c0_i32_2 = arith.constant 0 : i32
    return %c0_i32, %c0_i32_0, %c0_i32_1 : i32, i32, i32
  }
  func.func @transform_5(%arg0: i32) -> (i32, i32) {
    %c0_i32 = arith.constant 0 : i32
    %c0_i32_0 = arith.constant 0 : i32
    %c0_i32_1 = arith.constant 0 : i32
    return %c0_i32, %c0_i32_0 : i32, i32
  }
  func.func @transform_6(%arg0: i32) -> (i32, i32, i32) {
    %c0_i32 = arith.constant 0 : i32
    %c0_i32_0 = arith.constant 0 : i32
    %c0_i32_1 = arith.constant 0 : i32
    %c0_i32_2 = arith.constant 0 : i32
    return %c0_i32, %c0_i32_0, %c0_i32_1 : i32, i32, i32
  }
  func.func @transform_7(%arg0: i32) -> (i32, i32) {
    %c0_i32 = arith.constant 0 : i32
    %c0_i32_0 = arith.constant 0 : i32
    %c0_i32_1 = arith.constant 0 : i32
    return %c0_i32, %c0_i32_0 : i32, i32
  }
  func.func @transform_8(%arg0: i32) -> (i32, i32) {
    %c0_i32 = arith.constant 0 : i32
    %c0_i32_0 = arith.constant 0 : i32
    %c0_i32_1 = arith.constant 0 : i32
    return %c0_i32, %c0_i32_0 : i32, i32
  }
  func.func @transform_9(%arg0: i32) -> (i32, i32) {
    %c0_i32 = arith.constant 0 : i32
    %c0_i32_0 = arith.constant 0 : i32
    %c0_i32_1 = arith.constant 0 : i32
    return %c0_i32, %c0_i32_0 : i32, i32
  }
  func.func @transform_10(%arg0: i32) -> (i32, i32, i32) {
    %c0_i32 = arith.constant 0 : i32
    %c0_i32_0 = arith.constant 0 : i32
    %c0_i32_1 = arith.constant 0 : i32
    return %arg0, %c0_i32, %c0_i32_0 : i32, i32, i32
  }
}

</mosaic_0001>

<llo_original>
// kernel: inception_forward.1
$region0: #{inception_forward.1}
  #allocation0 [shape = 'u32[]', space=smem, size = 0x4, offset = 0x4, fixed_abs, tag = 'smem constant byte address 0x4 - core index']
  #allocation1 [shape = 'u32[72,128]{1,0:T(1,128)}', space=vmem, size = 0x9000, scoped, tag = 'internal scratch']
  %s0 = inlined_call_operand.vmem [shape: s32[256,1], index: 0, kind: input, shape index: {}]
  %s1 = inlined_call_operand.vmem [shape: f32[2,256,4], index: 1, kind: input, shape index: {}]
  %s2 = inlined_call_operand.vmem [shape: bf16[4,16], index: 2, kind: input, shape index: {}]
  %s3 = inlined_call_operand.vmem [shape: f32[1,16], index: 3, kind: input, shape index: {}]
  %s4 = inlined_call_operand.vmem [shape: bf16[9,4,8], index: 4, kind: input, shape index: {}]
  %s5 = inlined_call_operand.vmem [shape: f32[1,8], index: 5, kind: input, shape index: {}]
  %s6 = inlined_call_operand.vmem [shape: bf16[25,4,8], index: 6, kind: input, shape index: {}]
  %s7 = inlined_call_operand.vmem [shape: f32[1,8], index: 7, kind: input, shape index: {}]
  %s8 = inlined_call_operand.vmem [shape: bf16[4,8], index: 8, kind: input, shape index: {}]
  %s9 = inlined_call_operand.vmem [shape: f32[1,8], index: 9, kind: input, shape index: {}]
  %s10 = inlined_call_operand.hbm [shape: f32[2,256,32], index: 10, kind: output, shape index: {}]
  %s11 = sld [smem:[#allocation0]]
  $region73: #{inception_forward.1} parent=0
    _
  %s13 = ssub.s32 1, %s11
  %s14 = scalar_select 0, %s13, %s11
  $region1: #{inception_forward.1} parent=0
    #allocation2 [shape = 'u8[262144]{0}', space=vmem, size = 0x40000, scoped, tag = 'output window, operand 0']
    #allocation3 [shape = 's32[2]{0}', space=sflag, size = 0x8, scoped, tag = 'scoped memory for inception_forward.1']
    %15 = vsyncpa [#allocation3], 0
    %s16 = scalar_lea.sflag [#allocation3], 1
    %17 = vsyncpa %s16, 0
    loop: start=0, step=1, limit=4
    $region2: #{inception_forward.1} parent=1 // loop_pre_header
      _
    $region3: #{inception_forward.1} parent=1 // loop_header
      %s19 = sphi 0, %s23
      %p20 = scmp.ge.s32.totalorder %s19, 4
      %s27 = sphi 0, %s27
      %s29 = sphi 0, %s27
      %s30 = sphi 0, %s29
      %s44 = sphi 0, %s30
      %s50 = sphi 0, %s52
      %s53 = sphi 0, %s50
      %s54 = sphi 0, %s53
      %s70 = sphi 0, %s54
      %s74 = sphi 0, %s74
      %s76 = sphi 0, %s74
      %s77 = sphi 0, %s76
      %s91 = sphi 0, %s77
      %s95 = sphi 0, %s95
      %s97 = sphi 0, %s95
      %s98 = sphi 0, %s97
      %s112 = sphi 0, %s98
      %s116 = sphi 0, %s116
      %s118 = sphi 0, %s116
      %s119 = sphi 0, %s118
      %s133 = sphi 0, %s119
      %s137 = sphi 0, %s137
      %s139 = sphi 0, %s137
      %s140 = sphi 0, %s139
      %s154 = sphi 0, %s140
      %s158 = sphi 0, %s158
      %s160 = sphi 0, %s158
      %s161 = sphi 0, %s160
      %s175 = sphi 0, %s161
      %s179 = sphi 0, %s179
      %s181 = sphi 0, %s179
      %s182 = sphi 0, %s181
      %s196 = sphi 0, %s182
      %s200 = sphi 0, %s200
      %s202 = sphi 0, %s200
      %s203 = sphi 0, %s202
      %s217 = sphi 0, %s203
      %s221 = sphi 0, %s221
      %s223 = sphi 0, %s221
      %s224 = sphi 0, %s223
      %s238 = sphi 0, %s224
      %s244 = sphi 0, %s246
      %s247 = sphi 0, %s244
      %s248 = sphi 0, %s247
      %s264 = sphi 0, %s248
    $region4: #{inception_forward.1} parent=1 // loop_header_branch
      %22 = sbr.rel (%p20) target = $region8
    $region5: #{inception_forward.1} parent=1 // loop_body
      %s24 = ssub.s32 %s19, 1
      %s25 = ssub.s32 %s19, 2
      %s26 = sadd.s32 %s19, 1
      %s28 = sadd.s32 %s27, 1
      %p31 = scmp.eq.s32.totalorder %s19, 1
      %p32 = scmp.ne.s32.totalorder %s27, %s29
      %p33 = scmp.eq.s32.totalorder %s19, 0
      %p34 = por %p32, %p33
      %p35 = scmp.ne.s32.totalorder %s27, %s29
      %p36 = scmp.eq.s32.totalorder %s24, 1
      %p37 = por %p35, %p36
      %p38 = scmp.ne.s32.totalorder %s29, %s30
      %p39 = scmp.eq.s32.totalorder %s24, 0
      %p40 = por %p38, %p39
      %p41 = scmp.ne.s32.totalorder %s29, %s30
      %p42 = scmp.eq.s32.totalorder %s25, 1
      %p43 = por %p41, %p42
      %p45 = scmp.ne.s32.totalorder %s30, %s44
      %p46 = scmp.eq.s32.totalorder %s25, 0
      %p47 = por %p45, %p46
      %s48 = ssub.s32 %s19, %s26
      %p49 = scmp.eq.s32.totalorder %s48, 0
      %s51 = sadd.s32 %s50, 1
      %s52 = scalar_select %p49, %s50, %s51
      %p55 = pneg %p49
      %p56 = scmp.eq.s32.totalorder %s19, 1
      %p57 = por %p55, %p56
      %p58 = scmp.ne.s32.totalorder %s50, %s53
      %p59 = scmp.eq.s32.totalorder %s19, 0
      %p60 = por %p58, %p59
      %p61 = scmp.ne.s32.totalorder %s50, %s53
      %p62 = scmp.eq.s32.totalorder %s24, 1
      %p63 = por %p61, %p62
      %p64 = scmp.ne.s32.totalorder %s53, %s54
      %p65 = scmp.eq.s32.totalorder %s24, 0
      %p66 = por %p64, %p65
      %p67 = scmp.ne.s32.totalorder %s53, %s54
      %p68 = scmp.eq.s32.totalorder %s25, 1
      %p69 = por %p67, %p68
      %p71 = scmp.ne.s32.totalorder %s54, %s70
      %p72 = scmp.eq.s32.totalorder %s25, 0
      %p73 = por %p71, %p72
      %s75 = sadd.s32 %s74, 1
      %p78 = scmp.eq.s32.totalorder %s19, 1
      %p79 = scmp.ne.s32.totalorder %s74, %s76
      %p80 = scmp.eq.s32.totalorder %s19, 0
      %p81 = por %p79, %p80
      %p82 = scmp.ne.s32.totalorder %s74, %s76
      %p83 = scmp.eq.s32.totalorder %s24, 1
      %p84 = por %p82, %p83
      %p85 = scmp.ne.s32.totalorder %s76, %s77
      %p86 = scmp.eq.s32.totalorder %s24, 0
      %p87 = por %p85, %p86
      %p88 = scmp.ne.s32.totalorder %s76, %s77
      %p89 = scmp.eq.s32.totalorder %s25, 1
      %p90 = por %p88, %p89
      %p92 = scmp.ne.s32.totalorder %s77, %s91
      %p93 = scmp.eq.s32.totalorder %s25, 0
      %p94 = por %p92, %p93
      %s96 = sadd.s32 %s95, 1
      %p99 = scmp.eq.s32.totalorder %s19, 1
      %p100 = scmp.ne.s32.totalorder %s95, %s97
      %p101 = scmp.eq.s32.totalorder %s19, 0
      %p102 = por %p100, %p101
      %p103 = scmp.ne.s32.totalorder %s95, %s97
      %p104 = scmp.eq.s32.totalorder %s24, 1
      %p105 = por %p103, %p104
      %p106 = scmp.ne.s32.totalorder %s97, %s98
      %p107 = scmp.eq.s32.totalorder %s24, 0
      %p108 = por %p106, %p107
      %p109 = scmp.ne.s32.totalorder %s97, %s98
      %p110 = scmp.eq.s32.totalorder %s25, 1
      %p111 = por %p109, %p110
      %p113 = scmp.ne.s32.totalorder %s98, %s112
      %p114 = scmp.eq.s32.totalorder %s25, 0
      %p115 = por %p113, %p114
      %s117 = sadd.s32 %s116, 1
      %p120 = scmp.eq.s32.totalorder %s19, 1
      %p121 = scmp.ne.s32.totalorder %s116, %s118
      %p122 = scmp.eq.s32.totalorder %s19, 0
      %p123 = por %p121, %p122
      %p124 = scmp.ne.s32.totalorder %s116, %s118
      %p125 = scmp.eq.s32.totalorder %s24, 1
      %p126 = por %p124, %p125
      %p127 = scmp.ne.s32.totalorder %s118, %s119
      %p128 = scmp.eq.s32.totalorder %s24, 0
      %p129 = por %p127, %p128
      %p130 = scmp.ne.s32.totalorder %s118, %s119
      %p131 = scmp.eq.s32.totalorder %s25, 1
      %p132 = por %p130, %p131
      %p134 = scmp.ne.s32.totalorder %s119, %s133
      %p135 = scmp.eq.s32.totalorder %s25, 0
      %p136 = por %p134, %p135
      %s138 = sadd.s32 %s137, 1
      %p141 = scmp.eq.s32.totalorder %s19, 1
      %p142 = scmp.ne.s32.totalorder %s137, %s139
      %p143 = scmp.eq.s32.totalorder %s19, 0
      %p144 = por %p142, %p143
      %p145 = scmp.ne.s32.totalorder %s137, %s139
      %p146 = scmp.eq.s32.totalorder %s24, 1
      %p147 = por %p145, %p146
      %p148 = scmp.ne.s32.totalorder %s139, %s140
      %p149 = scmp.eq.s32.totalorder %s24, 0
      %p150 = por %p148, %p149
      %p151 = scmp.ne.s32.totalorder %s139, %s140
      %p152 = scmp.eq.s32.totalorder %s25, 1
      %p153 = por %p151, %p152
      %p155 = scmp.ne.s32.totalorder %s140, %s154
      %p156 = scmp.eq.s32.totalorder %s25, 0
      %p157 = por %p155, %p156
      %s159 = sadd.s32 %s158, 1
      %p162 = scmp.eq.s32.totalorder %s19, 1
      %p163 = scmp.ne.s32.totalorder %s158, %s160
      %p164 = scmp.eq.s32.totalorder %s19, 0
      %p165 = por %p163, %p164
      %p166 = scmp.ne.s32.totalorder %s158, %s160
      %p167 = scmp.eq.s32.totalorder %s24, 1
      %p168 = por %p166, %p167
      %p169 = scmp.ne.s32.totalorder %s160, %s161
      %p170 = scmp.eq.s32.totalorder %s24, 0
      %p171 = por %p169, %p170
      %p172 = scmp.ne.s32.totalorder %s160, %s161
      %p173 = scmp.eq.s32.totalorder %s25, 1
      %p174 = por %p172, %p173
      %p176 = scmp.ne.s32.totalorder %s161, %s175
      %p177 = scmp.eq.s32.totalorder %s25, 0
      %p178 = por %p176, %p177
      %s180 = sadd.s32 %s179, 1
      %p183 = scmp.eq.s32.totalorder %s19, 1
      %p184 = scmp.ne.s32.totalorder %s179, %s181
      %p185 = scmp.eq.s32.totalorder %s19, 0
      %p186 = por %p184, %p185
      %p187 = scmp.ne.s32.totalorder %s179, %s181
      %p188 = scmp.eq.s32.totalorder %s24, 1
      %p189 = por %p187, %p188
      %p190 = scmp.ne.s32.totalorder %s181, %s182
      %p191 = scmp.eq.s32.totalorder %s24, 0
      %p192 = por %p190, %p191
      %p193 = scmp.ne.s32.totalorder %s181, %s182
      %p194 = scmp.eq.s32.totalorder %s25, 1
      %p195 = por %p193, %p194
      %p197 = scmp.ne.s32.totalorder %s182, %s196
      %p198 = scmp.eq.s32.totalorder %s25, 0
      %p199 = por %p197, %p198
      %s201 = sadd.s32 %s200, 1
      %p204 = scmp.eq.s32.totalorder %s19, 1
      %p205 = scmp.ne.s32.totalorder %s200, %s202
      %p206 = scmp.eq.s32.totalorder %s19, 0
      %p207 = por %p205, %p206
      %p208 = scmp.ne.s32.totalorder %s200, %s202
      %p209 = scmp.eq.s32.totalorder %s24, 1
      %p210 = por %p208, %p209
      %p211 = scmp.ne.s32.totalorder %s202, %s203
      %p212 = scmp.eq.s32.totalorder %s24, 0
      %p213 = por %p211, %p212
      %p214 = scmp.ne.s32.totalorder %s202, %s203
      %p215 = scmp.eq.s32.totalorder %s25, 1
      %p216 = por %p214, %p215
      %p218 = scmp.ne.s32.totalorder %s203, %s217
      %p219 = scmp.eq.s32.totalorder %s25, 0
      %p220 = por %p218, %p219
      %s222 = sadd.s32 %s221, 1
      %p225 = scmp.eq.s32.totalorder %s19, 1
      %p226 = scmp.ne.s32.totalorder %s221, %s223
      %p227 = scmp.eq.s32.totalorder %s19, 0
      %p228 = por %p226, %p227
      %p229 = scmp.ne.s32.totalorder %s221, %s223
      %p230 = scmp.eq.s32.totalorder %s24, 1
      %p231 = por %p229, %p230
      %p232 = scmp.ne.s32.totalorder %s223, %s224
      %p233 = scmp.eq.s32.totalorder %s24, 0
      %p234 = por %p232, %p233
      %p235 = scmp.ne.s32.totalorder %s223, %s224
      %p236 = scmp.eq.s32.totalorder %s25, 1
      %p237 = por %p235, %p236
      %p239 = scmp.ne.s32.totalorder %s224, %s238
      %p240 = scmp.eq.s32.totalorder %s25, 0
      %p241 = por %p239, %p240
      %s242 = ssub.s32 %s19, %s26
      %p243 = scmp.eq.s32.totalorder %s242, 0
      %s245 = sadd.s32 %s244, 1
      %s246 = scalar_select %p243, %s244, %s245
      %p249 = pneg %p243
      %p250 = scmp.eq.s32.totalorder %s19, 1
      %p251 = por %p249, %p250
      %p252 = scmp.ne.s32.totalorder %s244, %s247
      %p253 = scmp.eq.s32.totalorder %s19, 0
      %p254 = por %p252, %p253
      %p255 = scmp.ne.s32.totalorder %s244, %s247
      %p256 = scmp.eq.s32.totalorder %s24, 1
      %p257 = por %p255, %p256
      %p258 = scmp.ne.s32.totalorder %s247, %s248
      %p259 = scmp.eq.s32.totalorder %s24, 0
      %p260 = por %p258, %p259
      %p261 = scmp.ne.s32.totalorder %s247, %s248
      %p262 = scmp.eq.s32.totalorder %s25, 1
      %p263 = por %p261, %p262
      %p265 = scmp.ne.s32.totalorder %s248, %s264
      %p266 = scmp.eq.s32.totalorder %s25, 0
      %p267 = por %p265, %p266
      %p268 = scmp.le.s32.totalorder 1, %s19
      %p269 = scmp.lt.s32.totalorder %s19, 3
      %p270 = pnand %p268, %p269
      %p271 = pneg %p270
      // Predicated region
      $region9: #{inception_forward.1} parent=5 // pred_check
        _
      $region10: #{inception_forward.1} parent=5 // pred_check_branch
        %273 = sbr.rel (%p270) target = $region12
      $region11: #{inception_forward.1} parent=5 // pred_region
        %s274 = ssub.s32 %s19, 1
        // Predicated region
        $region13: #{inception_forward.1} parent=11 // pred_check
          %p275 = pneg %p40
        $region14: #{inception_forward.1} parent=11 // pred_check_branch
          %277 = sbr.rel (%p275) target = $region16
        $region15: #{inception_forward.1} parent=11 // pred_region
          _
        $region16: #{inception_forward.1} parent=11 // pred_fallthru
          _
        // Predicated region
        $region17: #{inception_forward.1} parent=11 // pred_check
          %p278 = pneg %p87
        $region18: #{inception_forward.1} parent=11 // pred_check_branch
          %280 = sbr.rel (%p278) target = $region20
        $region19: #{inception_forward.1} parent=11 // pred_region
          _
        $region20: #{inception_forward.1} parent=11 // pred_fallthru
          _
        // Predicated region
        $region21: #{inception_forward.1} parent=11 // pred_check
          %p281 = pneg %p108
        $region22: #{inception_forward.1} parent=11 // pred_check_branch
          %283 = sbr.rel (%p281) target = $region24
        $region23: #{inception_forward.1} parent=11 // pred_region
          _
        $region24: #{inception_forward.1} parent=11 // pred_fallthru
          _
        // Predicated region
        $region25: #{inception_forward.1} parent=11 // pred_check
          %p284 = pneg %p129
        $region26: #{inception_forward.1} parent=11 // pred_check_branch
          %286 = sbr.rel (%p284) target = $region28
        $region27: #{inception_forward.1} parent=11 // pred_region
          _
        $region28: #{inception_forward.1} parent=11 // pred_fallthru
          _
        // Predicated region
        $region29: #{inception_forward.1} parent=11 // pred_check
          %p287 = pneg %p150
        $region30: #{inception_forward.1} parent=11 // pred_check_branch
          %289 = sbr.rel (%p287) target = $region32
        $region31: #{inception_forward.1} parent=11 // pred_region
          _
        $region32: #{inception_forward.1} parent=11 // pred_fallthru
          _
        // Predicated region
        $region33: #{inception_forward.1} parent=11 // pred_check
          %p290 = pneg %p171
        $region34: #{inception_forward.1} parent=11 // pred_check_branch
          %292 = sbr.rel (%p290) target = $region36
        $region35: #{inception_forward.1} parent=11 // pred_region
          _
        $region36: #{inception_forward.1} parent=11 // pred_fallthru
          _
        // Predicated region
        $region37: #{inception_forward.1} parent=11 // pred_check
          %p293 = pneg %p192
        $region38: #{inception_forward.1} parent=11 // pred_check_branch
          %295 = sbr.rel (%p293) target = $region40
        $region39: #{inception_forward.1} parent=11 // pred_region
          _
        $region40: #{inception_forward.1} parent=11 // pred_fallthru
          _
        // Predicated region
        $region41: #{inception_forward.1} parent=11 // pred_check
          %p296 = pneg %p213
        $region42: #{inception_forward.1} parent=11 // pred_check_branch
          %298 = sbr.rel (%p296) target = $region44
        $region43: #{inception_forward.1} parent=11 // pred_region
          _
        $region44: #{inception_forward.1} parent=11 // pred_fallthru
          _
        // Predicated region
        $region45: #{inception_forward.1} parent=11 // pred_check
          %p299 = pneg %p234
        $region46: #{inception_forward.1} parent=11 // pred_check_branch
          %301 = sbr.rel (%p299) target = $region48
        $region47: #{inception_forward.1} parent=11 // pred_region
          _
        $region48: #{inception_forward.1} parent=11 // pred_fallthru
          _
      $region12: #{inception_forward.1} parent=5 // pred_fallthru
        _
      %p302 = scmp.lt.s32.totalorder %s19, 2
      // Predicated region
      $region49: #{inception_forward.1} parent=5 // pred_check
        %p303 = pneg %p302
      $region50: #{inception_forward.1} parent=5 // pred_check_branch
        %305 = sbr.rel (%p303) target = $region52
      $region51: #{inception_forward.1} parent=5 // pred_region
        // Predicated region
        $region53: #{inception_forward.1} parent=51 // pred_check
          %p306 = pneg %p60
        $region54: #{inception_forward.1} parent=51 // pred_check_branch
          %308 = sbr.rel (%p306) target = $region56
        $region55: #{inception_forward.1} parent=51 // pred_region
          %p309 = scmp.lt.s32.totalorder %s19, 1
          %s310 = scalar_select %p309, %s19, 1
          %s311 = smul.addr %s310, 32
          %s312 = smul.addr %s311, 8
          %s313 = scalar_lea.vmem %s1, %s312
        $region56: #{inception_forward.1} parent=51 // pred_fallthru
          _
      $region52: #{inception_forward.1} parent=5 // pred_fallthru
        _
      %p314 = scmp.le.s32.totalorder 1, %s19
      %p315 = scmp.lt.s32.totalorder %s19, 3
      %p316 = pnand %p314, %p315
      %p317 = pneg %p316
      // Predicated region
      $region57: #{inception_forward.1} parent=5 // pred_check
        _
      $region58: #{inception_forward.1} parent=5 // pred_check_branch
        %319 = sbr.rel (%p316) target = $region60
      $region59: #{inception_forward.1} parent=5 // pred_region
        %s320 = ssub.s32 %s19, 1
        %p321 = pneg %p40
        %p322 = pneg %p37
        %p323 = scmp.lt.s32.totalorder %s24, 1
        %s324 = scalar_select %p323, %s24, 1
        %s325 = smul.addr %s324, 32
        %s326 = smul.addr %s325, 8
        %s327 = scalar_lea.vmem %s1, %s326
        %p328 = pneg %p66
        %p329 = pneg %p63
        %p330 = pneg %p87
        %p331 = pneg %p84
        %p332 = pneg %p108
        %p333 = pneg %p105
        %p334 = pneg %p129
        %p335 = pneg %p126
        %p336 = pneg %p150
        %p337 = pneg %p147
        %p338 = pneg %p171
        %p339 = pneg %p168
        %p340 = pneg %p192
        %p341 = pneg %p189
        %p342 = pneg %p213
        %p343 = pneg %p210
        %p344 = pneg %p234
        %p345 = pneg %p231
        %p346 = pneg %p260
        %p347 = pneg %p257
        %s348 = sand.u32 %s247, 1
        %s349 = scalar_lea.sflag [#allocation3], %s348
        %s350 = sand.u32 %s247, 1
        %s351 = smul.addr %s350, 256
        %s352 = scalar_lea.vmem [#allocation2], %s351
        %p353 = scmp.lt.s32.totalorder %s24, 1
        %s354 = scalar_select %p353, %s24, 1
        %s355 = smul.addr %s354, 32
        %s356 = smul.addr %s355, 8
        %s357 = scalar_lea.vmem %s1, %s356
        %v361 = vld [vmem:[%s0] sm:$0xff]
        %v362 = vld [vmem:[%s0 + $0x8] sm:$0xff]
        %v363 = vld [vmem:[%s0 + $0x10] sm:$0xff]
        %v364 = vld [vmem:[%s0 + $0x18] sm:$0xff]
        %v365 = vld [vmem:[%s0 + $0x20] sm:$0xff]
        %v366 = vld [vmem:[%s0 + $0x28] sm:$0xff]
        %v367 = vld [vmem:[%s0 + $0x30] sm:$0xff]
        %v368 = vld [vmem:[%s0 + $0x38] sm:$0xff]
        %v369 = vld [vmem:[%s0 + $0x40] sm:$0xff]
        %v370 = vld [vmem:[%s0 + $0x48] sm:$0xff]
        %v371 = vld [vmem:[%s0 + $0x50] sm:$0xff]
        %v372 = vld [vmem:[%s0 + $0x58] sm:$0xff]
        %v373 = vld [vmem:[%s0 + $0x60] sm:$0xff]
        %v374 = vld [vmem:[%s0 + $0x68] sm:$0xff]
        %v375 = vld [vmem:[%s0 + $0x70] sm:$0xff]
        %v376 = vld [vmem:[%s0 + $0x78] sm:$0xff]
        %v377 = vld [vmem:[%s0 + $0x80] sm:$0xff]
        %v378 = vld [vmem:[%s0 + $0x88] sm:$0xff]
        %v379 = vld [vmem:[%s0 + $0x90] sm:$0xff]
        %v380 = vld [vmem:[%s0 + $0x98] sm:$0xff]
        %v381 = vld [vmem:[%s0 + $0xa0] sm:$0xff]
        %v382 = vld [vmem:[%s0 + $0xa8] sm:$0xff]
        %v383 = vld [vmem:[%s0 + $0xb0] sm:$0xff]
        %v384 = vld [vmem:[%s0 + $0xb8] sm:$0xff]
        %v385 = vld [vmem:[%s0 + $0xc0] sm:$0xff]
        %v386 = vld [vmem:[%s0 + $0xc8] sm:$0xff]
        %v387 = vld [vmem:[%s0 + $0xd0] sm:$0xff]
        %v388 = vld [vmem:[%s0 + $0xd8] sm:$0xff]
        %v389 = vld [vmem:[%s0 + $0xe0] sm:$0xff]
        %v390 = vld [vmem:[%s0 + $0xe8] sm:$0xff]
        %v391 = vld [vmem:[%s0 + $0xf0] sm:$0xff]
        %v392 = vld [vmem:[%s0 + $0xf8] sm:$0xff]
        %v393 = vld [vmem:[%s357] sm:$0xff]
        %v394 = vld [vmem:[%s357 + $0x8] sm:$0xff]
        %v395 = vld [vmem:[%s357 + $0x10] sm:$0xff]
        %v396 = vld [vmem:[%s357 + $0x18] sm:$0xff]
        %v397 = vld [vmem:[%s357 + $0x20] sm:$0xff]
        %v398 = vld [vmem:[%s357 + $0x28] sm:$0xff]
        %v399 = vld [vmem:[%s357 + $0x30] sm:$0xff]
        %v400 = vld [vmem:[%s357 + $0x38] sm:$0xff]
        %v401 = vld [vmem:[%s357 + $0x40] sm:$0xff]
        %v402 = vld [vmem:[%s357 + $0x48] sm:$0xff]
        %v403 = vld [vmem:[%s357 + $0x50] sm:$0xff]
        %v404 = vld [vmem:[%s357 + $0x58] sm:$0xff]
        %v405 = vld [vmem:[%s357 + $0x60] sm:$0xff]
        %v406 = vld [vmem:[%s357 + $0x68] sm:$0xff]
        %v407 = vld [vmem:[%s357 + $0x70] sm:$0xff]
        %v408 = vld [vmem:[%s357 + $0x78] sm:$0xff]
        %v409 = vld [vmem:[%s357 + $0x80] sm:$0xff]
        %v410 = vld [vmem:[%s357 + $0x88] sm:$0xff]
        %v411 = vld [vmem:[%s357 + $0x90] sm:$0xff]
        %v412 = vld [vmem:[%s357 + $0x98] sm:$0xff]
        %v413 = vld [vmem:[%s357 + $0xa0] sm:$0xff]
        %v414 = vld [vmem:[%s357 + $0xa8] sm:$0xff]
        %v415 = vld [vmem:[%s357 + $0xb0] sm:$0xff]
        %v416 = vld [vmem:[%s357 + $0xb8] sm:$0xff]
        %v417 = vld [vmem:[%s357 + $0xc0] sm:$0xff]
        %v418 = vld [vmem:[%s357 + $0xc8] sm:$0xff]
        %v419 = vld [vmem:[%s357 + $0xd0] sm:$0xff]
        %v420 = vld [vmem:[%s357 + $0xd8] sm:$0xff]
        %v421 = vld [vmem:[%s357 + $0xe0] sm:$0xff]
        %v422 = vld [vmem:[%s357 + $0xe8] sm:$0xff]
        %v423 = vld [vmem:[%s357 + $0xf0] sm:$0xff]
        %v424 = vld [vmem:[%s357 + $0xf8] sm:$0xff]
        %v425 = vpack.c.bf16 %v394, %v393
        %v426 = vpack.c.bf16 %v396, %v395
        %v427 = vpack.c.bf16 %v398, %v397
        %v428 = vpack.c.bf16 %v400, %v399
        %v429 = vpack.c.bf16 %v402, %v401
        %v430 = vpack.c.bf16 %v404, %v403
        %v431 = vpack.c.bf16 %v406, %v405
        %v432 = vpack.c.bf16 %v408, %v407
        %v433 = vpack.c.bf16 %v410, %v409
        %v434 = vpack.c.bf16 %v412, %v411
        %v435 = vpack.c.bf16 %v414, %v413
        %v436 = vpack.c.bf16 %v416, %v415
        %v437 = vpack.c.bf16 %v418, %v417
        %v438 = vpack.c.bf16 %v420, %v419
        %v439 = vpack.c.bf16 %v422, %v421
        %v440 = vpack.c.bf16 %v424, %v423
        %v441 = vld [vmem:[%s2] sm:$0x3]
        %v442 = vld [vmem:[%s3] sm:$0x1]
        %v444 = vperm.slane %v442, 0
        %vm446 = vcmask 31744
        %v448 = vsel %vm446, %v425, 0
        %v451 = vsel %vm446, %v426, 0
        %v454 = vsel %vm446, %v427, 0
        %v457 = vsel %vm446, %v428, 0
        %v460 = vsel %vm446, %v429, 0
        %v463 = vsel %vm446, %v430, 0
        %v466 = vsel %vm446, %v431, 0
        %v469 = vsel %vm446, %v432, 0
        %v472 = vsel %vm446, %v433, 0
        %v475 = vsel %vm446, %v434, 0
        %v478 = vsel %vm446, %v435, 0
        %v481 = vsel %vm446, %v436, 0
        %v484 = vsel %vm446, %v437, 0
        %v487 = vsel %vm446, %v438, 0
        %v490 = vsel %vm446, %v439, 0
        %v493 = vsel %vm446, %v440, 0
        %vm495 = vcmask 1041408
        %v497 = vsel %vm495, %v441, 0
        %499 = vmatpush.bf16.msra.mxu0 0
        %500 = vmatpush.bf16.msra.mxu0 0
        %501 = vmatpush.bf16.msra.mxu0 0
        %502 = vmatpush.bf16.msra.mxu0 0
        %503 = vmatpush.bf16.msra.mxu0 0
        %504 = vmatpush.bf16.msra.mxu0 0
        %505 = vmatpush.bf16.msra.mxu0 0
        %506 = vmatpush.bf16.msra.mxu0 %v497
        %507 = vmatmul.bf16.gmra.mxu0 %v448
        %v508 = vpop.f32.mrf.mxu0
        %v509 = vadd.f32 %v444, %v508
        %v510 = vpop.f32.mrf.mxu0
        %v511 = vadd.f32 %v444, %v510
        %512 = vmatmul.bf16.gmra.mxu0 %v451
        %v513 = vpop.f32.mrf.mxu0
        %v514 = vadd.f32 %v444, %v513
        %v515 = vpop.f32.mrf.mxu0
        %v516 = vadd.f32 %v444, %v515
        %517 = vmatmul.bf16.gmra.mxu0 %v454
        %v518 = vpop.f32.mrf.mxu0
        %v519 = vadd.f32 %v444, %v518
        %v520 = vpop.f32.mrf.mxu0
        %v521 = vadd.f32 %v444, %v520
        %522 = vmatmul.bf16.gmra.mxu0 %v457
        %v523 = vpop.f32.mrf.mxu0
        %v524 = vadd.f32 %v444, %v523
        %v525 = vpop.f32.mrf.mxu0
        %v526 = vadd.f32 %v444, %v525
        %527 = vmatmul.bf16.gmra.mxu0 %v460
        %v528 = vpop.f32.mrf.mxu0
        %v529 = vadd.f32 %v444, %v528
        %v530 = vpop.f32.mrf.mxu0
        %v531 = vadd.f32 %v444, %v530
        %532 = vmatmul.bf16.gmra.mxu0 %v463
        %v533 = vpop.f32.mrf.mxu0
        %v534 = vadd.f32 %v444, %v533
        %v535 = vpop.f32.mrf.mxu0
        %v536 = vadd.f32 %v444, %v535
        %537 = vmatmul.bf16.gmra.mxu0 %v466
        %v538 = vpop.f32.mrf.mxu0
        %v539 = vadd.f32 %v444, %v538
        %v540 = vpop.f32.mrf.mxu0
        %v541 = vadd.f32 %v444, %v540
        %542 = vmatmul.bf16.gmra.mxu0 %v469
        %v543 = vpop.f32.mrf.mxu0
        %v544 = vadd.f32 %v444, %v543
        %v545 = vpop.f32.mrf.mxu0
        %v546 = vadd.f32 %v444, %v545
        %547 = vmatmul.bf16.gmra.mxu0 %v472
        %v548 = vpop.f32.mrf.mxu0
        %v549 = vadd.f32 %v444, %v548
        %v550 = vpop.f32.mrf.mxu0
        %v551 = vadd.f32 %v444, %v550
        %552 = vmatmul.bf16.gmra.mxu0 %v475
        %v553 = vpop.f32.mrf.mxu0
        %v554 = vadd.f32 %v444, %v553
        %v555 = vpop.f32.mrf.mxu0
        %v556 = vadd.f32 %v444, %v555
        %557 = vmatmul.bf16.gmra.mxu0 %v478
        %v558 = vpop.f32.mrf.mxu0
        %v559 = vadd.f32 %v444, %v558
        %v560 = vpop.f32.mrf.mxu0
        %v561 = vadd.f32 %v444, %v560
        %562 = vmatmul.bf16.gmra.mxu0 %v481
        %v563 = vpop.f32.mrf.mxu0
        %v564 = vadd.f32 %v444, %v563
        %v565 = vpop.f32.mrf.mxu0
        %v566 = vadd.f32 %v444, %v565
        %567 = vmatmul.bf16.gmra.mxu0 %v484
        %v568 = vpop.f32.mrf.mxu0
        %v569 = vadd.f32 %v444, %v568
        %v570 = vpop.f32.mrf.mxu0
        %v571 = vadd.f32 %v444, %v570
        %572 = vmatmul.bf16.gmra.mxu0 %v487
        %v573 = vpop.f32.mrf.mxu0
        %v574 = vadd.f32 %v444, %v573
        %v575 = vpop.f32.mrf.mxu0
        %v576 = vadd.f32 %v444, %v575
        %577 = vmatmul.bf16.gmra.mxu0 %v490
        %v578 = vpop.f32.mrf.mxu0
        %v579 = vadd.f32 %v444, %v578
        %v580 = vpop.f32.mrf.mxu0
        %v581 = vadd.f32 %v444, %v580
        %582 = vmatmul.bf16.gmra.mxu0 %v493
        %v583 = vpop.f32.mrf.mxu0
        %v584 = vadd.f32 %v444, %v583
        %v585 = vpop.f32.mrf.mxu0
        %v586 = vadd.f32 %v444, %v585
        %587 = vdwg.mxu0
        %v588 = vmax.f32 %v509, 0.0
        %v589 = vmax.f32 %v511, 0.0
        %v590 = vmax.f32 %v514, 0.0
        %v591 = vmax.f32 %v516, 0.0
        %v592 = vmax.f32 %v519, 0.0
        %v593 = vmax.f32 %v521, 0.0
        %v594 = vmax.f32 %v524, 0.0
        %v595 = vmax.f32 %v526, 0.0
        %v596 = vmax.f32 %v529, 0.0
        %v597 = vmax.f32 %v531, 0.0
        %v598 = vmax.f32 %v534, 0.0
        %v599 = vmax.f32 %v536, 0.0
        %v600 = vmax.f32 %v539, 0.0
        %v601 = vmax.f32 %v541, 0.0
        %v602 = vmax.f32 %v544, 0.0
        %v603 = vmax.f32 %v546, 0.0
        %v604 = vmax.f32 %v549, 0.0
        %v605 = vmax.f32 %v551, 0.0
        %v606 = vmax.f32 %v554, 0.0
        %v607 = vmax.f32 %v556, 0.0
        %v608 = vmax.f32 %v559, 0.0
        %v609 = vmax.f32 %v561, 0.0
        %v610 = vmax.f32 %v564, 0.0
        %v611 = vmax.f32 %v566, 0.0
        %v612 = vmax.f32 %v569, 0.0
        %v613 = vmax.f32 %v571, 0.0
        %v614 = vmax.f32 %v574, 0.0
        %v615 = vmax.f32 %v576, 0.0
        %v616 = vmax.f32 %v579, 0.0
        %v617 = vmax.f32 %v581, 0.0
        %v618 = vmax.f32 %v584, 0.0
        %v619 = vmax.f32 %v586, 0.0
        %v620 = vpack.c.bf16 %v588, %v588
        %v621 = vpack.c.bf16 %v589, %v589
        %v622 = vpack.c.bf16 %v590, %v590
        %v623 = vpack.c.bf16 %v591, %v591
        %v624 = vpack.c.bf16 %v592, %v592
        %v625 = vpack.c.bf16 %v593, %v593
        %v626 = vpack.c.bf16 %v594, %v594
        %v627 = vpack.c.bf16 %v595, %v595
        %v628 = vpack.c.bf16 %v596, %v596
        %v629 = vpack.c.bf16 %v597, %v597
        %v630 = vpack.c.bf16 %v598, %v598
        %v631 = vpack.c.bf16 %v599, %v599
        %v632 = vpack.c.bf16 %v600, %v600
        %v633 = vpack.c.bf16 %v601, %v601
        %v634 = vpack.c.bf16 %v602, %v602
        %v635 = vpack.c.bf16 %v603, %v603
        %v636 = vpack.c.bf16 %v604, %v604
        %v637 = vpack.c.bf16 %v605, %v605
        %v638 = vpack.c.bf16 %v606, %v606
        %v639 = vpack.c.bf16 %v607, %v607
        %v640 = vpack.c.bf16 %v608, %v608
        %v641 = vpack.c.bf16 %v609, %v609
        %v642 = vpack.c.bf16 %v610, %v610
        %v643 = vpack.c.bf16 %v611, %v611
        %v644 = vpack.c.bf16 %v612, %v612
        %v645 = vpack.c.bf16 %v613, %v613
        %v646 = vpack.c.bf16 %v614, %v614
        %v647 = vpack.c.bf16 %v615, %v615
        %v648 = vpack.c.bf16 %v616, %v616
        %v649 = vpack.c.bf16 %v617, %v617
        %v650 = vpack.c.bf16 %v618, %v618
        %v651 = vpack.c.bf16 %v619, %v619
        %v682 = vunpack.c.l.b16 %v620
        %v683 = vunpack.c.l.b16 %v621
        %v684 = vunpack.c.l.b16 %v622
        %v685 = vunpack.c.l.b16 %v623
        %v686 = vunpack.c.l.b16 %v624
        %v687 = vunpack.c.l.b16 %v625
        %v688 = vunpack.c.l.b16 %v626
        %v689 = vunpack.c.l.b16 %v627
        %v690 = vunpack.c.l.b16 %v628
        %v691 = vunpack.c.l.b16 %v629
        %v692 = vunpack.c.l.b16 %v630
        %v693 = vunpack.c.l.b16 %v631
        %v694 = vunpack.c.l.b16 %v632
        %v695 = vunpack.c.l.b16 %v633
        %v696 = vunpack.c.l.b16 %v634
        %v697 = vunpack.c.l.b16 %v635
        %v698 = vunpack.c.l.b16 %v636
        %v699 = vunpack.c.l.b16 %v637
        %v700 = vunpack.c.l.b16 %v638
        %v701 = vunpack.c.l.b16 %v639
        %v702 = vunpack.c.l.b16 %v640
        %v703 = vunpack.c.l.b16 %v641
        %v704 = vunpack.c.l.b16 %v642
        %v705 = vunpack.c.l.b16 %v643
        %v706 = vunpack.c.l.b16 %v644
        %v707 = vunpack.c.l.b16 %v645
        %v708 = vunpack.c.l.b16 %v646
        %v709 = vunpack.c.l.b16 %v647
        %v710 = vunpack.c.l.b16 %v648
        %v711 = vunpack.c.l.b16 %v649
        %v712 = vpack.c.b16 %v683, %v682
        %v713 = vpack.c.b16 %v685, %v684
        %v714 = vpack.c.b16 %v687, %v686
        %v715 = vpack.c.b16 %v689, %v688
        %v716 = vpack.c.b16 %v691, %v690
        %v717 = vpack.c.b16 %v693, %v692
        %v718 = vpack.c.b16 %v695, %v694
        %v719 = vpack.c.b16 %v697, %v696
        %v720 = vpack.c.b16 %v699, %v698
        %v721 = vpack.c.b16 %v701, %v700
        %v722 = vpack.c.b16 %v703, %v702
        %v723 = vpack.c.b16 %v705, %v704
        %v724 = vpack.c.b16 %v707, %v706
        %v725 = vpack.c.b16 %v709, %v708
        %v726 = vpack.c.b16 %v711, %v710
        %vm727 = vsmask.f32 256
        %v729 = vshrl.u32 %v712, 16
        %v731 = vrot.slane %v729, 7
        %v732 = vshll.u32 %v712, 16
        %v734 = vor.u32 %v731, %v732
        %v736 = vshrl.u32 %v713, 16
        %v738 = vrot.slane %v736, 7
        %v739 = vshll.u32 %v713, 16
        %v741 = vor.u32 %v738, %v739
        %v742 = vsel %vm727, %v731, %v741
        %v744 = vshrl.u32 %v714, 16
        %v746 = vrot.slane %v744, 7
        %v747 = vshll.u32 %v714, 16
        %v749 = vor.u32 %v746, %v747
        %v750 = vsel %vm727, %v738, %v749
        %v752 = vshrl.u32 %v715, 16
        %v754 = vrot.slane %v752, 7
        %v755 = vshll.u32 %v715, 16
        %v757 = vor.u32 %v754, %v755
        %v758 = vsel %vm727, %v746, %v757
        %v760 = vshrl.u32 %v716, 16
        %v762 = vrot.slane %v760, 7
        %v763 = vshll.u32 %v716, 16
        %v765 = vor.u32 %v762, %v763
        %v766 = vsel %vm727, %v754, %v765
        %v768 = vshrl.u32 %v717, 16
        %v770 = vrot.slane %v768, 7
        %v771 = vshll.u32 %v717, 16
        %v773 = vor.u32 %v770, %v771
        %v774 = vsel %vm727, %v762, %v773
        %v776 = vshrl.u32 %v718, 16
        %v778 = vrot.slane %v776, 7
        %v779 = vshll.u32 %v718, 16
        %v781 = vor.u32 %v778, %v779
        %v782 = vsel %vm727, %v770, %v781
        %v784 = vshrl.u32 %v719, 16
        %v786 = vrot.slane %v784, 7
        %v787 = vshll.u32 %v719, 16
        %v789 = vor.u32 %v786, %v787
        %v790 = vsel %vm727, %v778, %v789
        %v792 = vshrl.u32 %v720, 16
        %v794 = vrot.slane %v792, 7
        %v795 = vshll.u32 %v720, 16
        %v797 = vor.u32 %v794, %v795
        %v798 = vsel %vm727, %v786, %v797
        %v800 = vshrl.u32 %v721, 16
        %v802 = vrot.slane %v800, 7
        %v803 = vshll.u32 %v721, 16
        %v805 = vor.u32 %v802, %v803
        %v806 = vsel %vm727, %v794, %v805
        %v808 = vshrl.u32 %v722, 16
        %v810 = vrot.slane %v808, 7
        %v811 = vshll.u32 %v722, 16
        %v813 = vor.u32 %v810, %v811
        %v814 = vsel %vm727, %v802, %v813
        %v816 = vshrl.u32 %v723, 16
        %v818 = vrot.slane %v816, 7
        %v819 = vshll.u32 %v723, 16
        %v821 = vor.u32 %v818, %v819
        %v822 = vsel %vm727, %v810, %v821
        %v824 = vshrl.u32 %v724, 16
        %v826 = vrot.slane %v824, 7
        %v827 = vshll.u32 %v724, 16
        %v829 = vor.u32 %v826, %v827
        %v830 = vsel %vm727, %v818, %v829
        %v832 = vshrl.u32 %v725, 16
        %v834 = vrot.slane %v832, 7
        %v835 = vshll.u32 %v725, 16
        %v837 = vor.u32 %v834, %v835
        %v838 = vsel %vm727, %v826, %v837
        %v840 = vshrl.u32 %v726, 16
        %v842 = vrot.slane %v840, 7
        %v843 = vshll.u32 %v726, 16
        %v845 = vor.u32 %v842, %v843
        %v846 = vsel %vm727, %v834, %v845
        %847 = vrot.lane.b32.xlu0 %v734, 120
        %v848 = vpop.permute.xlu0 %847
        %849 = vrot.lane.b32.xlu0 %v742, 120
        %v850 = vpop.permute.xlu0 %849
        %851 = vrot.lane.b32.xlu0 %v750, 120
        %v852 = vpop.permute.xlu0 %851
        %853 = vrot.lane.b32.xlu0 %v758, 120
        %v854 = vpop.permute.xlu0 %853
        %855 = vrot.lane.b32.xlu0 %v766, 120
        %v856 = vpop.permute.xlu0 %855
        %857 = vrot.lane.b32.xlu0 %v774, 120
        %v858 = vpop.permute.xlu0 %857
        %859 = vrot.lane.b32.xlu0 %v782, 120
        %v860 = vpop.permute.xlu0 %859
        %861 = vrot.lane.b32.xlu0 %v790, 120
        %v862 = vpop.permute.xlu0 %861
        %863 = vrot.lane.b32.xlu0 %v798, 120
        %v864 = vpop.permute.xlu0 %863
        %865 = vrot.lane.b32.xlu0 %v806, 120
        %v866 = vpop.permute.xlu0 %865
        %867 = vrot.lane.b32.xlu0 %v814, 120
        %v868 = vpop.permute.xlu0 %867
        %869 = vrot.lane.b32.xlu0 %v822, 120
        %v870 = vpop.permute.xlu0 %869
        %871 = vrot.lane.b32.xlu0 %v830, 120
        %v872 = vpop.permute.xlu0 %871
        %873 = vrot.lane.b32.xlu0 %v838, 120
        %v874 = vpop.permute.xlu0 %873
        %875 = vrot.lane.b32.xlu0 %v846, 120
        %v876 = vpop.permute.xlu0 %875
        %vm892 = vcmask 1040384
        %vm893 = vmand %vm892, %vm727
        %v894 = vsel %vm893, 0, %v848
        %vm895 = vcmp.ge.s32.totalorder %v361, 1
        %vm896 = vcmp.ge.s32.totalorder %v362, 1
        %vm897 = vcmp.ge.s32.totalorder %v363, 1
        %vm898 = vcmp.ge.s32.totalorder %v364, 1
        %vm899 = vcmp.ge.s32.totalorder %v365, 1
        %vm900 = vcmp.ge.s32.totalorder %v366, 1
        %vm901 = vcmp.ge.s32.totalorder %v367, 1
        %vm902 = vcmp.ge.s32.totalorder %v368, 1
        %vm903 = vcmp.ge.s32.totalorder %v369, 1
        %vm904 = vcmp.ge.s32.totalorder %v370, 1
        %vm905 = vcmp.ge.s32.totalorder %v371, 1
        %vm906 = vcmp.ge.s32.totalorder %v372, 1
        %vm907 = vcmp.ge.s32.totalorder %v373, 1
        %vm908 = vcmp.ge.s32.totalorder %v374, 1
        %vm909 = vcmp.ge.s32.totalorder %v375, 1
        %vm910 = vcmp.ge.s32.totalorder %v376, 1
        %vm911 = vcmp.ge.s32.totalorder %v377, 1
        %vm912 = vcmp.ge.s32.totalorder %v378, 1
        %vm913 = vcmp.ge.s32.totalorder %v379, 1
        %vm914 = vcmp.ge.s32.totalorder %v380, 1
        %vm915 = vcmp.ge.s32.totalorder %v381, 1
        %vm916 = vcmp.ge.s32.totalorder %v382, 1
        %vm917 = vcmp.ge.s32.totalorder %v383, 1
        %vm918 = vcmp.ge.s32.totalorder %v384, 1
        %vm919 = vcmp.ge.s32.totalorder %v385, 1
        %vm920 = vcmp.ge.s32.totalorder %v386, 1
        %vm921 = vcmp.ge.s32.totalorder %v387, 1
        %vm922 = vcmp.ge.s32.totalorder %v388, 1
        %vm923 = vcmp.ge.s32.totalorder %v389, 1
        %vm924 = vcmp.ge.s32.totalorder %v390, 1
        %vm925 = vcmp.ge.s32.totalorder %v391, 1
        %vm926 = vcmp.ge.s32.totalorder %v392, 1
        %v927 = vsel %vm895, 1, 0
        %v928 = vsel %vm896, 1, 0
        %v929 = vsel %vm897, 1, 0
        %v930 = vsel %vm898, 1, 0
        %v931 = vsel %vm899, 1, 0
        %v932 = vsel %vm900, 1, 0
        %v933 = vsel %vm901, 1, 0
        %v934 = vsel %vm902, 1, 0
        %v935 = vsel %vm903, 1, 0
        %v936 = vsel %vm904, 1, 0
        %v937 = vsel %vm905, 1, 0
        %v938 = vsel %vm906, 1, 0
        %v939 = vsel %vm907, 1, 0
        %v940 = vsel %vm908, 1, 0
        %v941 = vsel %vm909, 1, 0
        %v942 = vsel %vm910, 1, 0
        %v943 = vsel %vm911, 1, 0
        %v944 = vsel %vm912, 1, 0
        %v945 = vsel %vm913, 1, 0
        %v946 = vsel %vm914, 1, 0
        %v947 = vsel %vm915, 1, 0
        %v948 = vsel %vm916, 1, 0
        %v949 = vsel %vm917, 1, 0
        %v950 = vsel %vm918, 1, 0
        %v951 = vsel %vm919, 1, 0
        %v952 = vsel %vm920, 1, 0
        %v953 = vsel %vm921, 1, 0
        %v954 = vsel %vm922, 1, 0
        %v955 = vsel %vm923, 1, 0
        %v956 = vsel %vm924, 1, 0
        %v957 = vsel %vm925, 1, 0
        %v958 = vsel %vm926, 1, 0
        %959 = vset.pattern.permute.xlu0 0
        %960 = vperm.xlu0 %959, %v927
        %v961 = vpop.permute.xlu0 %960
        %962 = vset.pattern.permute.xlu0 0
        %963 = vperm.xlu0 %962, %v928
        %v964 = vpop.permute.xlu0 %963
        %965 = vset.pattern.permute.xlu0 0
        %966 = vperm.xlu0 %965, %v929
        %v967 = vpop.permute.xlu0 %966
        %968 = vset.pattern.permute.xlu0 0
        %969 = vperm.xlu0 %968, %v930
        %v970 = vpop.permute.xlu0 %969
        %971 = vset.pattern.permute.xlu0 0
        %972 = vperm.xlu0 %971, %v931
        %v973 = vpop.permute.xlu0 %972
        %974 = vset.pattern.permute.xlu0 0
        %975 = vperm.xlu0 %974, %v932
        %v976 = vpop.permute.xlu0 %975
        %977 = vset.pattern.permute.xlu0 0
        %978 = vperm.xlu0 %977, %v933
        %v979 = vpop.permute.xlu0 %978
        %980 = vset.pattern.permute.xlu0 0
        %981 = vperm.xlu0 %980, %v934
        %v982 = vpop.permute.xlu0 %981
        %983 = vset.pattern.permute.xlu0 0
        %984 = vperm.xlu0 %983, %v935
        %v985 = vpop.permute.xlu0 %984
        %986 = vset.pattern.permute.xlu0 0
        %987 = vperm.xlu0 %986, %v936
        %v988 = vpop.permute.xlu0 %987
        %989 = vset.pattern.permute.xlu0 0
        %990 = vperm.xlu0 %989, %v937
        %v991 = vpop.permute.xlu0 %990
        %992 = vset.pattern.permute.xlu0 0
        %993 = vperm.xlu0 %992, %v938
        %v994 = vpop.permute.xlu0 %993
        %995 = vset.pattern.permute.xlu0 0
        %996 = vperm.xlu0 %995, %v939
        %v997 = vpop.permute.xlu0 %996
        %998 = vset.pattern.permute.xlu0 0
        %999 = vperm.xlu0 %998, %v940
        %v1000 = vpop.permute.xlu0 %999
        %1001 = vset.pattern.permute.xlu0 0
        %1002 = vperm.xlu0 %1001, %v941
        %v1003 = vpop.permute.xlu0 %1002
        %1004 = vset.pattern.permute.xlu0 0
        %1005 = vperm.xlu0 %1004, %v942
        %v1006 = vpop.permute.xlu0 %1005
        %1007 = vset.pattern.permute.xlu0 0
        %1008 = vperm.xlu0 %1007, %v943
        %v1009 = vpop.permute.xlu0 %1008
        %1010 = vset.pattern.permute.xlu0 0
        %1011 = vperm.xlu0 %1010, %v944
        %v1012 = vpop.permute.xlu0 %1011
        %1013 = vset.pattern.permute.xlu0 0
        %1014 = vperm.xlu0 %1013, %v945
        %v1015 = vpop.permute.xlu0 %1014
        %1016 = vset.pattern.permute.xlu0 0
        %1017 = vperm.xlu0 %1016, %v946
        %v1018 = vpop.permute.xlu0 %1017
        %1019 = vset.pattern.permute.xlu0 0
        %1020 = vperm.xlu0 %1019, %v947
        %v1021 = vpop.permute.xlu0 %1020
        %1022 = vset.pattern.permute.xlu0 0
        %1023 = vperm.xlu0 %1022, %v948
        %v1024 = vpop.permute.xlu0 %1023
        %1025 = vset.pattern.permute.xlu0 0
        %1026 = vperm.xlu0 %1025, %v949
        %v1027 = vpop.permute.xlu0 %1026
        %1028 = vset.pattern.permute.xlu0 0
        %1029 = vperm.xlu0 %1028, %v950
        %v1030 = vpop.permute.xlu0 %1029
        %1031 = vset.pattern.permute.xlu0 0
        %1032 = vperm.xlu0 %1031, %v951
        %v1033 = vpop.permute.xlu0 %1032
        %1034 = vset.pattern.permute.xlu0 0
        %1035 = vperm.xlu0 %1034, %v952
        %v1036 = vpop.permute.xlu0 %1035
        %1037 = vset.pattern.permute.xlu0 0
        %1038 = vperm.xlu0 %1037, %v953
        %v1039 = vpop.permute.xlu0 %1038
        %1040 = vset.pattern.permute.xlu0 0
        %1041 = vperm.xlu0 %1040, %v954
        %v1042 = vpop.permute.xlu0 %1041
        %1043 = vset.pattern.permute.xlu0 0
        %1044 = vperm.xlu0 %1043, %v955
        %v1045 = vpop.permute.xlu0 %1044
        %1046 = vset.pattern.permute.xlu0 0
        %1047 = vperm.xlu0 %1046, %v956
        %v1048 = vpop.permute.xlu0 %1047
        %1049 = vset.pattern.permute.xlu0 0
        %1050 = vperm.xlu0 %1049, %v957
        %v1051 = vpop.permute.xlu0 %1050
        %1052 = vset.pattern.permute.xlu0 0
        %1053 = vperm.xlu0 %1052, %v958
        %v1054 = vpop.permute.xlu0 %1053
        %vm1055 = vcmp.eq.s32.totalorder %v961, 1
        %vm1056 = vcmp.eq.s32.totalorder %v964, 1
        %vm1057 = vcmp.eq.s32.totalorder %v967, 1
        %vm1058 = vcmp.eq.s32.totalorder %v970, 1
        %vm1059 = vcmp.eq.s32.totalorder %v973, 1
        %vm1060 = vcmp.eq.s32.totalorder %v976, 1
        %vm1061 = vcmp.eq.s32.totalorder %v979, 1
        %vm1062 = vcmp.eq.s32.totalorder %v982, 1
        %vm1063 = vcmp.eq.s32.totalorder %v985, 1
        %vm1064 = vcmp.eq.s32.totalorder %v988, 1
        %vm1065 = vcmp.eq.s32.totalorder %v991, 1
        %vm1066 = vcmp.eq.s32.totalorder %v994, 1
        %vm1067 = vcmp.eq.s32.totalorder %v997, 1
        %vm1068 = vcmp.eq.s32.totalorder %v1000, 1
        %vm1069 = vcmp.eq.s32.totalorder %v1003, 1
        %vm1070 = vcmp.eq.s32.totalorder %v1006, 1
        %vm1071 = vcmp.eq.s32.totalorder %v1009, 1
        %vm1072 = vcmp.eq.s32.totalorder %v1012, 1
        %vm1073 = vcmp.eq.s32.totalorder %v1015, 1
        %vm1074 = vcmp.eq.s32.totalorder %v1018, 1
        %vm1075 = vcmp.eq.s32.totalorder %v1021, 1
        %vm1076 = vcmp.eq.s32.totalorder %v1024, 1
        %vm1077 = vcmp.eq.s32.totalorder %v1027, 1
        %vm1078 = vcmp.eq.s32.totalorder %v1030, 1
        %vm1079 = vcmp.eq.s32.totalorder %v1033, 1
        %vm1080 = vcmp.eq.s32.totalorder %v1036, 1
        %vm1081 = vcmp.eq.s32.totalorder %v1039, 1
        %vm1082 = vcmp.eq.s32.totalorder %v1042, 1
        %vm1083 = vcmp.eq.s32.totalorder %v1045, 1
        %vm1084 = vcmp.eq.s32.totalorder %v1048, 1
        %vm1085 = vcmp.eq.s32.totalorder %v1051, 1
        %vm1086 = vcmp.eq.s32.totalorder %v1054, 1
        %vm1087 = vmpackc.low %vm1057, %vm1057
        %vm1088 = vmpackc.low %vm1058, %vm1058
        %vm1089 = vmpackc.low %vm1059, %vm1059
        %vm1090 = vmpackc.low %vm1060, %vm1060
        %vm1091 = vmpackc.low %vm1061, %vm1061
        %vm1092 = vmpackc.low %vm1062, %vm1062
        %vm1093 = vmpackc.low %vm1063, %vm1063
        %vm1094 = vmpackc.low %vm1064, %vm1064
        %vm1095 = vmpackc.low %vm1065, %vm1065
        %vm1096 = vmpackc.low %vm1066, %vm1066
        %vm1097 = vmpackc.low %vm1067, %vm1067
        %vm1098 = vmpackc.low %vm1068, %vm1068
        %vm1099 = vmpackc.low %vm1069, %vm1069
        %vm1100 = vmpackc.low %vm1070, %vm1070
        %vm1101 = vmpackc.low %vm1071, %vm1071
        %vm1102 = vmpackc.low %vm1072, %vm1072
        %vm1103 = vmpackc.low %vm1073, %vm1073
        %vm1104 = vmpackc.low %vm1074, %vm1074
        %vm1105 = vmpackc.low %vm1075, %vm1075
        %vm1106 = vmpackc.low %vm1076, %vm1076
        %vm1107 = vmpackc.low %vm1077, %vm1077
        %vm1108 = vmpackc.low %vm1078, %vm1078
        %vm1109 = vmpackc.low %vm1079, %vm1079
        %vm1110 = vmpackc.low %vm1080, %vm1080
        %vm1111 = vmpackc.low %vm1081, %vm1081
        %vm1112 = vmpackc.low %vm1082, %vm1082
        %vm1113 = vmpackc.low %vm1083, %vm1083
        %vm1114 = vmpackc.low %vm1084, %vm1084
        %vm1115 = vmpackc.low %vm1085, %vm1085
        %vm1116 = vmpackc.low %vm1086, %vm1086
        %v1117 = vsel %vm1087, 65537, 0
        %v1118 = vsel %vm1088, 65537, 0
        %v1119 = vsel %vm1089, 65537, 0
        %v1120 = vsel %vm1090, 65537, 0
        %v1121 = vsel %vm1091, 65537, 0
        %v1122 = vsel %vm1092, 65537, 0
        %v1123 = vsel %vm1093, 65537, 0
        %v1124 = vsel %vm1094, 65537, 0
        %v1125 = vsel %vm1095, 65537, 0
        %v1126 = vsel %vm1096, 65537, 0
        %v1127 = vsel %vm1097, 65537, 0
        %v1128 = vsel %vm1098, 65537, 0
        %v1129 = vsel %vm1099, 65537, 0
        %v1130 = vsel %vm1100, 65537, 0
        %v1131 = vsel %vm1101, 65537, 0
        %v1132 = vsel %vm1102, 65537, 0
        %v1133 = vsel %vm1103, 65537, 0
        %v1134 = vsel %vm1104, 65537, 0
        %v1135 = vsel %vm1105, 65537, 0
        %v1136 = vsel %vm1106, 65537, 0
        %v1137 = vsel %vm1107, 65537, 0
        %v1138 = vsel %vm1108, 65537, 0
        %v1139 = vsel %vm1109, 65537, 0
        %v1140 = vsel %vm1110, 65537, 0
        %v1141 = vsel %vm1111, 65537, 0
        %v1142 = vsel %vm1112, 65537, 0
        %v1143 = vsel %vm1113, 65537, 0
        %v1144 = vsel %vm1114, 65537, 0
        %v1145 = vsel %vm1115, 65537, 0
        %v1146 = vsel %vm1116, 65537, 0
        %v1147 = vunpack.c.l.b16 %v1117
        %v1148 = vunpack.c.l.b16 %v1118
        %v1149 = vunpack.c.l.b16 %v1119
        %v1150 = vunpack.c.l.b16 %v1120
        %v1151 = vunpack.c.l.b16 %v1121
        %v1152 = vunpack.c.l.b16 %v1122
        %v1153 = vunpack.c.l.b16 %v1123
        %v1154 = vunpack.c.l.b16 %v1124
        %v1155 = vunpack.c.l.b16 %v1125
        %v1156 = vunpack.c.l.b16 %v1126
        %v1157 = vunpack.c.l.b16 %v1127
        %v1158 = vunpack.c.l.b16 %v1128
        %v1159 = vunpack.c.l.b16 %v1129
        %v1160 = vunpack.c.l.b16 %v1130
        %v1161 = vunpack.c.l.b16 %v1131
        %v1162 = vunpack.c.l.b16 %v1132
        %v1163 = vunpack.c.l.b16 %v1133
        %v1164 = vunpack.c.l.b16 %v1134
        %v1165 = vunpack.c.l.b16 %v1135
        %v1166 = vunpack.c.l.b16 %v1136
        %v1167 = vunpack.c.l.b16 %v1137
        %v1168 = vunpack.c.l.b16 %v1138
        %v1169 = vunpack.c.l.b16 %v1139
        %v1170 = vunpack.c.l.b16 %v1140
        %v1171 = vunpack.c.l.b16 %v1141
        %v1172 = vunpack.c.l.b16 %v1142
        %v1173 = vunpack.c.l.b16 %v1143
        %v1174 = vunpack.c.l.b16 %v1144
        %v1175 = vunpack.c.l.b16 %v1145
        %v1176 = vunpack.c.l.b16 %v1146
        %v1177 = vpack.c.b16 %v1148, %v1147
        %v1178 = vpack.c.b16 %v1150, %v1149
        %v1179 = vpack.c.b16 %v1152, %v1151
        %v1180 = vpack.c.b16 %v1154, %v1153
        %v1181 = vpack.c.b16 %v1156, %v1155
        %v1182 = vpack.c.b16 %v1158, %v1157
        %v1183 = vpack.c.b16 %v1160, %v1159
        %v1184 = vpack.c.b16 %v1162, %v1161
        %v1185 = vpack.c.b16 %v1164, %v1163
        %v1186 = vpack.c.b16 %v1166, %v1165
        %v1187 = vpack.c.b16 %v1168, %v1167
        %v1188 = vpack.c.b16 %v1170, %v1169
        %v1189 = vpack.c.b16 %v1172, %v1171
        %v1190 = vpack.c.b16 %v1174, %v1173
        %v1191 = vpack.c.b16 %v1176, %v1175
        %v1192 = vunpack.c.l.b16 %v1177
        %v1193 = vunpack.c.h.b16 %v1177
        %v1194 = vunpack.c.l.b16 0
        %v1195 = vunpack.c.h.b16 0
        %vm1196 = vcmp.ne.s32.totalorder %v1192, %v1194
        %vm1197 = vcmp.ne.s32.totalorder %v1193, %v1195
        %vm1198 = vmpackc.low %vm1197, %vm1196
        %v1199 = vunpack.c.l.b16 %v1178
        %v1200 = vunpack.c.h.b16 %v1178
        %v1201 = vunpack.c.l.b16 0
        %v1202 = vunpack.c.h.b16 0
        %vm1203 = vcmp.ne.s32.totalorder %v1199, %v1201
        %vm1204 = vcmp.ne.s32.totalorder %v1200, %v1202
        %vm1205 = vmpackc.low %vm1204, %vm1203
        %v1206 = vunpack.c.l.b16 %v1179
        %v1207 = vunpack.c.h.b16 %v1179
        %v1208 = vunpack.c.l.b16 0
        %v1209 = vunpack.c.h.b16 0
        %vm1210 = vcmp.ne.s32.totalorder %v1206, %v1208
        %vm1211 = vcmp.ne.s32.totalorder %v1207, %v1209
        %vm1212 = vmpackc.low %vm1211, %vm1210
        %v1213 = vunpack.c.l.b16 %v1180
        %v1214 = vunpack.c.h.b16 %v1180
        %v1215 = vunpack.c.l.b16 0
        %v1216 = vunpack.c.h.b16 0
        %vm1217 = vcmp.ne.s32.totalorder %v1213, %v1215
        %vm1218 = vcmp.ne.s32.totalorder %v1214, %v1216
        %vm1219 = vmpackc.low %vm1218, %vm1217
        %v1220 = vunpack.c.l.b16 %v1181
        %v1221 = vunpack.c.h.b16 %v1181
        %v1222 = vunpack.c.l.b16 0
        %v1223 = vunpack.c.h.b16 0
        %vm1224 = vcmp.ne.s32.totalorder %v1220, %v1222
        %vm1225 = vcmp.ne.s32.totalorder %v1221, %v1223
        %vm1226 = vmpackc.low %vm1225, %vm1224
        %v1227 = vunpack.c.l.b16 %v1182
        %v1228 = vunpack.c.h.b16 %v1182
        %v1229 = vunpack.c.l.b16 0
        %v1230 = vunpack.c.h.b16 0
        %vm1231 = vcmp.ne.s32.totalorder %v1227, %v1229
        %vm1232 = vcmp.ne.s32.totalorder %v1228, %v1230
        %vm1233 = vmpackc.low %vm1232, %vm1231
        %v1234 = vunpack.c.l.b16 %v1183
        %v1235 = vunpack.c.h.b16 %v1183
        %v1236 = vunpack.c.l.b16 0
        %v1237 = vunpack.c.h.b16 0
        %vm1238 = vcmp.ne.s32.totalorder %v1234, %v1236
        %vm1239 = vcmp.ne.s32.totalorder %v1235, %v1237
        %vm1240 = vmpackc.low %vm1239, %vm1238
        %v1241 = vunpack.c.l.b16 %v1184
        %v1242 = vunpack.c.h.b16 %v1184
        %v1243 = vunpack.c.l.b16 0
        %v1244 = vunpack.c.h.b16 0
        %vm1245 = vcmp.ne.s32.totalorder %v1241, %v1243
        %vm1246 = vcmp.ne.s32.totalorder %v1242, %v1244
        %vm1247 = vmpackc.low %vm1246, %vm1245
        %v1248 = vunpack.c.l.b16 %v1185
        %v1249 = vunpack.c.h.b16 %v1185
        %v1250 = vunpack.c.l.b16 0
        %v1251 = vunpack.c.h.b16 0
        %vm1252 = vcmp.ne.s32.totalorder %v1248, %v1250
        %vm1253 = vcmp.ne.s32.totalorder %v1249, %v1251
        %vm1254 = vmpackc.low %vm1253, %vm1252
        %v1255 = vunpack.c.l.b16 %v1186
        %v1256 = vunpack.c.h.b16 %v1186
        %v1257 = vunpack.c.l.b16 0
        %v1258 = vunpack.c.h.b16 0
        %vm1259 = vcmp.ne.s32.totalorder %v1255, %v1257
        %vm1260 = vcmp.ne.s32.totalorder %v1256, %v1258
        %vm1261 = vmpackc.low %vm1260, %vm1259
        %v1262 = vunpack.c.l.b16 %v1187
        %v1263 = vunpack.c.h.b16 %v1187
        %v1264 = vunpack.c.l.b16 0
        %v1265 = vunpack.c.h.b16 0
        %vm1266 = vcmp.ne.s32.totalorder %v1262, %v1264
        %vm1267 = vcmp.ne.s32.totalorder %v1263, %v1265
        %vm1268 = vmpackc.low %vm1267, %vm1266
        %v1269 = vunpack.c.l.b16 %v1188
        %v1270 = vunpack.c.h.b16 %v1188
        %v1271 = vunpack.c.l.b16 0
        %v1272 = vunpack.c.h.b16 0
        %vm1273 = vcmp.ne.s32.totalorder %v1269, %v1271
        %vm1274 = vcmp.ne.s32.totalorder %v1270, %v1272
        %vm1275 = vmpackc.low %vm1274, %vm1273
        %v1276 = vunpack.c.l.b16 %v1189
        %v1277 = vunpack.c.h.b16 %v1189
        %v1278 = vunpack.c.l.b16 0
        %v1279 = vunpack.c.h.b16 0
        %vm1280 = vcmp.ne.s32.totalorder %v1276, %v1278
        %vm1281 = vcmp.ne.s32.totalorder %v1277, %v1279
        %vm1282 = vmpackc.low %vm1281, %vm1280
        %v1283 = vunpack.c.l.b16 %v1190
        %v1284 = vunpack.c.h.b16 %v1190
        %v1285 = vunpack.c.l.b16 0
        %v1286 = vunpack.c.h.b16 0
        %vm1287 = vcmp.ne.s32.totalorder %v1283, %v1285
        %vm1288 = vcmp.ne.s32.totalorder %v1284, %v1286
        %vm1289 = vmpackc.low %vm1288, %vm1287
        %v1290 = vunpack.c.l.b16 %v1191
        %v1291 = vunpack.c.h.b16 %v1191
        %v1292 = vunpack.c.l.b16 0
        %v1293 = vunpack.c.h.b16 0
        %vm1294 = vcmp.ne.s32.totalorder %v1290, %v1292
        %vm1295 = vcmp.ne.s32.totalorder %v1291, %v1293
        %vm1296 = vmpackc.low %vm1295, %vm1294
        %v1297 = vsel %vm1198, %v894, 0
        %v1298 = vsel %vm1205, %v850, 0
        %v1299 = vsel %vm1212, %v852, 0
        %v1300 = vsel %vm1219, %v854, 0
        %v1301 = vsel %vm1226, %v856, 0
        %v1302 = vsel %vm1233, %v858, 0
        %v1303 = vsel %vm1240, %v860, 0
        %v1304 = vsel %vm1247, %v862, 0
        %v1305 = vsel %vm1254, %v864, 0
        %v1306 = vsel %vm1261, %v866, 0
        %v1307 = vsel %vm1268, %v868, 0
        %v1308 = vsel %vm1275, %v870, 0
        %v1309 = vsel %vm1282, %v872, 0
        %v1310 = vsel %vm1289, %v874, 0
        %v1311 = vsel %vm1296, %v876, 0
        %v1312 = vld [vmem:[%s4] sm:$0x3]
        %1313 = vrot.lane.b32.xlu0 %v712, 120
        %v1314 = vpop.permute.xlu0 %1313
        %1315 = vrot.lane.b32.xlu0 %v713, 120
        %v1316 = vpop.permute.xlu0 %1315
        %1317 = vrot.lane.b32.xlu0 %v714, 120
        %v1318 = vpop.permute.xlu0 %1317
        %1319 = vrot.lane.b32.xlu0 %v715, 120
        %v1320 = vpop.permute.xlu0 %1319
        %1321 = vrot.lane.b32.xlu0 %v716, 120
        %v1322 = vpop.permute.xlu0 %1321
        %1323 = vrot.lane.b32.xlu0 %v717, 120
        %v1324 = vpop.permute.xlu0 %1323
        %1325 = vrot.lane.b32.xlu0 %v718, 120
        %v1326 = vpop.permute.xlu0 %1325
        %1327 = vrot.lane.b32.xlu0 %v719, 120
        %v1328 = vpop.permute.xlu0 %1327
        %1329 = vrot.lane.b32.xlu0 %v720, 120
        %v1330 = vpop.permute.xlu0 %1329
        %1331 = vrot.lane.b32.xlu0 %v721, 120
        %v1332 = vpop.permute.xlu0 %1331
        %1333 = vrot.lane.b32.xlu0 %v722, 120
        %v1334 = vpop.permute.xlu0 %1333
        %1335 = vrot.lane.b32.xlu0 %v723, 120
        %v1336 = vpop.permute.xlu0 %1335
        %1337 = vrot.lane.b32.xlu0 %v724, 120
        %v1338 = vpop.permute.xlu0 %1337
        %1339 = vrot.lane.b32.xlu0 %v725, 120
        %v1340 = vpop.permute.xlu0 %1339
        %1341 = vrot.lane.b32.xlu0 %v726, 120
        %v1342 = vpop.permute.xlu0 %1341
        %s1343 = scalar_lea.vmem %s4, 2
        %v1344 = vld [vmem:[%s1343] sm:$0x3]
        %v1346 = vsel %vm446, 0, 0
        %v1349 = vsel %vm446, %v1314, 0
        %v1352 = vsel %vm446, %v1316, 0
        %v1355 = vsel %vm446, %v1318, 0
        %v1358 = vsel %vm446, %v1320, 0
        %v1361 = vsel %vm446, %v1322, 0
        %v1364 = vsel %vm446, %v1324, 0
        %v1367 = vsel %vm446, %v1326, 0
        %v1370 = vsel %vm446, %v1328, 0
        %v1373 = vsel %vm446, %v1330, 0
        %v1376 = vsel %vm446, %v1332, 0
        %v1379 = vsel %vm446, %v1334, 0
        %v1382 = vsel %vm446, %v1336, 0
        %v1385 = vsel %vm446, %v1338, 0
        %v1388 = vsel %vm446, %v1340, 0
        %v1391 = vsel %vm446, %v1342, 0
        %v1394 = vsel %vm495, %v1344, 0
        %1396 = vmatpush.bf16.msra.mxu0 0
        %1397 = vmatpush.bf16.msra.mxu0 0
        %1398 = vmatpush.bf16.msra.mxu0 0
        %1399 = vmatpush.bf16.msra.mxu0 0
        %1400 = vmatpush.bf16.msra.mxu0 0
        %1401 = vmatpush.bf16.msra.mxu0 0
        %1402 = vmatpush.bf16.msra.mxu0 0
        %1403 = vmatpush.bf16.msra.mxu0 %v1394
        %1404 = vmatmul.bf16.gmra.mxu0 %v1346
        %v1405 = vpop.f32.mrf.mxu0
        %v1406 = vadd.f32 0.0, %v1405
        %v1407 = vpop.f32.mrf.mxu0
        %v1408 = vadd.f32 0.0, %v1407
        %1409 = vmatmul.bf16.gmra.mxu0 %v1349
        %v1410 = vpop.f32.mrf.mxu0
        %v1411 = vadd.f32 0.0, %v1410
        %v1412 = vpop.f32.mrf.mxu0
        %v1413 = vadd.f32 0.0, %v1412
        %1414 = vmatmul.bf16.gmra.mxu0 %v1352
        %v1415 = vpop.f32.mrf.mxu0
        %v1416 = vadd.f32 0.0, %v1415
        %v1417 = vpop.f32.mrf.mxu0
        %v1418 = vadd.f32 0.0, %v1417
        %1419 = vmatmul.bf16.gmra.mxu0 %v1355
        %v1420 = vpop.f32.mrf.mxu0
        %v1421 = vadd.f32 0.0, %v1420
        %v1422 = vpop.f32.mrf.mxu0
        %v1423 = vadd.f32 0.0, %v1422
        %1424 = vmatmul.bf16.gmra.mxu0 %v1358
        %v1425 = vpop.f32.mrf.mxu0
        %v1426 = vadd.f32 0.0, %v1425
        %v1427 = vpop.f32.mrf.mxu0
        %v1428 = vadd.f32 0.0, %v1427
        %1429 = vmatmul.bf16.gmra.mxu0 %v1361
        %v1430 = vpop.f32.mrf.mxu0
        %v1431 = vadd.f32 0.0, %v1430
        %v1432 = vpop.f32.mrf.mxu0
        %v1433 = vadd.f32 0.0, %v1432
        %1434 = vmatmul.bf16.gmra.mxu0 %v1364
        %v1435 = vpop.f32.mrf.mxu0
        %v1436 = vadd.f32 0.0, %v1435
        %v1437 = vpop.f32.mrf.mxu0
        %v1438 = vadd.f32 0.0, %v1437
        %1439 = vmatmul.bf16.gmra.mxu0 %v1367
        %v1440 = vpop.f32.mrf.mxu0
        %v1441 = vadd.f32 0.0, %v1440
        %v1442 = vpop.f32.mrf.mxu0
        %v1443 = vadd.f32 0.0, %v1442
        %1444 = vmatmul.bf16.gmra.mxu0 %v1370
        %v1445 = vpop.f32.mrf.mxu0
        %v1446 = vadd.f32 0.0, %v1445
        %v1447 = vpop.f32.mrf.mxu0
        %v1448 = vadd.f32 0.0, %v1447
        %1449 = vmatmul.bf16.gmra.mxu0 %v1373
        %v1450 = vpop.f32.mrf.mxu0
        %v1451 = vadd.f32 0.0, %v1450
        %v1452 = vpop.f32.mrf.mxu0
        %v1453 = vadd.f32 0.0, %v1452
        %1454 = vmatmul.bf16.gmra.mxu0 %v1376
        %v1455 = vpop.f32.mrf.mxu0
        %v1456 = vadd.f32 0.0, %v1455
        %v1457 = vpop.f32.mrf.mxu0
        %v1458 = vadd.f32 0.0, %v1457
        %1459 = vmatmul.bf16.gmra.mxu0 %v1379
        %v1460 = vpop.f32.mrf.mxu0
        %v1461 = vadd.f32 0.0, %v1460
        %v1462 = vpop.f32.mrf.mxu0
        %v1463 = vadd.f32 0.0, %v1462
        %1464 = vmatmul.bf16.gmra.mxu0 %v1382
        %v1465 = vpop.f32.mrf.mxu0
        %v1466 = vadd.f32 0.0, %v1465
        %v1467 = vpop.f32.mrf.mxu0
        %v1468 = vadd.f32 0.0, %v1467
        %1469 = vmatmul.bf16.gmra.mxu0 %v1385
        %v1470 = vpop.f32.mrf.mxu0
        %v1471 = vadd.f32 0.0, %v1470
        %v1472 = vpop.f32.mrf.mxu0
        %v1473 = vadd.f32 0.0, %v1472
        %1474 = vmatmul.bf16.gmra.mxu0 %v1388
        %v1475 = vpop.f32.mrf.mxu0
        %v1476 = vadd.f32 0.0, %v1475
        %v1477 = vpop.f32.mrf.mxu0
        %v1478 = vadd.f32 0.0, %v1477
        %1479 = vmatmul.bf16.gmra.mxu0 %v1391
        %v1480 = vpop.f32.mrf.mxu0
        %v1481 = vadd.f32 0.0, %v1480
        %v1482 = vpop.f32.mrf.mxu0
        %v1483 = vadd.f32 0.0, %v1482
        %1484 = vdwg.mxu0
        %v1486 = vsel %vm446, %v1297, 0
        %v1489 = vsel %vm446, %v1298, 0
        %v1492 = vsel %vm446, %v1299, 0
        %v1495 = vsel %vm446, %v1300, 0
        %v1498 = vsel %vm446, %v1301, 0
        %v1501 = vsel %vm446, %v1302, 0
        %v1504 = vsel %vm446, %v1303, 0
        %v1507 = vsel %vm446, %v1304, 0
        %v1510 = vsel %vm446, %v1305, 0
        %v1513 = vsel %vm446, %v1306, 0
        %v1516 = vsel %vm446, %v1307, 0
        %v1519 = vsel %vm446, %v1308, 0
        %v1522 = vsel %vm446, %v1309, 0
        %v1525 = vsel %vm446, %v1310, 0
        %v1528 = vsel %vm446, %v1311, 0
        %v1531 = vsel %vm495, %v1312, 0
        %1533 = vmatpush.bf16.msra.mxu0 0
        %1534 = vmatpush.bf16.msra.mxu0 0
        %1535 = vmatpush.bf16.msra.mxu0 0
        %1536 = vmatpush.bf16.msra.mxu0 0
        %1537 = vmatpush.bf16.msra.mxu0 0
        %1538 = vmatpush.bf16.msra.mxu0 0
        %1539 = vmatpush.bf16.msra.mxu0 0
        %1540 = vmatpush.bf16.msra.mxu0 %v1531
        %1541 = vmatmul.bf16.gmra.mxu0 %v1346
        %v1542 = vpop.f32.mrf.mxu0
        %v1543 = vadd.f32 %v1406, %v1542
        %v1544 = vpop.f32.mrf.mxu0
        %v1545 = vadd.f32 %v1408, %v1544
        %1546 = vmatmul.bf16.gmra.mxu0 %v1486
        %v1547 = vpop.f32.mrf.mxu0
        %v1548 = vadd.f32 %v1411, %v1547
        %v1549 = vpop.f32.mrf.mxu0
        %v1550 = vadd.f32 %v1413, %v1549
        %1551 = vmatmul.bf16.gmra.mxu0 %v1489
        %v1552 = vpop.f32.mrf.mxu0
        %v1553 = vadd.f32 %v1416, %v1552
        %v1554 = vpop.f32.mrf.mxu0
        %v1555 = vadd.f32 %v1418, %v1554
        %1556 = vmatmul.bf16.gmra.mxu0 %v1492
        %v1557 = vpop.f32.mrf.mxu0
        %v1558 = vadd.f32 %v1421, %v1557
        %v1559 = vpop.f32.mrf.mxu0
        %v1560 = vadd.f32 %v1423, %v1559
        %1561 = vmatmul.bf16.gmra.mxu0 %v1495
        %v1562 = vpop.f32.mrf.mxu0
        %v1563 = vadd.f32 %v1426, %v1562
        %v1564 = vpop.f32.mrf.mxu0
        %v1565 = vadd.f32 %v1428, %v1564
        %1566 = vmatmul.bf16.gmra.mxu0 %v1498
        %v1567 = vpop.f32.mrf.mxu0
        %v1568 = vadd.f32 %v1431, %v1567
        %v1569 = vpop.f32.mrf.mxu0
        %v1570 = vadd.f32 %v1433, %v1569
        %1571 = vmatmul.bf16.gmra.mxu0 %v1501
        %v1572 = vpop.f32.mrf.mxu0
        %v1573 = vadd.f32 %v1436, %v1572
        %v1574 = vpop.f32.mrf.mxu0
        %v1575 = vadd.f32 %v1438, %v1574
        %1576 = vmatmul.bf16.gmra.mxu0 %v1504
        %v1577 = vpop.f32.mrf.mxu0
        %v1578 = vadd.f32 %v1441, %v1577
        %v1579 = vpop.f32.mrf.mxu0
        %v1580 = vadd.f32 %v1443, %v1579
        %1581 = vmatmul.bf16.gmra.mxu0 %v1507
        %v1582 = vpop.f32.mrf.mxu0
        %v1583 = vadd.f32 %v1446, %v1582
        %v1584 = vpop.f32.mrf.mxu0
        %v1585 = vadd.f32 %v1448, %v1584
        %1586 = vmatmul.bf16.gmra.mxu0 %v1510
        %v1587 = vpop.f32.mrf.mxu0
        %v1588 = vadd.f32 %v1451, %v1587
        %v1589 = vpop.f32.mrf.mxu0
        %v1590 = vadd.f32 %v1453, %v1589
        %1591 = vmatmul.bf16.gmra.mxu0 %v1513
        %v1592 = vpop.f32.mrf.mxu0
        %v1593 = vadd.f32 %v1456, %v1592
        %v1594 = vpop.f32.mrf.mxu0
        %v1595 = vadd.f32 %v1458, %v1594
        %1596 = vmatmul.bf16.gmra.mxu0 %v1516
        %v1597 = vpop.f32.mrf.mxu0
        %v1598 = vadd.f32 %v1461, %v1597
        %v1599 = vpop.f32.mrf.mxu0
        %v1600 = vadd.f32 %v1463, %v1599
        %1601 = vmatmul.bf16.gmra.mxu0 %v1519
        %v1602 = vpop.f32.mrf.mxu0
        %v1603 = vadd.f32 %v1466, %v1602
        %v1604 = vpop.f32.mrf.mxu0
        %v1605 = vadd.f32 %v1468, %v1604
        %1606 = vmatmul.bf16.gmra.mxu0 %v1522
        %v1607 = vpop.f32.mrf.mxu0
        %v1608 = vadd.f32 %v1471, %v1607
        %v1609 = vpop.f32.mrf.mxu0
        %v1610 = vadd.f32 %v1473, %v1609
        %1611 = vmatmul.bf16.gmra.mxu0 %v1525
        %v1612 = vpop.f32.mrf.mxu0
        %v1613 = vadd.f32 %v1476, %v1612
        %v1614 = vpop.f32.mrf.mxu0
        %v1615 = vadd.f32 %v1478, %v1614
        %1616 = vmatmul.bf16.gmra.mxu0 %v1528
        %v1617 = vpop.f32.mrf.mxu0
        %v1618 = vadd.f32 %v1481, %v1617
        %v1619 = vpop.f32.mrf.mxu0
        %v1620 = vadd.f32 %v1483, %v1619
        %1621 = vdwg.mxu0
        %v1623 = vunpack.c.l.b16 %v650
        %v1624 = vpack.c.b16 %v1623, %v1623
        %vm1625 = vsmask.f32 7424
        %v1626 = vrot.slane %v732, 1
        %v1627 = vor.u32 %v729, %v1626
        %v1628 = vrot.slane %v739, 1
        %v1629 = vsel %vm1625, %v1627, %v1628
        %v1630 = vor.u32 %v736, %v1628
        %v1631 = vrot.slane %v747, 1
        %v1632 = vsel %vm1625, %v1630, %v1631
        %v1633 = vor.u32 %v744, %v1631
        %v1634 = vrot.slane %v755, 1
        %v1635 = vsel %vm1625, %v1633, %v1634
        %v1636 = vor.u32 %v752, %v1634
        %v1637 = vrot.slane %v763, 1
        %v1638 = vsel %vm1625, %v1636, %v1637
        %v1639 = vor.u32 %v760, %v1637
        %v1640 = vrot.slane %v771, 1
        %v1641 = vsel %vm1625, %v1639, %v1640
        %v1642 = vor.u32 %v768, %v1640
        %v1643 = vrot.slane %v779, 1
        %v1644 = vsel %vm1625, %v1642, %v1643
        %v1645 = vor.u32 %v776, %v1643
        %v1646 = vrot.slane %v787, 1
        %v1647 = vsel %vm1625, %v1645, %v1646
        %v1648 = vor.u32 %v784, %v1646
        %v1649 = vrot.slane %v795, 1
        %v1650 = vsel %vm1625, %v1648, %v1649
        %v1651 = vor.u32 %v792, %v1649
        %v1652 = vrot.slane %v803, 1
        %v1653 = vsel %vm1625, %v1651, %v1652
        %v1654 = vor.u32 %v800, %v1652
        %v1655 = vrot.slane %v811, 1
        %v1656 = vsel %vm1625, %v1654, %v1655
        %v1657 = vor.u32 %v808, %v1655
        %v1658 = vrot.slane %v819, 1
        %v1659 = vsel %vm1625, %v1657, %v1658
        %v1660 = vor.u32 %v816, %v1658
        %v1661 = vrot.slane %v827, 1
        %v1662 = vsel %vm1625, %v1660, %v1661
        %v1663 = vor.u32 %v824, %v1661
        %v1664 = vrot.slane %v835, 1
        %v1665 = vsel %vm1625, %v1663, %v1664
        %v1666 = vor.u32 %v832, %v1664
        %v1667 = vrot.slane %v843, 1
        %v1668 = vsel %vm1625, %v1666, %v1667
        %v1669 = vor.u32 %v840, %v1667
        %v1671 = vshll.u32 %v1624, 16
        %v1673 = vrot.slane %v1671, 1
        %v1674 = vsel %vm1625, %v1669, %v1673
        %1675 = vrot.lane.b32.xlu0 %v1626, 120
        %v1676 = vpop.permute.xlu0 %1675
        %1677 = vrot.lane.b32.xlu0 %v1629, 120
        %v1678 = vpop.permute.xlu0 %1677
        %1679 = vrot.lane.b32.xlu0 %v1632, 120
        %v1680 = vpop.permute.xlu0 %1679
        %1681 = vrot.lane.b32.xlu0 %v1635, 120
        %v1682 = vpop.permute.xlu0 %1681
        %1683 = vrot.lane.b32.xlu0 %v1638, 120
        %v1684 = vpop.permute.xlu0 %1683
        %1685 = vrot.lane.b32.xlu0 %v1641, 120
        %v1686 = vpop.permute.xlu0 %1685
        %1687 = vrot.lane.b32.xlu0 %v1644, 120
        %v1688 = vpop.permute.xlu0 %1687
        %1689 = vrot.lane.b32.xlu0 %v1647, 120
        %v1690 = vpop.permute.xlu0 %1689
        %1691 = vrot.lane.b32.xlu0 %v1650, 120
        %v1692 = vpop.permute.xlu0 %1691
        %1693 = vrot.lane.b32.xlu0 %v1653, 120
        %v1694 = vpop.permute.xlu0 %1693
        %1695 = vrot.lane.b32.xlu0 %v1656, 120
        %v1696 = vpop.permute.xlu0 %1695
        %1697 = vrot.lane.b32.xlu0 %v1659, 120
        %v1698 = vpop.permute.xlu0 %1697
        %1699 = vrot.lane.b32.xlu0 %v1662, 120
        %v1700 = vpop.permute.xlu0 %1699
        %1701 = vrot.lane.b32.xlu0 %v1665, 120
        %v1702 = vpop.permute.xlu0 %1701
        %1703 = vrot.lane.b32.xlu0 %v1668, 120
        %v1704 = vpop.permute.xlu0 %1703
        %1705 = vrot.lane.b32.xlu0 %v1674, 120
        %v1706 = vpop.permute.xlu0 %1705
        %vm1723 = vcmask 1047552
        %vm1724 = vmand %vm1723, %vm1625
        %v1725 = vsel %vm1724, 0, %v1676
        %vm1726 = vcmp.lt.s32.totalorder %v361, 15
        %vm1727 = vcmp.lt.s32.totalorder %v362, 15
        %vm1728 = vcmp.lt.s32.totalorder %v363, 15
        %vm1729 = vcmp.lt.s32.totalorder %v364, 15
        %vm1730 = vcmp.lt.s32.totalorder %v365, 15
        %vm1731 = vcmp.lt.s32.totalorder %v366, 15
        %vm1732 = vcmp.lt.s32.totalorder %v367, 15
        %vm1733 = vcmp.lt.s32.totalorder %v368, 15
        %vm1734 = vcmp.lt.s32.totalorder %v369, 15
        %vm1735 = vcmp.lt.s32.totalorder %v370, 15
        %vm1736 = vcmp.lt.s32.totalorder %v371, 15
        %vm1737 = vcmp.lt.s32.totalorder %v372, 15
        %vm1738 = vcmp.lt.s32.totalorder %v373, 15
        %vm1739 = vcmp.lt.s32.totalorder %v374, 15
        %vm1740 = vcmp.lt.s32.totalorder %v375, 15
        %vm1741 = vcmp.lt.s32.totalorder %v376, 15
        %vm1742 = vcmp.lt.s32.totalorder %v377, 15
        %vm1743 = vcmp.lt.s32.totalorder %v378, 15
        %vm1744 = vcmp.lt.s32.totalorder %v379, 15
        %vm1745 = vcmp.lt.s32.totalorder %v380, 15
        %vm1746 = vcmp.lt.s32.totalorder %v381, 15
        %vm1747 = vcmp.lt.s32.totalorder %v382, 15
        %vm1748 = vcmp.lt.s32.totalorder %v383, 15
        %vm1749 = vcmp.lt.s32.totalorder %v384, 15
        %vm1750 = vcmp.lt.s32.totalorder %v385, 15
        %vm1751 = vcmp.lt.s32.totalorder %v386, 15
        %vm1752 = vcmp.lt.s32.totalorder %v387, 15
        %vm1753 = vcmp.lt.s32.totalorder %v388, 15
        %vm1754 = vcmp.lt.s32.totalorder %v389, 15
        %vm1755 = vcmp.lt.s32.totalorder %v390, 15
        %vm1756 = vcmp.lt.s32.totalorder %v391, 15
        %vm1757 = vcmp.lt.s32.totalorder %v392, 15
        %v1758 = vsel %vm1726, 1, 0
        %v1759 = vsel %vm1727, 1, 0
        %v1760 = vsel %vm1728, 1, 0
        %v1761 = vsel %vm1729, 1, 0
        %v1762 = vsel %vm1730, 1, 0
        %v1763 = vsel %vm1731, 1, 0
        %v1764 = vsel %vm1732, 1, 0
        %v1765 = vsel %vm1733, 1, 0
        %v1766 = vsel %vm1734, 1, 0
        %v1767 = vsel %vm1735, 1, 0
        %v1768 = vsel %vm1736, 1, 0
        %v1769 = vsel %vm1737, 1, 0
        %v1770 = vsel %vm1738, 1, 0
        %v1771 = vsel %vm1739, 1, 0
        %v1772 = vsel %vm1740, 1, 0
        %v1773 = vsel %vm1741, 1, 0
        %v1774 = vsel %vm1742, 1, 0
        %v1775 = vsel %vm1743, 1, 0
        %v1776 = vsel %vm1744, 1, 0
        %v1777 = vsel %vm1745, 1, 0
        %v1778 = vsel %vm1746, 1, 0
        %v1779 = vsel %vm1747, 1, 0
        %v1780 = vsel %vm1748, 1, 0
        %v1781 = vsel %vm1749, 1, 0
        %v1782 = vsel %vm1750, 1, 0
        %v1783 = vsel %vm1751, 1, 0
        %v1784 = vsel %vm1752, 1, 0
        %v1785 = vsel %vm1753, 1, 0
        %v1786 = vsel %vm1754, 1, 0
        %v1787 = vsel %vm1755, 1, 0
        %v1788 = vsel %vm1756, 1, 0
        %v1789 = vsel %vm1757, 1, 0
        %1790 = vset.pattern.permute.xlu0 0
        %1791 = vperm.xlu0 %1790, %v1758
        %v1792 = vpop.permute.xlu0 %1791
        %1793 = vset.pattern.permute.xlu0 0
        %1794 = vperm.xlu0 %1793, %v1759
        %v1795 = vpop.permute.xlu0 %1794
        %1796 = vset.pattern.permute.xlu0 0
        %1797 = vperm.xlu0 %1796, %v1760
        %v1798 = vpop.permute.xlu0 %1797
        %1799 = vset.pattern.permute.xlu0 0
        %1800 = vperm.xlu0 %1799, %v1761
        %v1801 = vpop.permute.xlu0 %1800
        %1802 = vset.pattern.permute.xlu0 0
        %1803 = vperm.xlu0 %1802, %v1762
        %v1804 = vpop.permute.xlu0 %1803
        %1805 = vset.pattern.permute.xlu0 0
        %1806 = vperm.xlu0 %1805, %v1763
        %v1807 = vpop.permute.xlu0 %1806
        %1808 = vset.pattern.permute.xlu0 0
        %1809 = vperm.xlu0 %1808, %v1764
        %v1810 = vpop.permute.xlu0 %1809
        %1811 = vset.pattern.permute.xlu0 0
        %1812 = vperm.xlu0 %1811, %v1765
        %v1813 = vpop.permute.xlu0 %1812
        %1814 = vset.pattern.permute.xlu0 0
        %1815 = vperm.xlu0 %1814, %v1766
        %v1816 = vpop.permute.xlu0 %1815
        %1817 = vset.pattern.permute.xlu0 0
        %1818 = vperm.xlu0 %1817, %v1767
        %v1819 = vpop.permute.xlu0 %1818
        %1820 = vset.pattern.permute.xlu0 0
        %1821 = vperm.xlu0 %1820, %v1768
        %v1822 = vpop.permute.xlu0 %1821
        %1823 = vset.pattern.permute.xlu0 0
        %1824 = vperm.xlu0 %1823, %v1769
        %v1825 = vpop.permute.xlu0 %1824
        %1826 = vset.pattern.permute.xlu0 0
        %1827 = vperm.xlu0 %1826, %v1770
        %v1828 = vpop.permute.xlu0 %1827
        %1829 = vset.pattern.permute.xlu0 0
        %1830 = vperm.xlu0 %1829, %v1771
        %v1831 = vpop.permute.xlu0 %1830
        %1832 = vset.pattern.permute.xlu0 0
        %1833 = vperm.xlu0 %1832, %v1772
        %v1834 = vpop.permute.xlu0 %1833
        %1835 = vset.pattern.permute.xlu0 0
        %1836 = vperm.xlu0 %1835, %v1773
        %v1837 = vpop.permute.xlu0 %1836
        %1838 = vset.pattern.permute.xlu0 0
        %1839 = vperm.xlu0 %1838, %v1774
        %v1840 = vpop.permute.xlu0 %1839
        %1841 = vset.pattern.permute.xlu0 0
        %1842 = vperm.xlu0 %1841, %v1775
        %v1843 = vpop.permute.xlu0 %1842
        %1844 = vset.pattern.permute.xlu0 0
        %1845 = vperm.xlu0 %1844, %v1776
        %v1846 = vpop.permute.xlu0 %1845
        %1847 = vset.pattern.permute.xlu0 0
        %1848 = vperm.xlu0 %1847, %v1777
        %v1849 = vpop.permute.xlu0 %1848
        %1850 = vset.pattern.permute.xlu0 0
        %1851 = vperm.xlu0 %1850, %v1778
        %v1852 = vpop.permute.xlu0 %1851
        %1853 = vset.pattern.permute.xlu0 0
        %1854 = vperm.xlu0 %1853, %v1779
        %v1855 = vpop.permute.xlu0 %1854
        %1856 = vset.pattern.permute.xlu0 0
        %1857 = vperm.xlu0 %1856, %v1780
        %v1858 = vpop.permute.xlu0 %1857
        %1859 = vset.pattern.permute.xlu0 0
        %1860 = vperm.xlu0 %1859, %v1781
        %v1861 = vpop.permute.xlu0 %1860
        %1862 = vset.pattern.permute.xlu0 0
        %1863 = vperm.xlu0 %1862, %v1782
        %v1864 = vpop.permute.xlu0 %1863
        %1865 = vset.pattern.permute.xlu0 0
        %1866 = vperm.xlu0 %1865, %v1783
        %v1867 = vpop.permute.xlu0 %1866
        %1868 = vset.pattern.permute.xlu0 0
        %1869 = vperm.xlu0 %1868, %v1784
        %v1870 = vpop.permute.xlu0 %1869
        %1871 = vset.pattern.permute.xlu0 0
        %1872 = vperm.xlu0 %1871, %v1785
        %v1873 = vpop.permute.xlu0 %1872
        %1874 = vset.pattern.permute.xlu0 0
        %1875 = vperm.xlu0 %1874, %v1786
        %v1876 = vpop.permute.xlu0 %1875
        %1877 = vset.pattern.permute.xlu0 0
        %1878 = vperm.xlu0 %1877, %v1787
        %v1879 = vpop.permute.xlu0 %1878
        %1880 = vset.pattern.permute.xlu0 0
        %1881 = vperm.xlu0 %1880, %v1788
        %v1882 = vpop.permute.xlu0 %1881
        %1883 = vset.pattern.permute.xlu0 0
        %1884 = vperm.xlu0 %1883, %v1789
        %v1885 = vpop.permute.xlu0 %1884
        %vm1886 = vcmp.eq.s32.totalorder %v1792, 1
        %vm1887 = vcmp.eq.s32.totalorder %v1795, 1
        %vm1888 = vcmp.eq.s32.totalorder %v1798, 1
        %vm1889 = vcmp.eq.s32.totalorder %v1801, 1
        %vm1890 = vcmp.eq.s32.totalorder %v1804, 1
        %vm1891 = vcmp.eq.s32.totalorder %v1807, 1
        %vm1892 = vcmp.eq.s32.totalorder %v1810, 1
        %vm1893 = vcmp.eq.s32.totalorder %v1813, 1
        %vm1894 = vcmp.eq.s32.totalorder %v1816, 1
        %vm1895 = vcmp.eq.s32.totalorder %v1819, 1
        %vm1896 = vcmp.eq.s32.totalorder %v1822, 1
        %vm1897 = vcmp.eq.s32.totalorder %v1825, 1
        %vm1898 = vcmp.eq.s32.totalorder %v1828, 1
        %vm1899 = vcmp.eq.s32.totalorder %v1831, 1
        %vm1900 = vcmp.eq.s32.totalorder %v1834, 1
        %vm1901 = vcmp.eq.s32.totalorder %v1837, 1
        %vm1902 = vcmp.eq.s32.totalorder %v1840, 1
        %vm1903 = vcmp.eq.s32.totalorder %v1843, 1
        %vm1904 = vcmp.eq.s32.totalorder %v1846, 1
        %vm1905 = vcmp.eq.s32.totalorder %v1849, 1
        %vm1906 = vcmp.eq.s32.totalorder %v1852, 1
        %vm1907 = vcmp.eq.s32.totalorder %v1855, 1
        %vm1908 = vcmp.eq.s32.totalorder %v1858, 1
        %vm1909 = vcmp.eq.s32.totalorder %v1861, 1
        %vm1910 = vcmp.eq.s32.totalorder %v1864, 1
        %vm1911 = vcmp.eq.s32.totalorder %v1867, 1
        %vm1912 = vcmp.eq.s32.totalorder %v1870, 1
        %vm1913 = vcmp.eq.s32.totalorder %v1873, 1
        %vm1914 = vcmp.eq.s32.totalorder %v1876, 1
        %vm1915 = vcmp.eq.s32.totalorder %v1879, 1
        %vm1916 = vcmp.eq.s32.totalorder %v1882, 1
        %vm1917 = vcmp.eq.s32.totalorder %v1885, 1
        %vm1918 = vmpackc.low %vm1886, %vm1886
        %vm1919 = vmpackc.low %vm1887, %vm1887
        %vm1920 = vmpackc.low %vm1888, %vm1888
        %vm1921 = vmpackc.low %vm1889, %vm1889
        %vm1922 = vmpackc.low %vm1890, %vm1890
        %vm1923 = vmpackc.low %vm1891, %vm1891
        %vm1924 = vmpackc.low %vm1892, %vm1892
        %vm1925 = vmpackc.low %vm1893, %vm1893
        %vm1926 = vmpackc.low %vm1894, %vm1894
        %vm1927 = vmpackc.low %vm1895, %vm1895
        %vm1928 = vmpackc.low %vm1896, %vm1896
        %vm1929 = vmpackc.low %vm1897, %vm1897
        %vm1930 = vmpackc.low %vm1898, %vm1898
        %vm1931 = vmpackc.low %vm1899, %vm1899
        %vm1932 = vmpackc.low %vm1900, %vm1900
        %vm1933 = vmpackc.low %vm1901, %vm1901
        %vm1934 = vmpackc.low %vm1902, %vm1902
        %vm1935 = vmpackc.low %vm1903, %vm1903
        %vm1936 = vmpackc.low %vm1904, %vm1904
        %vm1937 = vmpackc.low %vm1905, %vm1905
        %vm1938 = vmpackc.low %vm1906, %vm1906
        %vm1939 = vmpackc.low %vm1907, %vm1907
        %vm1940 = vmpackc.low %vm1908, %vm1908
        %vm1941 = vmpackc.low %vm1909, %vm1909
        %vm1942 = vmpackc.low %vm1910, %vm1910
        %vm1943 = vmpackc.low %vm1911, %vm1911
        %vm1944 = vmpackc.low %vm1912, %vm1912
        %vm1945 = vmpackc.low %vm1913, %vm1913
        %vm1946 = vmpackc.low %vm1914, %vm1914
        %vm1947 = vmpackc.low %vm1915, %vm1915
        %vm1948 = vmpackc.low %vm1916, %vm1916
        %vm1949 = vmpackc.low %vm1917, %vm1917
        %v1950 = vsel %vm1918, 65537, 0
        %v1951 = vsel %vm1919, 65537, 0
        %v1952 = vsel %vm1920, 65537, 0
        %v1953 = vsel %vm1921, 65537, 0
        %v1954 = vsel %vm1922, 65537, 0
        %v1955 = vsel %vm1923, 65537, 0
        %v1956 = vsel %vm1924, 65537, 0
        %v1957 = vsel %vm1925, 65537, 0
        %v1958 = vsel %vm1926, 65537, 0
        %v1959 = vsel %vm1927, 65537, 0
        %v1960 = vsel %vm1928, 65537, 0
        %v1961 = vsel %vm1929, 65537, 0
        %v1962 = vsel %vm1930, 65537, 0
        %v1963 = vsel %vm1931, 65537, 0
        %v1964 = vsel %vm1932, 65537, 0
        %v1965 = vsel %vm1933, 65537, 0
        %v1966 = vsel %vm1934, 65537, 0
        %v1967 = vsel %vm1935, 65537, 0
        %v1968 = vsel %vm1936, 65537, 0
        %v1969 = vsel %vm1937, 65537, 0
        %v1970 = vsel %vm1938, 65537, 0
        %v1971 = vsel %vm1939, 65537, 0
        %v1972 = vsel %vm1940, 65537, 0
        %v1973 = vsel %vm1941, 65537, 0
        %v1974 = vsel %vm1942, 65537, 0
        %v1975 = vsel %vm1943, 65537, 0
        %v1976 = vsel %vm1944, 65537, 0
        %v1977 = vsel %vm1945, 65537, 0
        %v1978 = vsel %vm1946, 65537, 0
        %v1979 = vsel %vm1947, 65537, 0
        %v1980 = vsel %vm1948, 65537, 0
        %v1981 = vsel %vm1949, 65537, 0
        %v1982 = vunpack.c.l.b16 %v1950
        %v1983 = vunpack.c.l.b16 %v1951
        %v1984 = vunpack.c.l.b16 %v1952
        %v1985 = vunpack.c.l.b16 %v1953
        %v1986 = vunpack.c.l.b16 %v1954
        %v1987 = vunpack.c.l.b16 %v1955
        %v1988 = vunpack.c.l.b16 %v1956
        %v1989 = vunpack.c.l.b16 %v1957
        %v1990 = vunpack.c.l.b16 %v1958
        %v1991 = vunpack.c.l.b16 %v1959
        %v1992 = vunpack.c.l.b16 %v1960
        %v1993 = vunpack.c.l.b16 %v1961
        %v1994 = vunpack.c.l.b16 %v1962
        %v1995 = vunpack.c.l.b16 %v1963
        %v1996 = vunpack.c.l.b16 %v1964
        %v1997 = vunpack.c.l.b16 %v1965
        %v1998 = vunpack.c.l.b16 %v1966
        %v1999 = vunpack.c.l.b16 %v1967
        %v2000 = vunpack.c.l.b16 %v1968
        %v2001 = vunpack.c.l.b16 %v1969
        %v2002 = vunpack.c.l.b16 %v1970
        %v2003 = vunpack.c.l.b16 %v1971
        %v2004 = vunpack.c.l.b16 %v1972
        %v2005 = vunpack.c.l.b16 %v1973
        %v2006 = vunpack.c.l.b16 %v1974
        %v2007 = vunpack.c.l.b16 %v1975
        %v2008 = vunpack.c.l.b16 %v1976
        %v2009 = vunpack.c.l.b16 %v1977
        %v2010 = vunpack.c.l.b16 %v1978
        %v2011 = vunpack.c.l.b16 %v1979
        %v2012 = vunpack.c.l.b16 %v1980
        %v2013 = vunpack.c.l.b16 %v1981
        %v2014 = vpack.c.b16 %v1983, %v1982
        %v2015 = vpack.c.b16 %v1985, %v1984
        %v2016 = vpack.c.b16 %v1987, %v1986
        %v2017 = vpack.c.b16 %v1989, %v1988
        %v2018 = vpack.c.b16 %v1991, %v1990
        %v2019 = vpack.c.b16 %v1993, %v1992
        %v2020 = vpack.c.b16 %v1995, %v1994
        %v2021 = vpack.c.b16 %v1997, %v1996
        %v2022 = vpack.c.b16 %v1999, %v1998
        %v2023 = vpack.c.b16 %v2001, %v2000
        %v2024 = vpack.c.b16 %v2003, %v2002
        %v2025 = vpack.c.b16 %v2005, %v2004
        %v2026 = vpack.c.b16 %v2007, %v2006
        %v2027 = vpack.c.b16 %v2009, %v2008
        %v2028 = vpack.c.b16 %v2011, %v2010
        %v2029 = vpack.c.b16 %v2013, %v2012
        %v2030 = vunpack.c.l.b16 %v2014
        %v2031 = vunpack.c.h.b16 %v2014
        %v2032 = vunpack.c.l.b16 0
        %v2033 = vunpack.c.h.b16 0
        %vm2034 = vcmp.ne.s32.totalorder %v2030, %v2032
        %vm2035 = vcmp.ne.s32.totalorder %v2031, %v2033
        %vm2036 = vmpackc.low %vm2035, %vm2034
        %v2037 = vunpack.c.l.b16 %v2015
        %v2038 = vunpack.c.h.b16 %v2015
        %v2039 = vunpack.c.l.b16 0
        %v2040 = vunpack.c.h.b16 0
        %vm2041 = vcmp.ne.s32.totalorder %v2037, %v2039
        %vm2042 = vcmp.ne.s32.totalorder %v2038, %v2040
        %vm2043 = vmpackc.low %vm2042, %vm2041
        %v2044 = vunpack.c.l.b16 %v2016
        %v2045 = vunpack.c.h.b16 %v2016
        %v2046 = vunpack.c.l.b16 0
        %v2047 = vunpack.c.h.b16 0
        %vm2048 = vcmp.ne.s32.totalorder %v2044, %v2046
        %vm2049 = vcmp.ne.s32.totalorder %v2045, %v2047
        %vm2050 = vmpackc.low %vm2049, %vm2048
        %v2051 = vunpack.c.l.b16 %v2017
        %v2052 = vunpack.c.h.b16 %v2017
        %v2053 = vunpack.c.l.b16 0
        %v2054 = vunpack.c.h.b16 0
        %vm2055 = vcmp.ne.s32.totalorder %v2051, %v2053
        %vm2056 = vcmp.ne.s32.totalorder %v2052, %v2054
        %vm2057 = vmpackc.low %vm2056, %vm2055
        %v2058 = vunpack.c.l.b16 %v2018
        %v2059 = vunpack.c.h.b16 %v2018
        %v2060 = vunpack.c.l.b16 0
        %v2061 = vunpack.c.h.b16 0
        %vm2062 = vcmp.ne.s32.totalorder %v2058, %v2060
        %vm2063 = vcmp.ne.s32.totalorder %v2059, %v2061
        %vm2064 = vmpackc.low %vm2063, %vm2062
        %v2065 = vunpack.c.l.b16 %v2019
        %v2066 = vunpack.c.h.b16 %v2019
        %v2067 = vunpack.c.l.b16 0
        %v2068 = vunpack.c.h.b16 0
        %vm2069 = vcmp.ne.s32.totalorder %v2065, %v2067
        %vm2070 = vcmp.ne.s32.totalorder %v2066, %v2068
        %vm2071 = vmpackc.low %vm2070, %vm2069
        %v2072 = vunpack.c.l.b16 %v2020
        %v2073 = vunpack.c.h.b16 %v2020
        %v2074 = vunpack.c.l.b16 0
        %v2075 = vunpack.c.h.b16 0
        %vm2076 = vcmp.ne.s32.totalorder %v2072, %v2074
        %vm2077 = vcmp.ne.s32.totalorder %v2073, %v2075
        %vm2078 = vmpackc.low %vm2077, %vm2076
        %v2079 = vunpack.c.l.b16 %v2021
        %v2080 = vunpack.c.h.b16 %v2021
        %v2081 = vunpack.c.l.b16 0
        %v2082 = vunpack.c.h.b16 0
        %vm2083 = vcmp.ne.s32.totalorder %v2079, %v2081
        %vm2084 = vcmp.ne.s32.totalorder %v2080, %v2082
        %vm2085 = vmpackc.low %vm2084, %vm2083
        %v2086 = vunpack.c.l.b16 %v2022
        %v2087 = vunpack.c.h.b16 %v2022
        %v2088 = vunpack.c.l.b16 0
        %v2089 = vunpack.c.h.b16 0
        %vm2090 = vcmp.ne.s32.totalorder %v2086, %v2088
        %vm2091 = vcmp.ne.s32.totalorder %v2087, %v2089
        %vm2092 = vmpackc.low %vm2091, %vm2090
        %v2093 = vunpack.c.l.b16 %v2023
        %v2094 = vunpack.c.h.b16 %v2023
        %v2095 = vunpack.c.l.b16 0
        %v2096 = vunpack.c.h.b16 0
        %vm2097 = vcmp.ne.s32.totalorder %v2093, %v2095
        %vm2098 = vcmp.ne.s32.totalorder %v2094, %v2096
        %vm2099 = vmpackc.low %vm2098, %vm2097
        %v2100 = vunpack.c.l.b16 %v2024
        %v2101 = vunpack.c.h.b16 %v2024
        %v2102 = vunpack.c.l.b16 0
        %v2103 = vunpack.c.h.b16 0
        %vm2104 = vcmp.ne.s32.totalorder %v2100, %v2102
        %vm2105 = vcmp.ne.s32.totalorder %v2101, %v2103
        %vm2106 = vmpackc.low %vm2105, %vm2104
        %v2107 = vunpack.c.l.b16 %v2025
        %v2108 = vunpack.c.h.b16 %v2025
        %v2109 = vunpack.c.l.b16 0
        %v2110 = vunpack.c.h.b16 0
        %vm2111 = vcmp.ne.s32.totalorder %v2107, %v2109
        %vm2112 = vcmp.ne.s32.totalorder %v2108, %v2110
        %vm2113 = vmpackc.low %vm2112, %vm2111
        %v2114 = vunpack.c.l.b16 %v2026
        %v2115 = vunpack.c.h.b16 %v2026
        %v2116 = vunpack.c.l.b16 0
        %v2117 = vunpack.c.h.b16 0
        %vm2118 = vcmp.ne.s32.totalorder %v2114, %v2116
        %vm2119 = vcmp.ne.s32.totalorder %v2115, %v2117
        %vm2120 = vmpackc.low %vm2119, %vm2118
        %v2121 = vunpack.c.l.b16 %v2027
        %v2122 = vunpack.c.h.b16 %v2027
        %v2123 = vunpack.c.l.b16 0
        %v2124 = vunpack.c.h.b16 0
        %vm2125 = vcmp.ne.s32.totalorder %v2121, %v2123
        %vm2126 = vcmp.ne.s32.totalorder %v2122, %v2124
        %vm2127 = vmpackc.low %vm2126, %vm2125
        %v2128 = vunpack.c.l.b16 %v2028
        %v2129 = vunpack.c.h.b16 %v2028
        %v2130 = vunpack.c.l.b16 0
        %v2131 = vunpack.c.h.b16 0
        %vm2132 = vcmp.ne.s32.totalorder %v2128, %v2130
        %vm2133 = vcmp.ne.s32.totalorder %v2129, %v2131
        %vm2134 = vmpackc.low %vm2133, %vm2132
        %v2135 = vunpack.c.l.b16 %v2029
        %v2136 = vunpack.c.h.b16 %v2029
        %v2137 = vunpack.c.l.b16 0
        %v2138 = vunpack.c.h.b16 0
        %vm2139 = vcmp.ne.s32.totalorder %v2135, %v2137
        %vm2140 = vcmp.ne.s32.totalorder %v2136, %v2138
        %vm2141 = vmpackc.low %vm2140, %vm2139
        %v2142 = vsel %vm2036, %v1725, 0
        %v2143 = vsel %vm2043, %v1678, 0
        %v2144 = vsel %vm2050, %v1680, 0
        %v2145 = vsel %vm2057, %v1682, 0
        %v2146 = vsel %vm2064, %v1684, 0
        %v2147 = vsel %vm2071, %v1686, 0
        %v2148 = vsel %vm2078, %v1688, 0
        %v2149 = vsel %vm2085, %v1690, 0
        %v2150 = vsel %vm2092, %v1692, 0
        %v2151 = vsel %vm2099, %v1694, 0
        %v2152 = vsel %vm2106, %v1696, 0
        %v2153 = vsel %vm2113, %v1698, 0
        %v2154 = vsel %vm2120, %v1700, 0
        %v2155 = vsel %vm2127, %v1702, 0
        %v2156 = vsel %vm2134, %v1704, 0
        %v2157 = vsel %vm2141, %v1706, 0
        %s2158 = scalar_lea.vmem %s4, 4
        %v2159 = vld [vmem:[%s2158] sm:$0x3]
        %v2161 = vsel %vm446, %v2142, 0
        %v2164 = vsel %vm446, %v2143, 0
        %v2167 = vsel %vm446, %v2144, 0
        %v2170 = vsel %vm446, %v2145, 0
        %v2173 = vsel %vm446, %v2146, 0
        %v2176 = vsel %vm446, %v2147, 0
        %v2179 = vsel %vm446, %v2148, 0
        %v2182 = vsel %vm446, %v2149, 0
        %v2185 = vsel %vm446, %v2150, 0
        %v2188 = vsel %vm446, %v2151, 0
        %v2191 = vsel %vm446, %v2152, 0
        %v2194 = vsel %vm446, %v2153, 0
        %v2197 = vsel %vm446, %v2154, 0
        %v2200 = vsel %vm446, %v2155, 0
        %v2203 = vsel %vm446, %v2156, 0
        %v2206 = vsel %vm446, %v2157, 0
        %v2209 = vsel %vm495, %v2159, 0
        %2211 = vmatpush.bf16.msra.mxu0 0
        %2212 = vmatpush.bf16.msra.mxu0 0
        %2213 = vmatpush.bf16.msra.mxu0 0
        %2214 = vmatpush.bf16.msra.mxu0 0
        %2215 = vmatpush.bf16.msra.mxu0 0
        %2216 = vmatpush.bf16.msra.mxu0 0
        %2217 = vmatpush.bf16.msra.mxu0 0
        %2218 = vmatpush.bf16.msra.mxu0 %v2209
        %2219 = vmatmul.bf16.gmra.mxu0 %v2161
        %v2220 = vpop.f32.mrf.mxu0
        %v2221 = vadd.f32 0.0, %v2220
        %v2222 = vpop.f32.mrf.mxu0
        %v2223 = vadd.f32 0.0, %v2222
        %2224 = vmatmul.bf16.gmra.mxu0 %v2164
        %v2225 = vpop.f32.mrf.mxu0
        %v2226 = vadd.f32 0.0, %v2225
        %v2227 = vpop.f32.mrf.mxu0
        %v2228 = vadd.f32 0.0, %v2227
        %2229 = vmatmul.bf16.gmra.mxu0 %v2167
        %v2230 = vpop.f32.mrf.mxu0
        %v2231 = vadd.f32 0.0, %v2230
        %v2232 = vpop.f32.mrf.mxu0
        %v2233 = vadd.f32 0.0, %v2232
        %2234 = vmatmul.bf16.gmra.mxu0 %v2170
        %v2235 = vpop.f32.mrf.mxu0
        %v2236 = vadd.f32 0.0, %v2235
        %v2237 = vpop.f32.mrf.mxu0
        %v2238 = vadd.f32 0.0, %v2237
        %2239 = vmatmul.bf16.gmra.mxu0 %v2173
        %v2240 = vpop.f32.mrf.mxu0
        %v2241 = vadd.f32 0.0, %v2240
        %v2242 = vpop.f32.mrf.mxu0
        %v2243 = vadd.f32 0.0, %v2242
        %2244 = vmatmul.bf16.gmra.mxu0 %v2176
        %v2245 = vpop.f32.mrf.mxu0
        %v2246 = vadd.f32 0.0, %v2245
        %v2247 = vpop.f32.mrf.mxu0
        %v2248 = vadd.f32 0.0, %v2247
        %2249 = vmatmul.bf16.gmra.mxu0 %v2179
        %v2250 = vpop.f32.mrf.mxu0
        %v2251 = vadd.f32 0.0, %v2250
        %v2252 = vpop.f32.mrf.mxu0
        %v2253 = vadd.f32 0.0, %v2252
        %2254 = vmatmul.bf16.gmra.mxu0 %v2182
        %v2255 = vpop.f32.mrf.mxu0
        %v2256 = vadd.f32 0.0, %v2255
        %v2257 = vpop.f32.mrf.mxu0
        %v2258 = vadd.f32 0.0, %v2257
        %2259 = vmatmul.bf16.gmra.mxu0 %v2185
        %v2260 = vpop.f32.mrf.mxu0
        %v2261 = vadd.f32 0.0, %v2260
        %v2262 = vpop.f32.mrf.mxu0
        %v2263 = vadd.f32 0.0, %v2262
        %2264 = vmatmul.bf16.gmra.mxu0 %v2188
        %v2265 = vpop.f32.mrf.mxu0
        %v2266 = vadd.f32 0.0, %v2265
        %v2267 = vpop.f32.mrf.mxu0
        %v2268 = vadd.f32 0.0, %v2267
        %2269 = vmatmul.bf16.gmra.mxu0 %v2191
        %v2270 = vpop.f32.mrf.mxu0
        %v2271 = vadd.f32 0.0, %v2270
        %v2272 = vpop.f32.mrf.mxu0
        %v2273 = vadd.f32 0.0, %v2272
        %2274 = vmatmul.bf16.gmra.mxu0 %v2194
        %v2275 = vpop.f32.mrf.mxu0
        %v2276 = vadd.f32 0.0, %v2275
        %v2277 = vpop.f32.mrf.mxu0
        %v2278 = vadd.f32 0.0, %v2277
        %2279 = vmatmul.bf16.gmra.mxu0 %v2197
        %v2280 = vpop.f32.mrf.mxu0
        %v2281 = vadd.f32 0.0, %v2280
        %v2282 = vpop.f32.mrf.mxu0
        %v2283 = vadd.f32 0.0, %v2282
        %2284 = vmatmul.bf16.gmra.mxu0 %v2200
        %v2285 = vpop.f32.mrf.mxu0
        %v2286 = vadd.f32 0.0, %v2285
        %v2287 = vpop.f32.mrf.mxu0
        %v2288 = vadd.f32 0.0, %v2287
        %2289 = vmatmul.bf16.gmra.mxu0 %v2203
        %v2290 = vpop.f32.mrf.mxu0
        %v2291 = vadd.f32 0.0, %v2290
        %v2292 = vpop.f32.mrf.mxu0
        %v2293 = vadd.f32 0.0, %v2292
        %2294 = vmatmul.bf16.gmra.mxu0 %v2206
        %v2295 = vpop.f32.mrf.mxu0
        %v2296 = vadd.f32 0.0, %v2295
        %v2297 = vpop.f32.mrf.mxu0
        %v2298 = vadd.f32 0.0, %v2297
        %2299 = vdwg.mxu0
        %v2300 = vadd.f32 %v1543, %v2221
        %v2301 = vadd.f32 %v1545, %v2223
        %v2302 = vadd.f32 %v1548, %v2226
        %v2303 = vadd.f32 %v1550, %v2228
        %v2304 = vadd.f32 %v1553, %v2231
        %v2305 = vadd.f32 %v1555, %v2233
        %v2306 = vadd.f32 %v1558, %v2236
        %v2307 = vadd.f32 %v1560, %v2238
        %v2308 = vadd.f32 %v1563, %v2241
        %v2309 = vadd.f32 %v1565, %v2243
        %v2310 = vadd.f32 %v1568, %v2246
        %v2311 = vadd.f32 %v1570, %v2248
        %v2312 = vadd.f32 %v1573, %v2251
        %v2313 = vadd.f32 %v1575, %v2253
        %v2314 = vadd.f32 %v1578, %v2256
        %v2315 = vadd.f32 %v1580, %v2258
        %v2316 = vadd.f32 %v1583, %v2261
        %v2317 = vadd.f32 %v1585, %v2263
        %v2318 = vadd.f32 %v1588, %v2266
        %v2319 = vadd.f32 %v1590, %v2268
        %v2320 = vadd.f32 %v1593, %v2271
        %v2321 = vadd.f32 %v1595, %v2273
        %v2322 = vadd.f32 %v1598, %v2276
        %v2323 = vadd.f32 %v1600, %v2278
        %v2324 = vadd.f32 %v1603, %v2281
        %v2325 = vadd.f32 %v1605, %v2283
        %v2326 = vadd.f32 %v1608, %v2286
        %v2327 = vadd.f32 %v1610, %v2288
        %v2328 = vadd.f32 %v1613, %v2291
        %v2329 = vadd.f32 %v1615, %v2293
        %v2330 = vadd.f32 %v1618, %v2296
        %v2331 = vadd.f32 %v1620, %v2298
        %v2333 = vunpack.c.l.b16 %v651
        %v2334 = vpack.c.b16 %v2333, %v1623
        %v2336 = vshrl.u32 %v2334, 16
        %v2338 = vrot.slane %v2336, 7
        %v2339 = vshll.u32 %v2334, 16
        %v2341 = vor.u32 %v2338, %v2339
        %v2342 = vsel %vm727, %v842, %v2341
        %2343 = vrot.lane.b32.xlu0 %v2342, 120
        %v2344 = vpop.permute.xlu0 %2343
        %vm2346 = vmpackc.low %vm1055, %vm1055
        %vm2347 = vmpackc.low %vm1056, %vm1056
        %v2348 = vsel %vm2346, 65537, 0
        %v2349 = vsel %vm2347, 65537, 0
        %v2350 = vunpack.c.l.b16 %v2348
        %v2351 = vunpack.c.l.b16 %v2349
        %v2352 = vpack.c.b16 %v2351, %v2350
        %v2353 = vunpack.c.l.b16 %v2352
        %v2354 = vunpack.c.h.b16 %v2352
        %v2355 = vunpack.c.l.b16 0
        %v2356 = vunpack.c.h.b16 0
        %vm2357 = vcmp.ne.s32.totalorder %v2353, %v2355
        %vm2358 = vcmp.ne.s32.totalorder %v2354, %v2356
        %vm2359 = vmpackc.low %vm2358, %vm2357
        %v2360 = vsel %vm2359, %v894, 0
        %v2361 = vsel %vm1198, %v850, 0
        %v2362 = vsel %vm1205, %v852, 0
        %v2363 = vsel %vm1212, %v854, 0
        %v2364 = vsel %vm1219, %v856, 0
        %v2365 = vsel %vm1226, %v858, 0
        %v2366 = vsel %vm1233, %v860, 0
        %v2367 = vsel %vm1240, %v862, 0
        %v2368 = vsel %vm1247, %v864, 0
        %v2369 = vsel %vm1254, %v866, 0
        %v2370 = vsel %vm1261, %v868, 0
        %v2371 = vsel %vm1268, %v870, 0
        %v2372 = vsel %vm1275, %v872, 0
        %v2373 = vsel %vm1282, %v874, 0
        %v2374 = vsel %vm1289, %v876, 0
        %v2375 = vsel %vm1296, %v2344, 0
        %s2376 = scalar_lea.vmem %s4, 6
        %v2377 = vld [vmem:[%s2376] sm:$0x3]
        %v2379 = vsel %vm446, %v2360, 0
        %v2382 = vsel %vm446, %v2361, 0
        %v2385 = vsel %vm446, %v2362, 0
        %v2388 = vsel %vm446, %v2363, 0
        %v2391 = vsel %vm446, %v2364, 0
        %v2394 = vsel %vm446, %v2365, 0
        %v2397 = vsel %vm446, %v2366, 0
        %v2400 = vsel %vm446, %v2367, 0
        %v2403 = vsel %vm446, %v2368, 0
        %v2406 = vsel %vm446, %v2369, 0
        %v2409 = vsel %vm446, %v2370, 0
        %v2412 = vsel %vm446, %v2371, 0
        %v2415 = vsel %vm446, %v2372, 0
        %v2418 = vsel %vm446, %v2373, 0
        %v2421 = vsel %vm446, %v2374, 0
        %v2424 = vsel %vm446, %v2375, 0
        %v2427 = vsel %vm495, %v2377, 0
        %2429 = vmatpush.bf16.msra.mxu0 0
        %2430 = vmatpush.bf16.msra.mxu0 0
        %2431 = vmatpush.bf16.msra.mxu0 0
        %2432 = vmatpush.bf16.msra.mxu0 0
        %2433 = vmatpush.bf16.msra.mxu0 0
        %2434 = vmatpush.bf16.msra.mxu0 0
        %2435 = vmatpush.bf16.msra.mxu0 0
        %2436 = vmatpush.bf16.msra.mxu0 %v2427
        %2437 = vmatmul.bf16.gmra.mxu0 %v2379
        %v2438 = vpop.f32.mrf.mxu0
        %v2439 = vadd.f32 0.0, %v2438
        %v2440 = vpop.f32.mrf.mxu0
        %v2441 = vadd.f32 0.0, %v2440
        %2442 = vmatmul.bf16.gmra.mxu0 %v2382
        %v2443 = vpop.f32.mrf.mxu0
        %v2444 = vadd.f32 0.0, %v2443
        %v2445 = vpop.f32.mrf.mxu0
        %v2446 = vadd.f32 0.0, %v2445
        %2447 = vmatmul.bf16.gmra.mxu0 %v2385
        %v2448 = vpop.f32.mrf.mxu0
        %v2449 = vadd.f32 0.0, %v2448
        %v2450 = vpop.f32.mrf.mxu0
        %v2451 = vadd.f32 0.0, %v2450
        %2452 = vmatmul.bf16.gmra.mxu0 %v2388
        %v2453 = vpop.f32.mrf.mxu0
        %v2454 = vadd.f32 0.0, %v2453
        %v2455 = vpop.f32.mrf.mxu0
        %v2456 = vadd.f32 0.0, %v2455
        %2457 = vmatmul.bf16.gmra.mxu0 %v2391
        %v2458 = vpop.f32.mrf.mxu0
        %v2459 = vadd.f32 0.0, %v2458
        %v2460 = vpop.f32.mrf.mxu0
        %v2461 = vadd.f32 0.0, %v2460
        %2462 = vmatmul.bf16.gmra.mxu0 %v2394
        %v2463 = vpop.f32.mrf.mxu0
        %v2464 = vadd.f32 0.0, %v2463
        %v2465 = vpop.f32.mrf.mxu0
        %v2466 = vadd.f32 0.0, %v2465
        %2467 = vmatmul.bf16.gmra.mxu0 %v2397
        %v2468 = vpop.f32.mrf.mxu0
        %v2469 = vadd.f32 0.0, %v2468
        %v2470 = vpop.f32.mrf.mxu0
        %v2471 = vadd.f32 0.0, %v2470
        %2472 = vmatmul.bf16.gmra.mxu0 %v2400
        %v2473 = vpop.f32.mrf.mxu0
        %v2474 = vadd.f32 0.0, %v2473
        %v2475 = vpop.f32.mrf.mxu0
        %v2476 = vadd.f32 0.0, %v2475
        %2477 = vmatmul.bf16.gmra.mxu0 %v2403
        %v2478 = vpop.f32.mrf.mxu0
        %v2479 = vadd.f32 0.0, %v2478
        %v2480 = vpop.f32.mrf.mxu0
        %v2481 = vadd.f32 0.0, %v2480
        %2482 = vmatmul.bf16.gmra.mxu0 %v2406
        %v2483 = vpop.f32.mrf.mxu0
        %v2484 = vadd.f32 0.0, %v2483
        %v2485 = vpop.f32.mrf.mxu0
        %v2486 = vadd.f32 0.0, %v2485
        %2487 = vmatmul.bf16.gmra.mxu0 %v2409
        %v2488 = vpop.f32.mrf.mxu0
        %v2489 = vadd.f32 0.0, %v2488
        %v2490 = vpop.f32.mrf.mxu0
        %v2491 = vadd.f32 0.0, %v2490
        %2492 = vmatmul.bf16.gmra.mxu0 %v2412
        %v2493 = vpop.f32.mrf.mxu0
        %v2494 = vadd.f32 0.0, %v2493
        %v2495 = vpop.f32.mrf.mxu0
        %v2496 = vadd.f32 0.0, %v2495
        %2497 = vmatmul.bf16.gmra.mxu0 %v2415
        %v2498 = vpop.f32.mrf.mxu0
        %v2499 = vadd.f32 0.0, %v2498
        %v2500 = vpop.f32.mrf.mxu0
        %v2501 = vadd.f32 0.0, %v2500
        %2502 = vmatmul.bf16.gmra.mxu0 %v2418
        %v2503 = vpop.f32.mrf.mxu0
        %v2504 = vadd.f32 0.0, %v2503
        %v2505 = vpop.f32.mrf.mxu0
        %v2506 = vadd.f32 0.0, %v2505
        %2507 = vmatmul.bf16.gmra.mxu0 %v2421
        %v2508 = vpop.f32.mrf.mxu0
        %v2509 = vadd.f32 0.0, %v2508
        %v2510 = vpop.f32.mrf.mxu0
        %v2511 = vadd.f32 0.0, %v2510
        %2512 = vmatmul.bf16.gmra.mxu0 %v2424
        %v2513 = vpop.f32.mrf.mxu0
        %v2514 = vadd.f32 0.0, %v2513
        %v2515 = vpop.f32.mrf.mxu0
        %v2516 = vadd.f32 0.0, %v2515
        %2517 = vdwg.mxu0
        %v2518 = vadd.f32 %v2300, %v2439
        %v2519 = vadd.f32 %v2301, %v2441
        %v2520 = vadd.f32 %v2302, %v2444
        %v2521 = vadd.f32 %v2303, %v2446
        %v2522 = vadd.f32 %v2304, %v2449
        %v2523 = vadd.f32 %v2305, %v2451
        %v2524 = vadd.f32 %v2306, %v2454
        %v2525 = vadd.f32 %v2307, %v2456
        %v2526 = vadd.f32 %v2308, %v2459
        %v2527 = vadd.f32 %v2309, %v2461
        %v2528 = vadd.f32 %v2310, %v2464
        %v2529 = vadd.f32 %v2311, %v2466
        %v2530 = vadd.f32 %v2312, %v2469
        %v2531 = vadd.f32 %v2313, %v2471
        %v2532 = vadd.f32 %v2314, %v2474
        %v2533 = vadd.f32 %v2315, %v2476
        %v2534 = vadd.f32 %v2316, %v2479
        %v2535 = vadd.f32 %v2317, %v2481
        %v2536 = vadd.f32 %v2318, %v2484
        %v2537 = vadd.f32 %v2319, %v2486
        %v2538 = vadd.f32 %v2320, %v2489
        %v2539 = vadd.f32 %v2321, %v2491
        %v2540 = vadd.f32 %v2322, %v2494
        %v2541 = vadd.f32 %v2323, %v2496
        %v2542 = vadd.f32 %v2324, %v2499
        %v2543 = vadd.f32 %v2325, %v2501
        %v2544 = vadd.f32 %v2326, %v2504
        %v2545 = vadd.f32 %v2327, %v2506
        %v2546 = vadd.f32 %v2328, %v2509
        %v2547 = vadd.f32 %v2329, %v2511
        %v2548 = vadd.f32 %v2330, %v2514
        %v2549 = vadd.f32 %v2331, %v2516
        %s2550 = scalar_lea.vmem %s4, 8
        %v2551 = vld [vmem:[%s2550] sm:$0x3]
        %2552 = vrot.lane.b32.xlu0 %v2334, 120
        %v2553 = vpop.permute.xlu0 %2552
        %v2555 = vsel %vm446, %v2553, 0
        %v2558 = vsel %vm495, %v2551, 0
        %2560 = vmatpush.bf16.msra.mxu0 0
        %2561 = vmatpush.bf16.msra.mxu0 0
        %2562 = vmatpush.bf16.msra.mxu0 0
        %2563 = vmatpush.bf16.msra.mxu0 0
        %2564 = vmatpush.bf16.msra.mxu0 0
        %2565 = vmatpush.bf16.msra.mxu0 0
        %2566 = vmatpush.bf16.msra.mxu0 0
        %2567 = vmatpush.bf16.msra.mxu0 %v2558
        %2568 = vmatmul.bf16.gmra.mxu0 %v1349
        %v2569 = vpop.f32.mrf.mxu0
        %v2570 = vadd.f32 0.0, %v2569
        %v2571 = vpop.f32.mrf.mxu0
        %v2572 = vadd.f32 0.0, %v2571
        %2573 = vmatmul.bf16.gmra.mxu0 %v1352
        %v2574 = vpop.f32.mrf.mxu0
        %v2575 = vadd.f32 0.0, %v2574
        %v2576 = vpop.f32.mrf.mxu0
        %v2577 = vadd.f32 0.0, %v2576
        %2578 = vmatmul.bf16.gmra.mxu0 %v1355
        %v2579 = vpop.f32.mrf.mxu0
        %v2580 = vadd.f32 0.0, %v2579
        %v2581 = vpop.f32.mrf.mxu0
        %v2582 = vadd.f32 0.0, %v2581
        %2583 = vmatmul.bf16.gmra.mxu0 %v1358
        %v2584 = vpop.f32.mrf.mxu0
        %v2585 = vadd.f32 0.0, %v2584
        %v2586 = vpop.f32.mrf.mxu0
        %v2587 = vadd.f32 0.0, %v2586
        %2588 = vmatmul.bf16.gmra.mxu0 %v1361
        %v2589 = vpop.f32.mrf.mxu0
        %v2590 = vadd.f32 0.0, %v2589
        %v2591 = vpop.f32.mrf.mxu0
        %v2592 = vadd.f32 0.0, %v2591
        %2593 = vmatmul.bf16.gmra.mxu0 %v1364
        %v2594 = vpop.f32.mrf.mxu0
        %v2595 = vadd.f32 0.0, %v2594
        %v2596 = vpop.f32.mrf.mxu0
        %v2597 = vadd.f32 0.0, %v2596
        %2598 = vmatmul.bf16.gmra.mxu0 %v1367
        %v2599 = vpop.f32.mrf.mxu0
        %v2600 = vadd.f32 0.0, %v2599
        %v2601 = vpop.f32.mrf.mxu0
        %v2602 = vadd.f32 0.0, %v2601
        %2603 = vmatmul.bf16.gmra.mxu0 %v1370
        %v2604 = vpop.f32.mrf.mxu0
        %v2605 = vadd.f32 0.0, %v2604
        %v2606 = vpop.f32.mrf.mxu0
        %v2607 = vadd.f32 0.0, %v2606
        %2608 = vmatmul.bf16.gmra.mxu0 %v1373
        %v2609 = vpop.f32.mrf.mxu0
        %v2610 = vadd.f32 0.0, %v2609
        %v2611 = vpop.f32.mrf.mxu0
        %v2612 = vadd.f32 0.0, %v2611
        %2613 = vmatmul.bf16.gmra.mxu0 %v1376
        %v2614 = vpop.f32.mrf.mxu0
        %v2615 = vadd.f32 0.0, %v2614
        %v2616 = vpop.f32.mrf.mxu0
        %v2617 = vadd.f32 0.0, %v2616
        %2618 = vmatmul.bf16.gmra.mxu0 %v1379
        %v2619 = vpop.f32.mrf.mxu0
        %v2620 = vadd.f32 0.0, %v2619
        %v2621 = vpop.f32.mrf.mxu0
        %v2622 = vadd.f32 0.0, %v2621
        %2623 = vmatmul.bf16.gmra.mxu0 %v1382
        %v2624 = vpop.f32.mrf.mxu0
        %v2625 = vadd.f32 0.0, %v2624
        %v2626 = vpop.f32.mrf.mxu0
        %v2627 = vadd.f32 0.0, %v2626
        %2628 = vmatmul.bf16.gmra.mxu0 %v1385
        %v2629 = vpop.f32.mrf.mxu0
        %v2630 = vadd.f32 0.0, %v2629
        %v2631 = vpop.f32.mrf.mxu0
        %v2632 = vadd.f32 0.0, %v2631
        %2633 = vmatmul.bf16.gmra.mxu0 %v1388
        %v2634 = vpop.f32.mrf.mxu0
        %v2635 = vadd.f32 0.0, %v2634
        %v2636 = vpop.f32.mrf.mxu0
        %v2637 = vadd.f32 0.0, %v2636
        %2638 = vmatmul.bf16.gmra.mxu0 %v1391
        %v2639 = vpop.f32.mrf.mxu0
        %v2640 = vadd.f32 0.0, %v2639
        %v2641 = vpop.f32.mrf.mxu0
        %v2642 = vadd.f32 0.0, %v2641
        %2643 = vmatmul.bf16.gmra.mxu0 %v2555
        %v2644 = vpop.f32.mrf.mxu0
        %v2645 = vadd.f32 0.0, %v2644
        %v2646 = vpop.f32.mrf.mxu0
        %v2647 = vadd.f32 0.0, %v2646
        %2648 = vdwg.mxu0
        %v2649 = vadd.f32 %v2518, %v2570
        %v2650 = vadd.f32 %v2519, %v2572
        %v2651 = vadd.f32 %v2520, %v2575
        %v2652 = vadd.f32 %v2521, %v2577
        %v2653 = vadd.f32 %v2522, %v2580
        %v2654 = vadd.f32 %v2523, %v2582
        %v2655 = vadd.f32 %v2524, %v2585
        %v2656 = vadd.f32 %v2525, %v2587
        %v2657 = vadd.f32 %v2526, %v2590
        %v2658 = vadd.f32 %v2527, %v2592
        %v2659 = vadd.f32 %v2528, %v2595
        %v2660 = vadd.f32 %v2529, %v2597
        %v2661 = vadd.f32 %v2530, %v2600
        %v2662 = vadd.f32 %v2531, %v2602
        %v2663 = vadd.f32 %v2532, %v2605
        %v2664 = vadd.f32 %v2533, %v2607
        %v2665 = vadd.f32 %v2534, %v2610
        %v2666 = vadd.f32 %v2535, %v2612
        %v2667 = vadd.f32 %v2536, %v2615
        %v2668 = vadd.f32 %v2537, %v2617
        %v2669 = vadd.f32 %v2538, %v2620
        %v2670 = vadd.f32 %v2539, %v2622
        %v2671 = vadd.f32 %v2540, %v2625
        %v2672 = vadd.f32 %v2541, %v2627
        %v2673 = vadd.f32 %v2542, %v2630
        %v2674 = vadd.f32 %v2543, %v2632
        %v2675 = vadd.f32 %v2544, %v2635
        %v2676 = vadd.f32 %v2545, %v2637
        %v2677 = vadd.f32 %v2546, %v2640
        %v2678 = vadd.f32 %v2547, %v2642
        %v2679 = vadd.f32 %v2548, %v2645
        %v2680 = vadd.f32 %v2549, %v2647
        %v2681 = vrot.slane %v2339, 1
        %v2682 = vsel %vm1625, %v1669, %v2681
        %v2683 = vor.u32 %v2336, %v2681
        %v2700 = vsel %vm1724, %v2683, 0
        %v2701 = vsel %vm2036, %v1629, 0
        %v2702 = vsel %vm2043, %v1632, 0
        %v2703 = vsel %vm2050, %v1635, 0
        %v2704 = vsel %vm2057, %v1638, 0
        %v2705 = vsel %vm2064, %v1641, 0
        %v2706 = vsel %vm2071, %v1644, 0
        %v2707 = vsel %vm2078, %v1647, 0
        %v2708 = vsel %vm2085, %v1650, 0
        %v2709 = vsel %vm2092, %v1653, 0
        %v2710 = vsel %vm2099, %v1656, 0
        %v2711 = vsel %vm2106, %v1659, 0
        %v2712 = vsel %vm2113, %v1662, 0
        %v2713 = vsel %vm2120, %v1665, 0
        %v2714 = vsel %vm2127, %v1668, 0
        %v2715 = vsel %vm2134, %v2682, 0
        %v2716 = vsel %vm2141, %v2700, 0
        %s2717 = scalar_lea.vmem %s4, 10
        %v2718 = vld [vmem:[%s2717] sm:$0x3]
        %2735 = vrot.lane.b32.xlu0 %v2701, 120
        %v2736 = vpop.permute.xlu0 %2735
        %2737 = vrot.lane.b32.xlu0 %v2702, 120
        %v2738 = vpop.permute.xlu0 %2737
        %2739 = vrot.lane.b32.xlu0 %v2703, 120
        %v2740 = vpop.permute.xlu0 %2739
        %2741 = vrot.lane.b32.xlu0 %v2704, 120
        %v2742 = vpop.permute.xlu0 %2741
        %2743 = vrot.lane.b32.xlu0 %v2705, 120
        %v2744 = vpop.permute.xlu0 %2743
        %2745 = vrot.lane.b32.xlu0 %v2706, 120
        %v2746 = vpop.permute.xlu0 %2745
        %2747 = vrot.lane.b32.xlu0 %v2707, 120
        %v2748 = vpop.permute.xlu0 %2747
        %2749 = vrot.lane.b32.xlu0 %v2708, 120
        %v2750 = vpop.permute.xlu0 %2749
        %2751 = vrot.lane.b32.xlu0 %v2709, 120
        %v2752 = vpop.permute.xlu0 %2751
        %2753 = vrot.lane.b32.xlu0 %v2710, 120
        %v2754 = vpop.permute.xlu0 %2753
        %2755 = vrot.lane.b32.xlu0 %v2711, 120
        %v2756 = vpop.permute.xlu0 %2755
        %2757 = vrot.lane.b32.xlu0 %v2712, 120
        %v2758 = vpop.permute.xlu0 %2757
        %2759 = vrot.lane.b32.xlu0 %v2713, 120
        %v2760 = vpop.permute.xlu0 %2759
        %2761 = vrot.lane.b32.xlu0 %v2714, 120
        %v2762 = vpop.permute.xlu0 %2761
        %2763 = vrot.lane.b32.xlu0 %v2715, 120
        %v2764 = vpop.permute.xlu0 %2763
        %2765 = vrot.lane.b32.xlu0 %v2716, 120
        %v2766 = vpop.permute.xlu0 %2765
        %v2768 = vsel %vm446, %v2736, 0
        %v2771 = vsel %vm446, %v2738, 0
        %v2774 = vsel %vm446, %v2740, 0
        %v2777 = vsel %vm446, %v2742, 0
        %v2780 = vsel %vm446, %v2744, 0
        %v2783 = vsel %vm446, %v2746, 0
        %v2786 = vsel %vm446, %v2748, 0
        %v2789 = vsel %vm446, %v2750, 0
        %v2792 = vsel %vm446, %v2752, 0
        %v2795 = vsel %vm446, %v2754, 0
        %v2798 = vsel %vm446, %v2756, 0
        %v2801 = vsel %vm446, %v2758, 0
        %v2804 = vsel %vm446, %v2760, 0
        %v2807 = vsel %vm446, %v2762, 0
        %v2810 = vsel %vm446, %v2764, 0
        %v2813 = vsel %vm446, %v2766, 0
        %v2816 = vsel %vm495, %v2718, 0
        %2818 = vmatpush.bf16.msra.mxu0 0
        %2819 = vmatpush.bf16.msra.mxu0 0
        %2820 = vmatpush.bf16.msra.mxu0 0
        %2821 = vmatpush.bf16.msra.mxu0 0
        %2822 = vmatpush.bf16.msra.mxu0 0
        %2823 = vmatpush.bf16.msra.mxu0 0
        %2824 = vmatpush.bf16.msra.mxu0 0
        %2825 = vmatpush.bf16.msra.mxu0 %v2816
        %2826 = vmatmul.bf16.gmra.mxu0 %v2768
        %v2827 = vpop.f32.mrf.mxu0
        %v2828 = vadd.f32 0.0, %v2827
        %v2829 = vpop.f32.mrf.mxu0
        %v2830 = vadd.f32 0.0, %v2829
        %2831 = vmatmul.bf16.gmra.mxu0 %v2771
        %v2832 = vpop.f32.mrf.mxu0
        %v2833 = vadd.f32 0.0, %v2832
        %v2834 = vpop.f32.mrf.mxu0
        %v2835 = vadd.f32 0.0, %v2834
        %2836 = vmatmul.bf16.gmra.mxu0 %v2774
        %v2837 = vpop.f32.mrf.mxu0
        %v2838 = vadd.f32 0.0, %v2837
        %v2839 = vpop.f32.mrf.mxu0
        %v2840 = vadd.f32 0.0, %v2839
        %2841 = vmatmul.bf16.gmra.mxu0 %v2777
        %v2842 = vpop.f32.mrf.mxu0
        %v2843 = vadd.f32 0.0, %v2842
        %v2844 = vpop.f32.mrf.mxu0
        %v2845 = vadd.f32 0.0, %v2844
        %2846 = vmatmul.bf16.gmra.mxu0 %v2780
        %v2847 = vpop.f32.mrf.mxu0
        %v2848 = vadd.f32 0.0, %v2847
        %v2849 = vpop.f32.mrf.mxu0
        %v2850 = vadd.f32 0.0, %v2849
        %2851 = vmatmul.bf16.gmra.mxu0 %v2783
        %v2852 = vpop.f32.mrf.mxu0
        %v2853 = vadd.f32 0.0, %v2852
        %v2854 = vpop.f32.mrf.mxu0
        %v2855 = vadd.f32 0.0, %v2854
        %2856 = vmatmul.bf16.gmra.mxu0 %v2786
        %v2857 = vpop.f32.mrf.mxu0
        %v2858 = vadd.f32 0.0, %v2857
        %v2859 = vpop.f32.mrf.mxu0
        %v2860 = vadd.f32 0.0, %v2859
        %2861 = vmatmul.bf16.gmra.mxu0 %v2789
        %v2862 = vpop.f32.mrf.mxu0
        %v2863 = vadd.f32 0.0, %v2862
        %v2864 = vpop.f32.mrf.mxu0
        %v2865 = vadd.f32 0.0, %v2864
        %2866 = vmatmul.bf16.gmra.mxu0 %v2792
        %v2867 = vpop.f32.mrf.mxu0
        %v2868 = vadd.f32 0.0, %v2867
        %v2869 = vpop.f32.mrf.mxu0
        %v2870 = vadd.f32 0.0, %v2869
        %2871 = vmatmul.bf16.gmra.mxu0 %v2795
        %v2872 = vpop.f32.mrf.mxu0
        %v2873 = vadd.f32 0.0, %v2872
        %v2874 = vpop.f32.mrf.mxu0
        %v2875 = vadd.f32 0.0, %v2874
        %2876 = vmatmul.bf16.gmra.mxu0 %v2798
        %v2877 = vpop.f32.mrf.mxu0
        %v2878 = vadd.f32 0.0, %v2877
        %v2879 = vpop.f32.mrf.mxu0
        %v2880 = vadd.f32 0.0, %v2879
        %2881 = vmatmul.bf16.gmra.mxu0 %v2801
        %v2882 = vpop.f32.mrf.mxu0
        %v2883 = vadd.f32 0.0, %v2882
        %v2884 = vpop.f32.mrf.mxu0
        %v2885 = vadd.f32 0.0, %v2884
        %2886 = vmatmul.bf16.gmra.mxu0 %v2804
        %v2887 = vpop.f32.mrf.mxu0
        %v2888 = vadd.f32 0.0, %v2887
        %v2889 = vpop.f32.mrf.mxu0
        %v2890 = vadd.f32 0.0, %v2889
        %2891 = vmatmul.bf16.gmra.mxu0 %v2807
        %v2892 = vpop.f32.mrf.mxu0
        %v2893 = vadd.f32 0.0, %v2892
        %v2894 = vpop.f32.mrf.mxu0
        %v2895 = vadd.f32 0.0, %v2894
        %2896 = vmatmul.bf16.gmra.mxu0 %v2810
        %v2897 = vpop.f32.mrf.mxu0
        %v2898 = vadd.f32 0.0, %v2897
        %v2899 = vpop.f32.mrf.mxu0
        %v2900 = vadd.f32 0.0, %v2899
        %2901 = vmatmul.bf16.gmra.mxu0 %v2813
        %v2902 = vpop.f32.mrf.mxu0
        %v2903 = vadd.f32 0.0, %v2902
        %v2904 = vpop.f32.mrf.mxu0
        %v2905 = vadd.f32 0.0, %v2904
        %2906 = vdwg.mxu0
        %v2907 = vadd.f32 %v2649, %v2828
        %v2908 = vadd.f32 %v2650, %v2830
        %v2909 = vadd.f32 %v2651, %v2833
        %v2910 = vadd.f32 %v2652, %v2835
        %v2911 = vadd.f32 %v2653, %v2838
        %v2912 = vadd.f32 %v2654, %v2840
        %v2913 = vadd.f32 %v2655, %v2843
        %v2914 = vadd.f32 %v2656, %v2845
        %v2915 = vadd.f32 %v2657, %v2848
        %v2916 = vadd.f32 %v2658, %v2850
        %v2917 = vadd.f32 %v2659, %v2853
        %v2918 = vadd.f32 %v2660, %v2855
        %v2919 = vadd.f32 %v2661, %v2858
        %v2920 = vadd.f32 %v2662, %v2860
        %v2921 = vadd.f32 %v2663, %v2863
        %v2922 = vadd.f32 %v2664, %v2865
        %v2923 = vadd.f32 %v2665, %v2868
        %v2924 = vadd.f32 %v2666, %v2870
        %v2925 = vadd.f32 %v2667, %v2873
        %v2926 = vadd.f32 %v2668, %v2875
        %v2927 = vadd.f32 %v2669, %v2878
        %v2928 = vadd.f32 %v2670, %v2880
        %v2929 = vadd.f32 %v2671, %v2883
        %v2930 = vadd.f32 %v2672, %v2885
        %v2931 = vadd.f32 %v2673, %v2888
        %v2932 = vadd.f32 %v2674, %v2890
        %v2933 = vadd.f32 %v2675, %v2893
        %v2934 = vadd.f32 %v2676, %v2895
        %v2935 = vadd.f32 %v2677, %v2898
        %v2936 = vadd.f32 %v2678, %v2900
        %v2937 = vadd.f32 %v2679, %v2903
        %v2938 = vadd.f32 %v2680, %v2905
        %v2939 = vpack.c.b16 %v684, %v683
        %v2940 = vpack.c.b16 %v686, %v685
        %v2941 = vpack.c.b16 %v688, %v687
        %v2942 = vpack.c.b16 %v690, %v689
        %v2943 = vpack.c.b16 %v692, %v691
        %v2944 = vpack.c.b16 %v694, %v693
        %v2945 = vpack.c.b16 %v696, %v695
        %v2946 = vpack.c.b16 %v698, %v697
        %v2947 = vpack.c.b16 %v700, %v699
        %v2948 = vpack.c.b16 %v702, %v701
        %v2949 = vpack.c.b16 %v704, %v703
        %v2950 = vpack.c.b16 %v706, %v705
        %v2951 = vpack.c.b16 %v708, %v707
        %v2952 = vpack.c.b16 %v710, %v709
        %v2953 = vpack.c.b16 %v1623, %v711
        %v2954 = vpack.c.b16 %v2333, %v2333
        %vm2955 = vsmask.f32 4352
        %v2957 = vshrl.u32 %v2939, 16
        %v2959 = vrot.slane %v2957, 3
        %v2960 = vshll.u32 %v2939, 16
        %v2962 = vrot.slane %v2960, 4
        %v2963 = vor.u32 %v2959, %v2962
        %v2965 = vshrl.u32 %v2940, 16
        %v2967 = vrot.slane %v2965, 3
        %v2968 = vshll.u32 %v2940, 16
        %v2970 = vrot.slane %v2968, 4
        %v2971 = vor.u32 %v2967, %v2970
        %v2972 = vsel %vm2955, %v2963, %v2971
        %v2974 = vshrl.u32 %v2941, 16
        %v2976 = vrot.slane %v2974, 3
        %v2977 = vshll.u32 %v2941, 16
        %v2979 = vrot.slane %v2977, 4
        %v2980 = vor.u32 %v2976, %v2979
        %v2981 = vsel %vm2955, %v2971, %v2980
        %v2983 = vshrl.u32 %v2942, 16
        %v2985 = vrot.slane %v2983, 3
        %v2986 = vshll.u32 %v2942, 16
        %v2988 = vrot.slane %v2986, 4
        %v2989 = vor.u32 %v2985, %v2988
        %v2990 = vsel %vm2955, %v2980, %v2989
        %v2992 = vshrl.u32 %v2943, 16
        %v2994 = vrot.slane %v2992, 3
        %v2995 = vshll.u32 %v2943, 16
        %v2997 = vrot.slane %v2995, 4
        %v2998 = vor.u32 %v2994, %v2997
        %v2999 = vsel %vm2955, %v2989, %v2998
        %v3001 = vshrl.u32 %v2944, 16
        %v3003 = vrot.slane %v3001, 3
        %v3004 = vshll.u32 %v2944, 16
        %v3006 = vrot.slane %v3004, 4
        %v3007 = vor.u32 %v3003, %v3006
        %v3008 = vsel %vm2955, %v2998, %v3007
        %v3010 = vshrl.u32 %v2945, 16
        %v3012 = vrot.slane %v3010, 3
        %v3013 = vshll.u32 %v2945, 16
        %v3015 = vrot.slane %v3013, 4
        %v3016 = vor.u32 %v3012, %v3015
        %v3017 = vsel %vm2955, %v3007, %v3016
        %v3019 = vshrl.u32 %v2946, 16
        %v3021 = vrot.slane %v3019, 3
        %v3022 = vshll.u32 %v2946, 16
        %v3024 = vrot.slane %v3022, 4
        %v3025 = vor.u32 %v3021, %v3024
        %v3026 = vsel %vm2955, %v3016, %v3025
        %v3028 = vshrl.u32 %v2947, 16
        %v3030 = vrot.slane %v3028, 3
        %v3031 = vshll.u32 %v2947, 16
        %v3033 = vrot.slane %v3031, 4
        %v3034 = vor.u32 %v3030, %v3033
        %v3035 = vsel %vm2955, %v3025, %v3034
        %v3037 = vshrl.u32 %v2948, 16
        %v3039 = vrot.slane %v3037, 3
        %v3040 = vshll.u32 %v2948, 16
        %v3042 = vrot.slane %v3040, 4
        %v3043 = vor.u32 %v3039, %v3042
        %v3044 = vsel %vm2955, %v3034, %v3043
        %v3046 = vshrl.u32 %v2949, 16
        %v3048 = vrot.slane %v3046, 3
        %v3049 = vshll.u32 %v2949, 16
        %v3051 = vrot.slane %v3049, 4
        %v3052 = vor.u32 %v3048, %v3051
        %v3053 = vsel %vm2955, %v3043, %v3052
        %v3055 = vshrl.u32 %v2950, 16
        %v3057 = vrot.slane %v3055, 3
        %v3058 = vshll.u32 %v2950, 16
        %v3060 = vrot.slane %v3058, 4
        %v3061 = vor.u32 %v3057, %v3060
        %v3062 = vsel %vm2955, %v3052, %v3061
        %v3064 = vshrl.u32 %v2951, 16
        %v3066 = vrot.slane %v3064, 3
        %v3067 = vshll.u32 %v2951, 16
        %v3069 = vrot.slane %v3067, 4
        %v3070 = vor.u32 %v3066, %v3069
        %v3071 = vsel %vm2955, %v3061, %v3070
        %v3073 = vshrl.u32 %v2952, 16
        %v3075 = vrot.slane %v3073, 3
        %v3076 = vshll.u32 %v2952, 16
        %v3078 = vrot.slane %v3076, 4
        %v3079 = vor.u32 %v3075, %v3078
        %v3080 = vsel %vm2955, %v3070, %v3079
        %v3082 = vshrl.u32 %v2953, 16
        %v3084 = vrot.slane %v3082, 3
        %v3085 = vshll.u32 %v2953, 16
        %v3087 = vrot.slane %v3085, 4
        %v3088 = vor.u32 %v3084, %v3087
        %v3089 = vsel %vm2955, %v3079, %v3088
        %v3091 = vshrl.u32 %v2954, 16
        %v3093 = vrot.slane %v3091, 3
        %v3094 = vshll.u32 %v2954, 16
        %v3096 = vrot.slane %v3094, 4
        %v3097 = vor.u32 %v3093, %v3096
        %v3098 = vsel %vm2955, %v3088, %v3097
        %v3115 = vsel %vm893, %v3093, 0
        %v3116 = vsel %vm2359, %v2972, 0
        %v3117 = vsel %vm1198, %v2981, 0
        %v3118 = vsel %vm1205, %v2990, 0
        %v3119 = vsel %vm1212, %v2999, 0
        %v3120 = vsel %vm1219, %v3008, 0
        %v3121 = vsel %vm1226, %v3017, 0
        %v3122 = vsel %vm1233, %v3026, 0
        %v3123 = vsel %vm1240, %v3035, 0
        %v3124 = vsel %vm1247, %v3044, 0
        %v3125 = vsel %vm1254, %v3053, 0
        %v3126 = vsel %vm1261, %v3062, 0
        %v3127 = vsel %vm1268, %v3071, 0
        %v3128 = vsel %vm1275, %v3080, 0
        %v3129 = vsel %vm1282, %v3089, 0
        %v3130 = vsel %vm1289, %v3098, 0
        %v3131 = vsel %vm1296, %v3115, 0
        %s3132 = scalar_lea.vmem %s4, 12
        %v3133 = vld [vmem:[%s3132] sm:$0x3]
        %3150 = vrot.lane.b32.xlu0 %v3116, 120
        %v3151 = vpop.permute.xlu0 %3150
        %3152 = vrot.lane.b32.xlu0 %v3117, 120
        %v3153 = vpop.permute.xlu0 %3152
        %3154 = vrot.lane.b32.xlu0 %v3118, 120
        %v3155 = vpop.permute.xlu0 %3154
        %3156 = vrot.lane.b32.xlu0 %v3119, 120
        %v3157 = vpop.permute.xlu0 %3156
        %3158 = vrot.lane.b32.xlu0 %v3120, 120
        %v3159 = vpop.permute.xlu0 %3158
        %3160 = vrot.lane.b32.xlu0 %v3121, 120
        %v3161 = vpop.permute.xlu0 %3160
        %3162 = vrot.lane.b32.xlu0 %v3122, 120
        %v3163 = vpop.permute.xlu0 %3162
        %3164 = vrot.lane.b32.xlu0 %v3123, 120
        %v3165 = vpop.permute.xlu0 %3164
        %3166 = vrot.lane.b32.xlu0 %v3124, 120
        %v3167 = vpop.permute.xlu0 %3166
        %3168 = vrot.lane.b32.xlu0 %v3125, 120
        %v3169 = vpop.permute.xlu0 %3168
        %3170 = vrot.lane.b32.xlu0 %v3126, 120
        %v3171 = vpop.permute.xlu0 %3170
        %3172 = vrot.lane.b32.xlu0 %v3127, 120
        %v3173 = vpop.permute.xlu0 %3172
        %3174 = vrot.lane.b32.xlu0 %v3128, 120
        %v3175 = vpop.permute.xlu0 %3174
        %3176 = vrot.lane.b32.xlu0 %v3129, 120
        %v3177 = vpop.permute.xlu0 %3176
        %3178 = vrot.lane.b32.xlu0 %v3130, 120
        %v3179 = vpop.permute.xlu0 %3178
        %3180 = vrot.lane.b32.xlu0 %v3131, 120
        %v3181 = vpop.permute.xlu0 %3180
        %v3183 = vsel %vm446, %v3151, 0
        %v3186 = vsel %vm446, %v3153, 0
        %v3189 = vsel %vm446, %v3155, 0
        %v3192 = vsel %vm446, %v3157, 0
        %v3195 = vsel %vm446, %v3159, 0
        %v3198 = vsel %vm446, %v3161, 0
        %v3201 = vsel %vm446, %v3163, 0
        %v3204 = vsel %vm446, %v3165, 0
        %v3207 = vsel %vm446, %v3167, 0
        %v3210 = vsel %vm446, %v3169, 0
        %v3213 = vsel %vm446, %v3171, 0
        %v3216 = vsel %vm446, %v3173, 0
        %v3219 = vsel %vm446, %v3175, 0
        %v3222 = vsel %vm446, %v3177, 0
        %v3225 = vsel %vm446, %v3179, 0
        %v3228 = vsel %vm446, %v3181, 0
        %v3231 = vsel %vm495, %v3133, 0
        %3233 = vmatpush.bf16.msra.mxu0 0
        %3234 = vmatpush.bf16.msra.mxu0 0
        %3235 = vmatpush.bf16.msra.mxu0 0
        %3236 = vmatpush.bf16.msra.mxu0 0
        %3237 = vmatpush.bf16.msra.mxu0 0
        %3238 = vmatpush.bf16.msra.mxu0 0
        %3239 = vmatpush.bf16.msra.mxu0 0
        %3240 = vmatpush.bf16.msra.mxu0 %v3231
        %3241 = vmatmul.bf16.gmra.mxu0 %v3183
        %v3242 = vpop.f32.mrf.mxu0
        %v3243 = vadd.f32 0.0, %v3242
        %v3244 = vpop.f32.mrf.mxu0
        %v3245 = vadd.f32 0.0, %v3244
        %3246 = vmatmul.bf16.gmra.mxu0 %v3186
        %v3247 = vpop.f32.mrf.mxu0
        %v3248 = vadd.f32 0.0, %v3247
        %v3249 = vpop.f32.mrf.mxu0
        %v3250 = vadd.f32 0.0, %v3249
        %3251 = vmatmul.bf16.gmra.mxu0 %v3189
        %v3252 = vpop.f32.mrf.mxu0
        %v3253 = vadd.f32 0.0, %v3252
        %v3254 = vpop.f32.mrf.mxu0
        %v3255 = vadd.f32 0.0, %v3254
        %3256 = vmatmul.bf16.gmra.mxu0 %v3192
        %v3257 = vpop.f32.mrf.mxu0
        %v3258 = vadd.f32 0.0, %v3257
        %v3259 = vpop.f32.mrf.mxu0
        %v3260 = vadd.f32 0.0, %v3259
        %3261 = vmatmul.bf16.gmra.mxu0 %v3195
        %v3262 = vpop.f32.mrf.mxu0
        %v3263 = vadd.f32 0.0, %v3262
        %v3264 = vpop.f32.mrf.mxu0
        %v3265 = vadd.f32 0.0, %v3264
        %3266 = vmatmul.bf16.gmra.mxu0 %v3198
        %v3267 = vpop.f32.mrf.mxu0
        %v3268 = vadd.f32 0.0, %v3267
        %v3269 = vpop.f32.mrf.mxu0
        %v3270 = vadd.f32 0.0, %v3269
        %3271 = vmatmul.bf16.gmra.mxu0 %v3201
        %v3272 = vpop.f32.mrf.mxu0
        %v3273 = vadd.f32 0.0, %v3272
        %v3274 = vpop.f32.mrf.mxu0
        %v3275 = vadd.f32 0.0, %v3274
        %3276 = vmatmul.bf16.gmra.mxu0 %v3204
        %v3277 = vpop.f32.mrf.mxu0
        %v3278 = vadd.f32 0.0, %v3277
        %v3279 = vpop.f32.mrf.mxu0
        %v3280 = vadd.f32 0.0, %v3279
        %3281 = vmatmul.bf16.gmra.mxu0 %v3207
        %v3282 = vpop.f32.mrf.mxu0
        %v3283 = vadd.f32 0.0, %v3282
        %v3284 = vpop.f32.mrf.mxu0
        %v3285 = vadd.f32 0.0, %v3284
        %3286 = vmatmul.bf16.gmra.mxu0 %v3210
        %v3287 = vpop.f32.mrf.mxu0
        %v3288 = vadd.f32 0.0, %v3287
        %v3289 = vpop.f32.mrf.mxu0
        %v3290 = vadd.f32 0.0, %v3289
        %3291 = vmatmul.bf16.gmra.mxu0 %v3213
        %v3292 = vpop.f32.mrf.mxu0
        %v3293 = vadd.f32 0.0, %v3292
        %v3294 = vpop.f32.mrf.mxu0
        %v3295 = vadd.f32 0.0, %v3294
        %3296 = vmatmul.bf16.gmra.mxu0 %v3216
        %v3297 = vpop.f32.mrf.mxu0
        %v3298 = vadd.f32 0.0, %v3297
        %v3299 = vpop.f32.mrf.mxu0
        %v3300 = vadd.f32 0.0, %v3299
        %3301 = vmatmul.bf16.gmra.mxu0 %v3219
        %v3302 = vpop.f32.mrf.mxu0
        %v3303 = vadd.f32 0.0, %v3302
        %v3304 = vpop.f32.mrf.mxu0
        %v3305 = vadd.f32 0.0, %v3304
        %3306 = vmatmul.bf16.gmra.mxu0 %v3222
        %v3307 = vpop.f32.mrf.mxu0
        %v3308 = vadd.f32 0.0, %v3307
        %v3309 = vpop.f32.mrf.mxu0
        %v3310 = vadd.f32 0.0, %v3309
        %3311 = vmatmul.bf16.gmra.mxu0 %v3225
        %v3312 = vpop.f32.mrf.mxu0
        %v3313 = vadd.f32 0.0, %v3312
        %v3314 = vpop.f32.mrf.mxu0
        %v3315 = vadd.f32 0.0, %v3314
        %3316 = vmatmul.bf16.gmra.mxu0 %v3228
        %v3317 = vpop.f32.mrf.mxu0
        %v3318 = vadd.f32 0.0, %v3317
        %v3319 = vpop.f32.mrf.mxu0
        %v3320 = vadd.f32 0.0, %v3319
        %3321 = vdwg.mxu0
        %v3322 = vadd.f32 %v2907, %v3243
        %v3323 = vadd.f32 %v2908, %v3245
        %v3324 = vadd.f32 %v2909, %v3248
        %v3325 = vadd.f32 %v2910, %v3250
        %v3326 = vadd.f32 %v2911, %v3253
        %v3327 = vadd.f32 %v2912, %v3255
        %v3328 = vadd.f32 %v2913, %v3258
        %v3329 = vadd.f32 %v2914, %v3260
        %v3330 = vadd.f32 %v2915, %v3263
        %v3331 = vadd.f32 %v2916, %v3265
        %v3332 = vadd.f32 %v2917, %v3268
        %v3333 = vadd.f32 %v2918, %v3270
        %v3334 = vadd.f32 %v2919, %v3273
        %v3335 = vadd.f32 %v2920, %v3275
        %v3336 = vadd.f32 %v2921, %v3278
        %v3337 = vadd.f32 %v2922, %v3280
        %v3338 = vadd.f32 %v2923, %v3283
        %v3339 = vadd.f32 %v2924, %v3285
        %v3340 = vadd.f32 %v2925, %v3288
        %v3341 = vadd.f32 %v2926, %v3290
        %v3342 = vadd.f32 %v2927, %v3293
        %v3343 = vadd.f32 %v2928, %v3295
        %v3344 = vadd.f32 %v2929, %v3298
        %v3345 = vadd.f32 %v2930, %v3300
        %v3346 = vadd.f32 %v2931, %v3303
        %v3347 = vadd.f32 %v2932, %v3305
        %v3348 = vadd.f32 %v2933, %v3308
        %v3349 = vadd.f32 %v2934, %v3310
        %v3350 = vadd.f32 %v2935, %v3313
        %v3351 = vadd.f32 %v2936, %v3315
        %v3352 = vadd.f32 %v2937, %v3318
        %v3353 = vadd.f32 %v2938, %v3320
        %s3354 = scalar_lea.vmem %s4, 14
        %v3355 = vld [vmem:[%s3354] sm:$0x3]
        %3357 = vrot.lane.b32.xlu0 0, 120
        %v3358 = vpop.permute.xlu0 %3357
        %v3360 = vsel %vm446, %v3358, 0
        %v3363 = vsel %vm495, %v3355, 0
        %3365 = vmatpush.bf16.msra.mxu0 0
        %3366 = vmatpush.bf16.msra.mxu0 0
        %3367 = vmatpush.bf16.msra.mxu0 0
        %3368 = vmatpush.bf16.msra.mxu0 0
        %3369 = vmatpush.bf16.msra.mxu0 0
        %3370 = vmatpush.bf16.msra.mxu0 0
        %3371 = vmatpush.bf16.msra.mxu0 0
        %3372 = vmatpush.bf16.msra.mxu0 %v3363
        %3373 = vmatmul.bf16.gmra.mxu0 %v1352
        %v3374 = vpop.f32.mrf.mxu0
        %v3375 = vadd.f32 0.0, %v3374
        %v3376 = vpop.f32.mrf.mxu0
        %v3377 = vadd.f32 0.0, %v3376
        %3378 = vmatmul.bf16.gmra.mxu0 %v1355
        %v3379 = vpop.f32.mrf.mxu0
        %v3380 = vadd.f32 0.0, %v3379
        %v3381 = vpop.f32.mrf.mxu0
        %v3382 = vadd.f32 0.0, %v3381
        %3383 = vmatmul.bf16.gmra.mxu0 %v1358
        %v3384 = vpop.f32.mrf.mxu0
        %v3385 = vadd.f32 0.0, %v3384
        %v3386 = vpop.f32.mrf.mxu0
        %v3387 = vadd.f32 0.0, %v3386
        %3388 = vmatmul.bf16.gmra.mxu0 %v1361
        %v3389 = vpop.f32.mrf.mxu0
        %v3390 = vadd.f32 0.0, %v3389
        %v3391 = vpop.f32.mrf.mxu0
        %v3392 = vadd.f32 0.0, %v3391
        %3393 = vmatmul.bf16.gmra.mxu0 %v1364
        %v3394 = vpop.f32.mrf.mxu0
        %v3395 = vadd.f32 0.0, %v3394
        %v3396 = vpop.f32.mrf.mxu0
        %v3397 = vadd.f32 0.0, %v3396
        %3398 = vmatmul.bf16.gmra.mxu0 %v1367
        %v3399 = vpop.f32.mrf.mxu0
        %v3400 = vadd.f32 0.0, %v3399
        %v3401 = vpop.f32.mrf.mxu0
        %v3402 = vadd.f32 0.0, %v3401
        %3403 = vmatmul.bf16.gmra.mxu0 %v1370
        %v3404 = vpop.f32.mrf.mxu0
        %v3405 = vadd.f32 0.0, %v3404
        %v3406 = vpop.f32.mrf.mxu0
        %v3407 = vadd.f32 0.0, %v3406
        %3408 = vmatmul.bf16.gmra.mxu0 %v1373
        %v3409 = vpop.f32.mrf.mxu0
        %v3410 = vadd.f32 0.0, %v3409
        %v3411 = vpop.f32.mrf.mxu0
        %v3412 = vadd.f32 0.0, %v3411
        %3413 = vmatmul.bf16.gmra.mxu0 %v1376
        %v3414 = vpop.f32.mrf.mxu0
        %v3415 = vadd.f32 0.0, %v3414
        %v3416 = vpop.f32.mrf.mxu0
        %v3417 = vadd.f32 0.0, %v3416
        %3418 = vmatmul.bf16.gmra.mxu0 %v1379
        %v3419 = vpop.f32.mrf.mxu0
        %v3420 = vadd.f32 0.0, %v3419
        %v3421 = vpop.f32.mrf.mxu0
        %v3422 = vadd.f32 0.0, %v3421
        %3423 = vmatmul.bf16.gmra.mxu0 %v1382
        %v3424 = vpop.f32.mrf.mxu0
        %v3425 = vadd.f32 0.0, %v3424
        %v3426 = vpop.f32.mrf.mxu0
        %v3427 = vadd.f32 0.0, %v3426
        %3428 = vmatmul.bf16.gmra.mxu0 %v1385
        %v3429 = vpop.f32.mrf.mxu0
        %v3430 = vadd.f32 0.0, %v3429
        %v3431 = vpop.f32.mrf.mxu0
        %v3432 = vadd.f32 0.0, %v3431
        %3433 = vmatmul.bf16.gmra.mxu0 %v1388
        %v3434 = vpop.f32.mrf.mxu0
        %v3435 = vadd.f32 0.0, %v3434
        %v3436 = vpop.f32.mrf.mxu0
        %v3437 = vadd.f32 0.0, %v3436
        %3438 = vmatmul.bf16.gmra.mxu0 %v1391
        %v3439 = vpop.f32.mrf.mxu0
        %v3440 = vadd.f32 0.0, %v3439
        %v3441 = vpop.f32.mrf.mxu0
        %v3442 = vadd.f32 0.0, %v3441
        %3443 = vmatmul.bf16.gmra.mxu0 %v2555
        %v3444 = vpop.f32.mrf.mxu0
        %v3445 = vadd.f32 0.0, %v3444
        %v3446 = vpop.f32.mrf.mxu0
        %v3447 = vadd.f32 0.0, %v3446
        %3448 = vmatmul.bf16.gmra.mxu0 %v3360
        %v3449 = vpop.f32.mrf.mxu0
        %v3450 = vadd.f32 0.0, %v3449
        %v3451 = vpop.f32.mrf.mxu0
        %v3452 = vadd.f32 0.0, %v3451
        %3453 = vdwg.mxu0
        %v3454 = vadd.f32 %v3322, %v3375
        %v3455 = vadd.f32 %v3323, %v3377
        %v3456 = vadd.f32 %v3324, %v3380
        %v3457 = vadd.f32 %v3325, %v3382
        %v3458 = vadd.f32 %v3326, %v3385
        %v3459 = vadd.f32 %v3327, %v3387
        %v3460 = vadd.f32 %v3328, %v3390
        %v3461 = vadd.f32 %v3329, %v3392
        %v3462 = vadd.f32 %v3330, %v3395
        %v3463 = vadd.f32 %v3331, %v3397
        %v3464 = vadd.f32 %v3332, %v3400
        %v3465 = vadd.f32 %v3333, %v3402
        %v3466 = vadd.f32 %v3334, %v3405
        %v3467 = vadd.f32 %v3335, %v3407
        %v3468 = vadd.f32 %v3336, %v3410
        %v3469 = vadd.f32 %v3337, %v3412
        %v3470 = vadd.f32 %v3338, %v3415
        %v3471 = vadd.f32 %v3339, %v3417
        %v3472 = vadd.f32 %v3340, %v3420
        %v3473 = vadd.f32 %v3341, %v3422
        %v3474 = vadd.f32 %v3342, %v3425
        %v3475 = vadd.f32 %v3343, %v3427
        %v3476 = vadd.f32 %v3344, %v3430
        %v3477 = vadd.f32 %v3345, %v3432
        %v3478 = vadd.f32 %v3346, %v3435
        %v3479 = vadd.f32 %v3347, %v3437
        %v3480 = vadd.f32 %v3348, %v3440
        %v3481 = vadd.f32 %v3349, %v3442
        %v3482 = vadd.f32 %v3350, %v3445
        %v3483 = vadd.f32 %v3351, %v3447
        %v3484 = vadd.f32 %v3352, %v3450
        %v3485 = vadd.f32 %v3353, %v3452
        %v3486 = vsel %vm2036, %v1632, 0
        %v3487 = vsel %vm2043, %v1635, 0
        %v3488 = vsel %vm2050, %v1638, 0
        %v3489 = vsel %vm2057, %v1641, 0
        %v3490 = vsel %vm2064, %v1644, 0
        %v3491 = vsel %vm2071, %v1647, 0
        %v3492 = vsel %vm2078, %v1650, 0
        %v3493 = vsel %vm2085, %v1653, 0
        %v3494 = vsel %vm2092, %v1656, 0
        %v3495 = vsel %vm2099, %v1659, 0
        %v3496 = vsel %vm2106, %v1662, 0
        %v3497 = vsel %vm2113, %v1665, 0
        %v3498 = vsel %vm2120, %v1668, 0
        %v3499 = vsel %vm2127, %v2682, 0
        %v3500 = vsel %vm2134, %v2700, 0
        %s3501 = scalar_lea.vmem %s4, 16
        %v3502 = vld [vmem:[%s3501] sm:$0x3]
        %3518 = vrot.lane.b32.xlu0 %v3486, 120
        %v3519 = vpop.permute.xlu0 %3518
        %3520 = vrot.lane.b32.xlu0 %v3487, 120
        %v3521 = vpop.permute.xlu0 %3520
        %3522 = vrot.lane.b32.xlu0 %v3488, 120
        %v3523 = vpop.permute.xlu0 %3522
        %3524 = vrot.lane.b32.xlu0 %v3489, 120
        %v3525 = vpop.permute.xlu0 %3524
        %3526 = vrot.lane.b32.xlu0 %v3490, 120
        %v3527 = vpop.permute.xlu0 %3526
        %3528 = vrot.lane.b32.xlu0 %v3491, 120
        %v3529 = vpop.permute.xlu0 %3528
        %3530 = vrot.lane.b32.xlu0 %v3492, 120
        %v3531 = vpop.permute.xlu0 %3530
        %3532 = vrot.lane.b32.xlu0 %v3493, 120
        %v3533 = vpop.permute.xlu0 %3532
        %3534 = vrot.lane.b32.xlu0 %v3494, 120
        %v3535 = vpop.permute.xlu0 %3534
        %3536 = vrot.lane.b32.xlu0 %v3495, 120
        %v3537 = vpop.permute.xlu0 %3536
        %3538 = vrot.lane.b32.xlu0 %v3496, 120
        %v3539 = vpop.permute.xlu0 %3538
        %3540 = vrot.lane.b32.xlu0 %v3497, 120
        %v3541 = vpop.permute.xlu0 %3540
        %3542 = vrot.lane.b32.xlu0 %v3498, 120
        %v3543 = vpop.permute.xlu0 %3542
        %3544 = vrot.lane.b32.xlu0 %v3499, 120
        %v3545 = vpop.permute.xlu0 %3544
        %3546 = vrot.lane.b32.xlu0 %v3500, 120
        %v3547 = vpop.permute.xlu0 %3546
        %v3549 = vsel %vm446, %v3519, 0
        %v3552 = vsel %vm446, %v3521, 0
        %v3555 = vsel %vm446, %v3523, 0
        %v3558 = vsel %vm446, %v3525, 0
        %v3561 = vsel %vm446, %v3527, 0
        %v3564 = vsel %vm446, %v3529, 0
        %v3567 = vsel %vm446, %v3531, 0
        %v3570 = vsel %vm446, %v3533, 0
        %v3573 = vsel %vm446, %v3535, 0
        %v3576 = vsel %vm446, %v3537, 0
        %v3579 = vsel %vm446, %v3539, 0
        %v3582 = vsel %vm446, %v3541, 0
        %v3585 = vsel %vm446, %v3543, 0
        %v3588 = vsel %vm446, %v3545, 0
        %v3591 = vsel %vm446, %v3547, 0
        %v3594 = vsel %vm495, %v3502, 0
        %3596 = vmatpush.bf16.msra.mxu0 0
        %3597 = vmatpush.bf16.msra.mxu0 0
        %3598 = vmatpush.bf16.msra.mxu0 0
        %3599 = vmatpush.bf16.msra.mxu0 0
        %3600 = vmatpush.bf16.msra.mxu0 0
        %3601 = vmatpush.bf16.msra.mxu0 0
        %3602 = vmatpush.bf16.msra.mxu0 0
        %3603 = vmatpush.bf16.msra.mxu0 %v3594
        %3604 = vmatmul.bf16.gmra.mxu0 %v3549
        %v3605 = vpop.f32.mrf.mxu0
        %v3606 = vadd.f32 0.0, %v3605
        %v3607 = vpop.f32.mrf.mxu0
        %v3608 = vadd.f32 0.0, %v3607
        %3609 = vmatmul.bf16.gmra.mxu0 %v3552
        %v3610 = vpop.f32.mrf.mxu0
        %v3611 = vadd.f32 0.0, %v3610
        %v3612 = vpop.f32.mrf.mxu0
        %v3613 = vadd.f32 0.0, %v3612
        %3614 = vmatmul.bf16.gmra.mxu0 %v3555
        %v3615 = vpop.f32.mrf.mxu0
        %v3616 = vadd.f32 0.0, %v3615
        %v3617 = vpop.f32.mrf.mxu0
        %v3618 = vadd.f32 0.0, %v3617
        %3619 = vmatmul.bf16.gmra.mxu0 %v3558
        %v3620 = vpop.f32.mrf.mxu0
        %v3621 = vadd.f32 0.0, %v3620
        %v3622 = vpop.f32.mrf.mxu0
        %v3623 = vadd.f32 0.0, %v3622
        %3624 = vmatmul.bf16.gmra.mxu0 %v3561
        %v3625 = vpop.f32.mrf.mxu0
        %v3626 = vadd.f32 0.0, %v3625
        %v3627 = vpop.f32.mrf.mxu0
        %v3628 = vadd.f32 0.0, %v3627
        %3629 = vmatmul.bf16.gmra.mxu0 %v3564
        %v3630 = vpop.f32.mrf.mxu0
        %v3631 = vadd.f32 0.0, %v3630
        %v3632 = vpop.f32.mrf.mxu0
        %v3633 = vadd.f32 0.0, %v3632
        %3634 = vmatmul.bf16.gmra.mxu0 %v3567
        %v3635 = vpop.f32.mrf.mxu0
        %v3636 = vadd.f32 0.0, %v3635
        %v3637 = vpop.f32.mrf.mxu0
        %v3638 = vadd.f32 0.0, %v3637
        %3639 = vmatmul.bf16.gmra.mxu0 %v3570
        %v3640 = vpop.f32.mrf.mxu0
        %v3641 = vadd.f32 0.0, %v3640
        %v3642 = vpop.f32.mrf.mxu0
        %v3643 = vadd.f32 0.0, %v3642
        %3644 = vmatmul.bf16.gmra.mxu0 %v3573
        %v3645 = vpop.f32.mrf.mxu0
        %v3646 = vadd.f32 0.0, %v3645
        %v3647 = vpop.f32.mrf.mxu0
        %v3648 = vadd.f32 0.0, %v3647
        %3649 = vmatmul.bf16.gmra.mxu0 %v3576
        %v3650 = vpop.f32.mrf.mxu0
        %v3651 = vadd.f32 0.0, %v3650
        %v3652 = vpop.f32.mrf.mxu0
        %v3653 = vadd.f32 0.0, %v3652
        %3654 = vmatmul.bf16.gmra.mxu0 %v3579
        %v3655 = vpop.f32.mrf.mxu0
        %v3656 = vadd.f32 0.0, %v3655
        %v3657 = vpop.f32.mrf.mxu0
        %v3658 = vadd.f32 0.0, %v3657
        %3659 = vmatmul.bf16.gmra.mxu0 %v3582
        %v3660 = vpop.f32.mrf.mxu0
        %v3661 = vadd.f32 0.0, %v3660
        %v3662 = vpop.f32.mrf.mxu0
        %v3663 = vadd.f32 0.0, %v3662
        %3664 = vmatmul.bf16.gmra.mxu0 %v3585
        %v3665 = vpop.f32.mrf.mxu0
        %v3666 = vadd.f32 0.0, %v3665
        %v3667 = vpop.f32.mrf.mxu0
        %v3668 = vadd.f32 0.0, %v3667
        %3669 = vmatmul.bf16.gmra.mxu0 %v3588
        %v3670 = vpop.f32.mrf.mxu0
        %v3671 = vadd.f32 0.0, %v3670
        %v3672 = vpop.f32.mrf.mxu0
        %v3673 = vadd.f32 0.0, %v3672
        %3674 = vmatmul.bf16.gmra.mxu0 %v3591
        %v3675 = vpop.f32.mrf.mxu0
        %v3676 = vadd.f32 0.0, %v3675
        %v3677 = vpop.f32.mrf.mxu0
        %v3678 = vadd.f32 0.0, %v3677
        %3679 = vmatmul.bf16.gmra.mxu0 %v3360
        %v3680 = vpop.f32.mrf.mxu0
        %v3681 = vadd.f32 0.0, %v3680
        %v3682 = vpop.f32.mrf.mxu0
        %v3683 = vadd.f32 0.0, %v3682
        %3684 = vdwg.mxu0
        %v3685 = vadd.f32 %v3454, %v3606
        %v3686 = vadd.f32 %v3455, %v3608
        %v3687 = vadd.f32 %v3456, %v3611
        %v3688 = vadd.f32 %v3457, %v3613
        %v3689 = vadd.f32 %v3458, %v3616
        %v3690 = vadd.f32 %v3459, %v3618
        %v3691 = vadd.f32 %v3460, %v3621
        %v3692 = vadd.f32 %v3461, %v3623
        %v3693 = vadd.f32 %v3462, %v3626
        %v3694 = vadd.f32 %v3463, %v3628
        %v3695 = vadd.f32 %v3464, %v3631
        %v3696 = vadd.f32 %v3465, %v3633
        %v3697 = vadd.f32 %v3466, %v3636
        %v3698 = vadd.f32 %v3467, %v3638
        %v3699 = vadd.f32 %v3468, %v3641
        %v3700 = vadd.f32 %v3469, %v3643
        %v3701 = vadd.f32 %v3470, %v3646
        %v3702 = vadd.f32 %v3471, %v3648
        %v3703 = vadd.f32 %v3472, %v3651
        %v3704 = vadd.f32 %v3473, %v3653
        %v3705 = vadd.f32 %v3474, %v3656
        %v3706 = vadd.f32 %v3475, %v3658
        %v3707 = vadd.f32 %v3476, %v3661
        %v3708 = vadd.f32 %v3477, %v3663
        %v3709 = vadd.f32 %v3478, %v3666
        %v3710 = vadd.f32 %v3479, %v3668
        %v3711 = vadd.f32 %v3480, %v3671
        %v3712 = vadd.f32 %v3481, %v3673
        %v3713 = vadd.f32 %v3482, %v3676
        %v3714 = vadd.f32 %v3483, %v3678
        %v3715 = vadd.f32 %v3484, %v3681
        %v3716 = vadd.f32 %v3485, %v3683
        %v3717 = vld [vmem:[%s5] sm:$0x1]
        %v3719 = vperm.slane %v3717, 0
        %v3721 = vadd.f32 %v3685, %v3719
        %v3722 = vadd.f32 %v3686, %v3719
        %v3723 = vadd.f32 %v3687, %v3719
        %v3724 = vadd.f32 %v3688, %v3719
        %v3725 = vadd.f32 %v3689, %v3719
        %v3726 = vadd.f32 %v3690, %v3719
        %v3727 = vadd.f32 %v3691, %v3719
        %v3728 = vadd.f32 %v3692, %v3719
        %v3729 = vadd.f32 %v3693, %v3719
        %v3730 = vadd.f32 %v3694, %v3719
        %v3731 = vadd.f32 %v3695, %v3719
        %v3732 = vadd.f32 %v3696, %v3719
        %v3733 = vadd.f32 %v3697, %v3719
        %v3734 = vadd.f32 %v3698, %v3719
        %v3735 = vadd.f32 %v3699, %v3719
        %v3736 = vadd.f32 %v3700, %v3719
        %v3737 = vadd.f32 %v3701, %v3719
        %v3738 = vadd.f32 %v3702, %v3719
        %v3739 = vadd.f32 %v3703, %v3719
        %v3740 = vadd.f32 %v3704, %v3719
        %v3741 = vadd.f32 %v3705, %v3719
        %v3742 = vadd.f32 %v3706, %v3719
        %v3743 = vadd.f32 %v3707, %v3719
        %v3744 = vadd.f32 %v3708, %v3719
        %v3745 = vadd.f32 %v3709, %v3719
        %v3746 = vadd.f32 %v3710, %v3719
        %v3747 = vadd.f32 %v3711, %v3719
        %v3748 = vadd.f32 %v3712, %v3719
        %v3749 = vadd.f32 %v3713, %v3719
        %v3750 = vadd.f32 %v3714, %v3719
        %v3751 = vadd.f32 %v3715, %v3719
        %v3752 = vadd.f32 %v3716, %v3719
        %v3753 = vmax.f32 %v3721, 0.0
        %v3754 = vmax.f32 %v3722, 0.0
        %v3755 = vmax.f32 %v3723, 0.0
        %v3756 = vmax.f32 %v3724, 0.0
        %v3757 = vmax.f32 %v3725, 0.0
        %v3758 = vmax.f32 %v3726, 0.0
        %v3759 = vmax.f32 %v3727, 0.0
        %v3760 = vmax.f32 %v3728, 0.0
        %v3761 = vmax.f32 %v3729, 0.0
        %v3762 = vmax.f32 %v3730, 0.0
        %v3763 = vmax.f32 %v3731, 0.0
        %v3764 = vmax.f32 %v3732, 0.0
        %v3765 = vmax.f32 %v3733, 0.0
        %v3766 = vmax.f32 %v3734, 0.0
        %v3767 = vmax.f32 %v3735, 0.0
        %v3768 = vmax.f32 %v3736, 0.0
        %v3769 = vmax.f32 %v3737, 0.0
        %v3770 = vmax.f32 %v3738, 0.0
        %v3771 = vmax.f32 %v3739, 0.0
        %v3772 = vmax.f32 %v3740, 0.0
        %v3773 = vmax.f32 %v3741, 0.0
        %v3774 = vmax.f32 %v3742, 0.0
        %v3775 = vmax.f32 %v3743, 0.0
        %v3776 = vmax.f32 %v3744, 0.0
        %v3777 = vmax.f32 %v3745, 0.0
        %v3778 = vmax.f32 %v3746, 0.0
        %v3779 = vmax.f32 %v3747, 0.0
        %v3780 = vmax.f32 %v3748, 0.0
        %v3781 = vmax.f32 %v3749, 0.0
        %v3782 = vmax.f32 %v3750, 0.0
        %v3783 = vmax.f32 %v3751, 0.0
        %v3784 = vmax.f32 %v3752, 0.0
        %v3785 = vrot.slane %v712, 7
        %v3786 = vrot.slane %v713, 7
        %v3787 = vsel %vm892, %v3785, %v3786
        %v3788 = vrot.slane %v714, 7
        %v3789 = vsel %vm892, %v3786, %v3788
        %v3790 = vrot.slane %v715, 7
        %v3791 = vsel %vm892, %v3788, %v3790
        %v3792 = vrot.slane %v716, 7
        %v3793 = vsel %vm892, %v3790, %v3792
        %v3794 = vrot.slane %v717, 7
        %v3795 = vsel %vm892, %v3792, %v3794
        %v3796 = vrot.slane %v718, 7
        %v3797 = vsel %vm892, %v3794, %v3796
        %v3798 = vrot.slane %v719, 7
        %v3799 = vsel %vm892, %v3796, %v3798
        %v3800 = vrot.slane %v720, 7
        %v3801 = vsel %vm892, %v3798, %v3800
        %v3802 = vrot.slane %v721, 7
        %v3803 = vsel %vm892, %v3800, %v3802
        %v3804 = vrot.slane %v722, 7
        %v3805 = vsel %vm892, %v3802, %v3804
        %v3806 = vrot.slane %v723, 7
        %v3807 = vsel %vm892, %v3804, %v3806
        %v3808 = vrot.slane %v724, 7
        %v3809 = vsel %vm892, %v3806, %v3808
        %v3810 = vrot.slane %v725, 7
        %v3811 = vsel %vm892, %v3808, %v3810
        %3812 = vrot.lane.b32.xlu0 %v3785, 116
        %v3813 = vpop.permute.xlu0 %3812
        %3814 = vrot.lane.b32.xlu0 %v3787, 116
        %v3815 = vpop.permute.xlu0 %3814
        %3816 = vrot.lane.b32.xlu0 %v3789, 116
        %v3817 = vpop.permute.xlu0 %3816
        %3818 = vrot.lane.b32.xlu0 %v3791, 116
        %v3819 = vpop.permute.xlu0 %3818
        %3820 = vrot.lane.b32.xlu0 %v3793, 116
        %v3821 = vpop.permute.xlu0 %3820
        %3822 = vrot.lane.b32.xlu0 %v3795, 116
        %v3823 = vpop.permute.xlu0 %3822
        %3824 = vrot.lane.b32.xlu0 %v3797, 116
        %v3825 = vpop.permute.xlu0 %3824
        %3826 = vrot.lane.b32.xlu0 %v3799, 116
        %v3827 = vpop.permute.xlu0 %3826
        %3828 = vrot.lane.b32.xlu0 %v3801, 116
        %v3829 = vpop.permute.xlu0 %3828
        %3830 = vrot.lane.b32.xlu0 %v3803, 116
        %v3831 = vpop.permute.xlu0 %3830
        %3832 = vrot.lane.b32.xlu0 %v3805, 116
        %v3833 = vpop.permute.xlu0 %3832
        %3834 = vrot.lane.b32.xlu0 %v3807, 116
        %v3835 = vpop.permute.xlu0 %3834
        %3836 = vrot.lane.b32.xlu0 %v3809, 116
        %v3837 = vpop.permute.xlu0 %3836
        %3838 = vrot.lane.b32.xlu0 %v3811, 116
        %v3839 = vpop.permute.xlu0 %3838
        %vm3853 = vcmask 1040384
        %v3855 = vsel %vm3853, 0, %v3813
        %vm3857 = vcmp.ge.s32.totalorder %v361, 2
        %vm3858 = vcmp.ge.s32.totalorder %v362, 2
        %vm3859 = vcmp.ge.s32.totalorder %v363, 2
        %vm3860 = vcmp.ge.s32.totalorder %v364, 2
        %vm3861 = vcmp.ge.s32.totalorder %v365, 2
        %vm3862 = vcmp.ge.s32.totalorder %v366, 2
        %vm3863 = vcmp.ge.s32.totalorder %v367, 2
        %vm3864 = vcmp.ge.s32.totalorder %v368, 2
        %vm3865 = vcmp.ge.s32.totalorder %v369, 2
        %vm3866 = vcmp.ge.s32.totalorder %v370, 2
        %vm3867 = vcmp.ge.s32.totalorder %v371, 2
        %vm3868 = vcmp.ge.s32.totalorder %v372, 2
        %vm3869 = vcmp.ge.s32.totalorder %v373, 2
        %vm3870 = vcmp.ge.s32.totalorder %v374, 2
        %vm3871 = vcmp.ge.s32.totalorder %v375, 2
        %vm3872 = vcmp.ge.s32.totalorder %v376, 2
        %vm3873 = vcmp.ge.s32.totalorder %v377, 2
        %vm3874 = vcmp.ge.s32.totalorder %v378, 2
        %vm3875 = vcmp.ge.s32.totalorder %v379, 2
        %vm3876 = vcmp.ge.s32.totalorder %v380, 2
        %vm3877 = vcmp.ge.s32.totalorder %v381, 2
        %vm3878 = vcmp.ge.s32.totalorder %v382, 2
        %vm3879 = vcmp.ge.s32.totalorder %v383, 2
        %vm3880 = vcmp.ge.s32.totalorder %v384, 2
        %vm3881 = vcmp.ge.s32.totalorder %v385, 2
        %vm3882 = vcmp.ge.s32.totalorder %v386, 2
        %vm3883 = vcmp.ge.s32.totalorder %v387, 2
        %vm3884 = vcmp.ge.s32.totalorder %v388, 2
        %vm3885 = vcmp.ge.s32.totalorder %v389, 2
        %vm3886 = vcmp.ge.s32.totalorder %v390, 2
        %vm3887 = vcmp.ge.s32.totalorder %v391, 2
        %vm3888 = vcmp.ge.s32.totalorder %v392, 2
        %v3889 = vsel %vm3857, 1, 0
        %v3890 = vsel %vm3858, 1, 0
        %v3891 = vsel %vm3859, 1, 0
        %v3892 = vsel %vm3860, 1, 0
        %v3893 = vsel %vm3861, 1, 0
        %v3894 = vsel %vm3862, 1, 0
        %v3895 = vsel %vm3863, 1, 0
        %v3896 = vsel %vm3864, 1, 0
        %v3897 = vsel %vm3865, 1, 0
        %v3898 = vsel %vm3866, 1, 0
        %v3899 = vsel %vm3867, 1, 0
        %v3900 = vsel %vm3868, 1, 0
        %v3901 = vsel %vm3869, 1, 0
        %v3902 = vsel %vm3870, 1, 0
        %v3903 = vsel %vm3871, 1, 0
        %v3904 = vsel %vm3872, 1, 0
        %v3905 = vsel %vm3873, 1, 0
        %v3906 = vsel %vm3874, 1, 0
        %v3907 = vsel %vm3875, 1, 0
        %v3908 = vsel %vm3876, 1, 0
        %v3909 = vsel %vm3877, 1, 0
        %v3910 = vsel %vm3878, 1, 0
        %v3911 = vsel %vm3879, 1, 0
        %v3912 = vsel %vm3880, 1, 0
        %v3913 = vsel %vm3881, 1, 0
        %v3914 = vsel %vm3882, 1, 0
        %v3915 = vsel %vm3883, 1, 0
        %v3916 = vsel %vm3884, 1, 0
        %v3917 = vsel %vm3885, 1, 0
        %v3918 = vsel %vm3886, 1, 0
        %v3919 = vsel %vm3887, 1, 0
        %v3920 = vsel %vm3888, 1, 0
        %3921 = vset.pattern.permute.xlu0 0
        %3922 = vperm.xlu0 %3921, %v3889
        %v3923 = vpop.permute.xlu0 %3922
        %3924 = vset.pattern.permute.xlu0 0
        %3925 = vperm.xlu0 %3924, %v3890
        %v3926 = vpop.permute.xlu0 %3925
        %3927 = vset.pattern.permute.xlu0 0
        %3928 = vperm.xlu0 %3927, %v3891
        %v3929 = vpop.permute.xlu0 %3928
        %3930 = vset.pattern.permute.xlu0 0
        %3931 = vperm.xlu0 %3930, %v3892
        %v3932 = vpop.permute.xlu0 %3931
        %3933 = vset.pattern.permute.xlu0 0
        %3934 = vperm.xlu0 %3933, %v3893
        %v3935 = vpop.permute.xlu0 %3934
        %3936 = vset.pattern.permute.xlu0 0
        %3937 = vperm.xlu0 %3936, %v3894
        %v3938 = vpop.permute.xlu0 %3937
        %3939 = vset.pattern.permute.xlu0 0
        %3940 = vperm.xlu0 %3939, %v3895
        %v3941 = vpop.permute.xlu0 %3940
        %3942 = vset.pattern.permute.xlu0 0
        %3943 = vperm.xlu0 %3942, %v3896
        %v3944 = vpop.permute.xlu0 %3943
        %3945 = vset.pattern.permute.xlu0 0
        %3946 = vperm.xlu0 %3945, %v3897
        %v3947 = vpop.permute.xlu0 %3946
        %3948 = vset.pattern.permute.xlu0 0
        %3949 = vperm.xlu0 %3948, %v3898
        %v3950 = vpop.permute.xlu0 %3949
        %3951 = vset.pattern.permute.xlu0 0
        %3952 = vperm.xlu0 %3951, %v3899
        %v3953 = vpop.permute.xlu0 %3952
        %3954 = vset.pattern.permute.xlu0 0
        %3955 = vperm.xlu0 %3954, %v3900
        %v3956 = vpop.permute.xlu0 %3955
        %3957 = vset.pattern.permute.xlu0 0
        %3958 = vperm.xlu0 %3957, %v3901
        %v3959 = vpop.permute.xlu0 %3958
        %3960 = vset.pattern.permute.xlu0 0
        %3961 = vperm.xlu0 %3960, %v3902
        %v3962 = vpop.permute.xlu0 %3961
        %3963 = vset.pattern.permute.xlu0 0
        %3964 = vperm.xlu0 %3963, %v3903
        %v3965 = vpop.permute.xlu0 %3964
        %3966 = vset.pattern.permute.xlu0 0
        %3967 = vperm.xlu0 %3966, %v3904
        %v3968 = vpop.permute.xlu0 %3967
        %3969 = vset.pattern.permute.xlu0 0
        %3970 = vperm.xlu0 %3969, %v3905
        %v3971 = vpop.permute.xlu0 %3970
        %3972 = vset.pattern.permute.xlu0 0
        %3973 = vperm.xlu0 %3972, %v3906
        %v3974 = vpop.permute.xlu0 %3973
        %3975 = vset.pattern.permute.xlu0 0
        %3976 = vperm.xlu0 %3975, %v3907
        %v3977 = vpop.permute.xlu0 %3976
        %3978 = vset.pattern.permute.xlu0 0
        %3979 = vperm.xlu0 %3978, %v3908
        %v3980 = vpop.permute.xlu0 %3979
        %3981 = vset.pattern.permute.xlu0 0
        %3982 = vperm.xlu0 %3981, %v3909
        %v3983 = vpop.permute.xlu0 %3982
        %3984 = vset.pattern.permute.xlu0 0
        %3985 = vperm.xlu0 %3984, %v3910
        %v3986 = vpop.permute.xlu0 %3985
        %3987 = vset.pattern.permute.xlu0 0
        %3988 = vperm.xlu0 %3987, %v3911
        %v3989 = vpop.permute.xlu0 %3988
        %3990 = vset.pattern.permute.xlu0 0
        %3991 = vperm.xlu0 %3990, %v3912
        %v3992 = vpop.permute.xlu0 %3991
        %3993 = vset.pattern.permute.xlu0 0
        %3994 = vperm.xlu0 %3993, %v3913
        %v3995 = vpop.permute.xlu0 %3994
        %3996 = vset.pattern.permute.xlu0 0
        %3997 = vperm.xlu0 %3996, %v3914
        %v3998 = vpop.permute.xlu0 %3997
        %3999 = vset.pattern.permute.xlu0 0
        %4000 = vperm.xlu0 %3999, %v3915
        %v4001 = vpop.permute.xlu0 %4000
        %4002 = vset.pattern.permute.xlu0 0
        %4003 = vperm.xlu0 %4002, %v3916
        %v4004 = vpop.permute.xlu0 %4003
        %4005 = vset.pattern.permute.xlu0 0
        %4006 = vperm.xlu0 %4005, %v3917
        %v4007 = vpop.permute.xlu0 %4006
        %4008 = vset.pattern.permute.xlu0 0
        %4009 = vperm.xlu0 %4008, %v3918
        %v4010 = vpop.permute.xlu0 %4009
        %4011 = vset.pattern.permute.xlu0 0
        %4012 = vperm.xlu0 %4011, %v3919
        %v4013 = vpop.permute.xlu0 %4012
        %4014 = vset.pattern.permute.xlu0 0
        %4015 = vperm.xlu0 %4014, %v3920
        %v4016 = vpop.permute.xlu0 %4015
        %vm4017 = vcmp.eq.s32.totalorder %v3923, 1
        %vm4018 = vcmp.eq.s32.totalorder %v3926, 1
        %vm4019 = vcmp.eq.s32.totalorder %v3929, 1
        %vm4020 = vcmp.eq.s32.totalorder %v3932, 1
        %vm4021 = vcmp.eq.s32.totalorder %v3935, 1
        %vm4022 = vcmp.eq.s32.totalorder %v3938, 1
        %vm4023 = vcmp.eq.s32.totalorder %v3941, 1
        %vm4024 = vcmp.eq.s32.totalorder %v3944, 1
        %vm4025 = vcmp.eq.s32.totalorder %v3947, 1
        %vm4026 = vcmp.eq.s32.totalorder %v3950, 1
        %vm4027 = vcmp.eq.s32.totalorder %v3953, 1
        %vm4028 = vcmp.eq.s32.totalorder %v3956, 1
        %vm4029 = vcmp.eq.s32.totalorder %v3959, 1
        %vm4030 = vcmp.eq.s32.totalorder %v3962, 1
        %vm4031 = vcmp.eq.s32.totalorder %v3965, 1
        %vm4032 = vcmp.eq.s32.totalorder %v3968, 1
        %vm4033 = vcmp.eq.s32.totalorder %v3971, 1
        %vm4034 = vcmp.eq.s32.totalorder %v3974, 1
        %vm4035 = vcmp.eq.s32.totalorder %v3977, 1
        %vm4036 = vcmp.eq.s32.totalorder %v3980, 1
        %vm4037 = vcmp.eq.s32.totalorder %v3983, 1
        %vm4038 = vcmp.eq.s32.totalorder %v3986, 1
        %vm4039 = vcmp.eq.s32.totalorder %v3989, 1
        %vm4040 = vcmp.eq.s32.totalorder %v3992, 1
        %vm4041 = vcmp.eq.s32.totalorder %v3995, 1
        %vm4042 = vcmp.eq.s32.totalorder %v3998, 1
        %vm4043 = vcmp.eq.s32.totalorder %v4001, 1
        %vm4044 = vcmp.eq.s32.totalorder %v4004, 1
        %vm4045 = vcmp.eq.s32.totalorder %v4007, 1
        %vm4046 = vcmp.eq.s32.totalorder %v4010, 1
        %vm4047 = vcmp.eq.s32.totalorder %v4013, 1
        %vm4048 = vcmp.eq.s32.totalorder %v4016, 1
        %vm4049 = vmpackc.low %vm4021, %vm4021
        %vm4050 = vmpackc.low %vm4022, %vm4022
        %vm4051 = vmpackc.low %vm4023, %vm4023
        %vm4052 = vmpackc.low %vm4024, %vm4024
        %vm4053 = vmpackc.low %vm4025, %vm4025
        %vm4054 = vmpackc.low %vm4026, %vm4026
        %vm4055 = vmpackc.low %vm4027, %vm4027
        %vm4056 = vmpackc.low %vm4028, %vm4028
        %vm4057 = vmpackc.low %vm4029, %vm4029
        %vm4058 = vmpackc.low %vm4030, %vm4030
        %vm4059 = vmpackc.low %vm4031, %vm4031
        %vm4060 = vmpackc.low %vm4032, %vm4032
        %vm4061 = vmpackc.low %vm4033, %vm4033
        %vm4062 = vmpackc.low %vm4034, %vm4034
        %vm4063 = vmpackc.low %vm4035, %vm4035
        %vm4064 = vmpackc.low %vm4036, %vm4036
        %vm4065 = vmpackc.low %vm4037, %vm4037
        %vm4066 = vmpackc.low %vm4038, %vm4038
        %vm4067 = vmpackc.low %vm4039, %vm4039
        %vm4068 = vmpackc.low %vm4040, %vm4040
        %vm4069 = vmpackc.low %vm4041, %vm4041
        %vm4070 = vmpackc.low %vm4042, %vm4042
        %vm4071 = vmpackc.low %vm4043, %vm4043
        %vm4072 = vmpackc.low %vm4044, %vm4044
        %vm4073 = vmpackc.low %vm4045, %vm4045
        %vm4074 = vmpackc.low %vm4046, %vm4046
        %vm4075 = vmpackc.low %vm4047, %vm4047
        %vm4076 = vmpackc.low %vm4048, %vm4048
        %v4077 = vsel %vm4049, 65537, 0
        %v4078 = vsel %vm4050, 65537, 0
        %v4079 = vsel %vm4051, 65537, 0
        %v4080 = vsel %vm4052, 65537, 0
        %v4081 = vsel %vm4053, 65537, 0
        %v4082 = vsel %vm4054, 65537, 0
        %v4083 = vsel %vm4055, 65537, 0
        %v4084 = vsel %vm4056, 65537, 0
        %v4085 = vsel %vm4057, 65537, 0
        %v4086 = vsel %vm4058, 65537, 0
        %v4087 = vsel %vm4059, 65537, 0
        %v4088 = vsel %vm4060, 65537, 0
        %v4089 = vsel %vm4061, 65537, 0
        %v4090 = vsel %vm4062, 65537, 0
        %v4091 = vsel %vm4063, 65537, 0
        %v4092 = vsel %vm4064, 65537, 0
        %v4093 = vsel %vm4065, 65537, 0
        %v4094 = vsel %vm4066, 65537, 0
        %v4095 = vsel %vm4067, 65537, 0
        %v4096 = vsel %vm4068, 65537, 0
        %v4097 = vsel %vm4069, 65537, 0
        %v4098 = vsel %vm4070, 65537, 0
        %v4099 = vsel %vm4071, 65537, 0
        %v4100 = vsel %vm4072, 65537, 0
        %v4101 = vsel %vm4073, 65537, 0
        %v4102 = vsel %vm4074, 65537, 0
        %v4103 = vsel %vm4075, 65537, 0
        %v4104 = vsel %vm4076, 65537, 0
        %v4105 = vunpack.c.l.b16 %v4077
        %v4106 = vunpack.c.l.b16 %v4078
        %v4107 = vunpack.c.l.b16 %v4079
        %v4108 = vunpack.c.l.b16 %v4080
        %v4109 = vunpack.c.l.b16 %v4081
        %v4110 = vunpack.c.l.b16 %v4082
        %v4111 = vunpack.c.l.b16 %v4083
        %v4112 = vunpack.c.l.b16 %v4084
        %v4113 = vunpack.c.l.b16 %v4085
        %v4114 = vunpack.c.l.b16 %v4086
        %v4115 = vunpack.c.l.b16 %v4087
        %v4116 = vunpack.c.l.b16 %v4088
        %v4117 = vunpack.c.l.b16 %v4089
        %v4118 = vunpack.c.l.b16 %v4090
        %v4119 = vunpack.c.l.b16 %v4091
        %v4120 = vunpack.c.l.b16 %v4092
        %v4121 = vunpack.c.l.b16 %v4093
        %v4122 = vunpack.c.l.b16 %v4094
        %v4123 = vunpack.c.l.b16 %v4095
        %v4124 = vunpack.c.l.b16 %v4096
        %v4125 = vunpack.c.l.b16 %v4097
        %v4126 = vunpack.c.l.b16 %v4098
        %v4127 = vunpack.c.l.b16 %v4099
        %v4128 = vunpack.c.l.b16 %v4100
        %v4129 = vunpack.c.l.b16 %v4101
        %v4130 = vunpack.c.l.b16 %v4102
        %v4131 = vunpack.c.l.b16 %v4103
        %v4132 = vunpack.c.l.b16 %v4104
        %v4133 = vpack.c.b16 %v4106, %v4105
        %v4134 = vpack.c.b16 %v4108, %v4107
        %v4135 = vpack.c.b16 %v4110, %v4109
        %v4136 = vpack.c.b16 %v4112, %v4111
        %v4137 = vpack.c.b16 %v4114, %v4113
        %v4138 = vpack.c.b16 %v4116, %v4115
        %v4139 = vpack.c.b16 %v4118, %v4117
        %v4140 = vpack.c.b16 %v4120, %v4119
        %v4141 = vpack.c.b16 %v4122, %v4121
        %v4142 = vpack.c.b16 %v4124, %v4123
        %v4143 = vpack.c.b16 %v4126, %v4125
        %v4144 = vpack.c.b16 %v4128, %v4127
        %v4145 = vpack.c.b16 %v4130, %v4129
        %v4146 = vpack.c.b16 %v4132, %v4131
        %v4147 = vunpack.c.l.b16 %v4133
        %v4148 = vunpack.c.h.b16 %v4133
        %v4149 = vunpack.c.l.b16 0
        %v4150 = vunpack.c.h.b16 0
        %vm4151 = vcmp.ne.s32.totalorder %v4147, %v4149
        %vm4152 = vcmp.ne.s32.totalorder %v4148, %v4150
        %vm4153 = vmpackc.low %vm4152, %vm4151
        %v4154 = vunpack.c.l.b16 %v4134
        %v4155 = vunpack.c.h.b16 %v4134
        %v4156 = vunpack.c.l.b16 0
        %v4157 = vunpack.c.h.b16 0
        %vm4158 = vcmp.ne.s32.totalorder %v4154, %v4156
        %vm4159 = vcmp.ne.s32.totalorder %v4155, %v4157
        %vm4160 = vmpackc.low %vm4159, %vm4158
        %v4161 = vunpack.c.l.b16 %v4135
        %v4162 = vunpack.c.h.b16 %v4135
        %v4163 = vunpack.c.l.b16 0
        %v4164 = vunpack.c.h.b16 0
        %vm4165 = vcmp.ne.s32.totalorder %v4161, %v4163
        %vm4166 = vcmp.ne.s32.totalorder %v4162, %v4164
        %vm4167 = vmpackc.low %vm4166, %vm4165
        %v4168 = vunpack.c.l.b16 %v4136
        %v4169 = vunpack.c.h.b16 %v4136
        %v4170 = vunpack.c.l.b16 0
        %v4171 = vunpack.c.h.b16 0
        %vm4172 = vcmp.ne.s32.totalorder %v4168, %v4170
        %vm4173 = vcmp.ne.s32.totalorder %v4169, %v4171
        %vm4174 = vmpackc.low %vm4173, %vm4172
        %v4175 = vunpack.c.l.b16 %v4137
        %v4176 = vunpack.c.h.b16 %v4137
        %v4177 = vunpack.c.l.b16 0
        %v4178 = vunpack.c.h.b16 0
        %vm4179 = vcmp.ne.s32.totalorder %v4175, %v4177
        %vm4180 = vcmp.ne.s32.totalorder %v4176, %v4178
        %vm4181 = vmpackc.low %vm4180, %vm4179
        %v4182 = vunpack.c.l.b16 %v4138
        %v4183 = vunpack.c.h.b16 %v4138
        %v4184 = vunpack.c.l.b16 0
        %v4185 = vunpack.c.h.b16 0
        %vm4186 = vcmp.ne.s32.totalorder %v4182, %v4184
        %vm4187 = vcmp.ne.s32.totalorder %v4183, %v4185
        %vm4188 = vmpackc.low %vm4187, %vm4186
        %v4189 = vunpack.c.l.b16 %v4139
        %v4190 = vunpack.c.h.b16 %v4139
        %v4191 = vunpack.c.l.b16 0
        %v4192 = vunpack.c.h.b16 0
        %vm4193 = vcmp.ne.s32.totalorder %v4189, %v4191
        %vm4194 = vcmp.ne.s32.totalorder %v4190, %v4192
        %vm4195 = vmpackc.low %vm4194, %vm4193
        %v4196 = vunpack.c.l.b16 %v4140
        %v4197 = vunpack.c.h.b16 %v4140
        %v4198 = vunpack.c.l.b16 0
        %v4199 = vunpack.c.h.b16 0
        %vm4200 = vcmp.ne.s32.totalorder %v4196, %v4198
        %vm4201 = vcmp.ne.s32.totalorder %v4197, %v4199
        %vm4202 = vmpackc.low %vm4201, %vm4200
        %v4203 = vunpack.c.l.b16 %v4141
        %v4204 = vunpack.c.h.b16 %v4141
        %v4205 = vunpack.c.l.b16 0
        %v4206 = vunpack.c.h.b16 0
        %vm4207 = vcmp.ne.s32.totalorder %v4203, %v4205
        %vm4208 = vcmp.ne.s32.totalorder %v4204, %v4206
        %vm4209 = vmpackc.low %vm4208, %vm4207
        %v4210 = vunpack.c.l.b16 %v4142
        %v4211 = vunpack.c.h.b16 %v4142
        %v4212 = vunpack.c.l.b16 0
        %v4213 = vunpack.c.h.b16 0
        %vm4214 = vcmp.ne.s32.totalorder %v4210, %v4212
        %vm4215 = vcmp.ne.s32.totalorder %v4211, %v4213
        %vm4216 = vmpackc.low %vm4215, %vm4214
        %v4217 = vunpack.c.l.b16 %v4143
        %v4218 = vunpack.c.h.b16 %v4143
        %v4219 = vunpack.c.l.b16 0
        %v4220 = vunpack.c.h.b16 0
        %vm4221 = vcmp.ne.s32.totalorder %v4217, %v4219
        %vm4222 = vcmp.ne.s32.totalorder %v4218, %v4220
        %vm4223 = vmpackc.low %vm4222, %vm4221
        %v4224 = vunpack.c.l.b16 %v4144
        %v4225 = vunpack.c.h.b16 %v4144
        %v4226 = vunpack.c.l.b16 0
        %v4227 = vunpack.c.h.b16 0
        %vm4228 = vcmp.ne.s32.totalorder %v4224, %v4226
        %vm4229 = vcmp.ne.s32.totalorder %v4225, %v4227
        %vm4230 = vmpackc.low %vm4229, %vm4228
        %v4231 = vunpack.c.l.b16 %v4145
        %v4232 = vunpack.c.h.b16 %v4145
        %v4233 = vunpack.c.l.b16 0
        %v4234 = vunpack.c.h.b16 0
        %vm4235 = vcmp.ne.s32.totalorder %v4231, %v4233
        %vm4236 = vcmp.ne.s32.totalorder %v4232, %v4234
        %vm4237 = vmpackc.low %vm4236, %vm4235
        %v4238 = vunpack.c.l.b16 %v4146
        %v4239 = vunpack.c.h.b16 %v4146
        %v4240 = vunpack.c.l.b16 0
        %v4241 = vunpack.c.h.b16 0
        %vm4242 = vcmp.ne.s32.totalorder %v4238, %v4240
        %vm4243 = vcmp.ne.s32.totalorder %v4239, %v4241
        %vm4244 = vmpackc.low %vm4243, %vm4242
        %v4245 = vsel %vm4153, %v3855, 0
        %v4246 = vsel %vm4160, %v3815, 0
        %v4247 = vsel %vm4167, %v3817, 0
        %v4248 = vsel %vm4174, %v3819, 0
        %v4249 = vsel %vm4181, %v3821, 0
        %v4250 = vsel %vm4188, %v3823, 0
        %v4251 = vsel %vm4195, %v3825, 0
        %v4252 = vsel %vm4202, %v3827, 0
        %v4253 = vsel %vm4209, %v3829, 0
        %v4254 = vsel %vm4216, %v3831, 0
        %v4255 = vsel %vm4223, %v3833, 0
        %v4256 = vsel %vm4230, %v3835, 0
        %v4257 = vsel %vm4237, %v3837, 0
        %v4258 = vsel %vm4244, %v3839, 0
        %v4259 = vld [vmem:[%s6] sm:$0x3]
        %4260 = vrot.lane.b32.xlu0 %v734, 116
        %v4261 = vpop.permute.xlu0 %4260
        %4262 = vrot.lane.b32.xlu0 %v742, 116
        %v4263 = vpop.permute.xlu0 %4262
        %4264 = vrot.lane.b32.xlu0 %v750, 116
        %v4265 = vpop.permute.xlu0 %4264
        %4266 = vrot.lane.b32.xlu0 %v758, 116
        %v4267 = vpop.permute.xlu0 %4266
        %4268 = vrot.lane.b32.xlu0 %v766, 116
        %v4269 = vpop.permute.xlu0 %4268
        %4270 = vrot.lane.b32.xlu0 %v774, 116
        %v4271 = vpop.permute.xlu0 %4270
        %4272 = vrot.lane.b32.xlu0 %v782, 116
        %v4273 = vpop.permute.xlu0 %4272
        %4274 = vrot.lane.b32.xlu0 %v790, 116
        %v4275 = vpop.permute.xlu0 %4274
        %4276 = vrot.lane.b32.xlu0 %v798, 116
        %v4277 = vpop.permute.xlu0 %4276
        %4278 = vrot.lane.b32.xlu0 %v806, 116
        %v4279 = vpop.permute.xlu0 %4278
        %4280 = vrot.lane.b32.xlu0 %v814, 116
        %v4281 = vpop.permute.xlu0 %4280
        %4282 = vrot.lane.b32.xlu0 %v822, 116
        %v4283 = vpop.permute.xlu0 %4282
        %4284 = vrot.lane.b32.xlu0 %v830, 116
        %v4285 = vpop.permute.xlu0 %4284
        %4286 = vrot.lane.b32.xlu0 %v838, 116
        %v4287 = vpop.permute.xlu0 %4286
        %v4302 = vsel %vm893, 0, %v4261
        %v4303 = vsel %vm1205, %v4302, 0
        %v4304 = vsel %vm1212, %v4263, 0
        %v4305 = vsel %vm1219, %v4265, 0
        %v4306 = vsel %vm1226, %v4267, 0
        %v4307 = vsel %vm1233, %v4269, 0
        %v4308 = vsel %vm1240, %v4271, 0
        %v4309 = vsel %vm1247, %v4273, 0
        %v4310 = vsel %vm1254, %v4275, 0
        %v4311 = vsel %vm1261, %v4277, 0
        %v4312 = vsel %vm1268, %v4279, 0
        %v4313 = vsel %vm1275, %v4281, 0
        %v4314 = vsel %vm1282, %v4283, 0
        %v4315 = vsel %vm1289, %v4285, 0
        %v4316 = vsel %vm1296, %v4287, 0
        %s4317 = scalar_lea.vmem %s6, 2
        %v4318 = vld [vmem:[%s4317] sm:$0x3]
        %v4320 = vsel %vm446, %v4303, 0
        %v4323 = vsel %vm446, %v4304, 0
        %v4326 = vsel %vm446, %v4305, 0
        %v4329 = vsel %vm446, %v4306, 0
        %v4332 = vsel %vm446, %v4307, 0
        %v4335 = vsel %vm446, %v4308, 0
        %v4338 = vsel %vm446, %v4309, 0
        %v4341 = vsel %vm446, %v4310, 0
        %v4344 = vsel %vm446, %v4311, 0
        %v4347 = vsel %vm446, %v4312, 0
        %v4350 = vsel %vm446, %v4313, 0
        %v4353 = vsel %vm446, %v4314, 0
        %v4356 = vsel %vm446, %v4315, 0
        %v4359 = vsel %vm446, %v4316, 0
        %v4362 = vsel %vm495, %v4318, 0
        %4364 = vmatpush.bf16.msra.mxu0 0
        %4365 = vmatpush.bf16.msra.mxu0 0
        %4366 = vmatpush.bf16.msra.mxu0 0
        %4367 = vmatpush.bf16.msra.mxu0 0
        %4368 = vmatpush.bf16.msra.mxu0 0
        %4369 = vmatpush.bf16.msra.mxu0 0
        %4370 = vmatpush.bf16.msra.mxu0 0
        %4371 = vmatpush.bf16.msra.mxu0 %v4362
        %4372 = vmatmul.bf16.gmra.mxu0 %v1346
        %v4373 = vpop.f32.mrf.mxu0
        %v4374 = vadd.f32 0.0, %v4373
        %v4375 = vpop.f32.mrf.mxu0
        %v4376 = vadd.f32 0.0, %v4375
        %4377 = vmatmul.bf16.gmra.mxu0 %v1346
        %v4378 = vpop.f32.mrf.mxu0
        %v4379 = vadd.f32 0.0, %v4378
        %v4380 = vpop.f32.mrf.mxu0
        %v4381 = vadd.f32 0.0, %v4380
        %4382 = vmatmul.bf16.gmra.mxu0 %v4320
        %v4383 = vpop.f32.mrf.mxu0
        %v4384 = vadd.f32 0.0, %v4383
        %v4385 = vpop.f32.mrf.mxu0
        %v4386 = vadd.f32 0.0, %v4385
        %4387 = vmatmul.bf16.gmra.mxu0 %v4323
        %v4388 = vpop.f32.mrf.mxu0
        %v4389 = vadd.f32 0.0, %v4388
        %v4390 = vpop.f32.mrf.mxu0
        %v4391 = vadd.f32 0.0, %v4390
        %4392 = vmatmul.bf16.gmra.mxu0 %v4326
        %v4393 = vpop.f32.mrf.mxu0
        %v4394 = vadd.f32 0.0, %v4393
        %v4395 = vpop.f32.mrf.mxu0
        %v4396 = vadd.f32 0.0, %v4395
        %4397 = vmatmul.bf16.gmra.mxu0 %v4329
        %v4398 = vpop.f32.mrf.mxu0
        %v4399 = vadd.f32 0.0, %v4398
        %v4400 = vpop.f32.mrf.mxu0
        %v4401 = vadd.f32 0.0, %v4400
        %4402 = vmatmul.bf16.gmra.mxu0 %v4332
        %v4403 = vpop.f32.mrf.mxu0
        %v4404 = vadd.f32 0.0, %v4403
        %v4405 = vpop.f32.mrf.mxu0
        %v4406 = vadd.f32 0.0, %v4405
        %4407 = vmatmul.bf16.gmra.mxu0 %v4335
        %v4408 = vpop.f32.mrf.mxu0
        %v4409 = vadd.f32 0.0, %v4408
        %v4410 = vpop.f32.mrf.mxu0
        %v4411 = vadd.f32 0.0, %v4410
        %4412 = vmatmul.bf16.gmra.mxu0 %v4338
        %v4413 = vpop.f32.mrf.mxu0
        %v4414 = vadd.f32 0.0, %v4413
        %v4415 = vpop.f32.mrf.mxu0
        %v4416 = vadd.f32 0.0, %v4415
        %4417 = vmatmul.bf16.gmra.mxu0 %v4341
        %v4418 = vpop.f32.mrf.mxu0
        %v4419 = vadd.f32 0.0, %v4418
        %v4420 = vpop.f32.mrf.mxu0
        %v4421 = vadd.f32 0.0, %v4420
        %4422 = vmatmul.bf16.gmra.mxu0 %v4344
        %v4423 = vpop.f32.mrf.mxu0
        %v4424 = vadd.f32 0.0, %v4423
        %v4425 = vpop.f32.mrf.mxu0
        %v4426 = vadd.f32 0.0, %v4425
        %4427 = vmatmul.bf16.gmra.mxu0 %v4347
        %v4428 = vpop.f32.mrf.mxu0
        %v4429 = vadd.f32 0.0, %v4428
        %v4430 = vpop.f32.mrf.mxu0
        %v4431 = vadd.f32 0.0, %v4430
        %4432 = vmatmul.bf16.gmra.mxu0 %v4350
        %v4433 = vpop.f32.mrf.mxu0
        %v4434 = vadd.f32 0.0, %v4433
        %v4435 = vpop.f32.mrf.mxu0
        %v4436 = vadd.f32 0.0, %v4435
        %4437 = vmatmul.bf16.gmra.mxu0 %v4353
        %v4438 = vpop.f32.mrf.mxu0
        %v4439 = vadd.f32 0.0, %v4438
        %v4440 = vpop.f32.mrf.mxu0
        %v4441 = vadd.f32 0.0, %v4440
        %4442 = vmatmul.bf16.gmra.mxu0 %v4356
        %v4443 = vpop.f32.mrf.mxu0
        %v4444 = vadd.f32 0.0, %v4443
        %v4445 = vpop.f32.mrf.mxu0
        %v4446 = vadd.f32 0.0, %v4445
        %4447 = vmatmul.bf16.gmra.mxu0 %v4359
        %v4448 = vpop.f32.mrf.mxu0
        %v4449 = vadd.f32 0.0, %v4448
        %v4450 = vpop.f32.mrf.mxu0
        %v4451 = vadd.f32 0.0, %v4450
        %4452 = vdwg.mxu0
        %v4454 = vsel %vm446, %v4245, 0
        %v4457 = vsel %vm446, %v4246, 0
        %v4460 = vsel %vm446, %v4247, 0
        %v4463 = vsel %vm446, %v4248, 0
        %v4466 = vsel %vm446, %v4249, 0
        %v4469 = vsel %vm446, %v4250, 0
        %v4472 = vsel %vm446, %v4251, 0
        %v4475 = vsel %vm446, %v4252, 0
        %v4478 = vsel %vm446, %v4253, 0
        %v4481 = vsel %vm446, %v4254, 0
        %v4484 = vsel %vm446, %v4255, 0
        %v4487 = vsel %vm446, %v4256, 0
        %v4490 = vsel %vm446, %v4257, 0
        %v4493 = vsel %vm446, %v4258, 0
        %v4496 = vsel %vm495, %v4259, 0
        %4498 = vmatpush.bf16.msra.mxu0 0
        %4499 = vmatpush.bf16.msra.mxu0 0
        %4500 = vmatpush.bf16.msra.mxu0 0
        %4501 = vmatpush.bf16.msra.mxu0 0
        %4502 = vmatpush.bf16.msra.mxu0 0
        %4503 = vmatpush.bf16.msra.mxu0 0
        %4504 = vmatpush.bf16.msra.mxu0 0
        %4505 = vmatpush.bf16.msra.mxu0 %v4496
        %4506 = vmatmul.bf16.gmra.mxu0 %v1346
        %v4507 = vpop.f32.mrf.mxu0
        %v4508 = vadd.f32 %v4374, %v4507
        %v4509 = vpop.f32.mrf.mxu0
        %v4510 = vadd.f32 %v4376, %v4509
        %4511 = vmatmul.bf16.gmra.mxu0 %v1346
        %v4512 = vpop.f32.mrf.mxu0
        %v4513 = vadd.f32 %v4379, %v4512
        %v4514 = vpop.f32.mrf.mxu0
        %v4515 = vadd.f32 %v4381, %v4514
        %4516 = vmatmul.bf16.gmra.mxu0 %v4454
        %v4517 = vpop.f32.mrf.mxu0
        %v4518 = vadd.f32 %v4384, %v4517
        %v4519 = vpop.f32.mrf.mxu0
        %v4520 = vadd.f32 %v4386, %v4519
        %4521 = vmatmul.bf16.gmra.mxu0 %v4457
        %v4522 = vpop.f32.mrf.mxu0
        %v4523 = vadd.f32 %v4389, %v4522
        %v4524 = vpop.f32.mrf.mxu0
        %v4525 = vadd.f32 %v4391, %v4524
        %4526 = vmatmul.bf16.gmra.mxu0 %v4460
        %v4527 = vpop.f32.mrf.mxu0
        %v4528 = vadd.f32 %v4394, %v4527
        %v4529 = vpop.f32.mrf.mxu0
        %v4530 = vadd.f32 %v4396, %v4529
        %4531 = vmatmul.bf16.gmra.mxu0 %v4463
        %v4532 = vpop.f32.mrf.mxu0
        %v4533 = vadd.f32 %v4399, %v4532
        %v4534 = vpop.f32.mrf.mxu0
        %v4535 = vadd.f32 %v4401, %v4534
        %4536 = vmatmul.bf16.gmra.mxu0 %v4466
        %v4537 = vpop.f32.mrf.mxu0
        %v4538 = vadd.f32 %v4404, %v4537
        %v4539 = vpop.f32.mrf.mxu0
        %v4540 = vadd.f32 %v4406, %v4539
        %4541 = vmatmul.bf16.gmra.mxu0 %v4469
        %v4542 = vpop.f32.mrf.mxu0
        %v4543 = vadd.f32 %v4409, %v4542
        %v4544 = vpop.f32.mrf.mxu0
        %v4545 = vadd.f32 %v4411, %v4544
        %4546 = vmatmul.bf16.gmra.mxu0 %v4472
        %v4547 = vpop.f32.mrf.mxu0
        %v4548 = vadd.f32 %v4414, %v4547
        %v4549 = vpop.f32.mrf.mxu0
        %v4550 = vadd.f32 %v4416, %v4549
        %4551 = vmatmul.bf16.gmra.mxu0 %v4475
        %v4552 = vpop.f32.mrf.mxu0
        %v4553 = vadd.f32 %v4419, %v4552
        %v4554 = vpop.f32.mrf.mxu0
        %v4555 = vadd.f32 %v4421, %v4554
        %4556 = vmatmul.bf16.gmra.mxu0 %v4478
        %v4557 = vpop.f32.mrf.mxu0
        %v4558 = vadd.f32 %v4424, %v4557
        %v4559 = vpop.f32.mrf.mxu0
        %v4560 = vadd.f32 %v4426, %v4559
        %4561 = vmatmul.bf16.gmra.mxu0 %v4481
        %v4562 = vpop.f32.mrf.mxu0
        %v4563 = vadd.f32 %v4429, %v4562
        %v4564 = vpop.f32.mrf.mxu0
        %v4565 = vadd.f32 %v4431, %v4564
        %4566 = vmatmul.bf16.gmra.mxu0 %v4484
        %v4567 = vpop.f32.mrf.mxu0
        %v4568 = vadd.f32 %v4434, %v4567
        %v4569 = vpop.f32.mrf.mxu0
        %v4570 = vadd.f32 %v4436, %v4569
        %4571 = vmatmul.bf16.gmra.mxu0 %v4487
        %v4572 = vpop.f32.mrf.mxu0
        %v4573 = vadd.f32 %v4439, %v4572
        %v4574 = vpop.f32.mrf.mxu0
        %v4575 = vadd.f32 %v4441, %v4574
        %4576 = vmatmul.bf16.gmra.mxu0 %v4490
        %v4577 = vpop.f32.mrf.mxu0
        %v4578 = vadd.f32 %v4444, %v4577
        %v4579 = vpop.f32.mrf.mxu0
        %v4580 = vadd.f32 %v4446, %v4579
        %4581 = vmatmul.bf16.gmra.mxu0 %v4493
        %v4582 = vpop.f32.mrf.mxu0
        %v4583 = vadd.f32 %v4449, %v4582
        %v4584 = vpop.f32.mrf.mxu0
        %v4585 = vadd.f32 %v4451, %v4584
        %4586 = vdwg.mxu0
        %4587 = vrot.lane.b32.xlu0 %v712, 116
        %v4588 = vpop.permute.xlu0 %4587
        %4589 = vrot.lane.b32.xlu0 %v713, 116
        %v4590 = vpop.permute.xlu0 %4589
        %4591 = vrot.lane.b32.xlu0 %v714, 116
        %v4592 = vpop.permute.xlu0 %4591
        %4593 = vrot.lane.b32.xlu0 %v715, 116
        %v4594 = vpop.permute.xlu0 %4593
        %4595 = vrot.lane.b32.xlu0 %v716, 116
        %v4596 = vpop.permute.xlu0 %4595
        %4597 = vrot.lane.b32.xlu0 %v717, 116
        %v4598 = vpop.permute.xlu0 %4597
        %4599 = vrot.lane.b32.xlu0 %v718, 116
        %v4600 = vpop.permute.xlu0 %4599
        %4601 = vrot.lane.b32.xlu0 %v719, 116
        %v4602 = vpop.permute.xlu0 %4601
        %4603 = vrot.lane.b32.xlu0 %v720, 116
        %v4604 = vpop.permute.xlu0 %4603
        %4605 = vrot.lane.b32.xlu0 %v721, 116
        %v4606 = vpop.permute.xlu0 %4605
        %4607 = vrot.lane.b32.xlu0 %v722, 116
        %v4608 = vpop.permute.xlu0 %4607
        %4609 = vrot.lane.b32.xlu0 %v723, 116
        %v4610 = vpop.permute.xlu0 %4609
        %4611 = vrot.lane.b32.xlu0 %v724, 116
        %v4612 = vpop.permute.xlu0 %4611
        %4613 = vrot.lane.b32.xlu0 %v725, 116
        %v4614 = vpop.permute.xlu0 %4613
        %s4615 = scalar_lea.vmem %s6, 4
        %v4616 = vld [vmem:[%s4615] sm:$0x3]
        %v4618 = vsel %vm446, %v4588, 0
        %v4621 = vsel %vm446, %v4590, 0
        %v4624 = vsel %vm446, %v4592, 0
        %v4627 = vsel %vm446, %v4594, 0
        %v4630 = vsel %vm446, %v4596, 0
        %v4633 = vsel %vm446, %v4598, 0
        %v4636 = vsel %vm446, %v4600, 0
        %v4639 = vsel %vm446, %v4602, 0
        %v4642 = vsel %vm446, %v4604, 0
        %v4645 = vsel %vm446, %v4606, 0
        %v4648 = vsel %vm446, %v4608, 0
        %v4651 = vsel %vm446, %v4610, 0
        %v4654 = vsel %vm446, %v4612, 0
        %v4657 = vsel %vm446, %v4614, 0
        %v4660 = vsel %vm495, %v4616, 0
        %4662 = vmatpush.bf16.msra.mxu0 0
        %4663 = vmatpush.bf16.msra.mxu0 0
        %4664 = vmatpush.bf16.msra.mxu0 0
        %4665 = vmatpush.bf16.msra.mxu0 0
        %4666 = vmatpush.bf16.msra.mxu0 0
        %4667 = vmatpush.bf16.msra.mxu0 0
        %4668 = vmatpush.bf16.msra.mxu0 0
        %4669 = vmatpush.bf16.msra.mxu0 %v4660
        %4670 = vmatmul.bf16.gmra.mxu0 %v1346
        %v4671 = vpop.f32.mrf.mxu0
        %v4672 = vadd.f32 0.0, %v4671
        %v4673 = vpop.f32.mrf.mxu0
        %v4674 = vadd.f32 0.0, %v4673
        %4675 = vmatmul.bf16.gmra.mxu0 %v1346
        %v4676 = vpop.f32.mrf.mxu0
        %v4677 = vadd.f32 0.0, %v4676
        %v4678 = vpop.f32.mrf.mxu0
        %v4679 = vadd.f32 0.0, %v4678
        %4680 = vmatmul.bf16.gmra.mxu0 %v4618
        %v4681 = vpop.f32.mrf.mxu0
        %v4682 = vadd.f32 0.0, %v4681
        %v4683 = vpop.f32.mrf.mxu0
        %v4684 = vadd.f32 0.0, %v4683
        %4685 = vmatmul.bf16.gmra.mxu0 %v4621
        %v4686 = vpop.f32.mrf.mxu0
        %v4687 = vadd.f32 0.0, %v4686
        %v4688 = vpop.f32.mrf.mxu0
        %v4689 = vadd.f32 0.0, %v4688
        %4690 = vmatmul.bf16.gmra.mxu0 %v4624
        %v4691 = vpop.f32.mrf.mxu0
        %v4692 = vadd.f32 0.0, %v4691
        %v4693 = vpop.f32.mrf.mxu0
        %v4694 = vadd.f32 0.0, %v4693
        %4695 = vmatmul.bf16.gmra.mxu0 %v4627
        %v4696 = vpop.f32.mrf.mxu0
        %v4697 = vadd.f32 0.0, %v4696
        %v4698 = vpop.f32.mrf.mxu0
        %v4699 = vadd.f32 0.0, %v4698
        %4700 = vmatmul.bf16.gmra.mxu0 %v4630
        %v4701 = vpop.f32.mrf.mxu0
        %v4702 = vadd.f32 0.0, %v4701
        %v4703 = vpop.f32.mrf.mxu0
        %v4704 = vadd.f32 0.0, %v4703
        %4705 = vmatmul.bf16.gmra.mxu0 %v4633
        %v4706 = vpop.f32.mrf.mxu0
        %v4707 = vadd.f32 0.0, %v4706
        %v4708 = vpop.f32.mrf.mxu0
        %v4709 = vadd.f32 0.0, %v4708
        %4710 = vmatmul.bf16.gmra.mxu0 %v4636
        %v4711 = vpop.f32.mrf.mxu0
        %v4712 = vadd.f32 0.0, %v4711
        %v4713 = vpop.f32.mrf.mxu0
        %v4714 = vadd.f32 0.0, %v4713
        %4715 = vmatmul.bf16.gmra.mxu0 %v4639
        %v4716 = vpop.f32.mrf.mxu0
        %v4717 = vadd.f32 0.0, %v4716
        %v4718 = vpop.f32.mrf.mxu0
        %v4719 = vadd.f32 0.0, %v4718
        %4720 = vmatmul.bf16.gmra.mxu0 %v4642
        %v4721 = vpop.f32.mrf.mxu0
        %v4722 = vadd.f32 0.0, %v4721
        %v4723 = vpop.f32.mrf.mxu0
        %v4724 = vadd.f32 0.0, %v4723
        %4725 = vmatmul.bf16.gmra.mxu0 %v4645
        %v4726 = vpop.f32.mrf.mxu0
        %v4727 = vadd.f32 0.0, %v4726
        %v4728 = vpop.f32.mrf.mxu0
        %v4729 = vadd.f32 0.0, %v4728
        %4730 = vmatmul.bf16.gmra.mxu0 %v4648
        %v4731 = vpop.f32.mrf.mxu0
        %v4732 = vadd.f32 0.0, %v4731
        %v4733 = vpop.f32.mrf.mxu0
        %v4734 = vadd.f32 0.0, %v4733
        %4735 = vmatmul.bf16.gmra.mxu0 %v4651
        %v4736 = vpop.f32.mrf.mxu0
        %v4737 = vadd.f32 0.0, %v4736
        %v4738 = vpop.f32.mrf.mxu0
        %v4739 = vadd.f32 0.0, %v4738
        %4740 = vmatmul.bf16.gmra.mxu0 %v4654
        %v4741 = vpop.f32.mrf.mxu0
        %v4742 = vadd.f32 0.0, %v4741
        %v4743 = vpop.f32.mrf.mxu0
        %v4744 = vadd.f32 0.0, %v4743
        %4745 = vmatmul.bf16.gmra.mxu0 %v4657
        %v4746 = vpop.f32.mrf.mxu0
        %v4747 = vadd.f32 0.0, %v4746
        %v4748 = vpop.f32.mrf.mxu0
        %v4749 = vadd.f32 0.0, %v4748
        %4750 = vdwg.mxu0
        %v4751 = vadd.f32 %v4508, %v4672
        %v4752 = vadd.f32 %v4510, %v4674
        %v4753 = vadd.f32 %v4513, %v4677
        %v4754 = vadd.f32 %v4515, %v4679
        %v4755 = vadd.f32 %v4518, %v4682
        %v4756 = vadd.f32 %v4520, %v4684
        %v4757 = vadd.f32 %v4523, %v4687
        %v4758 = vadd.f32 %v4525, %v4689
        %v4759 = vadd.f32 %v4528, %v4692
        %v4760 = vadd.f32 %v4530, %v4694
        %v4761 = vadd.f32 %v4533, %v4697
        %v4762 = vadd.f32 %v4535, %v4699
        %v4763 = vadd.f32 %v4538, %v4702
        %v4764 = vadd.f32 %v4540, %v4704
        %v4765 = vadd.f32 %v4543, %v4707
        %v4766 = vadd.f32 %v4545, %v4709
        %v4767 = vadd.f32 %v4548, %v4712
        %v4768 = vadd.f32 %v4550, %v4714
        %v4769 = vadd.f32 %v4553, %v4717
        %v4770 = vadd.f32 %v4555, %v4719
        %v4771 = vadd.f32 %v4558, %v4722
        %v4772 = vadd.f32 %v4560, %v4724
        %v4773 = vadd.f32 %v4563, %v4727
        %v4774 = vadd.f32 %v4565, %v4729
        %v4775 = vadd.f32 %v4568, %v4732
        %v4776 = vadd.f32 %v4570, %v4734
        %v4777 = vadd.f32 %v4573, %v4737
        %v4778 = vadd.f32 %v4575, %v4739
        %v4779 = vadd.f32 %v4578, %v4742
        %v4780 = vadd.f32 %v4580, %v4744
        %v4781 = vadd.f32 %v4583, %v4747
        %v4782 = vadd.f32 %v4585, %v4749
        %v4783 = vpack.c.b16 %v710, %v710
        %v4785 = vshll.u32 %v4783, 16
        %v4787 = vrot.slane %v4785, 1
        %v4788 = vsel %vm1625, %v1666, %v4787
        %4789 = vrot.lane.b32.xlu0 %v1626, 116
        %v4790 = vpop.permute.xlu0 %4789
        %4791 = vrot.lane.b32.xlu0 %v1629, 116
        %v4792 = vpop.permute.xlu0 %4791
        %4793 = vrot.lane.b32.xlu0 %v1632, 116
        %v4794 = vpop.permute.xlu0 %4793
        %4795 = vrot.lane.b32.xlu0 %v1635, 116
        %v4796 = vpop.permute.xlu0 %4795
        %4797 = vrot.lane.b32.xlu0 %v1638, 116
        %v4798 = vpop.permute.xlu0 %4797
        %4799 = vrot.lane.b32.xlu0 %v1641, 116
        %v4800 = vpop.permute.xlu0 %4799
        %4801 = vrot.lane.b32.xlu0 %v1644, 116
        %v4802 = vpop.permute.xlu0 %4801
        %4803 = vrot.lane.b32.xlu0 %v1647, 116
        %v4804 = vpop.permute.xlu0 %4803
        %4805 = vrot.lane.b32.xlu0 %v1650, 116
        %v4806 = vpop.permute.xlu0 %4805
        %4807 = vrot.lane.b32.xlu0 %v1653, 116
        %v4808 = vpop.permute.xlu0 %4807
        %4809 = vrot.lane.b32.xlu0 %v1656, 116
        %v4810 = vpop.permute.xlu0 %4809
        %4811 = vrot.lane.b32.xlu0 %v1659, 116
        %v4812 = vpop.permute.xlu0 %4811
        %4813 = vrot.lane.b32.xlu0 %v1662, 116
        %v4814 = vpop.permute.xlu0 %4813
        %4815 = vrot.lane.b32.xlu0 %v1665, 116
        %v4816 = vpop.permute.xlu0 %4815
        %4817 = vrot.lane.b32.xlu0 %v4788, 116
        %v4818 = vpop.permute.xlu0 %4817
        %v4834 = vsel %vm1724, 0, %v4790
        %v4835 = vsel %vm2043, %v4834, 0
        %v4836 = vsel %vm2050, %v4792, 0
        %v4837 = vsel %vm2057, %v4794, 0
        %v4838 = vsel %vm2064, %v4796, 0
        %v4839 = vsel %vm2071, %v4798, 0
        %v4840 = vsel %vm2078, %v4800, 0
        %v4841 = vsel %vm2085, %v4802, 0
        %v4842 = vsel %vm2092, %v4804, 0
        %v4843 = vsel %vm2099, %v4806, 0
        %v4844 = vsel %vm2106, %v4808, 0
        %v4845 = vsel %vm2113, %v4810, 0
        %v4846 = vsel %vm2120, %v4812, 0
        %v4847 = vsel %vm2127, %v4814, 0
        %v4848 = vsel %vm2134, %v4816, 0
        %v4849 = vsel %vm2141, %v4818, 0
        %s4850 = scalar_lea.vmem %s6, 6
        %v4851 = vld [vmem:[%s4850] sm:$0x3]
        %v4853 = vsel %vm446, %v4835, 0
        %v4856 = vsel %vm446, %v4836, 0
        %v4859 = vsel %vm446, %v4837, 0
        %v4862 = vsel %vm446, %v4838, 0
        %v4865 = vsel %vm446, %v4839, 0
        %v4868 = vsel %vm446, %v4840, 0
        %v4871 = vsel %vm446, %v4841, 0
        %v4874 = vsel %vm446, %v4842, 0
        %v4877 = vsel %vm446, %v4843, 0
        %v4880 = vsel %vm446, %v4844, 0
        %v4883 = vsel %vm446, %v4845, 0
        %v4886 = vsel %vm446, %v4846, 0
        %v4889 = vsel %vm446, %v4847, 0
        %v4892 = vsel %vm446, %v4848, 0
        %v4895 = vsel %vm446, %v4849, 0
        %v4898 = vsel %vm495, %v4851, 0
        %4900 = vmatpush.bf16.msra.mxu0 0
        %4901 = vmatpush.bf16.msra.mxu0 0
        %4902 = vmatpush.bf16.msra.mxu0 0
        %4903 = vmatpush.bf16.msra.mxu0 0
        %4904 = vmatpush.bf16.msra.mxu0 0
        %4905 = vmatpush.bf16.msra.mxu0 0
        %4906 = vmatpush.bf16.msra.mxu0 0
        %4907 = vmatpush.bf16.msra.mxu0 %v4898
        %4908 = vmatmul.bf16.gmra.mxu0 %v1346
        %v4909 = vpop.f32.mrf.mxu0
        %v4910 = vadd.f32 0.0, %v4909
        %v4911 = vpop.f32.mrf.mxu0
        %v4912 = vadd.f32 0.0, %v4911
        %4913 = vmatmul.bf16.gmra.mxu0 %v4853
        %v4914 = vpop.f32.mrf.mxu0
        %v4915 = vadd.f32 0.0, %v4914
        %v4916 = vpop.f32.mrf.mxu0
        %v4917 = vadd.f32 0.0, %v4916
        %4918 = vmatmul.bf16.gmra.mxu0 %v4856
        %v4919 = vpop.f32.mrf.mxu0
        %v4920 = vadd.f32 0.0, %v4919
        %v4921 = vpop.f32.mrf.mxu0
        %v4922 = vadd.f32 0.0, %v4921
        %4923 = vmatmul.bf16.gmra.mxu0 %v4859
        %v4924 = vpop.f32.mrf.mxu0
        %v4925 = vadd.f32 0.0, %v4924
        %v4926 = vpop.f32.mrf.mxu0
        %v4927 = vadd.f32 0.0, %v4926
        %4928 = vmatmul.bf16.gmra.mxu0 %v4862
        %v4929 = vpop.f32.mrf.mxu0
        %v4930 = vadd.f32 0.0, %v4929
        %v4931 = vpop.f32.mrf.mxu0
        %v4932 = vadd.f32 0.0, %v4931
        %4933 = vmatmul.bf16.gmra.mxu0 %v4865
        %v4934 = vpop.f32.mrf.mxu0
        %v4935 = vadd.f32 0.0, %v4934
        %v4936 = vpop.f32.mrf.mxu0
        %v4937 = vadd.f32 0.0, %v4936
        %4938 = vmatmul.bf16.gmra.mxu0 %v4868
        %v4939 = vpop.f32.mrf.mxu0
        %v4940 = vadd.f32 0.0, %v4939
        %v4941 = vpop.f32.mrf.mxu0
        %v4942 = vadd.f32 0.0, %v4941
        %4943 = vmatmul.bf16.gmra.mxu0 %v4871
        %v4944 = vpop.f32.mrf.mxu0
        %v4945 = vadd.f32 0.0, %v4944
        %v4946 = vpop.f32.mrf.mxu0
        %v4947 = vadd.f32 0.0, %v4946
        %4948 = vmatmul.bf16.gmra.mxu0 %v4874
        %v4949 = vpop.f32.mrf.mxu0
        %v4950 = vadd.f32 0.0, %v4949
        %v4951 = vpop.f32.mrf.mxu0
        %v4952 = vadd.f32 0.0, %v4951
        %4953 = vmatmul.bf16.gmra.mxu0 %v4877
        %v4954 = vpop.f32.mrf.mxu0
        %v4955 = vadd.f32 0.0, %v4954
        %v4956 = vpop.f32.mrf.mxu0
        %v4957 = vadd.f32 0.0, %v4956
        %4958 = vmatmul.bf16.gmra.mxu0 %v4880
        %v4959 = vpop.f32.mrf.mxu0
        %v4960 = vadd.f32 0.0, %v4959
        %v4961 = vpop.f32.mrf.mxu0
        %v4962 = vadd.f32 0.0, %v4961
        %4963 = vmatmul.bf16.gmra.mxu0 %v4883
        %v4964 = vpop.f32.mrf.mxu0
        %v4965 = vadd.f32 0.0, %v4964
        %v4966 = vpop.f32.mrf.mxu0
        %v4967 = vadd.f32 0.0, %v4966
        %4968 = vmatmul.bf16.gmra.mxu0 %v4886
        %v4969 = vpop.f32.mrf.mxu0
        %v4970 = vadd.f32 0.0, %v4969
        %v4971 = vpop.f32.mrf.mxu0
        %v4972 = vadd.f32 0.0, %v4971
        %4973 = vmatmul.bf16.gmra.mxu0 %v4889
        %v4974 = vpop.f32.mrf.mxu0
        %v4975 = vadd.f32 0.0, %v4974
        %v4976 = vpop.f32.mrf.mxu0
        %v4977 = vadd.f32 0.0, %v4976
        %4978 = vmatmul.bf16.gmra.mxu0 %v4892
        %v4979 = vpop.f32.mrf.mxu0
        %v4980 = vadd.f32 0.0, %v4979
        %v4981 = vpop.f32.mrf.mxu0
        %v4982 = vadd.f32 0.0, %v4981
        %4983 = vmatmul.bf16.gmra.mxu0 %v4895
        %v4984 = vpop.f32.mrf.mxu0
        %v4985 = vadd.f32 0.0, %v4984
        %v4986 = vpop.f32.mrf.mxu0
        %v4987 = vadd.f32 0.0, %v4986
        %4988 = vdwg.mxu0
        %v4989 = vadd.f32 %v4751, %v4910
        %v4990 = vadd.f32 %v4752, %v4912
        %v4991 = vadd.f32 %v4753, %v4915
        %v4992 = vadd.f32 %v4754, %v4917
        %v4993 = vadd.f32 %v4755, %v4920
        %v4994 = vadd.f32 %v4756, %v4922
        %v4995 = vadd.f32 %v4757, %v4925
        %v4996 = vadd.f32 %v4758, %v4927
        %v4997 = vadd.f32 %v4759, %v4930
        %v4998 = vadd.f32 %v4760, %v4932
        %v4999 = vadd.f32 %v4761, %v4935
        %v5000 = vadd.f32 %v4762, %v4937
        %v5001 = vadd.f32 %v4763, %v4940
        %v5002 = vadd.f32 %v4764, %v4942
        %v5003 = vadd.f32 %v4765, %v4945
        %v5004 = vadd.f32 %v4766, %v4947
        %v5005 = vadd.f32 %v4767, %v4950
        %v5006 = vadd.f32 %v4768, %v4952
        %v5007 = vadd.f32 %v4769, %v4955
        %v5008 = vadd.f32 %v4770, %v4957
        %v5009 = vadd.f32 %v4771, %v4960
        %v5010 = vadd.f32 %v4772, %v4962
        %v5011 = vadd.f32 %v4773, %v4965
        %v5012 = vadd.f32 %v4774, %v4967
        %v5013 = vadd.f32 %v4775, %v4970
        %v5014 = vadd.f32 %v4776, %v4972
        %v5015 = vadd.f32 %v4777, %v4975
        %v5016 = vadd.f32 %v4778, %v4977
        %v5017 = vadd.f32 %v4779, %v4980
        %v5018 = vadd.f32 %v4780, %v4982
        %v5019 = vadd.f32 %v4781, %v4985
        %v5020 = vadd.f32 %v4782, %v4987
        %vm5021 = vcmask 1046528
        %v5022 = vrot.slane %v712, 1
        %v5023 = vrot.slane %v713, 1
        %v5024 = vsel %vm5021, %v5022, %v5023
        %v5025 = vrot.slane %v714, 1
        %v5026 = vsel %vm5021, %v5023, %v5025
        %v5027 = vrot.slane %v715, 1
        %v5028 = vsel %vm5021, %v5025, %v5027
        %v5029 = vrot.slane %v716, 1
        %v5030 = vsel %vm5021, %v5027, %v5029
        %v5031 = vrot.slane %v717, 1
        %v5032 = vsel %vm5021, %v5029, %v5031
        %v5033 = vrot.slane %v718, 1
        %v5034 = vsel %vm5021, %v5031, %v5033
        %v5035 = vrot.slane %v719, 1
        %v5036 = vsel %vm5021, %v5033, %v5035
        %v5037 = vrot.slane %v720, 1
        %v5038 = vsel %vm5021, %v5035, %v5037
        %v5039 = vrot.slane %v721, 1
        %v5040 = vsel %vm5021, %v5037, %v5039
        %v5041 = vrot.slane %v722, 1
        %v5042 = vsel %vm5021, %v5039, %v5041
        %v5043 = vrot.slane %v723, 1
        %v5044 = vsel %vm5021, %v5041, %v5043
        %v5045 = vrot.slane %v724, 1
        %v5046 = vsel %vm5021, %v5043, %v5045
        %v5047 = vrot.slane %v725, 1
        %v5048 = vsel %vm5021, %v5045, %v5047
        %v5049 = vrot.slane %v4783, 1
        %v5050 = vsel %vm5021, %v5047, %v5049
        %5051 = vrot.lane.b32.xlu0 %v5022, 116
        %v5052 = vpop.permute.xlu0 %5051
        %5053 = vrot.lane.b32.xlu0 %v5024, 116
        %v5054 = vpop.permute.xlu0 %5053
        %5055 = vrot.lane.b32.xlu0 %v5026, 116
        %v5056 = vpop.permute.xlu0 %5055
        %5057 = vrot.lane.b32.xlu0 %v5028, 116
        %v5058 = vpop.permute.xlu0 %5057
        %5059 = vrot.lane.b32.xlu0 %v5030, 116
        %v5060 = vpop.permute.xlu0 %5059
        %5061 = vrot.lane.b32.xlu0 %v5032, 116
        %v5062 = vpop.permute.xlu0 %5061
        %5063 = vrot.lane.b32.xlu0 %v5034, 116
        %v5064 = vpop.permute.xlu0 %5063
        %5065 = vrot.lane.b32.xlu0 %v5036, 116
        %v5066 = vpop.permute.xlu0 %5065
        %5067 = vrot.lane.b32.xlu0 %v5038, 116
        %v5068 = vpop.permute.xlu0 %5067
        %5069 = vrot.lane.b32.xlu0 %v5040, 116
        %v5070 = vpop.permute.xlu0 %5069
        %5071 = vrot.lane.b32.xlu0 %v5042, 116
        %v5072 = vpop.permute.xlu0 %5071
        %5073 = vrot.lane.b32.xlu0 %v5044, 116
        %v5074 = vpop.permute.xlu0 %5073
        %5075 = vrot.lane.b32.xlu0 %v5046, 116
        %v5076 = vpop.permute.xlu0 %5075
        %5077 = vrot.lane.b32.xlu0 %v5048, 116
        %v5078 = vpop.permute.xlu0 %5077
        %5079 = vrot.lane.b32.xlu0 %v5050, 116
        %v5080 = vpop.permute.xlu0 %5079
        %vm5095 = vcmask 1046528
        %v5097 = vsel %vm5095, 0, %v5052
        %vm5099 = vcmp.lt.s32.totalorder %v361, 14
        %vm5100 = vcmp.lt.s32.totalorder %v362, 14
        %vm5101 = vcmp.lt.s32.totalorder %v363, 14
        %vm5102 = vcmp.lt.s32.totalorder %v364, 14
        %vm5103 = vcmp.lt.s32.totalorder %v365, 14
        %vm5104 = vcmp.lt.s32.totalorder %v366, 14
        %vm5105 = vcmp.lt.s32.totalorder %v367, 14
        %vm5106 = vcmp.lt.s32.totalorder %v368, 14
        %vm5107 = vcmp.lt.s32.totalorder %v369, 14
        %vm5108 = vcmp.lt.s32.totalorder %v370, 14
        %vm5109 = vcmp.lt.s32.totalorder %v371, 14
        %vm5110 = vcmp.lt.s32.totalorder %v372, 14
        %vm5111 = vcmp.lt.s32.totalorder %v373, 14
        %vm5112 = vcmp.lt.s32.totalorder %v374, 14
        %vm5113 = vcmp.lt.s32.totalorder %v375, 14
        %vm5114 = vcmp.lt.s32.totalorder %v376, 14
        %vm5115 = vcmp.lt.s32.totalorder %v377, 14
        %vm5116 = vcmp.lt.s32.totalorder %v378, 14
        %vm5117 = vcmp.lt.s32.totalorder %v379, 14
        %vm5118 = vcmp.lt.s32.totalorder %v380, 14
        %vm5119 = vcmp.lt.s32.totalorder %v381, 14
        %vm5120 = vcmp.lt.s32.totalorder %v382, 14
        %vm5121 = vcmp.lt.s32.totalorder %v383, 14
        %vm5122 = vcmp.lt.s32.totalorder %v384, 14
        %vm5123 = vcmp.lt.s32.totalorder %v385, 14
        %vm5124 = vcmp.lt.s32.totalorder %v386, 14
        %vm5125 = vcmp.lt.s32.totalorder %v387, 14
        %vm5126 = vcmp.lt.s32.totalorder %v388, 14
        %vm5127 = vcmp.lt.s32.totalorder %v389, 14
        %vm5128 = vcmp.lt.s32.totalorder %v390, 14
        %vm5129 = vcmp.lt.s32.totalorder %v391, 14
        %vm5130 = vcmp.lt.s32.totalorder %v392, 14
        %v5131 = vsel %vm5099, 1, 0
        %v5132 = vsel %vm5100, 1, 0
        %v5133 = vsel %vm5101, 1, 0
        %v5134 = vsel %vm5102, 1, 0
        %v5135 = vsel %vm5103, 1, 0
        %v5136 = vsel %vm5104, 1, 0
        %v5137 = vsel %vm5105, 1, 0
        %v5138 = vsel %vm5106, 1, 0
        %v5139 = vsel %vm5107, 1, 0
        %v5140 = vsel %vm5108, 1, 0
        %v5141 = vsel %vm5109, 1, 0
        %v5142 = vsel %vm5110, 1, 0
        %v5143 = vsel %vm5111, 1, 0
        %v5144 = vsel %vm5112, 1, 0
        %v5145 = vsel %vm5113, 1, 0
        %v5146 = vsel %vm5114, 1, 0
        %v5147 = vsel %vm5115, 1, 0
        %v5148 = vsel %vm5116, 1, 0
        %v5149 = vsel %vm5117, 1, 0
        %v5150 = vsel %vm5118, 1, 0
        %v5151 = vsel %vm5119, 1, 0
        %v5152 = vsel %vm5120, 1, 0
        %v5153 = vsel %vm5121, 1, 0
        %v5154 = vsel %vm5122, 1, 0
        %v5155 = vsel %vm5123, 1, 0
        %v5156 = vsel %vm5124, 1, 0
        %v5157 = vsel %vm5125, 1, 0
        %v5158 = vsel %vm5126, 1, 0
        %v5159 = vsel %vm5127, 1, 0
        %v5160 = vsel %vm5128, 1, 0
        %v5161 = vsel %vm5129, 1, 0
        %v5162 = vsel %vm5130, 1, 0
        %5163 = vset.pattern.permute.xlu0 0
        %5164 = vperm.xlu0 %5163, %v5131
        %v5165 = vpop.permute.xlu0 %5164
        %5166 = vset.pattern.permute.xlu0 0
        %5167 = vperm.xlu0 %5166, %v5132
        %v5168 = vpop.permute.xlu0 %5167
        %5169 = vset.pattern.permute.xlu0 0
        %5170 = vperm.xlu0 %5169, %v5133
        %v5171 = vpop.permute.xlu0 %5170
        %5172 = vset.pattern.permute.xlu0 0
        %5173 = vperm.xlu0 %5172, %v5134
        %v5174 = vpop.permute.xlu0 %5173
        %5175 = vset.pattern.permute.xlu0 0
        %5176 = vperm.xlu0 %5175, %v5135
        %v5177 = vpop.permute.xlu0 %5176
        %5178 = vset.pattern.permute.xlu0 0
        %5179 = vperm.xlu0 %5178, %v5136
        %v5180 = vpop.permute.xlu0 %5179
        %5181 = vset.pattern.permute.xlu0 0
        %5182 = vperm.xlu0 %5181, %v5137
        %v5183 = vpop.permute.xlu0 %5182
        %5184 = vset.pattern.permute.xlu0 0
        %5185 = vperm.xlu0 %5184, %v5138
        %v5186 = vpop.permute.xlu0 %5185
        %5187 = vset.pattern.permute.xlu0 0
        %5188 = vperm.xlu0 %5187, %v5139
        %v5189 = vpop.permute.xlu0 %5188
        %5190 = vset.pattern.permute.xlu0 0
        %5191 = vperm.xlu0 %5190, %v5140
        %v5192 = vpop.permute.xlu0 %5191
        %5193 = vset.pattern.permute.xlu0 0
        %5194 = vperm.xlu0 %5193, %v5141
        %v5195 = vpop.permute.xlu0 %5194
        %5196 = vset.pattern.permute.xlu0 0
        %5197 = vperm.xlu0 %5196, %v5142
        %v5198 = vpop.permute.xlu0 %5197
        %5199 = vset.pattern.permute.xlu0 0
        %5200 = vperm.xlu0 %5199, %v5143
        %v5201 = vpop.permute.xlu0 %5200
        %5202 = vset.pattern.permute.xlu0 0
        %5203 = vperm.xlu0 %5202, %v5144
        %v5204 = vpop.permute.xlu0 %5203
        %5205 = vset.pattern.permute.xlu0 0
        %5206 = vperm.xlu0 %5205, %v5145
        %v5207 = vpop.permute.xlu0 %5206
        %5208 = vset.pattern.permute.xlu0 0
        %5209 = vperm.xlu0 %5208, %v5146
        %v5210 = vpop.permute.xlu0 %5209
        %5211 = vset.pattern.permute.xlu0 0
        %5212 = vperm.xlu0 %5211, %v5147
        %v5213 = vpop.permute.xlu0 %5212
        %5214 = vset.pattern.permute.xlu0 0
        %5215 = vperm.xlu0 %5214, %v5148
        %v5216 = vpop.permute.xlu0 %5215
        %5217 = vset.pattern.permute.xlu0 0
        %5218 = vperm.xlu0 %5217, %v5149
        %v5219 = vpop.permute.xlu0 %5218
        %5220 = vset.pattern.permute.xlu0 0
        %5221 = vperm.xlu0 %5220, %v5150
        %v5222 = vpop.permute.xlu0 %5221
        %5223 = vset.pattern.permute.xlu0 0
        %5224 = vperm.xlu0 %5223, %v5151
        %v5225 = vpop.permute.xlu0 %5224
        %5226 = vset.pattern.permute.xlu0 0
        %5227 = vperm.xlu0 %5226, %v5152
        %v5228 = vpop.permute.xlu0 %5227
        %5229 = vset.pattern.permute.xlu0 0
        %5230 = vperm.xlu0 %5229, %v5153
        %v5231 = vpop.permute.xlu0 %5230
        %5232 = vset.pattern.permute.xlu0 0
        %5233 = vperm.xlu0 %5232, %v5154
        %v5234 = vpop.permute.xlu0 %5233
        %5235 = vset.pattern.permute.xlu0 0
        %5236 = vperm.xlu0 %5235, %v5155
        %v5237 = vpop.permute.xlu0 %5236
        %5238 = vset.pattern.permute.xlu0 0
        %5239 = vperm.xlu0 %5238, %v5156
        %v5240 = vpop.permute.xlu0 %5239
        %5241 = vset.pattern.permute.xlu0 0
        %5242 = vperm.xlu0 %5241, %v5157
        %v5243 = vpop.permute.xlu0 %5242
        %5244 = vset.pattern.permute.xlu0 0
        %5245 = vperm.xlu0 %5244, %v5158
        %v5246 = vpop.permute.xlu0 %5245
        %5247 = vset.pattern.permute.xlu0 0
        %5248 = vperm.xlu0 %5247, %v5159
        %v5249 = vpop.permute.xlu0 %5248
        %5250 = vset.pattern.permute.xlu0 0
        %5251 = vperm.xlu0 %5250, %v5160
        %v5252 = vpop.permute.xlu0 %5251
        %5253 = vset.pattern.permute.xlu0 0
        %5254 = vperm.xlu0 %5253, %v5161
        %v5255 = vpop.permute.xlu0 %5254
        %5256 = vset.pattern.permute.xlu0 0
        %5257 = vperm.xlu0 %5256, %v5162
        %v5258 = vpop.permute.xlu0 %5257
        %vm5259 = vcmp.eq.s32.totalorder %v5165, 1
        %vm5260 = vcmp.eq.s32.totalorder %v5168, 1
        %vm5261 = vcmp.eq.s32.totalorder %v5171, 1
        %vm5262 = vcmp.eq.s32.totalorder %v5174, 1
        %vm5263 = vcmp.eq.s32.totalorder %v5177, 1
        %vm5264 = vcmp.eq.s32.totalorder %v5180, 1
        %vm5265 = vcmp.eq.s32.totalorder %v5183, 1
        %vm5266 = vcmp.eq.s32.totalorder %v5186, 1
        %vm5267 = vcmp.eq.s32.totalorder %v5189, 1
        %vm5268 = vcmp.eq.s32.totalorder %v5192, 1
        %vm5269 = vcmp.eq.s32.totalorder %v5195, 1
        %vm5270 = vcmp.eq.s32.totalorder %v5198, 1
        %vm5271 = vcmp.eq.s32.totalorder %v5201, 1
        %vm5272 = vcmp.eq.s32.totalorder %v5204, 1
        %vm5273 = vcmp.eq.s32.totalorder %v5207, 1
        %vm5274 = vcmp.eq.s32.totalorder %v5210, 1
        %vm5275 = vcmp.eq.s32.totalorder %v5213, 1
        %vm5276 = vcmp.eq.s32.totalorder %v5216, 1
        %vm5277 = vcmp.eq.s32.totalorder %v5219, 1
        %vm5278 = vcmp.eq.s32.totalorder %v5222, 1
        %vm5279 = vcmp.eq.s32.totalorder %v5225, 1
        %vm5280 = vcmp.eq.s32.totalorder %v5228, 1
        %vm5281 = vcmp.eq.s32.totalorder %v5231, 1
        %vm5282 = vcmp.eq.s32.totalorder %v5234, 1
        %vm5283 = vcmp.eq.s32.totalorder %v5237, 1
        %vm5284 = vcmp.eq.s32.totalorder %v5240, 1
        %vm5285 = vcmp.eq.s32.totalorder %v5243, 1
        %vm5286 = vcmp.eq.s32.totalorder %v5246, 1
        %vm5287 = vcmp.eq.s32.totalorder %v5249, 1
        %vm5288 = vcmp.eq.s32.totalorder %v5252, 1
        %vm5289 = vcmp.eq.s32.totalorder %v5255, 1
        %vm5290 = vcmp.eq.s32.totalorder %v5258, 1
        %vm5291 = vmpackc.low %vm5261, %vm5261
        %vm5292 = vmpackc.low %vm5262, %vm5262
        %vm5293 = vmpackc.low %vm5263, %vm5263
        %vm5294 = vmpackc.low %vm5264, %vm5264
        %vm5295 = vmpackc.low %vm5265, %vm5265
        %vm5296 = vmpackc.low %vm5266, %vm5266
        %vm5297 = vmpackc.low %vm5267, %vm5267
        %vm5298 = vmpackc.low %vm5268, %vm5268
        %vm5299 = vmpackc.low %vm5269, %vm5269
        %vm5300 = vmpackc.low %vm5270, %vm5270
        %vm5301 = vmpackc.low %vm5271, %vm5271
        %vm5302 = vmpackc.low %vm5272, %vm5272
        %vm5303 = vmpackc.low %vm5273, %vm5273
        %vm5304 = vmpackc.low %vm5274, %vm5274
        %vm5305 = vmpackc.low %vm5275, %vm5275
        %vm5306 = vmpackc.low %vm5276, %vm5276
        %vm5307 = vmpackc.low %vm5277, %vm5277
        %vm5308 = vmpackc.low %vm5278, %vm5278
        %vm5309 = vmpackc.low %vm5279, %vm5279
        %vm5310 = vmpackc.low %vm5280, %vm5280
        %vm5311 = vmpackc.low %vm5281, %vm5281
        %vm5312 = vmpackc.low %vm5282, %vm5282
        %vm5313 = vmpackc.low %vm5283, %vm5283
        %vm5314 = vmpackc.low %vm5284, %vm5284
        %vm5315 = vmpackc.low %vm5285, %vm5285
        %vm5316 = vmpackc.low %vm5286, %vm5286
        %vm5317 = vmpackc.low %vm5287, %vm5287
        %vm5318 = vmpackc.low %vm5288, %vm5288
        %vm5319 = vmpackc.low %vm5289, %vm5289
        %vm5320 = vmpackc.low %vm5290, %vm5290
        %v5321 = vsel %vm5291, 65537, 0
        %v5322 = vsel %vm5292, 65537, 0
        %v5323 = vsel %vm5293, 65537, 0
        %v5324 = vsel %vm5294, 65537, 0
        %v5325 = vsel %vm5295, 65537, 0
        %v5326 = vsel %vm5296, 65537, 0
        %v5327 = vsel %vm5297, 65537, 0
        %v5328 = vsel %vm5298, 65537, 0
        %v5329 = vsel %vm5299, 65537, 0
        %v5330 = vsel %vm5300, 65537, 0
        %v5331 = vsel %vm5301, 65537, 0
        %v5332 = vsel %vm5302, 65537, 0
        %v5333 = vsel %vm5303, 65537, 0
        %v5334 = vsel %vm5304, 65537, 0
        %v5335 = vsel %vm5305, 65537, 0
        %v5336 = vsel %vm5306, 65537, 0
        %v5337 = vsel %vm5307, 65537, 0
        %v5338 = vsel %vm5308, 65537, 0
        %v5339 = vsel %vm5309, 65537, 0
        %v5340 = vsel %vm5310, 65537, 0
        %v5341 = vsel %vm5311, 65537, 0
        %v5342 = vsel %vm5312, 65537, 0
        %v5343 = vsel %vm5313, 65537, 0
        %v5344 = vsel %vm5314, 65537, 0
        %v5345 = vsel %vm5315, 65537, 0
        %v5346 = vsel %vm5316, 65537, 0
        %v5347 = vsel %vm5317, 65537, 0
        %v5348 = vsel %vm5318, 65537, 0
        %v5349 = vsel %vm5319, 65537, 0
        %v5350 = vsel %vm5320, 65537, 0
        %v5351 = vunpack.c.l.b16 %v5321
        %v5352 = vunpack.c.l.b16 %v5322
        %v5353 = vunpack.c.l.b16 %v5323
        %v5354 = vunpack.c.l.b16 %v5324
        %v5355 = vunpack.c.l.b16 %v5325
        %v5356 = vunpack.c.l.b16 %v5326
        %v5357 = vunpack.c.l.b16 %v5327
        %v5358 = vunpack.c.l.b16 %v5328
        %v5359 = vunpack.c.l.b16 %v5329
        %v5360 = vunpack.c.l.b16 %v5330
        %v5361 = vunpack.c.l.b16 %v5331
        %v5362 = vunpack.c.l.b16 %v5332
        %v5363 = vunpack.c.l.b16 %v5333
        %v5364 = vunpack.c.l.b16 %v5334
        %v5365 = vunpack.c.l.b16 %v5335
        %v5366 = vunpack.c.l.b16 %v5336
        %v5367 = vunpack.c.l.b16 %v5337
        %v5368 = vunpack.c.l.b16 %v5338
        %v5369 = vunpack.c.l.b16 %v5339
        %v5370 = vunpack.c.l.b16 %v5340
        %v5371 = vunpack.c.l.b16 %v5341
        %v5372 = vunpack.c.l.b16 %v5342
        %v5373 = vunpack.c.l.b16 %v5343
        %v5374 = vunpack.c.l.b16 %v5344
        %v5375 = vunpack.c.l.b16 %v5345
        %v5376 = vunpack.c.l.b16 %v5346
        %v5377 = vunpack.c.l.b16 %v5347
        %v5378 = vunpack.c.l.b16 %v5348
        %v5379 = vunpack.c.l.b16 %v5349
        %v5380 = vunpack.c.l.b16 %v5350
        %v5381 = vpack.c.b16 %v5352, %v5351
        %v5382 = vpack.c.b16 %v5354, %v5353
        %v5383 = vpack.c.b16 %v5356, %v5355
        %v5384 = vpack.c.b16 %v5358, %v5357
        %v5385 = vpack.c.b16 %v5360, %v5359
        %v5386 = vpack.c.b16 %v5362, %v5361
        %v5387 = vpack.c.b16 %v5364, %v5363
        %v5388 = vpack.c.b16 %v5366, %v5365
        %v5389 = vpack.c.b16 %v5368, %v5367
        %v5390 = vpack.c.b16 %v5370, %v5369
        %v5391 = vpack.c.b16 %v5372, %v5371
        %v5392 = vpack.c.b16 %v5374, %v5373
        %v5393 = vpack.c.b16 %v5376, %v5375
        %v5394 = vpack.c.b16 %v5378, %v5377
        %v5395 = vpack.c.b16 %v5380, %v5379
        %v5396 = vunpack.c.l.b16 %v5381
        %v5397 = vunpack.c.h.b16 %v5381
        %v5398 = vunpack.c.l.b16 0
        %v5399 = vunpack.c.h.b16 0
        %vm5400 = vcmp.ne.s32.totalorder %v5396, %v5398
        %vm5401 = vcmp.ne.s32.totalorder %v5397, %v5399
        %vm5402 = vmpackc.low %vm5401, %vm5400
        %v5403 = vunpack.c.l.b16 %v5382
        %v5404 = vunpack.c.h.b16 %v5382
        %v5405 = vunpack.c.l.b16 0
        %v5406 = vunpack.c.h.b16 0
        %vm5407 = vcmp.ne.s32.totalorder %v5403, %v5405
        %vm5408 = vcmp.ne.s32.totalorder %v5404, %v5406
        %vm5409 = vmpackc.low %vm5408, %vm5407
        %v5410 = vunpack.c.l.b16 %v5383
        %v5411 = vunpack.c.h.b16 %v5383
        %v5412 = vunpack.c.l.b16 0
        %v5413 = vunpack.c.h.b16 0
        %vm5414 = vcmp.ne.s32.totalorder %v5410, %v5412
        %vm5415 = vcmp.ne.s32.totalorder %v5411, %v5413
        %vm5416 = vmpackc.low %vm5415, %vm5414
        %v5417 = vunpack.c.l.b16 %v5384
        %v5418 = vunpack.c.h.b16 %v5384
        %v5419 = vunpack.c.l.b16 0
        %v5420 = vunpack.c.h.b16 0
        %vm5421 = vcmp.ne.s32.totalorder %v5417, %v5419
        %vm5422 = vcmp.ne.s32.totalorder %v5418, %v5420
        %vm5423 = vmpackc.low %vm5422, %vm5421
        %v5424 = vunpack.c.l.b16 %v5385
        %v5425 = vunpack.c.h.b16 %v5385
        %v5426 = vunpack.c.l.b16 0
        %v5427 = vunpack.c.h.b16 0
        %vm5428 = vcmp.ne.s32.totalorder %v5424, %v5426
        %vm5429 = vcmp.ne.s32.totalorder %v5425, %v5427
        %vm5430 = vmpackc.low %vm5429, %vm5428
        %v5431 = vunpack.c.l.b16 %v5386
        %v5432 = vunpack.c.h.b16 %v5386
        %v5433 = vunpack.c.l.b16 0
        %v5434 = vunpack.c.h.b16 0
        %vm5435 = vcmp.ne.s32.totalorder %v5431, %v5433
        %vm5436 = vcmp.ne.s32.totalorder %v5432, %v5434
        %vm5437 = vmpackc.low %vm5436, %vm5435
        %v5438 = vunpack.c.l.b16 %v5387
        %v5439 = vunpack.c.h.b16 %v5387
        %v5440 = vunpack.c.l.b16 0
        %v5441 = vunpack.c.h.b16 0
        %vm5442 = vcmp.ne.s32.totalorder %v5438, %v5440
        %vm5443 = vcmp.ne.s32.totalorder %v5439, %v5441
        %vm5444 = vmpackc.low %vm5443, %vm5442
        %v5445 = vunpack.c.l.b16 %v5388
        %v5446 = vunpack.c.h.b16 %v5388
        %v5447 = vunpack.c.l.b16 0
        %v5448 = vunpack.c.h.b16 0
        %vm5449 = vcmp.ne.s32.totalorder %v5445, %v5447
        %vm5450 = vcmp.ne.s32.totalorder %v5446, %v5448
        %vm5451 = vmpackc.low %vm5450, %vm5449
        %v5452 = vunpack.c.l.b16 %v5389
        %v5453 = vunpack.c.h.b16 %v5389
        %v5454 = vunpack.c.l.b16 0
        %v5455 = vunpack.c.h.b16 0
        %vm5456 = vcmp.ne.s32.totalorder %v5452, %v5454
        %vm5457 = vcmp.ne.s32.totalorder %v5453, %v5455
        %vm5458 = vmpackc.low %vm5457, %vm5456
        %v5459 = vunpack.c.l.b16 %v5390
        %v5460 = vunpack.c.h.b16 %v5390
        %v5461 = vunpack.c.l.b16 0
        %v5462 = vunpack.c.h.b16 0
        %vm5463 = vcmp.ne.s32.totalorder %v5459, %v5461
        %vm5464 = vcmp.ne.s32.totalorder %v5460, %v5462
        %vm5465 = vmpackc.low %vm5464, %vm5463
        %v5466 = vunpack.c.l.b16 %v5391
        %v5467 = vunpack.c.h.b16 %v5391
        %v5468 = vunpack.c.l.b16 0
        %v5469 = vunpack.c.h.b16 0
        %vm5470 = vcmp.ne.s32.totalorder %v5466, %v5468
        %vm5471 = vcmp.ne.s32.totalorder %v5467, %v5469
        %vm5472 = vmpackc.low %vm5471, %vm5470
        %v5473 = vunpack.c.l.b16 %v5392
        %v5474 = vunpack.c.h.b16 %v5392
        %v5475 = vunpack.c.l.b16 0
        %v5476 = vunpack.c.h.b16 0
        %vm5477 = vcmp.ne.s32.totalorder %v5473, %v5475
        %vm5478 = vcmp.ne.s32.totalorder %v5474, %v5476
        %vm5479 = vmpackc.low %vm5478, %vm5477
        %v5480 = vunpack.c.l.b16 %v5393
        %v5481 = vunpack.c.h.b16 %v5393
        %v5482 = vunpack.c.l.b16 0
        %v5483 = vunpack.c.h.b16 0
        %vm5484 = vcmp.ne.s32.totalorder %v5480, %v5482
        %vm5485 = vcmp.ne.s32.totalorder %v5481, %v5483
        %vm5486 = vmpackc.low %vm5485, %vm5484
        %v5487 = vunpack.c.l.b16 %v5394
        %v5488 = vunpack.c.h.b16 %v5394
        %v5489 = vunpack.c.l.b16 0
        %v5490 = vunpack.c.h.b16 0
        %vm5491 = vcmp.ne.s32.totalorder %v5487, %v5489
        %vm5492 = vcmp.ne.s32.totalorder %v5488, %v5490
        %vm5493 = vmpackc.low %vm5492, %vm5491
        %v5494 = vunpack.c.l.b16 %v5395
        %v5495 = vunpack.c.h.b16 %v5395
        %v5496 = vunpack.c.l.b16 0
        %v5497 = vunpack.c.h.b16 0
        %vm5498 = vcmp.ne.s32.totalorder %v5494, %v5496
        %vm5499 = vcmp.ne.s32.totalorder %v5495, %v5497
        %vm5500 = vmpackc.low %vm5499, %vm5498
        %v5501 = vsel %vm5402, %v5097, 0
        %v5502 = vsel %vm5409, %v5054, 0
        %v5503 = vsel %vm5416, %v5056, 0
        %v5504 = vsel %vm5423, %v5058, 0
        %v5505 = vsel %vm5430, %v5060, 0
        %v5506 = vsel %vm5437, %v5062, 0
        %v5507 = vsel %vm5444, %v5064, 0
        %v5508 = vsel %vm5451, %v5066, 0
        %v5509 = vsel %vm5458, %v5068, 0
        %v5510 = vsel %vm5465, %v5070, 0
        %v5511 = vsel %vm5472, %v5072, 0
        %v5512 = vsel %vm5479, %v5074, 0
        %v5513 = vsel %vm5486, %v5076, 0
        %v5514 = vsel %vm5493, %v5078, 0
        %v5515 = vsel %vm5500, %v5080, 0
        %s5516 = scalar_lea.vmem %s6, 8
        %v5517 = vld [vmem:[%s5516] sm:$0x3]
        %v5519 = vsel %vm446, %v5501, 0
        %v5522 = vsel %vm446, %v5502, 0
        %v5525 = vsel %vm446, %v5503, 0
        %v5528 = vsel %vm446, %v5504, 0
        %v5531 = vsel %vm446, %v5505, 0
        %v5534 = vsel %vm446, %v5506, 0
        %v5537 = vsel %vm446, %v5507, 0
        %v5540 = vsel %vm446, %v5508, 0
        %v5543 = vsel %vm446, %v5509, 0
        %v5546 = vsel %vm446, %v5510, 0
        %v5549 = vsel %vm446, %v5511, 0
        %v5552 = vsel %vm446, %v5512, 0
        %v5555 = vsel %vm446, %v5513, 0
        %v5558 = vsel %vm446, %v5514, 0
        %v5561 = vsel %vm446, %v5515, 0
        %v5564 = vsel %vm495, %v5517, 0
        %5566 = vmatpush.bf16.msra.mxu0 0
        %5567 = vmatpush.bf16.msra.mxu0 0
        %5568 = vmatpush.bf16.msra.mxu0 0
        %5569 = vmatpush.bf16.msra.mxu0 0
        %5570 = vmatpush.bf16.msra.mxu0 0
        %5571 = vmatpush.bf16.msra.mxu0 0
        %5572 = vmatpush.bf16.msra.mxu0 0
        %5573 = vmatpush.bf16.msra.mxu0 %v5564
        %5574 = vmatmul.bf16.gmra.mxu0 %v1346
        %v5575 = vpop.f32.mrf.mxu0
        %v5576 = vadd.f32 0.0, %v5575
        %v5577 = vpop.f32.mrf.mxu0
        %v5578 = vadd.f32 0.0, %v5577
        %5579 = vmatmul.bf16.gmra.mxu0 %v5519
        %v5580 = vpop.f32.mrf.mxu0
        %v5581 = vadd.f32 0.0, %v5580
        %v5582 = vpop.f32.mrf.mxu0
        %v5583 = vadd.f32 0.0, %v5582
        %5584 = vmatmul.bf16.gmra.mxu0 %v5522
        %v5585 = vpop.f32.mrf.mxu0
        %v5586 = vadd.f32 0.0, %v5585
        %v5587 = vpop.f32.mrf.mxu0
        %v5588 = vadd.f32 0.0, %v5587
        %5589 = vmatmul.bf16.gmra.mxu0 %v5525
        %v5590 = vpop.f32.mrf.mxu0
        %v5591 = vadd.f32 0.0, %v5590
        %v5592 = vpop.f32.mrf.mxu0
        %v5593 = vadd.f32 0.0, %v5592
        %5594 = vmatmul.bf16.gmra.mxu0 %v5528
        %v5595 = vpop.f32.mrf.mxu0
        %v5596 = vadd.f32 0.0, %v5595
        %v5597 = vpop.f32.mrf.mxu0
        %v5598 = vadd.f32 0.0, %v5597
        %5599 = vmatmul.bf16.gmra.mxu0 %v5531
        %v5600 = vpop.f32.mrf.mxu0
        %v5601 = vadd.f32 0.0, %v5600
        %v5602 = vpop.f32.mrf.mxu0
        %v5603 = vadd.f32 0.0, %v5602
        %5604 = vmatmul.bf16.gmra.mxu0 %v5534
        %v5605 = vpop.f32.mrf.mxu0
        %v5606 = vadd.f32 0.0, %v5605
        %v5607 = vpop.f32.mrf.mxu0
        %v5608 = vadd.f32 0.0, %v5607
        %5609 = vmatmul.bf16.gmra.mxu0 %v5537
        %v5610 = vpop.f32.mrf.mxu0
        %v5611 = vadd.f32 0.0, %v5610
        %v5612 = vpop.f32.mrf.mxu0
        %v5613 = vadd.f32 0.0, %v5612
        %5614 = vmatmul.bf16.gmra.mxu0 %v5540
        %v5615 = vpop.f32.mrf.mxu0
        %v5616 = vadd.f32 0.0, %v5615
        %v5617 = vpop.f32.mrf.mxu0
        %v5618 = vadd.f32 0.0, %v5617
        %5619 = vmatmul.bf16.gmra.mxu0 %v5543
        %v5620 = vpop.f32.mrf.mxu0
        %v5621 = vadd.f32 0.0, %v5620
        %v5622 = vpop.f32.mrf.mxu0
        %v5623 = vadd.f32 0.0, %v5622
        %5624 = vmatmul.bf16.gmra.mxu0 %v5546
        %v5625 = vpop.f32.mrf.mxu0
        %v5626 = vadd.f32 0.0, %v5625
        %v5627 = vpop.f32.mrf.mxu0
        %v5628 = vadd.f32 0.0, %v5627
        %5629 = vmatmul.bf16.gmra.mxu0 %v5549
        %v5630 = vpop.f32.mrf.mxu0
        %v5631 = vadd.f32 0.0, %v5630
        %v5632 = vpop.f32.mrf.mxu0
        %v5633 = vadd.f32 0.0, %v5632
        %5634 = vmatmul.bf16.gmra.mxu0 %v5552
        %v5635 = vpop.f32.mrf.mxu0
        %v5636 = vadd.f32 0.0, %v5635
        %v5637 = vpop.f32.mrf.mxu0
        %v5638 = vadd.f32 0.0, %v5637
        %5639 = vmatmul.bf16.gmra.mxu0 %v5555
        %v5640 = vpop.f32.mrf.mxu0
        %v5641 = vadd.f32 0.0, %v5640
        %v5642 = vpop.f32.mrf.mxu0
        %v5643 = vadd.f32 0.0, %v5642
        %5644 = vmatmul.bf16.gmra.mxu0 %v5558
        %v5645 = vpop.f32.mrf.mxu0
        %v5646 = vadd.f32 0.0, %v5645
        %v5647 = vpop.f32.mrf.mxu0
        %v5648 = vadd.f32 0.0, %v5647
        %5649 = vmatmul.bf16.gmra.mxu0 %v5561
        %v5650 = vpop.f32.mrf.mxu0
        %v5651 = vadd.f32 0.0, %v5650
        %v5652 = vpop.f32.mrf.mxu0
        %v5653 = vadd.f32 0.0, %v5652
        %5654 = vdwg.mxu0
        %v5655 = vadd.f32 %v4989, %v5576
        %v5656 = vadd.f32 %v4990, %v5578
        %v5657 = vadd.f32 %v4991, %v5581
        %v5658 = vadd.f32 %v4992, %v5583
        %v5659 = vadd.f32 %v4993, %v5586
        %v5660 = vadd.f32 %v4994, %v5588
        %v5661 = vadd.f32 %v4995, %v5591
        %v5662 = vadd.f32 %v4996, %v5593
        %v5663 = vadd.f32 %v4997, %v5596
        %v5664 = vadd.f32 %v4998, %v5598
        %v5665 = vadd.f32 %v4999, %v5601
        %v5666 = vadd.f32 %v5000, %v5603
        %v5667 = vadd.f32 %v5001, %v5606
        %v5668 = vadd.f32 %v5002, %v5608
        %v5669 = vadd.f32 %v5003, %v5611
        %v5670 = vadd.f32 %v5004, %v5613
        %v5671 = vadd.f32 %v5005, %v5616
        %v5672 = vadd.f32 %v5006, %v5618
        %v5673 = vadd.f32 %v5007, %v5621
        %v5674 = vadd.f32 %v5008, %v5623
        %v5675 = vadd.f32 %v5009, %v5626
        %v5676 = vadd.f32 %v5010, %v5628
        %v5677 = vadd.f32 %v5011, %v5631
        %v5678 = vadd.f32 %v5012, %v5633
        %v5679 = vadd.f32 %v5013, %v5636
        %v5680 = vadd.f32 %v5014, %v5638
        %v5681 = vadd.f32 %v5015, %v5641
        %v5682 = vadd.f32 %v5016, %v5643
        %v5683 = vadd.f32 %v5017, %v5646
        %v5684 = vadd.f32 %v5018, %v5648
        %v5685 = vadd.f32 %v5019, %v5651
        %v5686 = vadd.f32 %v5020, %v5653
        %v5687 = vrot.slane %v726, 7
        %v5688 = vsel %vm892, %v3810, %v5687
        %5689 = vrot.lane.b32.xlu0 %v5688, 116
        %v5690 = vpop.permute.xlu0 %5689
        %vm5692 = vmpackc.low %vm4019, %vm4019
        %vm5693 = vmpackc.low %vm4020, %vm4020
        %v5694 = vsel %vm5692, 65537, 0
        %v5695 = vsel %vm5693, 65537, 0
        %v5696 = vunpack.c.l.b16 %v5694
        %v5697 = vunpack.c.l.b16 %v5695
        %v5698 = vpack.c.b16 %v5697, %v5696
        %v5699 = vunpack.c.l.b16 %v5698
        %v5700 = vunpack.c.h.b16 %v5698
        %v5701 = vunpack.c.l.b16 0
        %v5702 = vunpack.c.h.b16 0
        %vm5703 = vcmp.ne.s32.totalorder %v5699, %v5701
        %vm5704 = vcmp.ne.s32.totalorder %v5700, %v5702
        %vm5705 = vmpackc.low %vm5704, %vm5703
        %v5706 = vsel %vm5705, %v3855, 0
        %v5707 = vsel %vm4153, %v3815, 0
        %v5708 = vsel %vm4160, %v3817, 0
        %v5709 = vsel %vm4167, %v3819, 0
        %v5710 = vsel %vm4174, %v3821, 0
        %v5711 = vsel %vm4181, %v3823, 0
        %v5712 = vsel %vm4188, %v3825, 0
        %v5713 = vsel %vm4195, %v3827, 0
        %v5714 = vsel %vm4202, %v3829, 0
        %v5715 = vsel %vm4209, %v3831, 0
        %v5716 = vsel %vm4216, %v3833, 0
        %v5717 = vsel %vm4223, %v3835, 0
        %v5718 = vsel %vm4230, %v3837, 0
        %v5719 = vsel %vm4237, %v3839, 0
        %v5720 = vsel %vm4244, %v5690, 0
        %s5721 = scalar_lea.vmem %s6, 10
        %v5722 = vld [vmem:[%s5721] sm:$0x3]
        %v5724 = vsel %vm446, %v5706, 0
        %v5727 = vsel %vm446, %v5707, 0
        %v5730 = vsel %vm446, %v5708, 0
        %v5733 = vsel %vm446, %v5709, 0
        %v5736 = vsel %vm446, %v5710, 0
        %v5739 = vsel %vm446, %v5711, 0
        %v5742 = vsel %vm446, %v5712, 0
        %v5745 = vsel %vm446, %v5713, 0
        %v5748 = vsel %vm446, %v5714, 0
        %v5751 = vsel %vm446, %v5715, 0
        %v5754 = vsel %vm446, %v5716, 0
        %v5757 = vsel %vm446, %v5717, 0
        %v5760 = vsel %vm446, %v5718, 0
        %v5763 = vsel %vm446, %v5719, 0
        %v5766 = vsel %vm446, %v5720, 0
        %v5769 = vsel %vm495, %v5722, 0
        %5771 = vmatpush.bf16.msra.mxu0 0
        %5772 = vmatpush.bf16.msra.mxu0 0
        %5773 = vmatpush.bf16.msra.mxu0 0
        %5774 = vmatpush.bf16.msra.mxu0 0
        %5775 = vmatpush.bf16.msra.mxu0 0
        %5776 = vmatpush.bf16.msra.mxu0 0
        %5777 = vmatpush.bf16.msra.mxu0 0
        %5778 = vmatpush.bf16.msra.mxu0 %v5769
        %5779 = vmatmul.bf16.gmra.mxu0 %v1346
        %v5780 = vpop.f32.mrf.mxu0
        %v5781 = vadd.f32 0.0, %v5780
        %v5782 = vpop.f32.mrf.mxu0
        %v5783 = vadd.f32 0.0, %v5782
        %5784 = vmatmul.bf16.gmra.mxu0 %v5724
        %v5785 = vpop.f32.mrf.mxu0
        %v5786 = vadd.f32 0.0, %v5785
        %v5787 = vpop.f32.mrf.mxu0
        %v5788 = vadd.f32 0.0, %v5787
        %5789 = vmatmul.bf16.gmra.mxu0 %v5727
        %v5790 = vpop.f32.mrf.mxu0
        %v5791 = vadd.f32 0.0, %v5790
        %v5792 = vpop.f32.mrf.mxu0
        %v5793 = vadd.f32 0.0, %v5792
        %5794 = vmatmul.bf16.gmra.mxu0 %v5730
        %v5795 = vpop.f32.mrf.mxu0
        %v5796 = vadd.f32 0.0, %v5795
        %v5797 = vpop.f32.mrf.mxu0
        %v5798 = vadd.f32 0.0, %v5797
        %5799 = vmatmul.bf16.gmra.mxu0 %v5733
        %v5800 = vpop.f32.mrf.mxu0
        %v5801 = vadd.f32 0.0, %v5800
        %v5802 = vpop.f32.mrf.mxu0
        %v5803 = vadd.f32 0.0, %v5802
        %5804 = vmatmul.bf16.gmra.mxu0 %v5736
        %v5805 = vpop.f32.mrf.mxu0
        %v5806 = vadd.f32 0.0, %v5805
        %v5807 = vpop.f32.mrf.mxu0
        %v5808 = vadd.f32 0.0, %v5807
        %5809 = vmatmul.bf16.gmra.mxu0 %v5739
        %v5810 = vpop.f32.mrf.mxu0
        %v5811 = vadd.f32 0.0, %v5810
        %v5812 = vpop.f32.mrf.mxu0
        %v5813 = vadd.f32 0.0, %v5812
        %5814 = vmatmul.bf16.gmra.mxu0 %v5742
        %v5815 = vpop.f32.mrf.mxu0
        %v5816 = vadd.f32 0.0, %v5815
        %v5817 = vpop.f32.mrf.mxu0
        %v5818 = vadd.f32 0.0, %v5817
        %5819 = vmatmul.bf16.gmra.mxu0 %v5745
        %v5820 = vpop.f32.mrf.mxu0
        %v5821 = vadd.f32 0.0, %v5820
        %v5822 = vpop.f32.mrf.mxu0
        %v5823 = vadd.f32 0.0, %v5822
        %5824 = vmatmul.bf16.gmra.mxu0 %v5748
        %v5825 = vpop.f32.mrf.mxu0
        %v5826 = vadd.f32 0.0, %v5825
        %v5827 = vpop.f32.mrf.mxu0
        %v5828 = vadd.f32 0.0, %v5827
        %5829 = vmatmul.bf16.gmra.mxu0 %v5751
        %v5830 = vpop.f32.mrf.mxu0
        %v5831 = vadd.f32 0.0, %v5830
        %v5832 = vpop.f32.mrf.mxu0
        %v5833 = vadd.f32 0.0, %v5832
        %5834 = vmatmul.bf16.gmra.mxu0 %v5754
        %v5835 = vpop.f32.mrf.mxu0
        %v5836 = vadd.f32 0.0, %v5835
        %v5837 = vpop.f32.mrf.mxu0
        %v5838 = vadd.f32 0.0, %v5837
        %5839 = vmatmul.bf16.gmra.mxu0 %v5757
        %v5840 = vpop.f32.mrf.mxu0
        %v5841 = vadd.f32 0.0, %v5840
        %v5842 = vpop.f32.mrf.mxu0
        %v5843 = vadd.f32 0.0, %v5842
        %5844 = vmatmul.bf16.gmra.mxu0 %v5760
        %v5845 = vpop.f32.mrf.mxu0
        %v5846 = vadd.f32 0.0, %v5845
        %v5847 = vpop.f32.mrf.mxu0
        %v5848 = vadd.f32 0.0, %v5847
        %5849 = vmatmul.bf16.gmra.mxu0 %v5763
        %v5850 = vpop.f32.mrf.mxu0
        %v5851 = vadd.f32 0.0, %v5850
        %v5852 = vpop.f32.mrf.mxu0
        %v5853 = vadd.f32 0.0, %v5852
        %5854 = vmatmul.bf16.gmra.mxu0 %v5766
        %v5855 = vpop.f32.mrf.mxu0
        %v5856 = vadd.f32 0.0, %v5855
        %v5857 = vpop.f32.mrf.mxu0
        %v5858 = vadd.f32 0.0, %v5857
        %5859 = vdwg.mxu0
        %v5860 = vadd.f32 %v5655, %v5781
        %v5861 = vadd.f32 %v5656, %v5783
        %v5862 = vadd.f32 %v5657, %v5786
        %v5863 = vadd.f32 %v5658, %v5788
        %v5864 = vadd.f32 %v5659, %v5791
        %v5865 = vadd.f32 %v5660, %v5793
        %v5866 = vadd.f32 %v5661, %v5796
        %v5867 = vadd.f32 %v5662, %v5798
        %v5868 = vadd.f32 %v5663, %v5801
        %v5869 = vadd.f32 %v5664, %v5803
        %v5870 = vadd.f32 %v5665, %v5806
        %v5871 = vadd.f32 %v5666, %v5808
        %v5872 = vadd.f32 %v5667, %v5811
        %v5873 = vadd.f32 %v5668, %v5813
        %v5874 = vadd.f32 %v5669, %v5816
        %v5875 = vadd.f32 %v5670, %v5818
        %v5876 = vadd.f32 %v5671, %v5821
        %v5877 = vadd.f32 %v5672, %v5823
        %v5878 = vadd.f32 %v5673, %v5826
        %v5879 = vadd.f32 %v5674, %v5828
        %v5880 = vadd.f32 %v5675, %v5831
        %v5881 = vadd.f32 %v5676, %v5833
        %v5882 = vadd.f32 %v5677, %v5836
        %v5883 = vadd.f32 %v5678, %v5838
        %v5884 = vadd.f32 %v5679, %v5841
        %v5885 = vadd.f32 %v5680, %v5843
        %v5886 = vadd.f32 %v5681, %v5846
        %v5887 = vadd.f32 %v5682, %v5848
        %v5888 = vadd.f32 %v5683, %v5851
        %v5889 = vadd.f32 %v5684, %v5853
        %v5890 = vadd.f32 %v5685, %v5856
        %v5891 = vadd.f32 %v5686, %v5858
        %5892 = vrot.lane.b32.xlu0 %v846, 116
        %v5893 = vpop.permute.xlu0 %5892
        %v5895 = vsel %vm1198, %v4302, 0
        %v5896 = vsel %vm1205, %v4263, 0
        %v5897 = vsel %vm1212, %v4265, 0
        %v5898 = vsel %vm1219, %v4267, 0
        %v5899 = vsel %vm1226, %v4269, 0
        %v5900 = vsel %vm1233, %v4271, 0
        %v5901 = vsel %vm1240, %v4273, 0
        %v5902 = vsel %vm1247, %v4275, 0
        %v5903 = vsel %vm1254, %v4277, 0
        %v5904 = vsel %vm1261, %v4279, 0
        %v5905 = vsel %vm1268, %v4281, 0
        %v5906 = vsel %vm1275, %v4283, 0
        %v5907 = vsel %vm1282, %v4285, 0
        %v5908 = vsel %vm1289, %v4287, 0
        %v5909 = vsel %vm1296, %v5893, 0
        %s5910 = scalar_lea.vmem %s6, 12
        %v5911 = vld [vmem:[%s5910] sm:$0x3]
        %v5913 = vsel %vm446, %v5895, 0
        %v5916 = vsel %vm446, %v5896, 0
        %v5919 = vsel %vm446, %v5897, 0
        %v5922 = vsel %vm446, %v5898, 0
        %v5925 = vsel %vm446, %v5899, 0
        %v5928 = vsel %vm446, %v5900, 0
        %v5931 = vsel %vm446, %v5901, 0
        %v5934 = vsel %vm446, %v5902, 0
        %v5937 = vsel %vm446, %v5903, 0
        %v5940 = vsel %vm446, %v5904, 0
        %v5943 = vsel %vm446, %v5905, 0
        %v5946 = vsel %vm446, %v5906, 0
        %v5949 = vsel %vm446, %v5907, 0
        %v5952 = vsel %vm446, %v5908, 0
        %v5955 = vsel %vm446, %v5909, 0
        %v5958 = vsel %vm495, %v5911, 0
        %5960 = vmatpush.bf16.msra.mxu0 0
        %5961 = vmatpush.bf16.msra.mxu0 0
        %5962 = vmatpush.bf16.msra.mxu0 0
        %5963 = vmatpush.bf16.msra.mxu0 0
        %5964 = vmatpush.bf16.msra.mxu0 0
        %5965 = vmatpush.bf16.msra.mxu0 0
        %5966 = vmatpush.bf16.msra.mxu0 0
        %5967 = vmatpush.bf16.msra.mxu0 %v5958
        %5968 = vmatmul.bf16.gmra.mxu0 %v1346
        %v5969 = vpop.f32.mrf.mxu0
        %v5970 = vadd.f32 0.0, %v5969
        %v5971 = vpop.f32.mrf.mxu0
        %v5972 = vadd.f32 0.0, %v5971
        %5973 = vmatmul.bf16.gmra.mxu0 %v5913
        %v5974 = vpop.f32.mrf.mxu0
        %v5975 = vadd.f32 0.0, %v5974
        %v5976 = vpop.f32.mrf.mxu0
        %v5977 = vadd.f32 0.0, %v5976
        %5978 = vmatmul.bf16.gmra.mxu0 %v5916
        %v5979 = vpop.f32.mrf.mxu0
        %v5980 = vadd.f32 0.0, %v5979
        %v5981 = vpop.f32.mrf.mxu0
        %v5982 = vadd.f32 0.0, %v5981
        %5983 = vmatmul.bf16.gmra.mxu0 %v5919
        %v5984 = vpop.f32.mrf.mxu0
        %v5985 = vadd.f32 0.0, %v5984
        %v5986 = vpop.f32.mrf.mxu0
        %v5987 = vadd.f32 0.0, %v5986
        %5988 = vmatmul.bf16.gmra.mxu0 %v5922
        %v5989 = vpop.f32.mrf.mxu0
        %v5990 = vadd.f32 0.0, %v5989
        %v5991 = vpop.f32.mrf.mxu0
        %v5992 = vadd.f32 0.0, %v5991
        %5993 = vmatmul.bf16.gmra.mxu0 %v5925
        %v5994 = vpop.f32.mrf.mxu0
        %v5995 = vadd.f32 0.0, %v5994
        %v5996 = vpop.f32.mrf.mxu0
        %v5997 = vadd.f32 0.0, %v5996
        %5998 = vmatmul.bf16.gmra.mxu0 %v5928
        %v5999 = vpop.f32.mrf.mxu0
        %v6000 = vadd.f32 0.0, %v5999
        %v6001 = vpop.f32.mrf.mxu0
        %v6002 = vadd.f32 0.0, %v6001
        %6003 = vmatmul.bf16.gmra.mxu0 %v5931
        %v6004 = vpop.f32.mrf.mxu0
        %v6005 = vadd.f32 0.0, %v6004
        %v6006 = vpop.f32.mrf.mxu0
        %v6007 = vadd.f32 0.0, %v6006
        %6008 = vmatmul.bf16.gmra.mxu0 %v5934
        %v6009 = vpop.f32.mrf.mxu0
        %v6010 = vadd.f32 0.0, %v6009
        %v6011 = vpop.f32.mrf.mxu0
        %v6012 = vadd.f32 0.0, %v6011
        %6013 = vmatmul.bf16.gmra.mxu0 %v5937
        %v6014 = vpop.f32.mrf.mxu0
        %v6015 = vadd.f32 0.0, %v6014
        %v6016 = vpop.f32.mrf.mxu0
        %v6017 = vadd.f32 0.0, %v6016
        %6018 = vmatmul.bf16.gmra.mxu0 %v5940
        %v6019 = vpop.f32.mrf.mxu0
        %v6020 = vadd.f32 0.0, %v6019
        %v6021 = vpop.f32.mrf.mxu0
        %v6022 = vadd.f32 0.0, %v6021
        %6023 = vmatmul.bf16.gmra.mxu0 %v5943
        %v6024 = vpop.f32.mrf.mxu0
        %v6025 = vadd.f32 0.0, %v6024
        %v6026 = vpop.f32.mrf.mxu0
        %v6027 = vadd.f32 0.0, %v6026
        %6028 = vmatmul.bf16.gmra.mxu0 %v5946
        %v6029 = vpop.f32.mrf.mxu0
        %v6030 = vadd.f32 0.0, %v6029
        %v6031 = vpop.f32.mrf.mxu0
        %v6032 = vadd.f32 0.0, %v6031
        %6033 = vmatmul.bf16.gmra.mxu0 %v5949
        %v6034 = vpop.f32.mrf.mxu0
        %v6035 = vadd.f32 0.0, %v6034
        %v6036 = vpop.f32.mrf.mxu0
        %v6037 = vadd.f32 0.0, %v6036
        %6038 = vmatmul.bf16.gmra.mxu0 %v5952
        %v6039 = vpop.f32.mrf.mxu0
        %v6040 = vadd.f32 0.0, %v6039
        %v6041 = vpop.f32.mrf.mxu0
        %v6042 = vadd.f32 0.0, %v6041
        %6043 = vmatmul.bf16.gmra.mxu0 %v5955
        %v6044 = vpop.f32.mrf.mxu0
        %v6045 = vadd.f32 0.0, %v6044
        %v6046 = vpop.f32.mrf.mxu0
        %v6047 = vadd.f32 0.0, %v6046
        %6048 = vdwg.mxu0
        %v6049 = vadd.f32 %v5860, %v5970
        %v6050 = vadd.f32 %v5861, %v5972
        %v6051 = vadd.f32 %v5862, %v5975
        %v6052 = vadd.f32 %v5863, %v5977
        %v6053 = vadd.f32 %v5864, %v5980
        %v6054 = vadd.f32 %v5865, %v5982
        %v6055 = vadd.f32 %v5866, %v5985
        %v6056 = vadd.f32 %v5867, %v5987
        %v6057 = vadd.f32 %v5868, %v5990
        %v6058 = vadd.f32 %v5869, %v5992
        %v6059 = vadd.f32 %v5870, %v5995
        %v6060 = vadd.f32 %v5871, %v5997
        %v6061 = vadd.f32 %v5872, %v6000
        %v6062 = vadd.f32 %v5873, %v6002
        %v6063 = vadd.f32 %v5874, %v6005
        %v6064 = vadd.f32 %v5875, %v6007
        %v6065 = vadd.f32 %v5876, %v6010
        %v6066 = vadd.f32 %v5877, %v6012
        %v6067 = vadd.f32 %v5878, %v6015
        %v6068 = vadd.f32 %v5879, %v6017
        %v6069 = vadd.f32 %v5880, %v6020
        %v6070 = vadd.f32 %v5881, %v6022
        %v6071 = vadd.f32 %v5882, %v6025
        %v6072 = vadd.f32 %v5883, %v6027
        %v6073 = vadd.f32 %v5884, %v6030
        %v6074 = vadd.f32 %v5885, %v6032
        %v6075 = vadd.f32 %v5886, %v6035
        %v6076 = vadd.f32 %v5887, %v6037
        %v6077 = vadd.f32 %v5888, %v6040
        %v6078 = vadd.f32 %v5889, %v6042
        %v6079 = vadd.f32 %v5890, %v6045
        %v6080 = vadd.f32 %v5891, %v6047
        %6081 = vrot.lane.b32.xlu0 %v726, 116
        %v6082 = vpop.permute.xlu0 %6081
        %s6083 = scalar_lea.vmem %s6, 14
        %v6084 = vld [vmem:[%s6083] sm:$0x3]
        %v6086 = vsel %vm446, %v6082, 0
        %v6089 = vsel %vm495, %v6084, 0
        %6091 = vmatpush.bf16.msra.mxu0 0
        %6092 = vmatpush.bf16.msra.mxu0 0
        %6093 = vmatpush.bf16.msra.mxu0 0
        %6094 = vmatpush.bf16.msra.mxu0 0
        %6095 = vmatpush.bf16.msra.mxu0 0
        %6096 = vmatpush.bf16.msra.mxu0 0
        %6097 = vmatpush.bf16.msra.mxu0 0
        %6098 = vmatpush.bf16.msra.mxu0 %v6089
        %6099 = vmatmul.bf16.gmra.mxu0 %v1346
        %v6100 = vpop.f32.mrf.mxu0
        %v6101 = vadd.f32 0.0, %v6100
        %v6102 = vpop.f32.mrf.mxu0
        %v6103 = vadd.f32 0.0, %v6102
        %6104 = vmatmul.bf16.gmra.mxu0 %v4618
        %v6105 = vpop.f32.mrf.mxu0
        %v6106 = vadd.f32 0.0, %v6105
        %v6107 = vpop.f32.mrf.mxu0
        %v6108 = vadd.f32 0.0, %v6107
        %6109 = vmatmul.bf16.gmra.mxu0 %v4621
        %v6110 = vpop.f32.mrf.mxu0
        %v6111 = vadd.f32 0.0, %v6110
        %v6112 = vpop.f32.mrf.mxu0
        %v6113 = vadd.f32 0.0, %v6112
        %6114 = vmatmul.bf16.gmra.mxu0 %v4624
        %v6115 = vpop.f32.mrf.mxu0
        %v6116 = vadd.f32 0.0, %v6115
        %v6117 = vpop.f32.mrf.mxu0
        %v6118 = vadd.f32 0.0, %v6117
        %6119 = vmatmul.bf16.gmra.mxu0 %v4627
        %v6120 = vpop.f32.mrf.mxu0
        %v6121 = vadd.f32 0.0, %v6120
        %v6122 = vpop.f32.mrf.mxu0
        %v6123 = vadd.f32 0.0, %v6122
        %6124 = vmatmul.bf16.gmra.mxu0 %v4630
        %v6125 = vpop.f32.mrf.mxu0
        %v6126 = vadd.f32 0.0, %v6125
        %v6127 = vpop.f32.mrf.mxu0
        %v6128 = vadd.f32 0.0, %v6127
        %6129 = vmatmul.bf16.gmra.mxu0 %v4633
        %v6130 = vpop.f32.mrf.mxu0
        %v6131 = vadd.f32 0.0, %v6130
        %v6132 = vpop.f32.mrf.mxu0
        %v6133 = vadd.f32 0.0, %v6132
        %6134 = vmatmul.bf16.gmra.mxu0 %v4636
        %v6135 = vpop.f32.mrf.mxu0
        %v6136 = vadd.f32 0.0, %v6135
        %v6137 = vpop.f32.mrf.mxu0
        %v6138 = vadd.f32 0.0, %v6137
        %6139 = vmatmul.bf16.gmra.mxu0 %v4639
        %v6140 = vpop.f32.mrf.mxu0
        %v6141 = vadd.f32 0.0, %v6140
        %v6142 = vpop.f32.mrf.mxu0
        %v6143 = vadd.f32 0.0, %v6142
        %6144 = vmatmul.bf16.gmra.mxu0 %v4642
        %v6145 = vpop.f32.mrf.mxu0
        %v6146 = vadd.f32 0.0, %v6145
        %v6147 = vpop.f32.mrf.mxu0
        %v6148 = vadd.f32 0.0, %v6147
        %6149 = vmatmul.bf16.gmra.mxu0 %v4645
        %v6150 = vpop.f32.mrf.mxu0
        %v6151 = vadd.f32 0.0, %v6150
        %v6152 = vpop.f32.mrf.mxu0
        %v6153 = vadd.f32 0.0, %v6152
        %6154 = vmatmul.bf16.gmra.mxu0 %v4648
        %v6155 = vpop.f32.mrf.mxu0
        %v6156 = vadd.f32 0.0, %v6155
        %v6157 = vpop.f32.mrf.mxu0
        %v6158 = vadd.f32 0.0, %v6157
        %6159 = vmatmul.bf16.gmra.mxu0 %v4651
        %v6160 = vpop.f32.mrf.mxu0
        %v6161 = vadd.f32 0.0, %v6160
        %v6162 = vpop.f32.mrf.mxu0
        %v6163 = vadd.f32 0.0, %v6162
        %6164 = vmatmul.bf16.gmra.mxu0 %v4654
        %v6165 = vpop.f32.mrf.mxu0
        %v6166 = vadd.f32 0.0, %v6165
        %v6167 = vpop.f32.mrf.mxu0
        %v6168 = vadd.f32 0.0, %v6167
        %6169 = vmatmul.bf16.gmra.mxu0 %v4657
        %v6170 = vpop.f32.mrf.mxu0
        %v6171 = vadd.f32 0.0, %v6170
        %v6172 = vpop.f32.mrf.mxu0
        %v6173 = vadd.f32 0.0, %v6172
        %6174 = vmatmul.bf16.gmra.mxu0 %v6086
        %v6175 = vpop.f32.mrf.mxu0
        %v6176 = vadd.f32 0.0, %v6175
        %v6177 = vpop.f32.mrf.mxu0
        %v6178 = vadd.f32 0.0, %v6177
        %6179 = vdwg.mxu0
        %v6180 = vadd.f32 %v6049, %v6101
        %v6181 = vadd.f32 %v6050, %v6103
        %v6182 = vadd.f32 %v6051, %v6106
        %v6183 = vadd.f32 %v6052, %v6108
        %v6184 = vadd.f32 %v6053, %v6111
        %v6185 = vadd.f32 %v6054, %v6113
        %v6186 = vadd.f32 %v6055, %v6116
        %v6187 = vadd.f32 %v6056, %v6118
        %v6188 = vadd.f32 %v6057, %v6121
        %v6189 = vadd.f32 %v6058, %v6123
        %v6190 = vadd.f32 %v6059, %v6126
        %v6191 = vadd.f32 %v6060, %v6128
        %v6192 = vadd.f32 %v6061, %v6131
        %v6193 = vadd.f32 %v6062, %v6133
        %v6194 = vadd.f32 %v6063, %v6136
        %v6195 = vadd.f32 %v6064, %v6138
        %v6196 = vadd.f32 %v6065, %v6141
        %v6197 = vadd.f32 %v6066, %v6143
        %v6198 = vadd.f32 %v6067, %v6146
        %v6199 = vadd.f32 %v6068, %v6148
        %v6200 = vadd.f32 %v6069, %v6151
        %v6201 = vadd.f32 %v6070, %v6153
        %v6202 = vadd.f32 %v6071, %v6156
        %v6203 = vadd.f32 %v6072, %v6158
        %v6204 = vadd.f32 %v6073, %v6161
        %v6205 = vadd.f32 %v6074, %v6163
        %v6206 = vadd.f32 %v6075, %v6166
        %v6207 = vadd.f32 %v6076, %v6168
        %v6208 = vadd.f32 %v6077, %v6171
        %v6209 = vadd.f32 %v6078, %v6173
        %v6210 = vadd.f32 %v6079, %v6176
        %v6211 = vadd.f32 %v6080, %v6178
        %6212 = vrot.lane.b32.xlu0 %v1668, 116
        %v6213 = vpop.permute.xlu0 %6212
        %6214 = vrot.lane.b32.xlu0 %v1674, 116
        %v6215 = vpop.permute.xlu0 %6214
        %v6218 = vsel %vm2036, %v4834, 0
        %v6219 = vsel %vm2043, %v4792, 0
        %v6220 = vsel %vm2050, %v4794, 0
        %v6221 = vsel %vm2057, %v4796, 0
        %v6222 = vsel %vm2064, %v4798, 0
        %v6223 = vsel %vm2071, %v4800, 0
        %v6224 = vsel %vm2078, %v4802, 0
        %v6225 = vsel %vm2085, %v4804, 0
        %v6226 = vsel %vm2092, %v4806, 0
        %v6227 = vsel %vm2099, %v4808, 0
        %v6228 = vsel %vm2106, %v4810, 0
        %v6229 = vsel %vm2113, %v4812, 0
        %v6230 = vsel %vm2120, %v4814, 0
        %v6231 = vsel %vm2127, %v4816, 0
        %v6232 = vsel %vm2134, %v6213, 0
        %v6233 = vsel %vm2141, %v6215, 0
        %s6234 = scalar_lea.vmem %s6, 16
        %v6235 = vld [vmem:[%s6234] sm:$0x3]
        %v6237 = vsel %vm446, %v6218, 0
        %v6240 = vsel %vm446, %v6219, 0
        %v6243 = vsel %vm446, %v6220, 0
        %v6246 = vsel %vm446, %v6221, 0
        %v6249 = vsel %vm446, %v6222, 0
        %v6252 = vsel %vm446, %v6223, 0
        %v6255 = vsel %vm446, %v6224, 0
        %v6258 = vsel %vm446, %v6225, 0
        %v6261 = vsel %vm446, %v6226, 0
        %v6264 = vsel %vm446, %v6227, 0
        %v6267 = vsel %vm446, %v6228, 0
        %v6270 = vsel %vm446, %v6229, 0
        %v6273 = vsel %vm446, %v6230, 0
        %v6276 = vsel %vm446, %v6231, 0
        %v6279 = vsel %vm446, %v6232, 0
        %v6282 = vsel %vm446, %v6233, 0
        %v6285 = vsel %vm495, %v6235, 0
        %6287 = vmatpush.bf16.msra.mxu0 0
        %6288 = vmatpush.bf16.msra.mxu0 0
        %6289 = vmatpush.bf16.msra.mxu0 0
        %6290 = vmatpush.bf16.msra.mxu0 0
        %6291 = vmatpush.bf16.msra.mxu0 0
        %6292 = vmatpush.bf16.msra.mxu0 0
        %6293 = vmatpush.bf16.msra.mxu0 0
        %6294 = vmatpush.bf16.msra.mxu0 %v6285
        %6295 = vmatmul.bf16.gmra.mxu0 %v6237
        %v6296 = vpop.f32.mrf.mxu0
        %v6297 = vadd.f32 0.0, %v6296
        %v6298 = vpop.f32.mrf.mxu0
        %v6299 = vadd.f32 0.0, %v6298
        %6300 = vmatmul.bf16.gmra.mxu0 %v6240
        %v6301 = vpop.f32.mrf.mxu0
        %v6302 = vadd.f32 0.0, %v6301
        %v6303 = vpop.f32.mrf.mxu0
        %v6304 = vadd.f32 0.0, %v6303
        %6305 = vmatmul.bf16.gmra.mxu0 %v6243
        %v6306 = vpop.f32.mrf.mxu0
        %v6307 = vadd.f32 0.0, %v6306
        %v6308 = vpop.f32.mrf.mxu0
        %v6309 = vadd.f32 0.0, %v6308
        %6310 = vmatmul.bf16.gmra.mxu0 %v6246
        %v6311 = vpop.f32.mrf.mxu0
        %v6312 = vadd.f32 0.0, %v6311
        %v6313 = vpop.f32.mrf.mxu0
        %v6314 = vadd.f32 0.0, %v6313
        %6315 = vmatmul.bf16.gmra.mxu0 %v6249
        %v6316 = vpop.f32.mrf.mxu0
        %v6317 = vadd.f32 0.0, %v6316
        %v6318 = vpop.f32.mrf.mxu0
        %v6319 = vadd.f32 0.0, %v6318
        %6320 = vmatmul.bf16.gmra.mxu0 %v6252
        %v6321 = vpop.f32.mrf.mxu0
        %v6322 = vadd.f32 0.0, %v6321
        %v6323 = vpop.f32.mrf.mxu0
        %v6324 = vadd.f32 0.0, %v6323
        %6325 = vmatmul.bf16.gmra.mxu0 %v6255
        %v6326 = vpop.f32.mrf.mxu0
        %v6327 = vadd.f32 0.0, %v6326
        %v6328 = vpop.f32.mrf.mxu0
        %v6329 = vadd.f32 0.0, %v6328
        %6330 = vmatmul.bf16.gmra.mxu0 %v6258
        %v6331 = vpop.f32.mrf.mxu0
        %v6332 = vadd.f32 0.0, %v6331
        %v6333 = vpop.f32.mrf.mxu0
        %v6334 = vadd.f32 0.0, %v6333
        %6335 = vmatmul.bf16.gmra.mxu0 %v6261
        %v6336 = vpop.f32.mrf.mxu0
        %v6337 = vadd.f32 0.0, %v6336
        %v6338 = vpop.f32.mrf.mxu0
        %v6339 = vadd.f32 0.0, %v6338
        %6340 = vmatmul.bf16.gmra.mxu0 %v6264
        %v6341 = vpop.f32.mrf.mxu0
        %v6342 = vadd.f32 0.0, %v6341
        %v6343 = vpop.f32.mrf.mxu0
        %v6344 = vadd.f32 0.0, %v6343
        %6345 = vmatmul.bf16.gmra.mxu0 %v6267
        %v6346 = vpop.f32.mrf.mxu0
        %v6347 = vadd.f32 0.0, %v6346
        %v6348 = vpop.f32.mrf.mxu0
        %v6349 = vadd.f32 0.0, %v6348
        %6350 = vmatmul.bf16.gmra.mxu0 %v6270
        %v6351 = vpop.f32.mrf.mxu0
        %v6352 = vadd.f32 0.0, %v6351
        %v6353 = vpop.f32.mrf.mxu0
        %v6354 = vadd.f32 0.0, %v6353
        %6355 = vmatmul.bf16.gmra.mxu0 %v6273
        %v6356 = vpop.f32.mrf.mxu0
        %v6357 = vadd.f32 0.0, %v6356
        %v6358 = vpop.f32.mrf.mxu0
        %v6359 = vadd.f32 0.0, %v6358
        %6360 = vmatmul.bf16.gmra.mxu0 %v6276
        %v6361 = vpop.f32.mrf.mxu0
        %v6362 = vadd.f32 0.0, %v6361
        %v6363 = vpop.f32.mrf.mxu0
        %v6364 = vadd.f32 0.0, %v6363
        %6365 = vmatmul.bf16.gmra.mxu0 %v6279
        %v6366 = vpop.f32.mrf.mxu0
        %v6367 = vadd.f32 0.0, %v6366
        %v6368 = vpop.f32.mrf.mxu0
        %v6369 = vadd.f32 0.0, %v6368
        %6370 = vmatmul.bf16.gmra.mxu0 %v6282
        %v6371 = vpop.f32.mrf.mxu0
        %v6372 = vadd.f32 0.0, %v6371
        %v6373 = vpop.f32.mrf.mxu0
        %v6374 = vadd.f32 0.0, %v6373
        %6375 = vdwg.mxu0
        %v6376 = vadd.f32 %v6180, %v6297
        %v6377 = vadd.f32 %v6181, %v6299
        %v6378 = vadd.f32 %v6182, %v6302
        %v6379 = vadd.f32 %v6183, %v6304
        %v6380 = vadd.f32 %v6184, %v6307
        %v6381 = vadd.f32 %v6185, %v6309
        %v6382 = vadd.f32 %v6186, %v6312
        %v6383 = vadd.f32 %v6187, %v6314
        %v6384 = vadd.f32 %v6188, %v6317
        %v6385 = vadd.f32 %v6189, %v6319
        %v6386 = vadd.f32 %v6190, %v6322
        %v6387 = vadd.f32 %v6191, %v6324
        %v6388 = vadd.f32 %v6192, %v6327
        %v6389 = vadd.f32 %v6193, %v6329
        %v6390 = vadd.f32 %v6194, %v6332
        %v6391 = vadd.f32 %v6195, %v6334
        %v6392 = vadd.f32 %v6196, %v6337
        %v6393 = vadd.f32 %v6197, %v6339
        %v6394 = vadd.f32 %v6198, %v6342
        %v6395 = vadd.f32 %v6199, %v6344
        %v6396 = vadd.f32 %v6200, %v6347
        %v6397 = vadd.f32 %v6201, %v6349
        %v6398 = vadd.f32 %v6202, %v6352
        %v6399 = vadd.f32 %v6203, %v6354
        %v6400 = vadd.f32 %v6204, %v6357
        %v6401 = vadd.f32 %v6205, %v6359
        %v6402 = vadd.f32 %v6206, %v6362
        %v6403 = vadd.f32 %v6207, %v6364
        %v6404 = vadd.f32 %v6208, %v6367
        %v6405 = vadd.f32 %v6209, %v6369
        %v6406 = vadd.f32 %v6210, %v6372
        %v6407 = vadd.f32 %v6211, %v6374
        %v6408 = vrot.slane %v726, 1
        %v6409 = vsel %vm5021, %v5047, %v6408
        %v6410 = vrot.slane %v1624, 1
        %v6411 = vsel %vm5021, %v6408, %v6410
        %6412 = vrot.lane.b32.xlu0 %v6409, 116
        %v6413 = vpop.permute.xlu0 %6412
        %6414 = vrot.lane.b32.xlu0 %v6411, 116
        %v6415 = vpop.permute.xlu0 %6414
        %vm6418 = vmpackc.low %vm5259, %vm5259
        %vm6419 = vmpackc.low %vm5260, %vm5260
        %v6420 = vsel %vm6418, 65537, 0
        %v6421 = vsel %vm6419, 65537, 0
        %v6422 = vunpack.c.l.b16 %v6420
        %v6423 = vunpack.c.l.b16 %v6421
        %v6424 = vpack.c.b16 %v6423, %v6422
        %v6425 = vunpack.c.l.b16 %v6424
        %v6426 = vunpack.c.h.b16 %v6424
        %v6427 = vunpack.c.l.b16 0
        %v6428 = vunpack.c.h.b16 0
        %vm6429 = vcmp.ne.s32.totalorder %v6425, %v6427
        %vm6430 = vcmp.ne.s32.totalorder %v6426, %v6428
        %vm6431 = vmpackc.low %vm6430, %vm6429
        %v6432 = vsel %vm6431, %v5097, 0
        %v6433 = vsel %vm5402, %v5054, 0
        %v6434 = vsel %vm5409, %v5056, 0
        %v6435 = vsel %vm5416, %v5058, 0
        %v6436 = vsel %vm5423, %v5060, 0
        %v6437 = vsel %vm5430, %v5062, 0
        %v6438 = vsel %vm5437, %v5064, 0
        %v6439 = vsel %vm5444, %v5066, 0
        %v6440 = vsel %vm5451, %v5068, 0
        %v6441 = vsel %vm5458, %v5070, 0
        %v6442 = vsel %vm5465, %v5072, 0
        %v6443 = vsel %vm5472, %v5074, 0
        %v6444 = vsel %vm5479, %v5076, 0
        %v6445 = vsel %vm5486, %v5078, 0
        %v6446 = vsel %vm5493, %v6413, 0
        %v6447 = vsel %vm5500, %v6415, 0
        %s6448 = scalar_lea.vmem %s6, 18
        %v6449 = vld [vmem:[%s6448] sm:$0x3]
        %v6451 = vsel %vm446, %v6432, 0
        %v6454 = vsel %vm446, %v6433, 0
        %v6457 = vsel %vm446, %v6434, 0
        %v6460 = vsel %vm446, %v6435, 0
        %v6463 = vsel %vm446, %v6436, 0
        %v6466 = vsel %vm446, %v6437, 0
        %v6469 = vsel %vm446, %v6438, 0
        %v6472 = vsel %vm446, %v6439, 0
        %v6475 = vsel %vm446, %v6440, 0
        %v6478 = vsel %vm446, %v6441, 0
        %v6481 = vsel %vm446, %v6442, 0
        %v6484 = vsel %vm446, %v6443, 0
        %v6487 = vsel %vm446, %v6444, 0
        %v6490 = vsel %vm446, %v6445, 0
        %v6493 = vsel %vm446, %v6446, 0
        %v6496 = vsel %vm446, %v6447, 0
        %v6499 = vsel %vm495, %v6449, 0
        %6501 = vmatpush.bf16.msra.mxu0 0
        %6502 = vmatpush.bf16.msra.mxu0 0
        %6503 = vmatpush.bf16.msra.mxu0 0
        %6504 = vmatpush.bf16.msra.mxu0 0
        %6505 = vmatpush.bf16.msra.mxu0 0
        %6506 = vmatpush.bf16.msra.mxu0 0
        %6507 = vmatpush.bf16.msra.mxu0 0
        %6508 = vmatpush.bf16.msra.mxu0 %v6499
        %6509 = vmatmul.bf16.gmra.mxu0 %v6451
        %v6510 = vpop.f32.mrf.mxu0
        %v6511 = vadd.f32 0.0, %v6510
        %v6512 = vpop.f32.mrf.mxu0
        %v6513 = vadd.f32 0.0, %v6512
        %6514 = vmatmul.bf16.gmra.mxu0 %v6454
        %v6515 = vpop.f32.mrf.mxu0
        %v6516 = vadd.f32 0.0, %v6515
        %v6517 = vpop.f32.mrf.mxu0
        %v6518 = vadd.f32 0.0, %v6517
        %6519 = vmatmul.bf16.gmra.mxu0 %v6457
        %v6520 = vpop.f32.mrf.mxu0
        %v6521 = vadd.f32 0.0, %v6520
        %v6522 = vpop.f32.mrf.mxu0
        %v6523 = vadd.f32 0.0, %v6522
        %6524 = vmatmul.bf16.gmra.mxu0 %v6460
        %v6525 = vpop.f32.mrf.mxu0
        %v6526 = vadd.f32 0.0, %v6525
        %v6527 = vpop.f32.mrf.mxu0
        %v6528 = vadd.f32 0.0, %v6527
        %6529 = vmatmul.bf16.gmra.mxu0 %v6463
        %v6530 = vpop.f32.mrf.mxu0
        %v6531 = vadd.f32 0.0, %v6530
        %v6532 = vpop.f32.mrf.mxu0
        %v6533 = vadd.f32 0.0, %v6532
        %6534 = vmatmul.bf16.gmra.mxu0 %v6466
        %v6535 = vpop.f32.mrf.mxu0
        %v6536 = vadd.f32 0.0, %v6535
        %v6537 = vpop.f32.mrf.mxu0
        %v6538 = vadd.f32 0.0, %v6537
        %6539 = vmatmul.bf16.gmra.mxu0 %v6469
        %v6540 = vpop.f32.mrf.mxu0
        %v6541 = vadd.f32 0.0, %v6540
        %v6542 = vpop.f32.mrf.mxu0
        %v6543 = vadd.f32 0.0, %v6542
        %6544 = vmatmul.bf16.gmra.mxu0 %v6472
        %v6545 = vpop.f32.mrf.mxu0
        %v6546 = vadd.f32 0.0, %v6545
        %v6547 = vpop.f32.mrf.mxu0
        %v6548 = vadd.f32 0.0, %v6547
        %6549 = vmatmul.bf16.gmra.mxu0 %v6475
        %v6550 = vpop.f32.mrf.mxu0
        %v6551 = vadd.f32 0.0, %v6550
        %v6552 = vpop.f32.mrf.mxu0
        %v6553 = vadd.f32 0.0, %v6552
        %6554 = vmatmul.bf16.gmra.mxu0 %v6478
        %v6555 = vpop.f32.mrf.mxu0
        %v6556 = vadd.f32 0.0, %v6555
        %v6557 = vpop.f32.mrf.mxu0
        %v6558 = vadd.f32 0.0, %v6557
        %6559 = vmatmul.bf16.gmra.mxu0 %v6481
        %v6560 = vpop.f32.mrf.mxu0
        %v6561 = vadd.f32 0.0, %v6560
        %v6562 = vpop.f32.mrf.mxu0
        %v6563 = vadd.f32 0.0, %v6562
        %6564 = vmatmul.bf16.gmra.mxu0 %v6484
        %v6565 = vpop.f32.mrf.mxu0
        %v6566 = vadd.f32 0.0, %v6565
        %v6567 = vpop.f32.mrf.mxu0
        %v6568 = vadd.f32 0.0, %v6567
        %6569 = vmatmul.bf16.gmra.mxu0 %v6487
        %v6570 = vpop.f32.mrf.mxu0
        %v6571 = vadd.f32 0.0, %v6570
        %v6572 = vpop.f32.mrf.mxu0
        %v6573 = vadd.f32 0.0, %v6572
        %6574 = vmatmul.bf16.gmra.mxu0 %v6490
        %v6575 = vpop.f32.mrf.mxu0
        %v6576 = vadd.f32 0.0, %v6575
        %v6577 = vpop.f32.mrf.mxu0
        %v6578 = vadd.f32 0.0, %v6577
        %6579 = vmatmul.bf16.gmra.mxu0 %v6493
        %v6580 = vpop.f32.mrf.mxu0
        %v6581 = vadd.f32 0.0, %v6580
        %v6582 = vpop.f32.mrf.mxu0
        %v6583 = vadd.f32 0.0, %v6582
        %6584 = vmatmul.bf16.gmra.mxu0 %v6496
        %v6585 = vpop.f32.mrf.mxu0
        %v6586 = vadd.f32 0.0, %v6585
        %v6587 = vpop.f32.mrf.mxu0
        %v6588 = vadd.f32 0.0, %v6587
        %6589 = vdwg.mxu0
        %v6590 = vadd.f32 %v6376, %v6511
        %v6591 = vadd.f32 %v6377, %v6513
        %v6592 = vadd.f32 %v6378, %v6516
        %v6593 = vadd.f32 %v6379, %v6518
        %v6594 = vadd.f32 %v6380, %v6521
        %v6595 = vadd.f32 %v6381, %v6523
        %v6596 = vadd.f32 %v6382, %v6526
        %v6597 = vadd.f32 %v6383, %v6528
        %v6598 = vadd.f32 %v6384, %v6531
        %v6599 = vadd.f32 %v6385, %v6533
        %v6600 = vadd.f32 %v6386, %v6536
        %v6601 = vadd.f32 %v6387, %v6538
        %v6602 = vadd.f32 %v6388, %v6541
        %v6603 = vadd.f32 %v6389, %v6543
        %v6604 = vadd.f32 %v6390, %v6546
        %v6605 = vadd.f32 %v6391, %v6548
        %v6606 = vadd.f32 %v6392, %v6551
        %v6607 = vadd.f32 %v6393, %v6553
        %v6608 = vadd.f32 %v6394, %v6556
        %v6609 = vadd.f32 %v6395, %v6558
        %v6610 = vadd.f32 %v6396, %v6561
        %v6611 = vadd.f32 %v6397, %v6563
        %v6612 = vadd.f32 %v6398, %v6566
        %v6613 = vadd.f32 %v6399, %v6568
        %v6614 = vadd.f32 %v6400, %v6571
        %v6615 = vadd.f32 %v6401, %v6573
        %v6616 = vadd.f32 %v6402, %v6576
        %v6617 = vadd.f32 %v6403, %v6578
        %v6618 = vadd.f32 %v6404, %v6581
        %v6619 = vadd.f32 %v6405, %v6583
        %v6620 = vadd.f32 %v6406, %v6586
        %v6621 = vadd.f32 %v6407, %v6588
        %v6622 = vrot.slane %v2334, 7
        %v6623 = vsel %vm892, %v5687, %v6622
        %6624 = vrot.lane.b32.xlu0 %v6623, 116
        %v6625 = vpop.permute.xlu0 %6624
        %vm6627 = vmpackc.low %vm4017, %vm4017
        %vm6628 = vmpackc.low %vm4018, %vm4018
        %v6629 = vsel %vm6627, 65537, 0
        %v6630 = vsel %vm6628, 65537, 0
        %v6631 = vunpack.c.l.b16 %v6629
        %v6632 = vunpack.c.l.b16 %v6630
        %v6633 = vpack.c.b16 %v6632, %v6631
        %v6634 = vunpack.c.l.b16 %v6633
        %v6635 = vunpack.c.h.b16 %v6633
        %v6636 = vunpack.c.l.b16 0
        %v6637 = vunpack.c.h.b16 0
        %vm6638 = vcmp.ne.s32.totalorder %v6634, %v6636
        %vm6639 = vcmp.ne.s32.totalorder %v6635, %v6637
        %vm6640 = vmpackc.low %vm6639, %vm6638
        %v6641 = vsel %vm6640, %v3855, 0
        %v6642 = vsel %vm5705, %v3815, 0
        %v6643 = vsel %vm4153, %v3817, 0
        %v6644 = vsel %vm4160, %v3819, 0
        %v6645 = vsel %vm4167, %v3821, 0
        %v6646 = vsel %vm4174, %v3823, 0
        %v6647 = vsel %vm4181, %v3825, 0
        %v6648 = vsel %vm4188, %v3827, 0
        %v6649 = vsel %vm4195, %v3829, 0
        %v6650 = vsel %vm4202, %v3831, 0
        %v6651 = vsel %vm4209, %v3833, 0
        %v6652 = vsel %vm4216, %v3835, 0
        %v6653 = vsel %vm4223, %v3837, 0
        %v6654 = vsel %vm4230, %v3839, 0
        %v6655 = vsel %vm4237, %v5690, 0
        %v6656 = vsel %vm4244, %v6625, 0
        %s6657 = scalar_lea.vmem %s6, 20
        %v6658 = vld [vmem:[%s6657] sm:$0x3]
        %v6660 = vsel %vm446, %v6641, 0
        %v6663 = vsel %vm446, %v6642, 0
        %v6666 = vsel %vm446, %v6643, 0
        %v6669 = vsel %vm446, %v6644, 0
        %v6672 = vsel %vm446, %v6645, 0
        %v6675 = vsel %vm446, %v6646, 0
        %v6678 = vsel %vm446, %v6647, 0
        %v6681 = vsel %vm446, %v6648, 0
        %v6684 = vsel %vm446, %v6649, 0
        %v6687 = vsel %vm446, %v6650, 0
        %v6690 = vsel %vm446, %v6651, 0
        %v6693 = vsel %vm446, %v6652, 0
        %v6696 = vsel %vm446, %v6653, 0
        %v6699 = vsel %vm446, %v6654, 0
        %v6702 = vsel %vm446, %v6655, 0
        %v6705 = vsel %vm446, %v6656, 0
        %v6708 = vsel %vm495, %v6658, 0
        %6710 = vmatpush.bf16.msra.mxu0 0
        %6711 = vmatpush.bf16.msra.mxu0 0
        %6712 = vmatpush.bf16.msra.mxu0 0
        %6713 = vmatpush.bf16.msra.mxu0 0
        %6714 = vmatpush.bf16.msra.mxu0 0
        %6715 = vmatpush.bf16.msra.mxu0 0
        %6716 = vmatpush.bf16.msra.mxu0 0
        %6717 = vmatpush.bf16.msra.mxu0 %v6708
        %6718 = vmatmul.bf16.gmra.mxu0 %v6660
        %v6719 = vpop.f32.mrf.mxu0
        %v6720 = vadd.f32 0.0, %v6719
        %v6721 = vpop.f32.mrf.mxu0
        %v6722 = vadd.f32 0.0, %v6721
        %6723 = vmatmul.bf16.gmra.mxu0 %v6663
        %v6724 = vpop.f32.mrf.mxu0
        %v6725 = vadd.f32 0.0, %v6724
        %v6726 = vpop.f32.mrf.mxu0
        %v6727 = vadd.f32 0.0, %v6726
        %6728 = vmatmul.bf16.gmra.mxu0 %v6666
        %v6729 = vpop.f32.mrf.mxu0
        %v6730 = vadd.f32 0.0, %v6729
        %v6731 = vpop.f32.mrf.mxu0
        %v6732 = vadd.f32 0.0, %v6731
        %6733 = vmatmul.bf16.gmra.mxu0 %v6669
        %v6734 = vpop.f32.mrf.mxu0
        %v6735 = vadd.f32 0.0, %v6734
        %v6736 = vpop.f32.mrf.mxu0
        %v6737 = vadd.f32 0.0, %v6736
        %6738 = vmatmul.bf16.gmra.mxu0 %v6672
        %v6739 = vpop.f32.mrf.mxu0
        %v6740 = vadd.f32 0.0, %v6739
        %v6741 = vpop.f32.mrf.mxu0
        %v6742 = vadd.f32 0.0, %v6741
        %6743 = vmatmul.bf16.gmra.mxu0 %v6675
        %v6744 = vpop.f32.mrf.mxu0
        %v6745 = vadd.f32 0.0, %v6744
        %v6746 = vpop.f32.mrf.mxu0
        %v6747 = vadd.f32 0.0, %v6746
        %6748 = vmatmul.bf16.gmra.mxu0 %v6678
        %v6749 = vpop.f32.mrf.mxu0
        %v6750 = vadd.f32 0.0, %v6749
        %v6751 = vpop.f32.mrf.mxu0
        %v6752 = vadd.f32 0.0, %v6751
        %6753 = vmatmul.bf16.gmra.mxu0 %v6681
        %v6754 = vpop.f32.mrf.mxu0
        %v6755 = vadd.f32 0.0, %v6754
        %v6756 = vpop.f32.mrf.mxu0
        %v6757 = vadd.f32 0.0, %v6756
        %6758 = vmatmul.bf16.gmra.mxu0 %v6684
        %v6759 = vpop.f32.mrf.mxu0
        %v6760 = vadd.f32 0.0, %v6759
        %v6761 = vpop.f32.mrf.mxu0
        %v6762 = vadd.f32 0.0, %v6761
        %6763 = vmatmul.bf16.gmra.mxu0 %v6687
        %v6764 = vpop.f32.mrf.mxu0
        %v6765 = vadd.f32 0.0, %v6764
        %v6766 = vpop.f32.mrf.mxu0
        %v6767 = vadd.f32 0.0, %v6766
        %6768 = vmatmul.bf16.gmra.mxu0 %v6690
        %v6769 = vpop.f32.mrf.mxu0
        %v6770 = vadd.f32 0.0, %v6769
        %v6771 = vpop.f32.mrf.mxu0
        %v6772 = vadd.f32 0.0, %v6771
        %6773 = vmatmul.bf16.gmra.mxu0 %v6693
        %v6774 = vpop.f32.mrf.mxu0
        %v6775 = vadd.f32 0.0, %v6774
        %v6776 = vpop.f32.mrf.mxu0
        %v6777 = vadd.f32 0.0, %v6776
        %6778 = vmatmul.bf16.gmra.mxu0 %v6696
        %v6779 = vpop.f32.mrf.mxu0
        %v6780 = vadd.f32 0.0, %v6779
        %v6781 = vpop.f32.mrf.mxu0
        %v6782 = vadd.f32 0.0, %v6781
        %6783 = vmatmul.bf16.gmra.mxu0 %v6699
        %v6784 = vpop.f32.mrf.mxu0
        %v6785 = vadd.f32 0.0, %v6784
        %v6786 = vpop.f32.mrf.mxu0
        %v6787 = vadd.f32 0.0, %v6786
        %6788 = vmatmul.bf16.gmra.mxu0 %v6702
        %v6789 = vpop.f32.mrf.mxu0
        %v6790 = vadd.f32 0.0, %v6789
        %v6791 = vpop.f32.mrf.mxu0
        %v6792 = vadd.f32 0.0, %v6791
        %6793 = vmatmul.bf16.gmra.mxu0 %v6705
        %v6794 = vpop.f32.mrf.mxu0
        %v6795 = vadd.f32 0.0, %v6794
        %v6796 = vpop.f32.mrf.mxu0
        %v6797 = vadd.f32 0.0, %v6796
        %6798 = vdwg.mxu0
        %v6799 = vadd.f32 %v6590, %v6720
        %v6800 = vadd.f32 %v6591, %v6722
        %v6801 = vadd.f32 %v6592, %v6725
        %v6802 = vadd.f32 %v6593, %v6727
        %v6803 = vadd.f32 %v6594, %v6730
        %v6804 = vadd.f32 %v6595, %v6732
        %v6805 = vadd.f32 %v6596, %v6735
        %v6806 = vadd.f32 %v6597, %v6737
        %v6807 = vadd.f32 %v6598, %v6740
        %v6808 = vadd.f32 %v6599, %v6742
        %v6809 = vadd.f32 %v6600, %v6745
        %v6810 = vadd.f32 %v6601, %v6747
        %v6811 = vadd.f32 %v6602, %v6750
        %v6812 = vadd.f32 %v6603, %v6752
        %v6813 = vadd.f32 %v6604, %v6755
        %v6814 = vadd.f32 %v6605, %v6757
        %v6815 = vadd.f32 %v6606, %v6760
        %v6816 = vadd.f32 %v6607, %v6762
        %v6817 = vadd.f32 %v6608, %v6765
        %v6818 = vadd.f32 %v6609, %v6767
        %v6819 = vadd.f32 %v6610, %v6770
        %v6820 = vadd.f32 %v6611, %v6772
        %v6821 = vadd.f32 %v6612, %v6775
        %v6822 = vadd.f32 %v6613, %v6777
        %v6823 = vadd.f32 %v6614, %v6780
        %v6824 = vadd.f32 %v6615, %v6782
        %v6825 = vadd.f32 %v6616, %v6785
        %v6826 = vadd.f32 %v6617, %v6787
        %v6827 = vadd.f32 %v6618, %v6790
        %v6828 = vadd.f32 %v6619, %v6792
        %v6829 = vadd.f32 %v6620, %v6795
        %v6830 = vadd.f32 %v6621, %v6797
        %6831 = vrot.lane.b32.xlu0 %v2342, 116
        %v6832 = vpop.permute.xlu0 %6831
        %v6834 = vsel %vm2359, %v4302, 0
        %v6835 = vsel %vm1198, %v4263, 0
        %v6836 = vsel %vm1205, %v4265, 0
        %v6837 = vsel %vm1212, %v4267, 0
        %v6838 = vsel %vm1219, %v4269, 0
        %v6839 = vsel %vm1226, %v4271, 0
        %v6840 = vsel %vm1233, %v4273, 0
        %v6841 = vsel %vm1240, %v4275, 0
        %v6842 = vsel %vm1247, %v4277, 0
        %v6843 = vsel %vm1254, %v4279, 0
        %v6844 = vsel %vm1261, %v4281, 0
        %v6845 = vsel %vm1268, %v4283, 0
        %v6846 = vsel %vm1275, %v4285, 0
        %v6847 = vsel %vm1282, %v4287, 0
        %v6848 = vsel %vm1289, %v5893, 0
        %v6849 = vsel %vm1296, %v6832, 0
        %s6850 = scalar_lea.vmem %s6, 22
        %v6851 = vld [vmem:[%s6850] sm:$0x3]
        %v6853 = vsel %vm446, %v6834, 0
        %v6856 = vsel %vm446, %v6835, 0
        %v6859 = vsel %vm446, %v6836, 0
        %v6862 = vsel %vm446, %v6837, 0
        %v6865 = vsel %vm446, %v6838, 0
        %v6868 = vsel %vm446, %v6839, 0
        %v6871 = vsel %vm446, %v6840, 0
        %v6874 = vsel %vm446, %v6841, 0
        %v6877 = vsel %vm446, %v6842, 0
        %v6880 = vsel %vm446, %v6843, 0
        %v6883 = vsel %vm446, %v6844, 0
        %v6886 = vsel %vm446, %v6845, 0
        %v6889 = vsel %vm446, %v6846, 0
        %v6892 = vsel %vm446, %v6847, 0
        %v6895 = vsel %vm446, %v6848, 0
        %v6898 = vsel %vm446, %v6849, 0
        %v6901 = vsel %vm495, %v6851, 0
        %6903 = vmatpush.bf16.msra.mxu0 0
        %6904 = vmatpush.bf16.msra.mxu0 0
        %6905 = vmatpush.bf16.msra.mxu0 0
        %6906 = vmatpush.bf16.msra.mxu0 0
        %6907 = vmatpush.bf16.msra.mxu0 0
        %6908 = vmatpush.bf16.msra.mxu0 0
        %6909 = vmatpush.bf16.msra.mxu0 0
        %6910 = vmatpush.bf16.msra.mxu0 %v6901
        %6911 = vmatmul.bf16.gmra.mxu0 %v6853
        %v6912 = vpop.f32.mrf.mxu0
        %v6913 = vadd.f32 0.0, %v6912
        %v6914 = vpop.f32.mrf.mxu0
        %v6915 = vadd.f32 0.0, %v6914
        %6916 = vmatmul.bf16.gmra.mxu0 %v6856
        %v6917 = vpop.f32.mrf.mxu0
        %v6918 = vadd.f32 0.0, %v6917
        %v6919 = vpop.f32.mrf.mxu0
        %v6920 = vadd.f32 0.0, %v6919
        %6921 = vmatmul.bf16.gmra.mxu0 %v6859
        %v6922 = vpop.f32.mrf.mxu0
        %v6923 = vadd.f32 0.0, %v6922
        %v6924 = vpop.f32.mrf.mxu0
        %v6925 = vadd.f32 0.0, %v6924
        %6926 = vmatmul.bf16.gmra.mxu0 %v6862
        %v6927 = vpop.f32.mrf.mxu0
        %v6928 = vadd.f32 0.0, %v6927
        %v6929 = vpop.f32.mrf.mxu0
        %v6930 = vadd.f32 0.0, %v6929
        %6931 = vmatmul.bf16.gmra.mxu0 %v6865
        %v6932 = vpop.f32.mrf.mxu0
        %v6933 = vadd.f32 0.0, %v6932
        %v6934 = vpop.f32.mrf.mxu0
        %v6935 = vadd.f32 0.0, %v6934
        %6936 = vmatmul.bf16.gmra.mxu0 %v6868
        %v6937 = vpop.f32.mrf.mxu0
        %v6938 = vadd.f32 0.0, %v6937
        %v6939 = vpop.f32.mrf.mxu0
        %v6940 = vadd.f32 0.0, %v6939
        %6941 = vmatmul.bf16.gmra.mxu0 %v6871
        %v6942 = vpop.f32.mrf.mxu0
        %v6943 = vadd.f32 0.0, %v6942
        %v6944 = vpop.f32.mrf.mxu0
        %v6945 = vadd.f32 0.0, %v6944
        %6946 = vmatmul.bf16.gmra.mxu0 %v6874
        %v6947 = vpop.f32.mrf.mxu0
        %v6948 = vadd.f32 0.0, %v6947
        %v6949 = vpop.f32.mrf.mxu0
        %v6950 = vadd.f32 0.0, %v6949
        %6951 = vmatmul.bf16.gmra.mxu0 %v6877
        %v6952 = vpop.f32.mrf.mxu0
        %v6953 = vadd.f32 0.0, %v6952
        %v6954 = vpop.f32.mrf.mxu0
        %v6955 = vadd.f32 0.0, %v6954
        %6956 = vmatmul.bf16.gmra.mxu0 %v6880
        %v6957 = vpop.f32.mrf.mxu0
        %v6958 = vadd.f32 0.0, %v6957
        %v6959 = vpop.f32.mrf.mxu0
        %v6960 = vadd.f32 0.0, %v6959
        %6961 = vmatmul.bf16.gmra.mxu0 %v6883
        %v6962 = vpop.f32.mrf.mxu0
        %v6963 = vadd.f32 0.0, %v6962
        %v6964 = vpop.f32.mrf.mxu0
        %v6965 = vadd.f32 0.0, %v6964
        %6966 = vmatmul.bf16.gmra.mxu0 %v6886
        %v6967 = vpop.f32.mrf.mxu0
        %v6968 = vadd.f32 0.0, %v6967
        %v6969 = vpop.f32.mrf.mxu0
        %v6970 = vadd.f32 0.0, %v6969
        %6971 = vmatmul.bf16.gmra.mxu0 %v6889
        %v6972 = vpop.f32.mrf.mxu0
        %v6973 = vadd.f32 0.0, %v6972
        %v6974 = vpop.f32.mrf.mxu0
        %v6975 = vadd.f32 0.0, %v6974
        %6976 = vmatmul.bf16.gmra.mxu0 %v6892
        %v6977 = vpop.f32.mrf.mxu0
        %v6978 = vadd.f32 0.0, %v6977
        %v6979 = vpop.f32.mrf.mxu0
        %v6980 = vadd.f32 0.0, %v6979
        %6981 = vmatmul.bf16.gmra.mxu0 %v6895
        %v6982 = vpop.f32.mrf.mxu0
        %v6983 = vadd.f32 0.0, %v6982
        %v6984 = vpop.f32.mrf.mxu0
        %v6985 = vadd.f32 0.0, %v6984
        %6986 = vmatmul.bf16.gmra.mxu0 %v6898
        %v6987 = vpop.f32.mrf.mxu0
        %v6988 = vadd.f32 0.0, %v6987
        %v6989 = vpop.f32.mrf.mxu0
        %v6990 = vadd.f32 0.0, %v6989
        %6991 = vdwg.mxu0
        %v6992 = vadd.f32 %v6799, %v6913
        %v6993 = vadd.f32 %v6800, %v6915
        %v6994 = vadd.f32 %v6801, %v6918
        %v6995 = vadd.f32 %v6802, %v6920
        %v6996 = vadd.f32 %v6803, %v6923
        %v6997 = vadd.f32 %v6804, %v6925
        %v6998 = vadd.f32 %v6805, %v6928
        %v6999 = vadd.f32 %v6806, %v6930
        %v7000 = vadd.f32 %v6807, %v6933
        %v7001 = vadd.f32 %v6808, %v6935
        %v7002 = vadd.f32 %v6809, %v6938
        %v7003 = vadd.f32 %v6810, %v6940
        %v7004 = vadd.f32 %v6811, %v6943
        %v7005 = vadd.f32 %v6812, %v6945
        %v7006 = vadd.f32 %v6813, %v6948
        %v7007 = vadd.f32 %v6814, %v6950
        %v7008 = vadd.f32 %v6815, %v6953
        %v7009 = vadd.f32 %v6816, %v6955
        %v7010 = vadd.f32 %v6817, %v6958
        %v7011 = vadd.f32 %v6818, %v6960
        %v7012 = vadd.f32 %v6819, %v6963
        %v7013 = vadd.f32 %v6820, %v6965
        %v7014 = vadd.f32 %v6821, %v6968
        %v7015 = vadd.f32 %v6822, %v6970
        %v7016 = vadd.f32 %v6823, %v6973
        %v7017 = vadd.f32 %v6824, %v6975
        %v7018 = vadd.f32 %v6825, %v6978
        %v7019 = vadd.f32 %v6826, %v6980
        %v7020 = vadd.f32 %v6827, %v6983
        %v7021 = vadd.f32 %v6828, %v6985
        %v7022 = vadd.f32 %v6829, %v6988
        %v7023 = vadd.f32 %v6830, %v6990
        %s7024 = scalar_lea.vmem %s6, 24
        %v7025 = vld [vmem:[%s7024] sm:$0x3]
        %7026 = vrot.lane.b32.xlu0 %v2334, 116
        %v7027 = vpop.permute.xlu0 %7026
        %v7029 = vsel %vm446, %v7027, 0
        %v7032 = vsel %vm495, %v7025, 0
        %7034 = vmatpush.bf16.msra.mxu0 0
        %7035 = vmatpush.bf16.msra.mxu0 0
        %7036 = vmatpush.bf16.msra.mxu0 0
        %7037 = vmatpush.bf16.msra.mxu0 0
        %7038 = vmatpush.bf16.msra.mxu0 0
        %7039 = vmatpush.bf16.msra.mxu0 0
        %7040 = vmatpush.bf16.msra.mxu0 0
        %7041 = vmatpush.bf16.msra.mxu0 %v7032
        %7042 = vmatmul.bf16.gmra.mxu0 %v4618
        %v7043 = vpop.f32.mrf.mxu0
        %v7044 = vadd.f32 0.0, %v7043
        %v7045 = vpop.f32.mrf.mxu0
        %v7046 = vadd.f32 0.0, %v7045
        %7047 = vmatmul.bf16.gmra.mxu0 %v4621
        %v7048 = vpop.f32.mrf.mxu0
        %v7049 = vadd.f32 0.0, %v7048
        %v7050 = vpop.f32.mrf.mxu0
        %v7051 = vadd.f32 0.0, %v7050
        %7052 = vmatmul.bf16.gmra.mxu0 %v4624
        %v7053 = vpop.f32.mrf.mxu0
        %v7054 = vadd.f32 0.0, %v7053
        %v7055 = vpop.f32.mrf.mxu0
        %v7056 = vadd.f32 0.0, %v7055
        %7057 = vmatmul.bf16.gmra.mxu0 %v4627
        %v7058 = vpop.f32.mrf.mxu0
        %v7059 = vadd.f32 0.0, %v7058
        %v7060 = vpop.f32.mrf.mxu0
        %v7061 = vadd.f32 0.0, %v7060
        %7062 = vmatmul.bf16.gmra.mxu0 %v4630
        %v7063 = vpop.f32.mrf.mxu0
        %v7064 = vadd.f32 0.0, %v7063
        %v7065 = vpop.f32.mrf.mxu0
        %v7066 = vadd.f32 0.0, %v7065
        %7067 = vmatmul.bf16.gmra.mxu0 %v4633
        %v7068 = vpop.f32.mrf.mxu0
        %v7069 = vadd.f32 0.0, %v7068
        %v7070 = vpop.f32.mrf.mxu0
        %v7071 = vadd.f32 0.0, %v7070
        %7072 = vmatmul.bf16.gmra.mxu0 %v4636
        %v7073 = vpop.f32.mrf.mxu0
        %v7074 = vadd.f32 0.0, %v7073
        %v7075 = vpop.f32.mrf.mxu0
        %v7076 = vadd.f32 0.0, %v7075
        %7077 = vmatmul.bf16.gmra.mxu0 %v4639
        %v7078 = vpop.f32.mrf.mxu0
        %v7079 = vadd.f32 0.0, %v7078
        %v7080 = vpop.f32.mrf.mxu0
        %v7081 = vadd.f32 0.0, %v7080
        %7082 = vmatmul.bf16.gmra.mxu0 %v4642
        %v7083 = vpop.f32.mrf.mxu0
        %v7084 = vadd.f32 0.0, %v7083
        %v7085 = vpop.f32.mrf.mxu0
        %v7086 = vadd.f32 0.0, %v7085
        %7087 = vmatmul.bf16.gmra.mxu0 %v4645
        %v7088 = vpop.f32.mrf.mxu0
        %v7089 = vadd.f32 0.0, %v7088
        %v7090 = vpop.f32.mrf.mxu0
        %v7091 = vadd.f32 0.0, %v7090
        %7092 = vmatmul.bf16.gmra.mxu0 %v4648
        %v7093 = vpop.f32.mrf.mxu0
        %v7094 = vadd.f32 0.0, %v7093
        %v7095 = vpop.f32.mrf.mxu0
        %v7096 = vadd.f32 0.0, %v7095
        %7097 = vmatmul.bf16.gmra.mxu0 %v4651
        %v7098 = vpop.f32.mrf.mxu0
        %v7099 = vadd.f32 0.0, %v7098
        %v7100 = vpop.f32.mrf.mxu0
        %v7101 = vadd.f32 0.0, %v7100
        %7102 = vmatmul.bf16.gmra.mxu0 %v4654
        %v7103 = vpop.f32.mrf.mxu0
        %v7104 = vadd.f32 0.0, %v7103
        %v7105 = vpop.f32.mrf.mxu0
        %v7106 = vadd.f32 0.0, %v7105
        %7107 = vmatmul.bf16.gmra.mxu0 %v4657
        %v7108 = vpop.f32.mrf.mxu0
        %v7109 = vadd.f32 0.0, %v7108
        %v7110 = vpop.f32.mrf.mxu0
        %v7111 = vadd.f32 0.0, %v7110
        %7112 = vmatmul.bf16.gmra.mxu0 %v6086
        %v7113 = vpop.f32.mrf.mxu0
        %v7114 = vadd.f32 0.0, %v7113
        %v7115 = vpop.f32.mrf.mxu0
        %v7116 = vadd.f32 0.0, %v7115
        %7117 = vmatmul.bf16.gmra.mxu0 %v7029
        %v7118 = vpop.f32.mrf.mxu0
        %v7119 = vadd.f32 0.0, %v7118
        %v7120 = vpop.f32.mrf.mxu0
        %v7121 = vadd.f32 0.0, %v7120
        %7122 = vdwg.mxu0
        %v7123 = vadd.f32 %v6992, %v7044
        %v7124 = vadd.f32 %v6993, %v7046
        %v7125 = vadd.f32 %v6994, %v7049
        %v7126 = vadd.f32 %v6995, %v7051
        %v7127 = vadd.f32 %v6996, %v7054
        %v7128 = vadd.f32 %v6997, %v7056
        %v7129 = vadd.f32 %v6998, %v7059
        %v7130 = vadd.f32 %v6999, %v7061
        %v7131 = vadd.f32 %v7000, %v7064
        %v7132 = vadd.f32 %v7001, %v7066
        %v7133 = vadd.f32 %v7002, %v7069
        %v7134 = vadd.f32 %v7003, %v7071
        %v7135 = vadd.f32 %v7004, %v7074
        %v7136 = vadd.f32 %v7005, %v7076
        %v7137 = vadd.f32 %v7006, %v7079
        %v7138 = vadd.f32 %v7007, %v7081
        %v7139 = vadd.f32 %v7008, %v7084
        %v7140 = vadd.f32 %v7009, %v7086
        %v7141 = vadd.f32 %v7010, %v7089
        %v7142 = vadd.f32 %v7011, %v7091
        %v7143 = vadd.f32 %v7012, %v7094
        %v7144 = vadd.f32 %v7013, %v7096
        %v7145 = vadd.f32 %v7014, %v7099
        %v7146 = vadd.f32 %v7015, %v7101
        %v7147 = vadd.f32 %v7016, %v7104
        %v7148 = vadd.f32 %v7017, %v7106
        %v7149 = vadd.f32 %v7018, %v7109
        %v7150 = vadd.f32 %v7019, %v7111
        %v7151 = vadd.f32 %v7020, %v7114
        %v7152 = vadd.f32 %v7021, %v7116
        %v7153 = vadd.f32 %v7022, %v7119
        %v7154 = vadd.f32 %v7023, %v7121
        %s7155 = scalar_lea.vmem %s6, 26
        %v7156 = vld [vmem:[%s7155] sm:$0x3]
        %7157 = vrot.lane.b32.xlu0 %v2701, 116
        %v7158 = vpop.permute.xlu0 %7157
        %7159 = vrot.lane.b32.xlu0 %v2702, 116
        %v7160 = vpop.permute.xlu0 %7159
        %7161 = vrot.lane.b32.xlu0 %v2703, 116
        %v7162 = vpop.permute.xlu0 %7161
        %7163 = vrot.lane.b32.xlu0 %v2704, 116
        %v7164 = vpop.permute.xlu0 %7163
        %7165 = vrot.lane.b32.xlu0 %v2705, 116
        %v7166 = vpop.permute.xlu0 %7165
        %7167 = vrot.lane.b32.xlu0 %v2706, 116
        %v7168 = vpop.permute.xlu0 %7167
        %7169 = vrot.lane.b32.xlu0 %v2707, 116
        %v7170 = vpop.permute.xlu0 %7169
        %7171 = vrot.lane.b32.xlu0 %v2708, 116
        %v7172 = vpop.permute.xlu0 %7171
        %7173 = vrot.lane.b32.xlu0 %v2709, 116
        %v7174 = vpop.permute.xlu0 %7173
        %7175 = vrot.lane.b32.xlu0 %v2710, 116
        %v7176 = vpop.permute.xlu0 %7175
        %7177 = vrot.lane.b32.xlu0 %v2711, 116
        %v7178 = vpop.permute.xlu0 %7177
        %7179 = vrot.lane.b32.xlu0 %v2712, 116
        %v7180 = vpop.permute.xlu0 %7179
        %7181 = vrot.lane.b32.xlu0 %v2713, 116
        %v7182 = vpop.permute.xlu0 %7181
        %7183 = vrot.lane.b32.xlu0 %v2714, 116
        %v7184 = vpop.permute.xlu0 %7183
        %7185 = vrot.lane.b32.xlu0 %v2715, 116
        %v7186 = vpop.permute.xlu0 %7185
        %7187 = vrot.lane.b32.xlu0 %v2716, 116
        %v7188 = vpop.permute.xlu0 %7187
        %v7190 = vsel %vm446, %v7158, 0
        %v7193 = vsel %vm446, %v7160, 0
        %v7196 = vsel %vm446, %v7162, 0
        %v7199 = vsel %vm446, %v7164, 0
        %v7202 = vsel %vm446, %v7166, 0
        %v7205 = vsel %vm446, %v7168, 0
        %v7208 = vsel %vm446, %v7170, 0
        %v7211 = vsel %vm446, %v7172, 0
        %v7214 = vsel %vm446, %v7174, 0
        %v7217 = vsel %vm446, %v7176, 0
        %v7220 = vsel %vm446, %v7178, 0
        %v7223 = vsel %vm446, %v7180, 0
        %v7226 = vsel %vm446, %v7182, 0
        %v7229 = vsel %vm446, %v7184, 0
        %v7232 = vsel %vm446, %v7186, 0
        %v7235 = vsel %vm446, %v7188, 0
        %v7238 = vsel %vm495, %v7156, 0
        %7240 = vmatpush.bf16.msra.mxu0 0
        %7241 = vmatpush.bf16.msra.mxu0 0
        %7242 = vmatpush.bf16.msra.mxu0 0
        %7243 = vmatpush.bf16.msra.mxu0 0
        %7244 = vmatpush.bf16.msra.mxu0 0
        %7245 = vmatpush.bf16.msra.mxu0 0
        %7246 = vmatpush.bf16.msra.mxu0 0
        %7247 = vmatpush.bf16.msra.mxu0 %v7238
        %7248 = vmatmul.bf16.gmra.mxu0 %v7190
        %v7249 = vpop.f32.mrf.mxu0
        %v7250 = vadd.f32 0.0, %v7249
        %v7251 = vpop.f32.mrf.mxu0
        %v7252 = vadd.f32 0.0, %v7251
        %7253 = vmatmul.bf16.gmra.mxu0 %v7193
        %v7254 = vpop.f32.mrf.mxu0
        %v7255 = vadd.f32 0.0, %v7254
        %v7256 = vpop.f32.mrf.mxu0
        %v7257 = vadd.f32 0.0, %v7256
        %7258 = vmatmul.bf16.gmra.mxu0 %v7196
        %v7259 = vpop.f32.mrf.mxu0
        %v7260 = vadd.f32 0.0, %v7259
        %v7261 = vpop.f32.mrf.mxu0
        %v7262 = vadd.f32 0.0, %v7261
        %7263 = vmatmul.bf16.gmra.mxu0 %v7199
        %v7264 = vpop.f32.mrf.mxu0
        %v7265 = vadd.f32 0.0, %v7264
        %v7266 = vpop.f32.mrf.mxu0
        %v7267 = vadd.f32 0.0, %v7266
        %7268 = vmatmul.bf16.gmra.mxu0 %v7202
        %v7269 = vpop.f32.mrf.mxu0
        %v7270 = vadd.f32 0.0, %v7269
        %v7271 = vpop.f32.mrf.mxu0
        %v7272 = vadd.f32 0.0, %v7271
        %7273 = vmatmul.bf16.gmra.mxu0 %v7205
        %v7274 = vpop.f32.mrf.mxu0
        %v7275 = vadd.f32 0.0, %v7274
        %v7276 = vpop.f32.mrf.mxu0
        %v7277 = vadd.f32 0.0, %v7276
        %7278 = vmatmul.bf16.gmra.mxu0 %v7208
        %v7279 = vpop.f32.mrf.mxu0
        %v7280 = vadd.f32 0.0, %v7279
        %v7281 = vpop.f32.mrf.mxu0
        %v7282 = vadd.f32 0.0, %v7281
        %7283 = vmatmul.bf16.gmra.mxu0 %v7211
        %v7284 = vpop.f32.mrf.mxu0
        %v7285 = vadd.f32 0.0, %v7284
        %v7286 = vpop.f32.mrf.mxu0
        %v7287 = vadd.f32 0.0, %v7286
        %7288 = vmatmul.bf16.gmra.mxu0 %v7214
        %v7289 = vpop.f32.mrf.mxu0
        %v7290 = vadd.f32 0.0, %v7289
        %v7291 = vpop.f32.mrf.mxu0
        %v7292 = vadd.f32 0.0, %v7291
        %7293 = vmatmul.bf16.gmra.mxu0 %v7217
        %v7294 = vpop.f32.mrf.mxu0
        %v7295 = vadd.f32 0.0, %v7294
        %v7296 = vpop.f32.mrf.mxu0
        %v7297 = vadd.f32 0.0, %v7296
        %7298 = vmatmul.bf16.gmra.mxu0 %v7220
        %v7299 = vpop.f32.mrf.mxu0
        %v7300 = vadd.f32 0.0, %v7299
        %v7301 = vpop.f32.mrf.mxu0
        %v7302 = vadd.f32 0.0, %v7301
        %7303 = vmatmul.bf16.gmra.mxu0 %v7223
        %v7304 = vpop.f32.mrf.mxu0
        %v7305 = vadd.f32 0.0, %v7304
        %v7306 = vpop.f32.mrf.mxu0
        %v7307 = vadd.f32 0.0, %v7306
        %7308 = vmatmul.bf16.gmra.mxu0 %v7226
        %v7309 = vpop.f32.mrf.mxu0
        %v7310 = vadd.f32 0.0, %v7309
        %v7311 = vpop.f32.mrf.mxu0
        %v7312 = vadd.f32 0.0, %v7311
        %7313 = vmatmul.bf16.gmra.mxu0 %v7229
        %v7314 = vpop.f32.mrf.mxu0
        %v7315 = vadd.f32 0.0, %v7314
        %v7316 = vpop.f32.mrf.mxu0
        %v7317 = vadd.f32 0.0, %v7316
        %7318 = vmatmul.bf16.gmra.mxu0 %v7232
        %v7319 = vpop.f32.mrf.mxu0
        %v7320 = vadd.f32 0.0, %v7319
        %v7321 = vpop.f32.mrf.mxu0
        %v7322 = vadd.f32 0.0, %v7321
        %7323 = vmatmul.bf16.gmra.mxu0 %v7235
        %v7324 = vpop.f32.mrf.mxu0
        %v7325 = vadd.f32 0.0, %v7324
        %v7326 = vpop.f32.mrf.mxu0
        %v7327 = vadd.f32 0.0, %v7326
        %7328 = vdwg.mxu0
        %v7329 = vadd.f32 %v7123, %v7250
        %v7330 = vadd.f32 %v7124, %v7252
        %v7331 = vadd.f32 %v7125, %v7255
        %v7332 = vadd.f32 %v7126, %v7257
        %v7333 = vadd.f32 %v7127, %v7260
        %v7334 = vadd.f32 %v7128, %v7262
        %v7335 = vadd.f32 %v7129, %v7265
        %v7336 = vadd.f32 %v7130, %v7267
        %v7337 = vadd.f32 %v7131, %v7270
        %v7338 = vadd.f32 %v7132, %v7272
        %v7339 = vadd.f32 %v7133, %v7275
        %v7340 = vadd.f32 %v7134, %v7277
        %v7341 = vadd.f32 %v7135, %v7280
        %v7342 = vadd.f32 %v7136, %v7282
        %v7343 = vadd.f32 %v7137, %v7285
        %v7344 = vadd.f32 %v7138, %v7287
        %v7345 = vadd.f32 %v7139, %v7290
        %v7346 = vadd.f32 %v7140, %v7292
        %v7347 = vadd.f32 %v7141, %v7295
        %v7348 = vadd.f32 %v7142, %v7297
        %v7349 = vadd.f32 %v7143, %v7300
        %v7350 = vadd.f32 %v7144, %v7302
        %v7351 = vadd.f32 %v7145, %v7305
        %v7352 = vadd.f32 %v7146, %v7307
        %v7353 = vadd.f32 %v7147, %v7310
        %v7354 = vadd.f32 %v7148, %v7312
        %v7355 = vadd.f32 %v7149, %v7315
        %v7356 = vadd.f32 %v7150, %v7317
        %v7357 = vadd.f32 %v7151, %v7320
        %v7358 = vadd.f32 %v7152, %v7322
        %v7359 = vadd.f32 %v7153, %v7325
        %v7360 = vadd.f32 %v7154, %v7327
        %v7361 = vrot.slane %v2334, 1
        %v7362 = vsel %vm5021, %v6408, %v7361
        %v7379 = vsel %vm5095, %v7361, 0
        %v7381 = vsel %vm6431, %v5024, 0
        %v7382 = vsel %vm5402, %v5026, 0
        %v7383 = vsel %vm5409, %v5028, 0
        %v7384 = vsel %vm5416, %v5030, 0
        %v7385 = vsel %vm5423, %v5032, 0
        %v7386 = vsel %vm5430, %v5034, 0
        %v7387 = vsel %vm5437, %v5036, 0
        %v7388 = vsel %vm5444, %v5038, 0
        %v7389 = vsel %vm5451, %v5040, 0
        %v7390 = vsel %vm5458, %v5042, 0
        %v7391 = vsel %vm5465, %v5044, 0
        %v7392 = vsel %vm5472, %v5046, 0
        %v7393 = vsel %vm5479, %v5048, 0
        %v7394 = vsel %vm5486, %v6409, 0
        %v7395 = vsel %vm5493, %v7362, 0
        %v7396 = vsel %vm5500, %v7379, 0
        %s7397 = scalar_lea.vmem %s6, 28
        %v7398 = vld [vmem:[%s7397] sm:$0x3]
        %7415 = vrot.lane.b32.xlu0 %v7381, 116
        %v7416 = vpop.permute.xlu0 %7415
        %7417 = vrot.lane.b32.xlu0 %v7382, 116
        %v7418 = vpop.permute.xlu0 %7417
        %7419 = vrot.lane.b32.xlu0 %v7383, 116
        %v7420 = vpop.permute.xlu0 %7419
        %7421 = vrot.lane.b32.xlu0 %v7384, 116
        %v7422 = vpop.permute.xlu0 %7421
        %7423 = vrot.lane.b32.xlu0 %v7385, 116
        %v7424 = vpop.permute.xlu0 %7423
        %7425 = vrot.lane.b32.xlu0 %v7386, 116
        %v7426 = vpop.permute.xlu0 %7425
        %7427 = vrot.lane.b32.xlu0 %v7387, 116
        %v7428 = vpop.permute.xlu0 %7427
        %7429 = vrot.lane.b32.xlu0 %v7388, 116
        %v7430 = vpop.permute.xlu0 %7429
        %7431 = vrot.lane.b32.xlu0 %v7389, 116
        %v7432 = vpop.permute.xlu0 %7431
        %7433 = vrot.lane.b32.xlu0 %v7390, 116
        %v7434 = vpop.permute.xlu0 %7433
        %7435 = vrot.lane.b32.xlu0 %v7391, 116
        %v7436 = vpop.permute.xlu0 %7435
        %7437 = vrot.lane.b32.xlu0 %v7392, 116
        %v7438 = vpop.permute.xlu0 %7437
        %7439 = vrot.lane.b32.xlu0 %v7393, 116
        %v7440 = vpop.permute.xlu0 %7439
        %7441 = vrot.lane.b32.xlu0 %v7394, 116
        %v7442 = vpop.permute.xlu0 %7441
        %7443 = vrot.lane.b32.xlu0 %v7395, 116
        %v7444 = vpop.permute.xlu0 %7443
        %7445 = vrot.lane.b32.xlu0 %v7396, 116
        %v7446 = vpop.permute.xlu0 %7445
        %v7448 = vsel %vm446, %v7416, 0
        %v7451 = vsel %vm446, %v7418, 0
        %v7454 = vsel %vm446, %v7420, 0
        %v7457 = vsel %vm446, %v7422, 0
        %v7460 = vsel %vm446, %v7424, 0
        %v7463 = vsel %vm446, %v7426, 0
        %v7466 = vsel %vm446, %v7428, 0
        %v7469 = vsel %vm446, %v7430, 0
        %v7472 = vsel %vm446, %v7432, 0
        %v7475 = vsel %vm446, %v7434, 0
        %v7478 = vsel %vm446, %v7436, 0
        %v7481 = vsel %vm446, %v7438, 0
        %v7484 = vsel %vm446, %v7440, 0
        %v7487 = vsel %vm446, %v7442, 0
        %v7490 = vsel %vm446, %v7444, 0
        %v7493 = vsel %vm446, %v7446, 0
        %v7496 = vsel %vm495, %v7398, 0
        %7498 = vmatpush.bf16.msra.mxu0 0
        %7499 = vmatpush.bf16.msra.mxu0 0
        %7500 = vmatpush.bf16.msra.mxu0 0
        %7501 = vmatpush.bf16.msra.mxu0 0
        %7502 = vmatpush.bf16.msra.mxu0 0
        %7503 = vmatpush.bf16.msra.mxu0 0
        %7504 = vmatpush.bf16.msra.mxu0 0
        %7505 = vmatpush.bf16.msra.mxu0 %v7496
        %7506 = vmatmul.bf16.gmra.mxu0 %v7448
        %v7507 = vpop.f32.mrf.mxu0
        %v7508 = vadd.f32 0.0, %v7507
        %v7509 = vpop.f32.mrf.mxu0
        %v7510 = vadd.f32 0.0, %v7509
        %7511 = vmatmul.bf16.gmra.mxu0 %v7451
        %v7512 = vpop.f32.mrf.mxu0
        %v7513 = vadd.f32 0.0, %v7512
        %v7514 = vpop.f32.mrf.mxu0
        %v7515 = vadd.f32 0.0, %v7514
        %7516 = vmatmul.bf16.gmra.mxu0 %v7454
        %v7517 = vpop.f32.mrf.mxu0
        %v7518 = vadd.f32 0.0, %v7517
        %v7519 = vpop.f32.mrf.mxu0
        %v7520 = vadd.f32 0.0, %v7519
        %7521 = vmatmul.bf16.gmra.mxu0 %v7457
        %v7522 = vpop.f32.mrf.mxu0
        %v7523 = vadd.f32 0.0, %v7522
        %v7524 = vpop.f32.mrf.mxu0
        %v7525 = vadd.f32 0.0, %v7524
        %7526 = vmatmul.bf16.gmra.mxu0 %v7460
        %v7527 = vpop.f32.mrf.mxu0
        %v7528 = vadd.f32 0.0, %v7527
        %v7529 = vpop.f32.mrf.mxu0
        %v7530 = vadd.f32 0.0, %v7529
        %7531 = vmatmul.bf16.gmra.mxu0 %v7463
        %v7532 = vpop.f32.mrf.mxu0
        %v7533 = vadd.f32 0.0, %v7532
        %v7534 = vpop.f32.mrf.mxu0
        %v7535 = vadd.f32 0.0, %v7534
        %7536 = vmatmul.bf16.gmra.mxu0 %v7466
        %v7537 = vpop.f32.mrf.mxu0
        %v7538 = vadd.f32 0.0, %v7537
        %v7539 = vpop.f32.mrf.mxu0
        %v7540 = vadd.f32 0.0, %v7539
        %7541 = vmatmul.bf16.gmra.mxu0 %v7469
        %v7542 = vpop.f32.mrf.mxu0
        %v7543 = vadd.f32 0.0, %v7542
        %v7544 = vpop.f32.mrf.mxu0
        %v7545 = vadd.f32 0.0, %v7544
        %7546 = vmatmul.bf16.gmra.mxu0 %v7472
        %v7547 = vpop.f32.mrf.mxu0
        %v7548 = vadd.f32 0.0, %v7547
        %v7549 = vpop.f32.mrf.mxu0
        %v7550 = vadd.f32 0.0, %v7549
        %7551 = vmatmul.bf16.gmra.mxu0 %v7475
        %v7552 = vpop.f32.mrf.mxu0
        %v7553 = vadd.f32 0.0, %v7552
        %v7554 = vpop.f32.mrf.mxu0
        %v7555 = vadd.f32 0.0, %v7554
        %7556 = vmatmul.bf16.gmra.mxu0 %v7478
        %v7557 = vpop.f32.mrf.mxu0
        %v7558 = vadd.f32 0.0, %v7557
        %v7559 = vpop.f32.mrf.mxu0
        %v7560 = vadd.f32 0.0, %v7559
        %7561 = vmatmul.bf16.gmra.mxu0 %v7481
        %v7562 = vpop.f32.mrf.mxu0
        %v7563 = vadd.f32 0.0, %v7562
        %v7564 = vpop.f32.mrf.mxu0
        %v7565 = vadd.f32 0.0, %v7564
        %7566 = vmatmul.bf16.gmra.mxu0 %v7484
        %v7567 = vpop.f32.mrf.mxu0
        %v7568 = vadd.f32 0.0, %v7567
        %v7569 = vpop.f32.mrf.mxu0
        %v7570 = vadd.f32 0.0, %v7569
        %7571 = vmatmul.bf16.gmra.mxu0 %v7487
        %v7572 = vpop.f32.mrf.mxu0
        %v7573 = vadd.f32 0.0, %v7572
        %v7574 = vpop.f32.mrf.mxu0
        %v7575 = vadd.f32 0.0, %v7574
        %7576 = vmatmul.bf16.gmra.mxu0 %v7490
        %v7577 = vpop.f32.mrf.mxu0
        %v7578 = vadd.f32 0.0, %v7577
        %v7579 = vpop.f32.mrf.mxu0
        %v7580 = vadd.f32 0.0, %v7579
        %7581 = vmatmul.bf16.gmra.mxu0 %v7493
        %v7582 = vpop.f32.mrf.mxu0
        %v7583 = vadd.f32 0.0, %v7582
        %v7584 = vpop.f32.mrf.mxu0
        %v7585 = vadd.f32 0.0, %v7584
        %7586 = vdwg.mxu0
        %v7587 = vadd.f32 %v7329, %v7508
        %v7588 = vadd.f32 %v7330, %v7510
        %v7589 = vadd.f32 %v7331, %v7513
        %v7590 = vadd.f32 %v7332, %v7515
        %v7591 = vadd.f32 %v7333, %v7518
        %v7592 = vadd.f32 %v7334, %v7520
        %v7593 = vadd.f32 %v7335, %v7523
        %v7594 = vadd.f32 %v7336, %v7525
        %v7595 = vadd.f32 %v7337, %v7528
        %v7596 = vadd.f32 %v7338, %v7530
        %v7597 = vadd.f32 %v7339, %v7533
        %v7598 = vadd.f32 %v7340, %v7535
        %v7599 = vadd.f32 %v7341, %v7538
        %v7600 = vadd.f32 %v7342, %v7540
        %v7601 = vadd.f32 %v7343, %v7543
        %v7602 = vadd.f32 %v7344, %v7545
        %v7603 = vadd.f32 %v7345, %v7548
        %v7604 = vadd.f32 %v7346, %v7550
        %v7605 = vadd.f32 %v7347, %v7553
        %v7606 = vadd.f32 %v7348, %v7555
        %v7607 = vadd.f32 %v7349, %v7558
        %v7608 = vadd.f32 %v7350, %v7560
        %v7609 = vadd.f32 %v7351, %v7563
        %v7610 = vadd.f32 %v7352, %v7565
        %v7611 = vadd.f32 %v7353, %v7568
        %v7612 = vadd.f32 %v7354, %v7570
        %v7613 = vadd.f32 %v7355, %v7573
        %v7614 = vadd.f32 %v7356, %v7575
        %v7615 = vadd.f32 %v7357, %v7578
        %v7616 = vadd.f32 %v7358, %v7580
        %v7617 = vadd.f32 %v7359, %v7583
        %v7618 = vadd.f32 %v7360, %v7585
        %vm7619 = vcmask 1044480
        %v7620 = vrot.slane %v2939, 3
        %v7621 = vrot.slane %v2940, 3
        %v7622 = vsel %vm7619, %v7620, %v7621
        %v7623 = vrot.slane %v2941, 3
        %v7624 = vsel %vm7619, %v7621, %v7623
        %v7625 = vrot.slane %v2942, 3
        %v7626 = vsel %vm7619, %v7623, %v7625
        %v7627 = vrot.slane %v2943, 3
        %v7628 = vsel %vm7619, %v7625, %v7627
        %v7629 = vrot.slane %v2944, 3
        %v7630 = vsel %vm7619, %v7627, %v7629
        %v7631 = vrot.slane %v2945, 3
        %v7632 = vsel %vm7619, %v7629, %v7631
        %v7633 = vrot.slane %v2946, 3
        %v7634 = vsel %vm7619, %v7631, %v7633
        %v7635 = vrot.slane %v2947, 3
        %v7636 = vsel %vm7619, %v7633, %v7635
        %v7637 = vrot.slane %v2948, 3
        %v7638 = vsel %vm7619, %v7635, %v7637
        %v7639 = vrot.slane %v2949, 3
        %v7640 = vsel %vm7619, %v7637, %v7639
        %v7641 = vrot.slane %v2950, 3
        %v7642 = vsel %vm7619, %v7639, %v7641
        %v7643 = vrot.slane %v2951, 3
        %v7644 = vsel %vm7619, %v7641, %v7643
        %v7645 = vrot.slane %v2952, 3
        %v7646 = vsel %vm7619, %v7643, %v7645
        %v7647 = vrot.slane %v2953, 3
        %v7648 = vsel %vm7619, %v7645, %v7647
        %v7649 = vrot.slane %v2954, 3
        %v7650 = vsel %vm7619, %v7647, %v7649
        %v7667 = vsel %vm3853, %v7649, 0
        %v7669 = vsel %vm6640, %v7622, 0
        %v7670 = vsel %vm5705, %v7624, 0
        %v7671 = vsel %vm4153, %v7626, 0
        %v7672 = vsel %vm4160, %v7628, 0
        %v7673 = vsel %vm4167, %v7630, 0
        %v7674 = vsel %vm4174, %v7632, 0
        %v7675 = vsel %vm4181, %v7634, 0
        %v7676 = vsel %vm4188, %v7636, 0
        %v7677 = vsel %vm4195, %v7638, 0
        %v7678 = vsel %vm4202, %v7640, 0
        %v7679 = vsel %vm4209, %v7642, 0
        %v7680 = vsel %vm4216, %v7644, 0
        %v7681 = vsel %vm4223, %v7646, 0
        %v7682 = vsel %vm4230, %v7648, 0
        %v7683 = vsel %vm4237, %v7650, 0
        %v7684 = vsel %vm4244, %v7667, 0
        %s7685 = scalar_lea.vmem %s6, 30
        %v7686 = vld [vmem:[%s7685] sm:$0x3]
        %7703 = vrot.lane.b32.xlu0 %v7669, 116
        %v7704 = vpop.permute.xlu0 %7703
        %7705 = vrot.lane.b32.xlu0 %v7670, 116
        %v7706 = vpop.permute.xlu0 %7705
        %7707 = vrot.lane.b32.xlu0 %v7671, 116
        %v7708 = vpop.permute.xlu0 %7707
        %7709 = vrot.lane.b32.xlu0 %v7672, 116
        %v7710 = vpop.permute.xlu0 %7709
        %7711 = vrot.lane.b32.xlu0 %v7673, 116
        %v7712 = vpop.permute.xlu0 %7711
        %7713 = vrot.lane.b32.xlu0 %v7674, 116
        %v7714 = vpop.permute.xlu0 %7713
        %7715 = vrot.lane.b32.xlu0 %v7675, 116
        %v7716 = vpop.permute.xlu0 %7715
        %7717 = vrot.lane.b32.xlu0 %v7676, 116
        %v7718 = vpop.permute.xlu0 %7717
        %7719 = vrot.lane.b32.xlu0 %v7677, 116
        %v7720 = vpop.permute.xlu0 %7719
        %7721 = vrot.lane.b32.xlu0 %v7678, 116
        %v7722 = vpop.permute.xlu0 %7721
        %7723 = vrot.lane.b32.xlu0 %v7679, 116
        %v7724 = vpop.permute.xlu0 %7723
        %7725 = vrot.lane.b32.xlu0 %v7680, 116
        %v7726 = vpop.permute.xlu0 %7725
        %7727 = vrot.lane.b32.xlu0 %v7681, 116
        %v7728 = vpop.permute.xlu0 %7727
        %7729 = vrot.lane.b32.xlu0 %v7682, 116
        %v7730 = vpop.permute.xlu0 %7729
        %7731 = vrot.lane.b32.xlu0 %v7683, 116
        %v7732 = vpop.permute.xlu0 %7731
        %7733 = vrot.lane.b32.xlu0 %v7684, 116
        %v7734 = vpop.permute.xlu0 %7733
        %v7736 = vsel %vm446, %v7704, 0
        %v7739 = vsel %vm446, %v7706, 0
        %v7742 = vsel %vm446, %v7708, 0
        %v7745 = vsel %vm446, %v7710, 0
        %v7748 = vsel %vm446, %v7712, 0
        %v7751 = vsel %vm446, %v7714, 0
        %v7754 = vsel %vm446, %v7716, 0
        %v7757 = vsel %vm446, %v7718, 0
        %v7760 = vsel %vm446, %v7720, 0
        %v7763 = vsel %vm446, %v7722, 0
        %v7766 = vsel %vm446, %v7724, 0
        %v7769 = vsel %vm446, %v7726, 0
        %v7772 = vsel %vm446, %v7728, 0
        %v7775 = vsel %vm446, %v7730, 0
        %v7778 = vsel %vm446, %v7732, 0
        %v7781 = vsel %vm446, %v7734, 0
        %v7784 = vsel %vm495, %v7686, 0
        %7786 = vmatpush.bf16.msra.mxu0 0
        %7787 = vmatpush.bf16.msra.mxu0 0
        %7788 = vmatpush.bf16.msra.mxu0 0
        %7789 = vmatpush.bf16.msra.mxu0 0
        %7790 = vmatpush.bf16.msra.mxu0 0
        %7791 = vmatpush.bf16.msra.mxu0 0
        %7792 = vmatpush.bf16.msra.mxu0 0
        %7793 = vmatpush.bf16.msra.mxu0 %v7784
        %7794 = vmatmul.bf16.gmra.mxu0 %v7736
        %v7795 = vpop.f32.mrf.mxu0
        %v7796 = vadd.f32 0.0, %v7795
        %v7797 = vpop.f32.mrf.mxu0
        %v7798 = vadd.f32 0.0, %v7797
        %7799 = vmatmul.bf16.gmra.mxu0 %v7739
        %v7800 = vpop.f32.mrf.mxu0
        %v7801 = vadd.f32 0.0, %v7800
        %v7802 = vpop.f32.mrf.mxu0
        %v7803 = vadd.f32 0.0, %v7802
        %7804 = vmatmul.bf16.gmra.mxu0 %v7742
        %v7805 = vpop.f32.mrf.mxu0
        %v7806 = vadd.f32 0.0, %v7805
        %v7807 = vpop.f32.mrf.mxu0
        %v7808 = vadd.f32 0.0, %v7807
        %7809 = vmatmul.bf16.gmra.mxu0 %v7745
        %v7810 = vpop.f32.mrf.mxu0
        %v7811 = vadd.f32 0.0, %v7810
        %v7812 = vpop.f32.mrf.mxu0
        %v7813 = vadd.f32 0.0, %v7812
        %7814 = vmatmul.bf16.gmra.mxu0 %v7748
        %v7815 = vpop.f32.mrf.mxu0
        %v7816 = vadd.f32 0.0, %v7815
        %v7817 = vpop.f32.mrf.mxu0
        %v7818 = vadd.f32 0.0, %v7817
        %7819 = vmatmul.bf16.gmra.mxu0 %v7751
        %v7820 = vpop.f32.mrf.mxu0
        %v7821 = vadd.f32 0.0, %v7820
        %v7822 = vpop.f32.mrf.mxu0
        %v7823 = vadd.f32 0.0, %v7822
        %7824 = vmatmul.bf16.gmra.mxu0 %v7754
        %v7825 = vpop.f32.mrf.mxu0
        %v7826 = vadd.f32 0.0, %v7825
        %v7827 = vpop.f32.mrf.mxu0
        %v7828 = vadd.f32 0.0, %v7827
        %7829 = vmatmul.bf16.gmra.mxu0 %v7757
        %v7830 = vpop.f32.mrf.mxu0
        %v7831 = vadd.f32 0.0, %v7830
        %v7832 = vpop.f32.mrf.mxu0
        %v7833 = vadd.f32 0.0, %v7832
        %7834 = vmatmul.bf16.gmra.mxu0 %v7760
        %v7835 = vpop.f32.mrf.mxu0
        %v7836 = vadd.f32 0.0, %v7835
        %v7837 = vpop.f32.mrf.mxu0
        %v7838 = vadd.f32 0.0, %v7837
        %7839 = vmatmul.bf16.gmra.mxu0 %v7763
        %v7840 = vpop.f32.mrf.mxu0
        %v7841 = vadd.f32 0.0, %v7840
        %v7842 = vpop.f32.mrf.mxu0
        %v7843 = vadd.f32 0.0, %v7842
        %7844 = vmatmul.bf16.gmra.mxu0 %v7766
        %v7845 = vpop.f32.mrf.mxu0
        %v7846 = vadd.f32 0.0, %v7845
        %v7847 = vpop.f32.mrf.mxu0
        %v7848 = vadd.f32 0.0, %v7847
        %7849 = vmatmul.bf16.gmra.mxu0 %v7769
        %v7850 = vpop.f32.mrf.mxu0
        %v7851 = vadd.f32 0.0, %v7850
        %v7852 = vpop.f32.mrf.mxu0
        %v7853 = vadd.f32 0.0, %v7852
        %7854 = vmatmul.bf16.gmra.mxu0 %v7772
        %v7855 = vpop.f32.mrf.mxu0
        %v7856 = vadd.f32 0.0, %v7855
        %v7857 = vpop.f32.mrf.mxu0
        %v7858 = vadd.f32 0.0, %v7857
        %7859 = vmatmul.bf16.gmra.mxu0 %v7775
        %v7860 = vpop.f32.mrf.mxu0
        %v7861 = vadd.f32 0.0, %v7860
        %v7862 = vpop.f32.mrf.mxu0
        %v7863 = vadd.f32 0.0, %v7862
        %7864 = vmatmul.bf16.gmra.mxu0 %v7778
        %v7865 = vpop.f32.mrf.mxu0
        %v7866 = vadd.f32 0.0, %v7865
        %v7867 = vpop.f32.mrf.mxu0
        %v7868 = vadd.f32 0.0, %v7867
        %7869 = vmatmul.bf16.gmra.mxu0 %v7781
        %v7870 = vpop.f32.mrf.mxu0
        %v7871 = vadd.f32 0.0, %v7870
        %v7872 = vpop.f32.mrf.mxu0
        %v7873 = vadd.f32 0.0, %v7872
        %7874 = vdwg.mxu0
        %v7875 = vadd.f32 %v7587, %v7796
        %v7876 = vadd.f32 %v7588, %v7798
        %v7877 = vadd.f32 %v7589, %v7801
        %v7878 = vadd.f32 %v7590, %v7803
        %v7879 = vadd.f32 %v7591, %v7806
        %v7880 = vadd.f32 %v7592, %v7808
        %v7881 = vadd.f32 %v7593, %v7811
        %v7882 = vadd.f32 %v7594, %v7813
        %v7883 = vadd.f32 %v7595, %v7816
        %v7884 = vadd.f32 %v7596, %v7818
        %v7885 = vadd.f32 %v7597, %v7821
        %v7886 = vadd.f32 %v7598, %v7823
        %v7887 = vadd.f32 %v7599, %v7826
        %v7888 = vadd.f32 %v7600, %v7828
        %v7889 = vadd.f32 %v7601, %v7831
        %v7890 = vadd.f32 %v7602, %v7833
        %v7891 = vadd.f32 %v7603, %v7836
        %v7892 = vadd.f32 %v7604, %v7838
        %v7893 = vadd.f32 %v7605, %v7841
        %v7894 = vadd.f32 %v7606, %v7843
        %v7895 = vadd.f32 %v7607, %v7846
        %v7896 = vadd.f32 %v7608, %v7848
        %v7897 = vadd.f32 %v7609, %v7851
        %v7898 = vadd.f32 %v7610, %v7853
        %v7899 = vadd.f32 %v7611, %v7856
        %v7900 = vadd.f32 %v7612, %v7858
        %v7901 = vadd.f32 %v7613, %v7861
        %v7902 = vadd.f32 %v7614, %v7863
        %v7903 = vadd.f32 %v7615, %v7866
        %v7904 = vadd.f32 %v7616, %v7868
        %v7905 = vadd.f32 %v7617, %v7871
        %v7906 = vadd.f32 %v7618, %v7873
        %s7907 = scalar_lea.vmem %s6, 32
        %v7908 = vld [vmem:[%s7907] sm:$0x3]
        %7909 = vrot.lane.b32.xlu0 %v3116, 116
        %v7910 = vpop.permute.xlu0 %7909
        %7911 = vrot.lane.b32.xlu0 %v3117, 116
        %v7912 = vpop.permute.xlu0 %7911
        %7913 = vrot.lane.b32.xlu0 %v3118, 116
        %v7914 = vpop.permute.xlu0 %7913
        %7915 = vrot.lane.b32.xlu0 %v3119, 116
        %v7916 = vpop.permute.xlu0 %7915
        %7917 = vrot.lane.b32.xlu0 %v3120, 116
        %v7918 = vpop.permute.xlu0 %7917
        %7919 = vrot.lane.b32.xlu0 %v3121, 116
        %v7920 = vpop.permute.xlu0 %7919
        %7921 = vrot.lane.b32.xlu0 %v3122, 116
        %v7922 = vpop.permute.xlu0 %7921
        %7923 = vrot.lane.b32.xlu0 %v3123, 116
        %v7924 = vpop.permute.xlu0 %7923
        %7925 = vrot.lane.b32.xlu0 %v3124, 116
        %v7926 = vpop.permute.xlu0 %7925
        %7927 = vrot.lane.b32.xlu0 %v3125, 116
        %v7928 = vpop.permute.xlu0 %7927
        %7929 = vrot.lane.b32.xlu0 %v3126, 116
        %v7930 = vpop.permute.xlu0 %7929
        %7931 = vrot.lane.b32.xlu0 %v3127, 116
        %v7932 = vpop.permute.xlu0 %7931
        %7933 = vrot.lane.b32.xlu0 %v3128, 116
        %v7934 = vpop.permute.xlu0 %7933
        %7935 = vrot.lane.b32.xlu0 %v3129, 116
        %v7936 = vpop.permute.xlu0 %7935
        %7937 = vrot.lane.b32.xlu0 %v3130, 116
        %v7938 = vpop.permute.xlu0 %7937
        %7939 = vrot.lane.b32.xlu0 %v3131, 116
        %v7940 = vpop.permute.xlu0 %7939
        %v7942 = vsel %vm446, %v7910, 0
        %v7945 = vsel %vm446, %v7912, 0
        %v7948 = vsel %vm446, %v7914, 0
        %v7951 = vsel %vm446, %v7916, 0
        %v7954 = vsel %vm446, %v7918, 0
        %v7957 = vsel %vm446, %v7920, 0
        %v7960 = vsel %vm446, %v7922, 0
        %v7963 = vsel %vm446, %v7924, 0
        %v7966 = vsel %vm446, %v7926, 0
        %v7969 = vsel %vm446, %v7928, 0
        %v7972 = vsel %vm446, %v7930, 0
        %v7975 = vsel %vm446, %v7932, 0
        %v7978 = vsel %vm446, %v7934, 0
        %v7981 = vsel %vm446, %v7936, 0
        %v7984 = vsel %vm446, %v7938, 0
        %v7987 = vsel %vm446, %v7940, 0
        %v7990 = vsel %vm495, %v7908, 0
        %7992 = vmatpush.bf16.msra.mxu0 0
        %7993 = vmatpush.bf16.msra.mxu0 0
        %7994 = vmatpush.bf16.msra.mxu0 0
        %7995 = vmatpush.bf16.msra.mxu0 0
        %7996 = vmatpush.bf16.msra.mxu0 0
        %7997 = vmatpush.bf16.msra.mxu0 0
        %7998 = vmatpush.bf16.msra.mxu0 0
        %7999 = vmatpush.bf16.msra.mxu0 %v7990
        %8000 = vmatmul.bf16.gmra.mxu0 %v7942
        %v8001 = vpop.f32.mrf.mxu0
        %v8002 = vadd.f32 0.0, %v8001
        %v8003 = vpop.f32.mrf.mxu0
        %v8004 = vadd.f32 0.0, %v8003
        %8005 = vmatmul.bf16.gmra.mxu0 %v7945
        %v8006 = vpop.f32.mrf.mxu0
        %v8007 = vadd.f32 0.0, %v8006
        %v8008 = vpop.f32.mrf.mxu0
        %v8009 = vadd.f32 0.0, %v8008
        %8010 = vmatmul.bf16.gmra.mxu0 %v7948
        %v8011 = vpop.f32.mrf.mxu0
        %v8012 = vadd.f32 0.0, %v8011
        %v8013 = vpop.f32.mrf.mxu0
        %v8014 = vadd.f32 0.0, %v8013
        %8015 = vmatmul.bf16.gmra.mxu0 %v7951
        %v8016 = vpop.f32.mrf.mxu0
        %v8017 = vadd.f32 0.0, %v8016
        %v8018 = vpop.f32.mrf.mxu0
        %v8019 = vadd.f32 0.0, %v8018
        %8020 = vmatmul.bf16.gmra.mxu0 %v7954
        %v8021 = vpop.f32.mrf.mxu0
        %v8022 = vadd.f32 0.0, %v8021
        %v8023 = vpop.f32.mrf.mxu0
        %v8024 = vadd.f32 0.0, %v8023
        %8025 = vmatmul.bf16.gmra.mxu0 %v7957
        %v8026 = vpop.f32.mrf.mxu0
        %v8027 = vadd.f32 0.0, %v8026
        %v8028 = vpop.f32.mrf.mxu0
        %v8029 = vadd.f32 0.0, %v8028
        %8030 = vmatmul.bf16.gmra.mxu0 %v7960
        %v8031 = vpop.f32.mrf.mxu0
        %v8032 = vadd.f32 0.0, %v8031
        %v8033 = vpop.f32.mrf.mxu0
        %v8034 = vadd.f32 0.0, %v8033
        %8035 = vmatmul.bf16.gmra.mxu0 %v7963
        %v8036 = vpop.f32.mrf.mxu0
        %v8037 = vadd.f32 0.0, %v8036
        %v8038 = vpop.f32.mrf.mxu0
        %v8039 = vadd.f32 0.0, %v8038
        %8040 = vmatmul.bf16.gmra.mxu0 %v7966
        %v8041 = vpop.f32.mrf.mxu0
        %v8042 = vadd.f32 0.0, %v8041
        %v8043 = vpop.f32.mrf.mxu0
        %v8044 = vadd.f32 0.0, %v8043
        %8045 = vmatmul.bf16.gmra.mxu0 %v7969
        %v8046 = vpop.f32.mrf.mxu0
        %v8047 = vadd.f32 0.0, %v8046
        %v8048 = vpop.f32.mrf.mxu0
        %v8049 = vadd.f32 0.0, %v8048
        %8050 = vmatmul.bf16.gmra.mxu0 %v7972
        %v8051 = vpop.f32.mrf.mxu0
        %v8052 = vadd.f32 0.0, %v8051
        %v8053 = vpop.f32.mrf.mxu0
        %v8054 = vadd.f32 0.0, %v8053
        %8055 = vmatmul.bf16.gmra.mxu0 %v7975
        %v8056 = vpop.f32.mrf.mxu0
        %v8057 = vadd.f32 0.0, %v8056
        %v8058 = vpop.f32.mrf.mxu0
        %v8059 = vadd.f32 0.0, %v8058
        %8060 = vmatmul.bf16.gmra.mxu0 %v7978
        %v8061 = vpop.f32.mrf.mxu0
        %v8062 = vadd.f32 0.0, %v8061
        %v8063 = vpop.f32.mrf.mxu0
        %v8064 = vadd.f32 0.0, %v8063
        %8065 = vmatmul.bf16.gmra.mxu0 %v7981
        %v8066 = vpop.f32.mrf.mxu0
        %v8067 = vadd.f32 0.0, %v8066
        %v8068 = vpop.f32.mrf.mxu0
        %v8069 = vadd.f32 0.0, %v8068
        %8070 = vmatmul.bf16.gmra.mxu0 %v7984
        %v8071 = vpop.f32.mrf.mxu0
        %v8072 = vadd.f32 0.0, %v8071
        %v8073 = vpop.f32.mrf.mxu0
        %v8074 = vadd.f32 0.0, %v8073
        %8075 = vmatmul.bf16.gmra.mxu0 %v7987
        %v8076 = vpop.f32.mrf.mxu0
        %v8077 = vadd.f32 0.0, %v8076
        %v8078 = vpop.f32.mrf.mxu0
        %v8079 = vadd.f32 0.0, %v8078
        %8080 = vdwg.mxu0
        %v8081 = vadd.f32 %v7875, %v8002
        %v8082 = vadd.f32 %v7876, %v8004
        %v8083 = vadd.f32 %v7877, %v8007
        %v8084 = vadd.f32 %v7878, %v8009
        %v8085 = vadd.f32 %v7879, %v8012
        %v8086 = vadd.f32 %v7880, %v8014
        %v8087 = vadd.f32 %v7881, %v8017
        %v8088 = vadd.f32 %v7882, %v8019
        %v8089 = vadd.f32 %v7883, %v8022
        %v8090 = vadd.f32 %v7884, %v8024
        %v8091 = vadd.f32 %v7885, %v8027
        %v8092 = vadd.f32 %v7886, %v8029
        %v8093 = vadd.f32 %v7887, %v8032
        %v8094 = vadd.f32 %v7888, %v8034
        %v8095 = vadd.f32 %v7889, %v8037
        %v8096 = vadd.f32 %v7890, %v8039
        %v8097 = vadd.f32 %v7891, %v8042
        %v8098 = vadd.f32 %v7892, %v8044
        %v8099 = vadd.f32 %v7893, %v8047
        %v8100 = vadd.f32 %v7894, %v8049
        %v8101 = vadd.f32 %v7895, %v8052
        %v8102 = vadd.f32 %v7896, %v8054
        %v8103 = vadd.f32 %v7897, %v8057
        %v8104 = vadd.f32 %v7898, %v8059
        %v8105 = vadd.f32 %v7899, %v8062
        %v8106 = vadd.f32 %v7900, %v8064
        %v8107 = vadd.f32 %v7901, %v8067
        %v8108 = vadd.f32 %v7902, %v8069
        %v8109 = vadd.f32 %v7903, %v8072
        %v8110 = vadd.f32 %v7904, %v8074
        %v8111 = vadd.f32 %v7905, %v8077
        %v8112 = vadd.f32 %v7906, %v8079
        %s8113 = scalar_lea.vmem %s6, 34
        %v8114 = vld [vmem:[%s8113] sm:$0x3]
        %8115 = vrot.lane.b32.xlu0 0, 116
        %v8116 = vpop.permute.xlu0 %8115
        %v8118 = vsel %vm446, %v8116, 0
        %v8121 = vsel %vm495, %v8114, 0
        %8123 = vmatpush.bf16.msra.mxu0 0
        %8124 = vmatpush.bf16.msra.mxu0 0
        %8125 = vmatpush.bf16.msra.mxu0 0
        %8126 = vmatpush.bf16.msra.mxu0 0
        %8127 = vmatpush.bf16.msra.mxu0 0
        %8128 = vmatpush.bf16.msra.mxu0 0
        %8129 = vmatpush.bf16.msra.mxu0 0
        %8130 = vmatpush.bf16.msra.mxu0 %v8121
        %8131 = vmatmul.bf16.gmra.mxu0 %v4621
        %v8132 = vpop.f32.mrf.mxu0
        %v8133 = vadd.f32 0.0, %v8132
        %v8134 = vpop.f32.mrf.mxu0
        %v8135 = vadd.f32 0.0, %v8134
        %8136 = vmatmul.bf16.gmra.mxu0 %v4624
        %v8137 = vpop.f32.mrf.mxu0
        %v8138 = vadd.f32 0.0, %v8137
        %v8139 = vpop.f32.mrf.mxu0
        %v8140 = vadd.f32 0.0, %v8139
        %8141 = vmatmul.bf16.gmra.mxu0 %v4627
        %v8142 = vpop.f32.mrf.mxu0
        %v8143 = vadd.f32 0.0, %v8142
        %v8144 = vpop.f32.mrf.mxu0
        %v8145 = vadd.f32 0.0, %v8144
        %8146 = vmatmul.bf16.gmra.mxu0 %v4630
        %v8147 = vpop.f32.mrf.mxu0
        %v8148 = vadd.f32 0.0, %v8147
        %v8149 = vpop.f32.mrf.mxu0
        %v8150 = vadd.f32 0.0, %v8149
        %8151 = vmatmul.bf16.gmra.mxu0 %v4633
        %v8152 = vpop.f32.mrf.mxu0
        %v8153 = vadd.f32 0.0, %v8152
        %v8154 = vpop.f32.mrf.mxu0
        %v8155 = vadd.f32 0.0, %v8154
        %8156 = vmatmul.bf16.gmra.mxu0 %v4636
        %v8157 = vpop.f32.mrf.mxu0
        %v8158 = vadd.f32 0.0, %v8157
        %v8159 = vpop.f32.mrf.mxu0
        %v8160 = vadd.f32 0.0, %v8159
        %8161 = vmatmul.bf16.gmra.mxu0 %v4639
        %v8162 = vpop.f32.mrf.mxu0
        %v8163 = vadd.f32 0.0, %v8162
        %v8164 = vpop.f32.mrf.mxu0
        %v8165 = vadd.f32 0.0, %v8164
        %8166 = vmatmul.bf16.gmra.mxu0 %v4642
        %v8167 = vpop.f32.mrf.mxu0
        %v8168 = vadd.f32 0.0, %v8167
        %v8169 = vpop.f32.mrf.mxu0
        %v8170 = vadd.f32 0.0, %v8169
        %8171 = vmatmul.bf16.gmra.mxu0 %v4645
        %v8172 = vpop.f32.mrf.mxu0
        %v8173 = vadd.f32 0.0, %v8172
        %v8174 = vpop.f32.mrf.mxu0
        %v8175 = vadd.f32 0.0, %v8174
        %8176 = vmatmul.bf16.gmra.mxu0 %v4648
        %v8177 = vpop.f32.mrf.mxu0
        %v8178 = vadd.f32 0.0, %v8177
        %v8179 = vpop.f32.mrf.mxu0
        %v8180 = vadd.f32 0.0, %v8179
        %8181 = vmatmul.bf16.gmra.mxu0 %v4651
        %v8182 = vpop.f32.mrf.mxu0
        %v8183 = vadd.f32 0.0, %v8182
        %v8184 = vpop.f32.mrf.mxu0
        %v8185 = vadd.f32 0.0, %v8184
        %8186 = vmatmul.bf16.gmra.mxu0 %v4654
        %v8187 = vpop.f32.mrf.mxu0
        %v8188 = vadd.f32 0.0, %v8187
        %v8189 = vpop.f32.mrf.mxu0
        %v8190 = vadd.f32 0.0, %v8189
        %8191 = vmatmul.bf16.gmra.mxu0 %v4657
        %v8192 = vpop.f32.mrf.mxu0
        %v8193 = vadd.f32 0.0, %v8192
        %v8194 = vpop.f32.mrf.mxu0
        %v8195 = vadd.f32 0.0, %v8194
        %8196 = vmatmul.bf16.gmra.mxu0 %v6086
        %v8197 = vpop.f32.mrf.mxu0
        %v8198 = vadd.f32 0.0, %v8197
        %v8199 = vpop.f32.mrf.mxu0
        %v8200 = vadd.f32 0.0, %v8199
        %8201 = vmatmul.bf16.gmra.mxu0 %v7029
        %v8202 = vpop.f32.mrf.mxu0
        %v8203 = vadd.f32 0.0, %v8202
        %v8204 = vpop.f32.mrf.mxu0
        %v8205 = vadd.f32 0.0, %v8204
        %8206 = vmatmul.bf16.gmra.mxu0 %v8118
        %v8207 = vpop.f32.mrf.mxu0
        %v8208 = vadd.f32 0.0, %v8207
        %v8209 = vpop.f32.mrf.mxu0
        %v8210 = vadd.f32 0.0, %v8209
        %8211 = vdwg.mxu0
        %v8212 = vadd.f32 %v8081, %v8133
        %v8213 = vadd.f32 %v8082, %v8135
        %v8214 = vadd.f32 %v8083, %v8138
        %v8215 = vadd.f32 %v8084, %v8140
        %v8216 = vadd.f32 %v8085, %v8143
        %v8217 = vadd.f32 %v8086, %v8145
        %v8218 = vadd.f32 %v8087, %v8148
        %v8219 = vadd.f32 %v8088, %v8150
        %v8220 = vadd.f32 %v8089, %v8153
        %v8221 = vadd.f32 %v8090, %v8155
        %v8222 = vadd.f32 %v8091, %v8158
        %v8223 = vadd.f32 %v8092, %v8160
        %v8224 = vadd.f32 %v8093, %v8163
        %v8225 = vadd.f32 %v8094, %v8165
        %v8226 = vadd.f32 %v8095, %v8168
        %v8227 = vadd.f32 %v8096, %v8170
        %v8228 = vadd.f32 %v8097, %v8173
        %v8229 = vadd.f32 %v8098, %v8175
        %v8230 = vadd.f32 %v8099, %v8178
        %v8231 = vadd.f32 %v8100, %v8180
        %v8232 = vadd.f32 %v8101, %v8183
        %v8233 = vadd.f32 %v8102, %v8185
        %v8234 = vadd.f32 %v8103, %v8188
        %v8235 = vadd.f32 %v8104, %v8190
        %v8236 = vadd.f32 %v8105, %v8193
        %v8237 = vadd.f32 %v8106, %v8195
        %v8238 = vadd.f32 %v8107, %v8198
        %v8239 = vadd.f32 %v8108, %v8200
        %v8240 = vadd.f32 %v8109, %v8203
        %v8241 = vadd.f32 %v8110, %v8205
        %v8242 = vadd.f32 %v8111, %v8208
        %v8243 = vadd.f32 %v8112, %v8210
        %s8244 = scalar_lea.vmem %s6, 36
        %v8245 = vld [vmem:[%s8244] sm:$0x3]
        %8246 = vrot.lane.b32.xlu0 %v3486, 116
        %v8247 = vpop.permute.xlu0 %8246
        %8248 = vrot.lane.b32.xlu0 %v3487, 116
        %v8249 = vpop.permute.xlu0 %8248
        %8250 = vrot.lane.b32.xlu0 %v3488, 116
        %v8251 = vpop.permute.xlu0 %8250
        %8252 = vrot.lane.b32.xlu0 %v3489, 116
        %v8253 = vpop.permute.xlu0 %8252
        %8254 = vrot.lane.b32.xlu0 %v3490, 116
        %v8255 = vpop.permute.xlu0 %8254
        %8256 = vrot.lane.b32.xlu0 %v3491, 116
        %v8257 = vpop.permute.xlu0 %8256
        %8258 = vrot.lane.b32.xlu0 %v3492, 116
        %v8259 = vpop.permute.xlu0 %8258
        %8260 = vrot.lane.b32.xlu0 %v3493, 116
        %v8261 = vpop.permute.xlu0 %8260
        %8262 = vrot.lane.b32.xlu0 %v3494, 116
        %v8263 = vpop.permute.xlu0 %8262
        %8264 = vrot.lane.b32.xlu0 %v3495, 116
        %v8265 = vpop.permute.xlu0 %8264
        %8266 = vrot.lane.b32.xlu0 %v3496, 116
        %v8267 = vpop.permute.xlu0 %8266
        %8268 = vrot.lane.b32.xlu0 %v3497, 116
        %v8269 = vpop.permute.xlu0 %8268
        %8270 = vrot.lane.b32.xlu0 %v3498, 116
        %v8271 = vpop.permute.xlu0 %8270
        %8272 = vrot.lane.b32.xlu0 %v3499, 116
        %v8273 = vpop.permute.xlu0 %8272
        %8274 = vrot.lane.b32.xlu0 %v3500, 116
        %v8275 = vpop.permute.xlu0 %8274
        %v8277 = vsel %vm446, %v8247, 0
        %v8280 = vsel %vm446, %v8249, 0
        %v8283 = vsel %vm446, %v8251, 0
        %v8286 = vsel %vm446, %v8253, 0
        %v8289 = vsel %vm446, %v8255, 0
        %v8292 = vsel %vm446, %v8257, 0
        %v8295 = vsel %vm446, %v8259, 0
        %v8298 = vsel %vm446, %v8261, 0
        %v8301 = vsel %vm446, %v8263, 0
        %v8304 = vsel %vm446, %v8265, 0
        %v8307 = vsel %vm446, %v8267, 0
        %v8310 = vsel %vm446, %v8269, 0
        %v8313 = vsel %vm446, %v8271, 0
        %v8316 = vsel %vm446, %v8273, 0
        %v8319 = vsel %vm446, %v8275, 0
        %v8322 = vsel %vm495, %v8245, 0
        %8324 = vmatpush.bf16.msra.mxu0 0
        %8325 = vmatpush.bf16.msra.mxu0 0
        %8326 = vmatpush.bf16.msra.mxu0 0
        %8327 = vmatpush.bf16.msra.mxu0 0
        %8328 = vmatpush.bf16.msra.mxu0 0
        %8329 = vmatpush.bf16.msra.mxu0 0
        %8330 = vmatpush.bf16.msra.mxu0 0
        %8331 = vmatpush.bf16.msra.mxu0 %v8322
        %8332 = vmatmul.bf16.gmra.mxu0 %v8277
        %v8333 = vpop.f32.mrf.mxu0
        %v8334 = vadd.f32 0.0, %v8333
        %v8335 = vpop.f32.mrf.mxu0
        %v8336 = vadd.f32 0.0, %v8335
        %8337 = vmatmul.bf16.gmra.mxu0 %v8280
        %v8338 = vpop.f32.mrf.mxu0
        %v8339 = vadd.f32 0.0, %v8338
        %v8340 = vpop.f32.mrf.mxu0
        %v8341 = vadd.f32 0.0, %v8340
        %8342 = vmatmul.bf16.gmra.mxu0 %v8283
        %v8343 = vpop.f32.mrf.mxu0
        %v8344 = vadd.f32 0.0, %v8343
        %v8345 = vpop.f32.mrf.mxu0
        %v8346 = vadd.f32 0.0, %v8345
        %8347 = vmatmul.bf16.gmra.mxu0 %v8286
        %v8348 = vpop.f32.mrf.mxu0
        %v8349 = vadd.f32 0.0, %v8348
        %v8350 = vpop.f32.mrf.mxu0
        %v8351 = vadd.f32 0.0, %v8350
        %8352 = vmatmul.bf16.gmra.mxu0 %v8289
        %v8353 = vpop.f32.mrf.mxu0
        %v8354 = vadd.f32 0.0, %v8353
        %v8355 = vpop.f32.mrf.mxu0
        %v8356 = vadd.f32 0.0, %v8355
        %8357 = vmatmul.bf16.gmra.mxu0 %v8292
        %v8358 = vpop.f32.mrf.mxu0
        %v8359 = vadd.f32 0.0, %v8358
        %v8360 = vpop.f32.mrf.mxu0
        %v8361 = vadd.f32 0.0, %v8360
        %8362 = vmatmul.bf16.gmra.mxu0 %v8295
        %v8363 = vpop.f32.mrf.mxu0
        %v8364 = vadd.f32 0.0, %v8363
        %v8365 = vpop.f32.mrf.mxu0
        %v8366 = vadd.f32 0.0, %v8365
        %8367 = vmatmul.bf16.gmra.mxu0 %v8298
        %v8368 = vpop.f32.mrf.mxu0
        %v8369 = vadd.f32 0.0, %v8368
        %v8370 = vpop.f32.mrf.mxu0
        %v8371 = vadd.f32 0.0, %v8370
        %8372 = vmatmul.bf16.gmra.mxu0 %v8301
        %v8373 = vpop.f32.mrf.mxu0
        %v8374 = vadd.f32 0.0, %v8373
        %v8375 = vpop.f32.mrf.mxu0
        %v8376 = vadd.f32 0.0, %v8375
        %8377 = vmatmul.bf16.gmra.mxu0 %v8304
        %v8378 = vpop.f32.mrf.mxu0
        %v8379 = vadd.f32 0.0, %v8378
        %v8380 = vpop.f32.mrf.mxu0
        %v8381 = vadd.f32 0.0, %v8380
        %8382 = vmatmul.bf16.gmra.mxu0 %v8307
        %v8383 = vpop.f32.mrf.mxu0
        %v8384 = vadd.f32 0.0, %v8383
        %v8385 = vpop.f32.mrf.mxu0
        %v8386 = vadd.f32 0.0, %v8385
        %8387 = vmatmul.bf16.gmra.mxu0 %v8310
        %v8388 = vpop.f32.mrf.mxu0
        %v8389 = vadd.f32 0.0, %v8388
        %v8390 = vpop.f32.mrf.mxu0
        %v8391 = vadd.f32 0.0, %v8390
        %8392 = vmatmul.bf16.gmra.mxu0 %v8313
        %v8393 = vpop.f32.mrf.mxu0
        %v8394 = vadd.f32 0.0, %v8393
        %v8395 = vpop.f32.mrf.mxu0
        %v8396 = vadd.f32 0.0, %v8395
        %8397 = vmatmul.bf16.gmra.mxu0 %v8316
        %v8398 = vpop.f32.mrf.mxu0
        %v8399 = vadd.f32 0.0, %v8398
        %v8400 = vpop.f32.mrf.mxu0
        %v8401 = vadd.f32 0.0, %v8400
        %8402 = vmatmul.bf16.gmra.mxu0 %v8319
        %v8403 = vpop.f32.mrf.mxu0
        %v8404 = vadd.f32 0.0, %v8403
        %v8405 = vpop.f32.mrf.mxu0
        %v8406 = vadd.f32 0.0, %v8405
        %8407 = vmatmul.bf16.gmra.mxu0 %v8118
        %v8408 = vpop.f32.mrf.mxu0
        %v8409 = vadd.f32 0.0, %v8408
        %v8410 = vpop.f32.mrf.mxu0
        %v8411 = vadd.f32 0.0, %v8410
        %8412 = vdwg.mxu0
        %v8413 = vadd.f32 %v8212, %v8334
        %v8414 = vadd.f32 %v8213, %v8336
        %v8415 = vadd.f32 %v8214, %v8339
        %v8416 = vadd.f32 %v8215, %v8341
        %v8417 = vadd.f32 %v8216, %v8344
        %v8418 = vadd.f32 %v8217, %v8346
        %v8419 = vadd.f32 %v8218, %v8349
        %v8420 = vadd.f32 %v8219, %v8351
        %v8421 = vadd.f32 %v8220, %v8354
        %v8422 = vadd.f32 %v8221, %v8356
        %v8423 = vadd.f32 %v8222, %v8359
        %v8424 = vadd.f32 %v8223, %v8361
        %v8425 = vadd.f32 %v8224, %v8364
        %v8426 = vadd.f32 %v8225, %v8366
        %v8427 = vadd.f32 %v8226, %v8369
        %v8428 = vadd.f32 %v8227, %v8371
        %v8429 = vadd.f32 %v8228, %v8374
        %v8430 = vadd.f32 %v8229, %v8376
        %v8431 = vadd.f32 %v8230, %v8379
        %v8432 = vadd.f32 %v8231, %v8381
        %v8433 = vadd.f32 %v8232, %v8384
        %v8434 = vadd.f32 %v8233, %v8386
        %v8435 = vadd.f32 %v8234, %v8389
        %v8436 = vadd.f32 %v8235, %v8391
        %v8437 = vadd.f32 %v8236, %v8394
        %v8438 = vadd.f32 %v8237, %v8396
        %v8439 = vadd.f32 %v8238, %v8399
        %v8440 = vadd.f32 %v8239, %v8401
        %v8441 = vadd.f32 %v8240, %v8404
        %v8442 = vadd.f32 %v8241, %v8406
        %v8443 = vadd.f32 %v8242, %v8409
        %v8444 = vadd.f32 %v8243, %v8411
        %v8445 = vsel %vm6431, %v5026, 0
        %v8446 = vsel %vm5402, %v5028, 0
        %v8447 = vsel %vm5409, %v5030, 0
        %v8448 = vsel %vm5416, %v5032, 0
        %v8449 = vsel %vm5423, %v5034, 0
        %v8450 = vsel %vm5430, %v5036, 0
        %v8451 = vsel %vm5437, %v5038, 0
        %v8452 = vsel %vm5444, %v5040, 0
        %v8453 = vsel %vm5451, %v5042, 0
        %v8454 = vsel %vm5458, %v5044, 0
        %v8455 = vsel %vm5465, %v5046, 0
        %v8456 = vsel %vm5472, %v5048, 0
        %v8457 = vsel %vm5479, %v6409, 0
        %v8458 = vsel %vm5486, %v7362, 0
        %v8459 = vsel %vm5493, %v7379, 0
        %s8460 = scalar_lea.vmem %s6, 38
        %v8461 = vld [vmem:[%s8460] sm:$0x3]
        %8477 = vrot.lane.b32.xlu0 %v8445, 116
        %v8478 = vpop.permute.xlu0 %8477
        %8479 = vrot.lane.b32.xlu0 %v8446, 116
        %v8480 = vpop.permute.xlu0 %8479
        %8481 = vrot.lane.b32.xlu0 %v8447, 116
        %v8482 = vpop.permute.xlu0 %8481
        %8483 = vrot.lane.b32.xlu0 %v8448, 116
        %v8484 = vpop.permute.xlu0 %8483
        %8485 = vrot.lane.b32.xlu0 %v8449, 116
        %v8486 = vpop.permute.xlu0 %8485
        %8487 = vrot.lane.b32.xlu0 %v8450, 116
        %v8488 = vpop.permute.xlu0 %8487
        %8489 = vrot.lane.b32.xlu0 %v8451, 116
        %v8490 = vpop.permute.xlu0 %8489
        %8491 = vrot.lane.b32.xlu0 %v8452, 116
        %v8492 = vpop.permute.xlu0 %8491
        %8493 = vrot.lane.b32.xlu0 %v8453, 116
        %v8494 = vpop.permute.xlu0 %8493
        %8495 = vrot.lane.b32.xlu0 %v8454, 116
        %v8496 = vpop.permute.xlu0 %8495
        %8497 = vrot.lane.b32.xlu0 %v8455, 116
        %v8498 = vpop.permute.xlu0 %8497
        %8499 = vrot.lane.b32.xlu0 %v8456, 116
        %v8500 = vpop.permute.xlu0 %8499
        %8501 = vrot.lane.b32.xlu0 %v8457, 116
        %v8502 = vpop.permute.xlu0 %8501
        %8503 = vrot.lane.b32.xlu0 %v8458, 116
        %v8504 = vpop.permute.xlu0 %8503
        %8505 = vrot.lane.b32.xlu0 %v8459, 116
        %v8506 = vpop.permute.xlu0 %8505
        %v8508 = vsel %vm446, %v8478, 0
        %v8511 = vsel %vm446, %v8480, 0
        %v8514 = vsel %vm446, %v8482, 0
        %v8517 = vsel %vm446, %v8484, 0
        %v8520 = vsel %vm446, %v8486, 0
        %v8523 = vsel %vm446, %v8488, 0
        %v8526 = vsel %vm446, %v8490, 0
        %v8529 = vsel %vm446, %v8492, 0
        %v8532 = vsel %vm446, %v8494, 0
        %v8535 = vsel %vm446, %v8496, 0
        %v8538 = vsel %vm446, %v8498, 0
        %v8541 = vsel %vm446, %v8500, 0
        %v8544 = vsel %vm446, %v8502, 0
        %v8547 = vsel %vm446, %v8504, 0
        %v8550 = vsel %vm446, %v8506, 0
        %v8553 = vsel %vm495, %v8461, 0
        %8555 = vmatpush.bf16.msra.mxu0 0
        %8556 = vmatpush.bf16.msra.mxu0 0
        %8557 = vmatpush.bf16.msra.mxu0 0
        %8558 = vmatpush.bf16.msra.mxu0 0
        %8559 = vmatpush.bf16.msra.mxu0 0
        %8560 = vmatpush.bf16.msra.mxu0 0
        %8561 = vmatpush.bf16.msra.mxu0 0
        %8562 = vmatpush.bf16.msra.mxu0 %v8553
        %8563 = vmatmul.bf16.gmra.mxu0 %v8508
        %v8564 = vpop.f32.mrf.mxu0
        %v8565 = vadd.f32 0.0, %v8564
        %v8566 = vpop.f32.mrf.mxu0
        %v8567 = vadd.f32 0.0, %v8566
        %8568 = vmatmul.bf16.gmra.mxu0 %v8511
        %v8569 = vpop.f32.mrf.mxu0
        %v8570 = vadd.f32 0.0, %v8569
        %v8571 = vpop.f32.mrf.mxu0
        %v8572 = vadd.f32 0.0, %v8571
        %8573 = vmatmul.bf16.gmra.mxu0 %v8514
        %v8574 = vpop.f32.mrf.mxu0
        %v8575 = vadd.f32 0.0, %v8574
        %v8576 = vpop.f32.mrf.mxu0
        %v8577 = vadd.f32 0.0, %v8576
        %8578 = vmatmul.bf16.gmra.mxu0 %v8517
        %v8579 = vpop.f32.mrf.mxu0
        %v8580 = vadd.f32 0.0, %v8579
        %v8581 = vpop.f32.mrf.mxu0
        %v8582 = vadd.f32 0.0, %v8581
        %8583 = vmatmul.bf16.gmra.mxu0 %v8520
        %v8584 = vpop.f32.mrf.mxu0
        %v8585 = vadd.f32 0.0, %v8584
        %v8586 = vpop.f32.mrf.mxu0
        %v8587 = vadd.f32 0.0, %v8586
        %8588 = vmatmul.bf16.gmra.mxu0 %v8523
        %v8589 = vpop.f32.mrf.mxu0
        %v8590 = vadd.f32 0.0, %v8589
        %v8591 = vpop.f32.mrf.mxu0
        %v8592 = vadd.f32 0.0, %v8591
        %8593 = vmatmul.bf16.gmra.mxu0 %v8526
        %v8594 = vpop.f32.mrf.mxu0
        %v8595 = vadd.f32 0.0, %v8594
        %v8596 = vpop.f32.mrf.mxu0
        %v8597 = vadd.f32 0.0, %v8596
        %8598 = vmatmul.bf16.gmra.mxu0 %v8529
        %v8599 = vpop.f32.mrf.mxu0
        %v8600 = vadd.f32 0.0, %v8599
        %v8601 = vpop.f32.mrf.mxu0
        %v8602 = vadd.f32 0.0, %v8601
        %8603 = vmatmul.bf16.gmra.mxu0 %v8532
        %v8604 = vpop.f32.mrf.mxu0
        %v8605 = vadd.f32 0.0, %v8604
        %v8606 = vpop.f32.mrf.mxu0
        %v8607 = vadd.f32 0.0, %v8606
        %8608 = vmatmul.bf16.gmra.mxu0 %v8535
        %v8609 = vpop.f32.mrf.mxu0
        %v8610 = vadd.f32 0.0, %v8609
        %v8611 = vpop.f32.mrf.mxu0
        %v8612 = vadd.f32 0.0, %v8611
        %8613 = vmatmul.bf16.gmra.mxu0 %v8538
        %v8614 = vpop.f32.mrf.mxu0
        %v8615 = vadd.f32 0.0, %v8614
        %v8616 = vpop.f32.mrf.mxu0
        %v8617 = vadd.f32 0.0, %v8616
        %8618 = vmatmul.bf16.gmra.mxu0 %v8541
        %v8619 = vpop.f32.mrf.mxu0
        %v8620 = vadd.f32 0.0, %v8619
        %v8621 = vpop.f32.mrf.mxu0
        %v8622 = vadd.f32 0.0, %v8621
        %8623 = vmatmul.bf16.gmra.mxu0 %v8544
        %v8624 = vpop.f32.mrf.mxu0
        %v8625 = vadd.f32 0.0, %v8624
        %v8626 = vpop.f32.mrf.mxu0
        %v8627 = vadd.f32 0.0, %v8626
        %8628 = vmatmul.bf16.gmra.mxu0 %v8547
        %v8629 = vpop.f32.mrf.mxu0
        %v8630 = vadd.f32 0.0, %v8629
        %v8631 = vpop.f32.mrf.mxu0
        %v8632 = vadd.f32 0.0, %v8631
        %8633 = vmatmul.bf16.gmra.mxu0 %v8550
        %v8634 = vpop.f32.mrf.mxu0
        %v8635 = vadd.f32 0.0, %v8634
        %v8636 = vpop.f32.mrf.mxu0
        %v8637 = vadd.f32 0.0, %v8636
        %8638 = vmatmul.bf16.gmra.mxu0 %v8118
        %v8639 = vpop.f32.mrf.mxu0
        %v8640 = vadd.f32 0.0, %v8639
        %v8641 = vpop.f32.mrf.mxu0
        %v8642 = vadd.f32 0.0, %v8641
        %8643 = vdwg.mxu0
        %v8644 = vadd.f32 %v8413, %v8565
        %v8645 = vadd.f32 %v8414, %v8567
        %v8646 = vadd.f32 %v8415, %v8570
        %v8647 = vadd.f32 %v8416, %v8572
        %v8648 = vadd.f32 %v8417, %v8575
        %v8649 = vadd.f32 %v8418, %v8577
        %v8650 = vadd.f32 %v8419, %v8580
        %v8651 = vadd.f32 %v8420, %v8582
        %v8652 = vadd.f32 %v8421, %v8585
        %v8653 = vadd.f32 %v8422, %v8587
        %v8654 = vadd.f32 %v8423, %v8590
        %v8655 = vadd.f32 %v8424, %v8592
        %v8656 = vadd.f32 %v8425, %v8595
        %v8657 = vadd.f32 %v8426, %v8597
        %v8658 = vadd.f32 %v8427, %v8600
        %v8659 = vadd.f32 %v8428, %v8602
        %v8660 = vadd.f32 %v8429, %v8605
        %v8661 = vadd.f32 %v8430, %v8607
        %v8662 = vadd.f32 %v8431, %v8610
        %v8663 = vadd.f32 %v8432, %v8612
        %v8664 = vadd.f32 %v8433, %v8615
        %v8665 = vadd.f32 %v8434, %v8617
        %v8666 = vadd.f32 %v8435, %v8620
        %v8667 = vadd.f32 %v8436, %v8622
        %v8668 = vadd.f32 %v8437, %v8625
        %v8669 = vadd.f32 %v8438, %v8627
        %v8670 = vadd.f32 %v8439, %v8630
        %v8671 = vadd.f32 %v8440, %v8632
        %v8672 = vadd.f32 %v8441, %v8635
        %v8673 = vadd.f32 %v8442, %v8637
        %v8674 = vadd.f32 %v8443, %v8640
        %v8675 = vadd.f32 %v8444, %v8642
        %v8676 = vsel %vm6640, %v7624, 0
        %v8677 = vsel %vm5705, %v7626, 0
        %v8678 = vsel %vm4153, %v7628, 0
        %v8679 = vsel %vm4160, %v7630, 0
        %v8680 = vsel %vm4167, %v7632, 0
        %v8681 = vsel %vm4174, %v7634, 0
        %v8682 = vsel %vm4181, %v7636, 0
        %v8683 = vsel %vm4188, %v7638, 0
        %v8684 = vsel %vm4195, %v7640, 0
        %v8685 = vsel %vm4202, %v7642, 0
        %v8686 = vsel %vm4209, %v7644, 0
        %v8687 = vsel %vm4216, %v7646, 0
        %v8688 = vsel %vm4223, %v7648, 0
        %v8689 = vsel %vm4230, %v7650, 0
        %v8690 = vsel %vm4237, %v7667, 0
        %s8691 = scalar_lea.vmem %s6, 40
        %v8692 = vld [vmem:[%s8691] sm:$0x3]
        %8708 = vrot.lane.b32.xlu0 %v8676, 116
        %v8709 = vpop.permute.xlu0 %8708
        %8710 = vrot.lane.b32.xlu0 %v8677, 116
        %v8711 = vpop.permute.xlu0 %8710
        %8712 = vrot.lane.b32.xlu0 %v8678, 116
        %v8713 = vpop.permute.xlu0 %8712
        %8714 = vrot.lane.b32.xlu0 %v8679, 116
        %v8715 = vpop.permute.xlu0 %8714
        %8716 = vrot.lane.b32.xlu0 %v8680, 116
        %v8717 = vpop.permute.xlu0 %8716
        %8718 = vrot.lane.b32.xlu0 %v8681, 116
        %v8719 = vpop.permute.xlu0 %8718
        %8720 = vrot.lane.b32.xlu0 %v8682, 116
        %v8721 = vpop.permute.xlu0 %8720
        %8722 = vrot.lane.b32.xlu0 %v8683, 116
        %v8723 = vpop.permute.xlu0 %8722
        %8724 = vrot.lane.b32.xlu0 %v8684, 116
        %v8725 = vpop.permute.xlu0 %8724
        %8726 = vrot.lane.b32.xlu0 %v8685, 116
        %v8727 = vpop.permute.xlu0 %8726
        %8728 = vrot.lane.b32.xlu0 %v8686, 116
        %v8729 = vpop.permute.xlu0 %8728
        %8730 = vrot.lane.b32.xlu0 %v8687, 116
        %v8731 = vpop.permute.xlu0 %8730
        %8732 = vrot.lane.b32.xlu0 %v8688, 116
        %v8733 = vpop.permute.xlu0 %8732
        %8734 = vrot.lane.b32.xlu0 %v8689, 116
        %v8735 = vpop.permute.xlu0 %8734
        %8736 = vrot.lane.b32.xlu0 %v8690, 116
        %v8737 = vpop.permute.xlu0 %8736
        %v8739 = vsel %vm446, %v8709, 0
        %v8742 = vsel %vm446, %v8711, 0
        %v8745 = vsel %vm446, %v8713, 0
        %v8748 = vsel %vm446, %v8715, 0
        %v8751 = vsel %vm446, %v8717, 0
        %v8754 = vsel %vm446, %v8719, 0
        %v8757 = vsel %vm446, %v8721, 0
        %v8760 = vsel %vm446, %v8723, 0
        %v8763 = vsel %vm446, %v8725, 0
        %v8766 = vsel %vm446, %v8727, 0
        %v8769 = vsel %vm446, %v8729, 0
        %v8772 = vsel %vm446, %v8731, 0
        %v8775 = vsel %vm446, %v8733, 0
        %v8778 = vsel %vm446, %v8735, 0
        %v8781 = vsel %vm446, %v8737, 0
        %v8784 = vsel %vm495, %v8692, 0
        %8786 = vmatpush.bf16.msra.mxu0 0
        %8787 = vmatpush.bf16.msra.mxu0 0
        %8788 = vmatpush.bf16.msra.mxu0 0
        %8789 = vmatpush.bf16.msra.mxu0 0
        %8790 = vmatpush.bf16.msra.mxu0 0
        %8791 = vmatpush.bf16.msra.mxu0 0
        %8792 = vmatpush.bf16.msra.mxu0 0
        %8793 = vmatpush.bf16.msra.mxu0 %v8784
        %8794 = vmatmul.bf16.gmra.mxu0 %v8739
        %v8795 = vpop.f32.mrf.mxu0
        %v8796 = vadd.f32 0.0, %v8795
        %v8797 = vpop.f32.mrf.mxu0
        %v8798 = vadd.f32 0.0, %v8797
        %8799 = vmatmul.bf16.gmra.mxu0 %v8742
        %v8800 = vpop.f32.mrf.mxu0
        %v8801 = vadd.f32 0.0, %v8800
        %v8802 = vpop.f32.mrf.mxu0
        %v8803 = vadd.f32 0.0, %v8802
        %8804 = vmatmul.bf16.gmra.mxu0 %v8745
        %v8805 = vpop.f32.mrf.mxu0
        %v8806 = vadd.f32 0.0, %v8805
        %v8807 = vpop.f32.mrf.mxu0
        %v8808 = vadd.f32 0.0, %v8807
        %8809 = vmatmul.bf16.gmra.mxu0 %v8748
        %v8810 = vpop.f32.mrf.mxu0
        %v8811 = vadd.f32 0.0, %v8810
        %v8812 = vpop.f32.mrf.mxu0
        %v8813 = vadd.f32 0.0, %v8812
        %8814 = vmatmul.bf16.gmra.mxu0 %v8751
        %v8815 = vpop.f32.mrf.mxu0
        %v8816 = vadd.f32 0.0, %v8815
        %v8817 = vpop.f32.mrf.mxu0
        %v8818 = vadd.f32 0.0, %v8817
        %8819 = vmatmul.bf16.gmra.mxu0 %v8754
        %v8820 = vpop.f32.mrf.mxu0
        %v8821 = vadd.f32 0.0, %v8820
        %v8822 = vpop.f32.mrf.mxu0
        %v8823 = vadd.f32 0.0, %v8822
        %8824 = vmatmul.bf16.gmra.mxu0 %v8757
        %v8825 = vpop.f32.mrf.mxu0
        %v8826 = vadd.f32 0.0, %v8825
        %v8827 = vpop.f32.mrf.mxu0
        %v8828 = vadd.f32 0.0, %v8827
        %8829 = vmatmul.bf16.gmra.mxu0 %v8760
        %v8830 = vpop.f32.mrf.mxu0
        %v8831 = vadd.f32 0.0, %v8830
        %v8832 = vpop.f32.mrf.mxu0
        %v8833 = vadd.f32 0.0, %v8832
        %8834 = vmatmul.bf16.gmra.mxu0 %v8763
        %v8835 = vpop.f32.mrf.mxu0
        %v8836 = vadd.f32 0.0, %v8835
        %v8837 = vpop.f32.mrf.mxu0
        %v8838 = vadd.f32 0.0, %v8837
        %8839 = vmatmul.bf16.gmra.mxu0 %v8766
        %v8840 = vpop.f32.mrf.mxu0
        %v8841 = vadd.f32 0.0, %v8840
        %v8842 = vpop.f32.mrf.mxu0
        %v8843 = vadd.f32 0.0, %v8842
        %8844 = vmatmul.bf16.gmra.mxu0 %v8769
        %v8845 = vpop.f32.mrf.mxu0
        %v8846 = vadd.f32 0.0, %v8845
        %v8847 = vpop.f32.mrf.mxu0
        %v8848 = vadd.f32 0.0, %v8847
        %8849 = vmatmul.bf16.gmra.mxu0 %v8772
        %v8850 = vpop.f32.mrf.mxu0
        %v8851 = vadd.f32 0.0, %v8850
        %v8852 = vpop.f32.mrf.mxu0
        %v8853 = vadd.f32 0.0, %v8852
        %8854 = vmatmul.bf16.gmra.mxu0 %v8775
        %v8855 = vpop.f32.mrf.mxu0
        %v8856 = vadd.f32 0.0, %v8855
        %v8857 = vpop.f32.mrf.mxu0
        %v8858 = vadd.f32 0.0, %v8857
        %8859 = vmatmul.bf16.gmra.mxu0 %v8778
        %v8860 = vpop.f32.mrf.mxu0
        %v8861 = vadd.f32 0.0, %v8860
        %v8862 = vpop.f32.mrf.mxu0
        %v8863 = vadd.f32 0.0, %v8862
        %8864 = vmatmul.bf16.gmra.mxu0 %v8781
        %v8865 = vpop.f32.mrf.mxu0
        %v8866 = vadd.f32 0.0, %v8865
        %v8867 = vpop.f32.mrf.mxu0
        %v8868 = vadd.f32 0.0, %v8867
        %8869 = vmatmul.bf16.gmra.mxu0 %v8118
        %v8870 = vpop.f32.mrf.mxu0
        %v8871 = vadd.f32 0.0, %v8870
        %v8872 = vpop.f32.mrf.mxu0
        %v8873 = vadd.f32 0.0, %v8872
        %8874 = vdwg.mxu0
        %v8875 = vadd.f32 %v8644, %v8796
        %v8876 = vadd.f32 %v8645, %v8798
        %v8877 = vadd.f32 %v8646, %v8801
        %v8878 = vadd.f32 %v8647, %v8803
        %v8879 = vadd.f32 %v8648, %v8806
        %v8880 = vadd.f32 %v8649, %v8808
        %v8881 = vadd.f32 %v8650, %v8811
        %v8882 = vadd.f32 %v8651, %v8813
        %v8883 = vadd.f32 %v8652, %v8816
        %v8884 = vadd.f32 %v8653, %v8818
        %v8885 = vadd.f32 %v8654, %v8821
        %v8886 = vadd.f32 %v8655, %v8823
        %v8887 = vadd.f32 %v8656, %v8826
        %v8888 = vadd.f32 %v8657, %v8828
        %v8889 = vadd.f32 %v8658, %v8831
        %v8890 = vadd.f32 %v8659, %v8833
        %v8891 = vadd.f32 %v8660, %v8836
        %v8892 = vadd.f32 %v8661, %v8838
        %v8893 = vadd.f32 %v8662, %v8841
        %v8894 = vadd.f32 %v8663, %v8843
        %v8895 = vadd.f32 %v8664, %v8846
        %v8896 = vadd.f32 %v8665, %v8848
        %v8897 = vadd.f32 %v8666, %v8851
        %v8898 = vadd.f32 %v8667, %v8853
        %v8899 = vadd.f32 %v8668, %v8856
        %v8900 = vadd.f32 %v8669, %v8858
        %v8901 = vadd.f32 %v8670, %v8861
        %v8902 = vadd.f32 %v8671, %v8863
        %v8903 = vadd.f32 %v8672, %v8866
        %v8904 = vadd.f32 %v8673, %v8868
        %v8905 = vadd.f32 %v8674, %v8871
        %v8906 = vadd.f32 %v8675, %v8873
        %v8907 = vsel %vm2359, %v2981, 0
        %v8908 = vsel %vm1198, %v2990, 0
        %v8909 = vsel %vm1205, %v2999, 0
        %v8910 = vsel %vm1212, %v3008, 0
        %v8911 = vsel %vm1219, %v3017, 0
        %v8912 = vsel %vm1226, %v3026, 0
        %v8913 = vsel %vm1233, %v3035, 0
        %v8914 = vsel %vm1240, %v3044, 0
        %v8915 = vsel %vm1247, %v3053, 0
        %v8916 = vsel %vm1254, %v3062, 0
        %v8917 = vsel %vm1261, %v3071, 0
        %v8918 = vsel %vm1268, %v3080, 0
        %v8919 = vsel %vm1275, %v3089, 0
        %v8920 = vsel %vm1282, %v3098, 0
        %v8921 = vsel %vm1289, %v3115, 0
        %s8922 = scalar_lea.vmem %s6, 42
        %v8923 = vld [vmem:[%s8922] sm:$0x3]
        %8939 = vrot.lane.b32.xlu0 %v8907, 116
        %v8940 = vpop.permute.xlu0 %8939
        %8941 = vrot.lane.b32.xlu0 %v8908, 116
        %v8942 = vpop.permute.xlu0 %8941
        %8943 = vrot.lane.b32.xlu0 %v8909, 116
        %v8944 = vpop.permute.xlu0 %8943
        %8945 = vrot.lane.b32.xlu0 %v8910, 116
        %v8946 = vpop.permute.xlu0 %8945
        %8947 = vrot.lane.b32.xlu0 %v8911, 116
        %v8948 = vpop.permute.xlu0 %8947
        %8949 = vrot.lane.b32.xlu0 %v8912, 116
        %v8950 = vpop.permute.xlu0 %8949
        %8951 = vrot.lane.b32.xlu0 %v8913, 116
        %v8952 = vpop.permute.xlu0 %8951
        %8953 = vrot.lane.b32.xlu0 %v8914, 116
        %v8954 = vpop.permute.xlu0 %8953
        %8955 = vrot.lane.b32.xlu0 %v8915, 116
        %v8956 = vpop.permute.xlu0 %8955
        %8957 = vrot.lane.b32.xlu0 %v8916, 116
        %v8958 = vpop.permute.xlu0 %8957
        %8959 = vrot.lane.b32.xlu0 %v8917, 116
        %v8960 = vpop.permute.xlu0 %8959
        %8961 = vrot.lane.b32.xlu0 %v8918, 116
        %v8962 = vpop.permute.xlu0 %8961
        %8963 = vrot.lane.b32.xlu0 %v8919, 116
        %v8964 = vpop.permute.xlu0 %8963
        %8965 = vrot.lane.b32.xlu0 %v8920, 116
        %v8966 = vpop.permute.xlu0 %8965
        %8967 = vrot.lane.b32.xlu0 %v8921, 116
        %v8968 = vpop.permute.xlu0 %8967
        %v8970 = vsel %vm446, %v8940, 0
        %v8973 = vsel %vm446, %v8942, 0
        %v8976 = vsel %vm446, %v8944, 0
        %v8979 = vsel %vm446, %v8946, 0
        %v8982 = vsel %vm446, %v8948, 0
        %v8985 = vsel %vm446, %v8950, 0
        %v8988 = vsel %vm446, %v8952, 0
        %v8991 = vsel %vm446, %v8954, 0
        %v8994 = vsel %vm446, %v8956, 0
        %v8997 = vsel %vm446, %v8958, 0
        %v9000 = vsel %vm446, %v8960, 0
        %v9003 = vsel %vm446, %v8962, 0
        %v9006 = vsel %vm446, %v8964, 0
        %v9009 = vsel %vm446, %v8966, 0
        %v9012 = vsel %vm446, %v8968, 0
        %v9015 = vsel %vm495, %v8923, 0
        %9017 = vmatpush.bf16.msra.mxu0 0
        %9018 = vmatpush.bf16.msra.mxu0 0
        %9019 = vmatpush.bf16.msra.mxu0 0
        %9020 = vmatpush.bf16.msra.mxu0 0
        %9021 = vmatpush.bf16.msra.mxu0 0
        %9022 = vmatpush.bf16.msra.mxu0 0
        %9023 = vmatpush.bf16.msra.mxu0 0
        %9024 = vmatpush.bf16.msra.mxu0 %v9015
        %9025 = vmatmul.bf16.gmra.mxu0 %v8970
        %v9026 = vpop.f32.mrf.mxu0
        %v9027 = vadd.f32 0.0, %v9026
        %v9028 = vpop.f32.mrf.mxu0
        %v9029 = vadd.f32 0.0, %v9028
        %9030 = vmatmul.bf16.gmra.mxu0 %v8973
        %v9031 = vpop.f32.mrf.mxu0
        %v9032 = vadd.f32 0.0, %v9031
        %v9033 = vpop.f32.mrf.mxu0
        %v9034 = vadd.f32 0.0, %v9033
        %9035 = vmatmul.bf16.gmra.mxu0 %v8976
        %v9036 = vpop.f32.mrf.mxu0
        %v9037 = vadd.f32 0.0, %v9036
        %v9038 = vpop.f32.mrf.mxu0
        %v9039 = vadd.f32 0.0, %v9038
        %9040 = vmatmul.bf16.gmra.mxu0 %v8979
        %v9041 = vpop.f32.mrf.mxu0
        %v9042 = vadd.f32 0.0, %v9041
        %v9043 = vpop.f32.mrf.mxu0
        %v9044 = vadd.f32 0.0, %v9043
        %9045 = vmatmul.bf16.gmra.mxu0 %v8982
        %v9046 = vpop.f32.mrf.mxu0
        %v9047 = vadd.f32 0.0, %v9046
        %v9048 = vpop.f32.mrf.mxu0
        %v9049 = vadd.f32 0.0, %v9048
        %9050 = vmatmul.bf16.gmra.mxu0 %v8985
        %v9051 = vpop.f32.mrf.mxu0
        %v9052 = vadd.f32 0.0, %v9051
        %v9053 = vpop.f32.mrf.mxu0
        %v9054 = vadd.f32 0.0, %v9053
        %9055 = vmatmul.bf16.gmra.mxu0 %v8988
        %v9056 = vpop.f32.mrf.mxu0
        %v9057 = vadd.f32 0.0, %v9056
        %v9058 = vpop.f32.mrf.mxu0
        %v9059 = vadd.f32 0.0, %v9058
        %9060 = vmatmul.bf16.gmra.mxu0 %v8991
        %v9061 = vpop.f32.mrf.mxu0
        %v9062 = vadd.f32 0.0, %v9061
        %v9063 = vpop.f32.mrf.mxu0
        %v9064 = vadd.f32 0.0, %v9063
        %9065 = vmatmul.bf16.gmra.mxu0 %v8994
        %v9066 = vpop.f32.mrf.mxu0
        %v9067 = vadd.f32 0.0, %v9066
        %v9068 = vpop.f32.mrf.mxu0
        %v9069 = vadd.f32 0.0, %v9068
        %9070 = vmatmul.bf16.gmra.mxu0 %v8997
        %v9071 = vpop.f32.mrf.mxu0
        %v9072 = vadd.f32 0.0, %v9071
        %v9073 = vpop.f32.mrf.mxu0
        %v9074 = vadd.f32 0.0, %v9073
        %9075 = vmatmul.bf16.gmra.mxu0 %v9000
        %v9076 = vpop.f32.mrf.mxu0
        %v9077 = vadd.f32 0.0, %v9076
        %v9078 = vpop.f32.mrf.mxu0
        %v9079 = vadd.f32 0.0, %v9078
        %9080 = vmatmul.bf16.gmra.mxu0 %v9003
        %v9081 = vpop.f32.mrf.mxu0
        %v9082 = vadd.f32 0.0, %v9081
        %v9083 = vpop.f32.mrf.mxu0
        %v9084 = vadd.f32 0.0, %v9083
        %9085 = vmatmul.bf16.gmra.mxu0 %v9006
        %v9086 = vpop.f32.mrf.mxu0
        %v9087 = vadd.f32 0.0, %v9086
        %v9088 = vpop.f32.mrf.mxu0
        %v9089 = vadd.f32 0.0, %v9088
        %9090 = vmatmul.bf16.gmra.mxu0 %v9009
        %v9091 = vpop.f32.mrf.mxu0
        %v9092 = vadd.f32 0.0, %v9091
        %v9093 = vpop.f32.mrf.mxu0
        %v9094 = vadd.f32 0.0, %v9093
        %9095 = vmatmul.bf16.gmra.mxu0 %v9012
        %v9096 = vpop.f32.mrf.mxu0
        %v9097 = vadd.f32 0.0, %v9096
        %v9098 = vpop.f32.mrf.mxu0
        %v9099 = vadd.f32 0.0, %v9098
        %9100 = vmatmul.bf16.gmra.mxu0 %v8118
        %v9101 = vpop.f32.mrf.mxu0
        %v9102 = vadd.f32 0.0, %v9101
        %v9103 = vpop.f32.mrf.mxu0
        %v9104 = vadd.f32 0.0, %v9103
        %9105 = vdwg.mxu0
        %v9106 = vadd.f32 %v8875, %v9027
        %v9107 = vadd.f32 %v8876, %v9029
        %v9108 = vadd.f32 %v8877, %v9032
        %v9109 = vadd.f32 %v8878, %v9034
        %v9110 = vadd.f32 %v8879, %v9037
        %v9111 = vadd.f32 %v8880, %v9039
        %v9112 = vadd.f32 %v8881, %v9042
        %v9113 = vadd.f32 %v8882, %v9044
        %v9114 = vadd.f32 %v8883, %v9047
        %v9115 = vadd.f32 %v8884, %v9049
        %v9116 = vadd.f32 %v8885, %v9052
        %v9117 = vadd.f32 %v8886, %v9054
        %v9118 = vadd.f32 %v8887, %v9057
        %v9119 = vadd.f32 %v8888, %v9059
        %v9120 = vadd.f32 %v8889, %v9062
        %v9121 = vadd.f32 %v8890, %v9064
        %v9122 = vadd.f32 %v8891, %v9067
        %v9123 = vadd.f32 %v8892, %v9069
        %v9124 = vadd.f32 %v8893, %v9072
        %v9125 = vadd.f32 %v8894, %v9074
        %v9126 = vadd.f32 %v8895, %v9077
        %v9127 = vadd.f32 %v8896, %v9079
        %v9128 = vadd.f32 %v8897, %v9082
        %v9129 = vadd.f32 %v8898, %v9084
        %v9130 = vadd.f32 %v8899, %v9087
        %v9131 = vadd.f32 %v8900, %v9089
        %v9132 = vadd.f32 %v8901, %v9092
        %v9133 = vadd.f32 %v8902, %v9094
        %v9134 = vadd.f32 %v8903, %v9097
        %v9135 = vadd.f32 %v8904, %v9099
        %v9136 = vadd.f32 %v8905, %v9102
        %v9137 = vadd.f32 %v8906, %v9104
        %s9138 = scalar_lea.vmem %s6, 44
        %v9139 = vld [vmem:[%s9138] sm:$0x3]
        %v9141 = vsel %vm495, %v9139, 0
        %9143 = vmatpush.bf16.msra.mxu0 0
        %9144 = vmatpush.bf16.msra.mxu0 0
        %9145 = vmatpush.bf16.msra.mxu0 0
        %9146 = vmatpush.bf16.msra.mxu0 0
        %9147 = vmatpush.bf16.msra.mxu0 0
        %9148 = vmatpush.bf16.msra.mxu0 0
        %9149 = vmatpush.bf16.msra.mxu0 0
        %9150 = vmatpush.bf16.msra.mxu0 %v9141
        %9151 = vmatmul.bf16.gmra.mxu0 %v4624
        %v9152 = vpop.f32.mrf.mxu0
        %v9153 = vadd.f32 0.0, %v9152
        %v9154 = vpop.f32.mrf.mxu0
        %v9155 = vadd.f32 0.0, %v9154
        %9156 = vmatmul.bf16.gmra.mxu0 %v4627
        %v9157 = vpop.f32.mrf.mxu0
        %v9158 = vadd.f32 0.0, %v9157
        %v9159 = vpop.f32.mrf.mxu0
        %v9160 = vadd.f32 0.0, %v9159
        %9161 = vmatmul.bf16.gmra.mxu0 %v4630
        %v9162 = vpop.f32.mrf.mxu0
        %v9163 = vadd.f32 0.0, %v9162
        %v9164 = vpop.f32.mrf.mxu0
        %v9165 = vadd.f32 0.0, %v9164
        %9166 = vmatmul.bf16.gmra.mxu0 %v4633
        %v9167 = vpop.f32.mrf.mxu0
        %v9168 = vadd.f32 0.0, %v9167
        %v9169 = vpop.f32.mrf.mxu0
        %v9170 = vadd.f32 0.0, %v9169
        %9171 = vmatmul.bf16.gmra.mxu0 %v4636
        %v9172 = vpop.f32.mrf.mxu0
        %v9173 = vadd.f32 0.0, %v9172
        %v9174 = vpop.f32.mrf.mxu0
        %v9175 = vadd.f32 0.0, %v9174
        %9176 = vmatmul.bf16.gmra.mxu0 %v4639
        %v9177 = vpop.f32.mrf.mxu0
        %v9178 = vadd.f32 0.0, %v9177
        %v9179 = vpop.f32.mrf.mxu0
        %v9180 = vadd.f32 0.0, %v9179
        %9181 = vmatmul.bf16.gmra.mxu0 %v4642
        %v9182 = vpop.f32.mrf.mxu0
        %v9183 = vadd.f32 0.0, %v9182
        %v9184 = vpop.f32.mrf.mxu0
        %v9185 = vadd.f32 0.0, %v9184
        %9186 = vmatmul.bf16.gmra.mxu0 %v4645
        %v9187 = vpop.f32.mrf.mxu0
        %v9188 = vadd.f32 0.0, %v9187
        %v9189 = vpop.f32.mrf.mxu0
        %v9190 = vadd.f32 0.0, %v9189
        %9191 = vmatmul.bf16.gmra.mxu0 %v4648
        %v9192 = vpop.f32.mrf.mxu0
        %v9193 = vadd.f32 0.0, %v9192
        %v9194 = vpop.f32.mrf.mxu0
        %v9195 = vadd.f32 0.0, %v9194
        %9196 = vmatmul.bf16.gmra.mxu0 %v4651
        %v9197 = vpop.f32.mrf.mxu0
        %v9198 = vadd.f32 0.0, %v9197
        %v9199 = vpop.f32.mrf.mxu0
        %v9200 = vadd.f32 0.0, %v9199
        %9201 = vmatmul.bf16.gmra.mxu0 %v4654
        %v9202 = vpop.f32.mrf.mxu0
        %v9203 = vadd.f32 0.0, %v9202
        %v9204 = vpop.f32.mrf.mxu0
        %v9205 = vadd.f32 0.0, %v9204
        %9206 = vmatmul.bf16.gmra.mxu0 %v4657
        %v9207 = vpop.f32.mrf.mxu0
        %v9208 = vadd.f32 0.0, %v9207
        %v9209 = vpop.f32.mrf.mxu0
        %v9210 = vadd.f32 0.0, %v9209
        %9211 = vmatmul.bf16.gmra.mxu0 %v6086
        %v9212 = vpop.f32.mrf.mxu0
        %v9213 = vadd.f32 0.0, %v9212
        %v9214 = vpop.f32.mrf.mxu0
        %v9215 = vadd.f32 0.0, %v9214
        %9216 = vmatmul.bf16.gmra.mxu0 %v7029
        %v9217 = vpop.f32.mrf.mxu0
        %v9218 = vadd.f32 0.0, %v9217
        %v9219 = vpop.f32.mrf.mxu0
        %v9220 = vadd.f32 0.0, %v9219
        %9221 = vmatmul.bf16.gmra.mxu0 %v8118
        %v9222 = vpop.f32.mrf.mxu0
        %v9223 = vadd.f32 0.0, %v9222
        %v9224 = vpop.f32.mrf.mxu0
        %v9225 = vadd.f32 0.0, %v9224
        %9226 = vmatmul.bf16.gmra.mxu0 %v8118
        %v9227 = vpop.f32.mrf.mxu0
        %v9228 = vadd.f32 0.0, %v9227
        %v9229 = vpop.f32.mrf.mxu0
        %v9230 = vadd.f32 0.0, %v9229
        %9231 = vdwg.mxu0
        %v9232 = vadd.f32 %v9106, %v9153
        %v9233 = vadd.f32 %v9107, %v9155
        %v9234 = vadd.f32 %v9108, %v9158
        %v9235 = vadd.f32 %v9109, %v9160
        %v9236 = vadd.f32 %v9110, %v9163
        %v9237 = vadd.f32 %v9111, %v9165
        %v9238 = vadd.f32 %v9112, %v9168
        %v9239 = vadd.f32 %v9113, %v9170
        %v9240 = vadd.f32 %v9114, %v9173
        %v9241 = vadd.f32 %v9115, %v9175
        %v9242 = vadd.f32 %v9116, %v9178
        %v9243 = vadd.f32 %v9117, %v9180
        %v9244 = vadd.f32 %v9118, %v9183
        %v9245 = vadd.f32 %v9119, %v9185
        %v9246 = vadd.f32 %v9120, %v9188
        %v9247 = vadd.f32 %v9121, %v9190
        %v9248 = vadd.f32 %v9122, %v9193
        %v9249 = vadd.f32 %v9123, %v9195
        %v9250 = vadd.f32 %v9124, %v9198
        %v9251 = vadd.f32 %v9125, %v9200
        %v9252 = vadd.f32 %v9126, %v9203
        %v9253 = vadd.f32 %v9127, %v9205
        %v9254 = vadd.f32 %v9128, %v9208
        %v9255 = vadd.f32 %v9129, %v9210
        %v9256 = vadd.f32 %v9130, %v9213
        %v9257 = vadd.f32 %v9131, %v9215
        %v9258 = vadd.f32 %v9132, %v9218
        %v9259 = vadd.f32 %v9133, %v9220
        %v9260 = vadd.f32 %v9134, %v9223
        %v9261 = vadd.f32 %v9135, %v9225
        %v9262 = vadd.f32 %v9136, %v9228
        %v9263 = vadd.f32 %v9137, %v9230
        %v9264 = vsel %vm2036, %v1635, 0
        %v9265 = vsel %vm2043, %v1638, 0
        %v9266 = vsel %vm2050, %v1641, 0
        %v9267 = vsel %vm2057, %v1644, 0
        %v9268 = vsel %vm2064, %v1647, 0
        %v9269 = vsel %vm2071, %v1650, 0
        %v9270 = vsel %vm2078, %v1653, 0
        %v9271 = vsel %vm2085, %v1656, 0
        %v9272 = vsel %vm2092, %v1659, 0
        %v9273 = vsel %vm2099, %v1662, 0
        %v9274 = vsel %vm2106, %v1665, 0
        %v9275 = vsel %vm2113, %v1668, 0
        %v9276 = vsel %vm2120, %v2682, 0
        %v9277 = vsel %vm2127, %v2700, 0
        %s9278 = scalar_lea.vmem %s6, 46
        %v9279 = vld [vmem:[%s9278] sm:$0x3]
        %9294 = vrot.lane.b32.xlu0 %v9264, 116
        %v9295 = vpop.permute.xlu0 %9294
        %9296 = vrot.lane.b32.xlu0 %v9265, 116
        %v9297 = vpop.permute.xlu0 %9296
        %9298 = vrot.lane.b32.xlu0 %v9266, 116
        %v9299 = vpop.permute.xlu0 %9298
        %9300 = vrot.lane.b32.xlu0 %v9267, 116
        %v9301 = vpop.permute.xlu0 %9300
        %9302 = vrot.lane.b32.xlu0 %v9268, 116
        %v9303 = vpop.permute.xlu0 %9302
        %9304 = vrot.lane.b32.xlu0 %v9269, 116
        %v9305 = vpop.permute.xlu0 %9304
        %9306 = vrot.lane.b32.xlu0 %v9270, 116
        %v9307 = vpop.permute.xlu0 %9306
        %9308 = vrot.lane.b32.xlu0 %v9271, 116
        %v9309 = vpop.permute.xlu0 %9308
        %9310 = vrot.lane.b32.xlu0 %v9272, 116
        %v9311 = vpop.permute.xlu0 %9310
        %9312 = vrot.lane.b32.xlu0 %v9273, 116
        %v9313 = vpop.permute.xlu0 %9312
        %9314 = vrot.lane.b32.xlu0 %v9274, 116
        %v9315 = vpop.permute.xlu0 %9314
        %9316 = vrot.lane.b32.xlu0 %v9275, 116
        %v9317 = vpop.permute.xlu0 %9316
        %9318 = vrot.lane.b32.xlu0 %v9276, 116
        %v9319 = vpop.permute.xlu0 %9318
        %9320 = vrot.lane.b32.xlu0 %v9277, 116
        %v9321 = vpop.permute.xlu0 %9320
        %v9323 = vsel %vm446, %v9295, 0
        %v9326 = vsel %vm446, %v9297, 0
        %v9329 = vsel %vm446, %v9299, 0
        %v9332 = vsel %vm446, %v9301, 0
        %v9335 = vsel %vm446, %v9303, 0
        %v9338 = vsel %vm446, %v9305, 0
        %v9341 = vsel %vm446, %v9307, 0
        %v9344 = vsel %vm446, %v9309, 0
        %v9347 = vsel %vm446, %v9311, 0
        %v9350 = vsel %vm446, %v9313, 0
        %v9353 = vsel %vm446, %v9315, 0
        %v9356 = vsel %vm446, %v9317, 0
        %v9359 = vsel %vm446, %v9319, 0
        %v9362 = vsel %vm446, %v9321, 0
        %v9365 = vsel %vm495, %v9279, 0
        %9367 = vmatpush.bf16.msra.mxu0 0
        %9368 = vmatpush.bf16.msra.mxu0 0
        %9369 = vmatpush.bf16.msra.mxu0 0
        %9370 = vmatpush.bf16.msra.mxu0 0
        %9371 = vmatpush.bf16.msra.mxu0 0
        %9372 = vmatpush.bf16.msra.mxu0 0
        %9373 = vmatpush.bf16.msra.mxu0 0
        %9374 = vmatpush.bf16.msra.mxu0 %v9365
        %9375 = vmatmul.bf16.gmra.mxu0 %v9323
        %v9376 = vpop.f32.mrf.mxu0
        %v9377 = vadd.f32 0.0, %v9376
        %v9378 = vpop.f32.mrf.mxu0
        %v9379 = vadd.f32 0.0, %v9378
        %9380 = vmatmul.bf16.gmra.mxu0 %v9326
        %v9381 = vpop.f32.mrf.mxu0
        %v9382 = vadd.f32 0.0, %v9381
        %v9383 = vpop.f32.mrf.mxu0
        %v9384 = vadd.f32 0.0, %v9383
        %9385 = vmatmul.bf16.gmra.mxu0 %v9329
        %v9386 = vpop.f32.mrf.mxu0
        %v9387 = vadd.f32 0.0, %v9386
        %v9388 = vpop.f32.mrf.mxu0
        %v9389 = vadd.f32 0.0, %v9388
        %9390 = vmatmul.bf16.gmra.mxu0 %v9332
        %v9391 = vpop.f32.mrf.mxu0
        %v9392 = vadd.f32 0.0, %v9391
        %v9393 = vpop.f32.mrf.mxu0
        %v9394 = vadd.f32 0.0, %v9393
        %9395 = vmatmul.bf16.gmra.mxu0 %v9335
        %v9396 = vpop.f32.mrf.mxu0
        %v9397 = vadd.f32 0.0, %v9396
        %v9398 = vpop.f32.mrf.mxu0
        %v9399 = vadd.f32 0.0, %v9398
        %9400 = vmatmul.bf16.gmra.mxu0 %v9338
        %v9401 = vpop.f32.mrf.mxu0
        %v9402 = vadd.f32 0.0, %v9401
        %v9403 = vpop.f32.mrf.mxu0
        %v9404 = vadd.f32 0.0, %v9403
        %9405 = vmatmul.bf16.gmra.mxu0 %v9341
        %v9406 = vpop.f32.mrf.mxu0
        %v9407 = vadd.f32 0.0, %v9406
        %v9408 = vpop.f32.mrf.mxu0
        %v9409 = vadd.f32 0.0, %v9408
        %9410 = vmatmul.bf16.gmra.mxu0 %v9344
        %v9411 = vpop.f32.mrf.mxu0
        %v9412 = vadd.f32 0.0, %v9411
        %v9413 = vpop.f32.mrf.mxu0
        %v9414 = vadd.f32 0.0, %v9413
        %9415 = vmatmul.bf16.gmra.mxu0 %v9347
        %v9416 = vpop.f32.mrf.mxu0
        %v9417 = vadd.f32 0.0, %v9416
        %v9418 = vpop.f32.mrf.mxu0
        %v9419 = vadd.f32 0.0, %v9418
        %9420 = vmatmul.bf16.gmra.mxu0 %v9350
        %v9421 = vpop.f32.mrf.mxu0
        %v9422 = vadd.f32 0.0, %v9421
        %v9423 = vpop.f32.mrf.mxu0
        %v9424 = vadd.f32 0.0, %v9423
        %9425 = vmatmul.bf16.gmra.mxu0 %v9353
        %v9426 = vpop.f32.mrf.mxu0
        %v9427 = vadd.f32 0.0, %v9426
        %v9428 = vpop.f32.mrf.mxu0
        %v9429 = vadd.f32 0.0, %v9428
        %9430 = vmatmul.bf16.gmra.mxu0 %v9356
        %v9431 = vpop.f32.mrf.mxu0
        %v9432 = vadd.f32 0.0, %v9431
        %v9433 = vpop.f32.mrf.mxu0
        %v9434 = vadd.f32 0.0, %v9433
        %9435 = vmatmul.bf16.gmra.mxu0 %v9359
        %v9436 = vpop.f32.mrf.mxu0
        %v9437 = vadd.f32 0.0, %v9436
        %v9438 = vpop.f32.mrf.mxu0
        %v9439 = vadd.f32 0.0, %v9438
        %9440 = vmatmul.bf16.gmra.mxu0 %v9362
        %v9441 = vpop.f32.mrf.mxu0
        %v9442 = vadd.f32 0.0, %v9441
        %v9443 = vpop.f32.mrf.mxu0
        %v9444 = vadd.f32 0.0, %v9443
        %9445 = vmatmul.bf16.gmra.mxu0 %v8118
        %v9446 = vpop.f32.mrf.mxu0
        %v9447 = vadd.f32 0.0, %v9446
        %v9448 = vpop.f32.mrf.mxu0
        %v9449 = vadd.f32 0.0, %v9448
        %9450 = vmatmul.bf16.gmra.mxu0 %v8118
        %v9451 = vpop.f32.mrf.mxu0
        %v9452 = vadd.f32 0.0, %v9451
        %v9453 = vpop.f32.mrf.mxu0
        %v9454 = vadd.f32 0.0, %v9453
        %9455 = vdwg.mxu0
        %v9456 = vadd.f32 %v9232, %v9377
        %v9457 = vadd.f32 %v9233, %v9379
        %v9458 = vadd.f32 %v9234, %v9382
        %v9459 = vadd.f32 %v9235, %v9384
        %v9460 = vadd.f32 %v9236, %v9387
        %v9461 = vadd.f32 %v9237, %v9389
        %v9462 = vadd.f32 %v9238, %v9392
        %v9463 = vadd.f32 %v9239, %v9394
        %v9464 = vadd.f32 %v9240, %v9397
        %v9465 = vadd.f32 %v9241, %v9399
        %v9466 = vadd.f32 %v9242, %v9402
        %v9467 = vadd.f32 %v9243, %v9404
        %v9468 = vadd.f32 %v9244, %v9407
        %v9469 = vadd.f32 %v9245, %v9409
        %v9470 = vadd.f32 %v9246, %v9412
        %v9471 = vadd.f32 %v9247, %v9414
        %v9472 = vadd.f32 %v9248, %v9417
        %v9473 = vadd.f32 %v9249, %v9419
        %v9474 = vadd.f32 %v9250, %v9422
        %v9475 = vadd.f32 %v9251, %v9424
        %v9476 = vadd.f32 %v9252, %v9427
        %v9477 = vadd.f32 %v9253, %v9429
        %v9478 = vadd.f32 %v9254, %v9432
        %v9479 = vadd.f32 %v9255, %v9434
        %v9480 = vadd.f32 %v9256, %v9437
        %v9481 = vadd.f32 %v9257, %v9439
        %v9482 = vadd.f32 %v9258, %v9442
        %v9483 = vadd.f32 %v9259, %v9444
        %v9484 = vadd.f32 %v9260, %v9447
        %v9485 = vadd.f32 %v9261, %v9449
        %v9486 = vadd.f32 %v9262, %v9452
        %v9487 = vadd.f32 %v9263, %v9454
        %v9488 = vsel %vm6431, %v5028, 0
        %v9489 = vsel %vm5402, %v5030, 0
        %v9490 = vsel %vm5409, %v5032, 0
        %v9491 = vsel %vm5416, %v5034, 0
        %v9492 = vsel %vm5423, %v5036, 0
        %v9493 = vsel %vm5430, %v5038, 0
        %v9494 = vsel %vm5437, %v5040, 0
        %v9495 = vsel %vm5444, %v5042, 0
        %v9496 = vsel %vm5451, %v5044, 0
        %v9497 = vsel %vm5458, %v5046, 0
        %v9498 = vsel %vm5465, %v5048, 0
        %v9499 = vsel %vm5472, %v6409, 0
        %v9500 = vsel %vm5479, %v7362, 0
        %v9501 = vsel %vm5486, %v7379, 0
        %s9502 = scalar_lea.vmem %s6, 48
        %v9503 = vld [vmem:[%s9502] sm:$0x3]
        %9518 = vrot.lane.b32.xlu0 %v9488, 116
        %v9519 = vpop.permute.xlu0 %9518
        %9520 = vrot.lane.b32.xlu0 %v9489, 116
        %v9521 = vpop.permute.xlu0 %9520
        %9522 = vrot.lane.b32.xlu0 %v9490, 116
        %v9523 = vpop.permute.xlu0 %9522
        %9524 = vrot.lane.b32.xlu0 %v9491, 116
        %v9525 = vpop.permute.xlu0 %9524
        %9526 = vrot.lane.b32.xlu0 %v9492, 116
        %v9527 = vpop.permute.xlu0 %9526
        %9528 = vrot.lane.b32.xlu0 %v9493, 116
        %v9529 = vpop.permute.xlu0 %9528
        %9530 = vrot.lane.b32.xlu0 %v9494, 116
        %v9531 = vpop.permute.xlu0 %9530
        %9532 = vrot.lane.b32.xlu0 %v9495, 116
        %v9533 = vpop.permute.xlu0 %9532
        %9534 = vrot.lane.b32.xlu0 %v9496, 116
        %v9535 = vpop.permute.xlu0 %9534
        %9536 = vrot.lane.b32.xlu0 %v9497, 116
        %v9537 = vpop.permute.xlu0 %9536
        %9538 = vrot.lane.b32.xlu0 %v9498, 116
        %v9539 = vpop.permute.xlu0 %9538
        %9540 = vrot.lane.b32.xlu0 %v9499, 116
        %v9541 = vpop.permute.xlu0 %9540
        %9542 = vrot.lane.b32.xlu0 %v9500, 116
        %v9543 = vpop.permute.xlu0 %9542
        %9544 = vrot.lane.b32.xlu0 %v9501, 116
        %v9545 = vpop.permute.xlu0 %9544
        %v9547 = vsel %vm446, %v9519, 0
        %v9550 = vsel %vm446, %v9521, 0
        %v9553 = vsel %vm446, %v9523, 0
        %v9556 = vsel %vm446, %v9525, 0
        %v9559 = vsel %vm446, %v9527, 0
        %v9562 = vsel %vm446, %v9529, 0
        %v9565 = vsel %vm446, %v9531, 0
        %v9568 = vsel %vm446, %v9533, 0
        %v9571 = vsel %vm446, %v9535, 0
        %v9574 = vsel %vm446, %v9537, 0
        %v9577 = vsel %vm446, %v9539, 0
        %v9580 = vsel %vm446, %v9541, 0
        %v9583 = vsel %vm446, %v9543, 0
        %v9586 = vsel %vm446, %v9545, 0
        %v9589 = vsel %vm495, %v9503, 0
        %9591 = vmatpush.bf16.msra.mxu0 0
        %9592 = vmatpush.bf16.msra.mxu0 0
        %9593 = vmatpush.bf16.msra.mxu0 0
        %9594 = vmatpush.bf16.msra.mxu0 0
        %9595 = vmatpush.bf16.msra.mxu0 0
        %9596 = vmatpush.bf16.msra.mxu0 0
        %9597 = vmatpush.bf16.msra.mxu0 0
        %9598 = vmatpush.bf16.msra.mxu0 %v9589
        %9599 = vmatmul.bf16.gmra.mxu0 %v9547
        %v9600 = vpop.f32.mrf.mxu0
        %v9601 = vadd.f32 0.0, %v9600
        %v9602 = vpop.f32.mrf.mxu0
        %v9603 = vadd.f32 0.0, %v9602
        %9604 = vmatmul.bf16.gmra.mxu0 %v9550
        %v9605 = vpop.f32.mrf.mxu0
        %v9606 = vadd.f32 0.0, %v9605
        %v9607 = vpop.f32.mrf.mxu0
        %v9608 = vadd.f32 0.0, %v9607
        %9609 = vmatmul.bf16.gmra.mxu0 %v9553
        %v9610 = vpop.f32.mrf.mxu0
        %v9611 = vadd.f32 0.0, %v9610
        %v9612 = vpop.f32.mrf.mxu0
        %v9613 = vadd.f32 0.0, %v9612
        %9614 = vmatmul.bf16.gmra.mxu0 %v9556
        %v9615 = vpop.f32.mrf.mxu0
        %v9616 = vadd.f32 0.0, %v9615
        %v9617 = vpop.f32.mrf.mxu0
        %v9618 = vadd.f32 0.0, %v9617
        %9619 = vmatmul.bf16.gmra.mxu0 %v9559
        %v9620 = vpop.f32.mrf.mxu0
        %v9621 = vadd.f32 0.0, %v9620
        %v9622 = vpop.f32.mrf.mxu0
        %v9623 = vadd.f32 0.0, %v9622
        %9624 = vmatmul.bf16.gmra.mxu0 %v9562
        %v9625 = vpop.f32.mrf.mxu0
        %v9626 = vadd.f32 0.0, %v9625
        %v9627 = vpop.f32.mrf.mxu0
        %v9628 = vadd.f32 0.0, %v9627
        %9629 = vmatmul.bf16.gmra.mxu0 %v9565
        %v9630 = vpop.f32.mrf.mxu0
        %v9631 = vadd.f32 0.0, %v9630
        %v9632 = vpop.f32.mrf.mxu0
        %v9633 = vadd.f32 0.0, %v9632
        %9634 = vmatmul.bf16.gmra.mxu0 %v9568
        %v9635 = vpop.f32.mrf.mxu0
        %v9636 = vadd.f32 0.0, %v9635
        %v9637 = vpop.f32.mrf.mxu0
        %v9638 = vadd.f32 0.0, %v9637
        %9639 = vmatmul.bf16.gmra.mxu0 %v9571
        %v9640 = vpop.f32.mrf.mxu0
        %v9641 = vadd.f32 0.0, %v9640
        %v9642 = vpop.f32.mrf.mxu0
        %v9643 = vadd.f32 0.0, %v9642
        %9644 = vmatmul.bf16.gmra.mxu0 %v9574
        %v9645 = vpop.f32.mrf.mxu0
        %v9646 = vadd.f32 0.0, %v9645
        %v9647 = vpop.f32.mrf.mxu0
        %v9648 = vadd.f32 0.0, %v9647
        %9649 = vmatmul.bf16.gmra.mxu0 %v9577
        %v9650 = vpop.f32.mrf.mxu0
        %v9651 = vadd.f32 0.0, %v9650
        %v9652 = vpop.f32.mrf.mxu0
        %v9653 = vadd.f32 0.0, %v9652
        %9654 = vmatmul.bf16.gmra.mxu0 %v9580
        %v9655 = vpop.f32.mrf.mxu0
        %v9656 = vadd.f32 0.0, %v9655
        %v9657 = vpop.f32.mrf.mxu0
        %v9658 = vadd.f32 0.0, %v9657
        %9659 = vmatmul.bf16.gmra.mxu0 %v9583
        %v9660 = vpop.f32.mrf.mxu0
        %v9661 = vadd.f32 0.0, %v9660
        %v9662 = vpop.f32.mrf.mxu0
        %v9663 = vadd.f32 0.0, %v9662
        %9664 = vmatmul.bf16.gmra.mxu0 %v9586
        %v9665 = vpop.f32.mrf.mxu0
        %v9666 = vadd.f32 0.0, %v9665
        %v9667 = vpop.f32.mrf.mxu0
        %v9668 = vadd.f32 0.0, %v9667
        %9669 = vmatmul.bf16.gmra.mxu0 %v8118
        %v9670 = vpop.f32.mrf.mxu0
        %v9671 = vadd.f32 0.0, %v9670
        %v9672 = vpop.f32.mrf.mxu0
        %v9673 = vadd.f32 0.0, %v9672
        %9674 = vmatmul.bf16.gmra.mxu0 %v8118
        %v9675 = vpop.f32.mrf.mxu0
        %v9676 = vadd.f32 0.0, %v9675
        %v9677 = vpop.f32.mrf.mxu0
        %v9678 = vadd.f32 0.0, %v9677
        %9679 = vdwg.mxu0
        %v9680 = vadd.f32 %v9456, %v9601
        %v9681 = vadd.f32 %v9457, %v9603
        %v9682 = vadd.f32 %v9458, %v9606
        %v9683 = vadd.f32 %v9459, %v9608
        %v9684 = vadd.f32 %v9460, %v9611
        %v9685 = vadd.f32 %v9461, %v9613
        %v9686 = vadd.f32 %v9462, %v9616
        %v9687 = vadd.f32 %v9463, %v9618
        %v9688 = vadd.f32 %v9464, %v9621
        %v9689 = vadd.f32 %v9465, %v9623
        %v9690 = vadd.f32 %v9466, %v9626
        %v9691 = vadd.f32 %v9467, %v9628
        %v9692 = vadd.f32 %v9468, %v9631
        %v9693 = vadd.f32 %v9469, %v9633
        %v9694 = vadd.f32 %v9470, %v9636
        %v9695 = vadd.f32 %v9471, %v9638
        %v9696 = vadd.f32 %v9472, %v9641
        %v9697 = vadd.f32 %v9473, %v9643
        %v9698 = vadd.f32 %v9474, %v9646
        %v9699 = vadd.f32 %v9475, %v9648
        %v9700 = vadd.f32 %v9476, %v9651
        %v9701 = vadd.f32 %v9477, %v9653
        %v9702 = vadd.f32 %v9478, %v9656
        %v9703 = vadd.f32 %v9479, %v9658
        %v9704 = vadd.f32 %v9480, %v9661
        %v9705 = vadd.f32 %v9481, %v9663
        %v9706 = vadd.f32 %v9482, %v9666
        %v9707 = vadd.f32 %v9483, %v9668
        %v9708 = vadd.f32 %v9484, %v9671
        %v9709 = vadd.f32 %v9485, %v9673
        %v9710 = vadd.f32 %v9486, %v9676
        %v9711 = vadd.f32 %v9487, %v9678
        %v9712 = vld [vmem:[%s7] sm:$0x1]
        %v9714 = vperm.slane %v9712, 0
        %v9716 = vadd.f32 %v9680, %v9714
        %v9717 = vadd.f32 %v9681, %v9714
        %v9718 = vadd.f32 %v9682, %v9714
        %v9719 = vadd.f32 %v9683, %v9714
        %v9720 = vadd.f32 %v9684, %v9714
        %v9721 = vadd.f32 %v9685, %v9714
        %v9722 = vadd.f32 %v9686, %v9714
        %v9723 = vadd.f32 %v9687, %v9714
        %v9724 = vadd.f32 %v9688, %v9714
        %v9725 = vadd.f32 %v9689, %v9714
        %v9726 = vadd.f32 %v9690, %v9714
        %v9727 = vadd.f32 %v9691, %v9714
        %v9728 = vadd.f32 %v9692, %v9714
        %v9729 = vadd.f32 %v9693, %v9714
        %v9730 = vadd.f32 %v9694, %v9714
        %v9731 = vadd.f32 %v9695, %v9714
        %v9732 = vadd.f32 %v9696, %v9714
        %v9733 = vadd.f32 %v9697, %v9714
        %v9734 = vadd.f32 %v9698, %v9714
        %v9735 = vadd.f32 %v9699, %v9714
        %v9736 = vadd.f32 %v9700, %v9714
        %v9737 = vadd.f32 %v9701, %v9714
        %v9738 = vadd.f32 %v9702, %v9714
        %v9739 = vadd.f32 %v9703, %v9714
        %v9740 = vadd.f32 %v9704, %v9714
        %v9741 = vadd.f32 %v9705, %v9714
        %v9742 = vadd.f32 %v9706, %v9714
        %v9743 = vadd.f32 %v9707, %v9714
        %v9744 = vadd.f32 %v9708, %v9714
        %v9745 = vadd.f32 %v9709, %v9714
        %v9746 = vadd.f32 %v9710, %v9714
        %v9747 = vadd.f32 %v9711, %v9714
        %v9748 = vmax.f32 %v9716, 0.0
        %v9749 = vmax.f32 %v9717, 0.0
        %v9750 = vmax.f32 %v9718, 0.0
        %v9751 = vmax.f32 %v9719, 0.0
        %v9752 = vmax.f32 %v9720, 0.0
        %v9753 = vmax.f32 %v9721, 0.0
        %v9754 = vmax.f32 %v9722, 0.0
        %v9755 = vmax.f32 %v9723, 0.0
        %v9756 = vmax.f32 %v9724, 0.0
        %v9757 = vmax.f32 %v9725, 0.0
        %v9758 = vmax.f32 %v9726, 0.0
        %v9759 = vmax.f32 %v9727, 0.0
        %v9760 = vmax.f32 %v9728, 0.0
        %v9761 = vmax.f32 %v9729, 0.0
        %v9762 = vmax.f32 %v9730, 0.0
        %v9763 = vmax.f32 %v9731, 0.0
        %v9764 = vmax.f32 %v9732, 0.0
        %v9765 = vmax.f32 %v9733, 0.0
        %v9766 = vmax.f32 %v9734, 0.0
        %v9767 = vmax.f32 %v9735, 0.0
        %v9768 = vmax.f32 %v9736, 0.0
        %v9769 = vmax.f32 %v9737, 0.0
        %v9770 = vmax.f32 %v9738, 0.0
        %v9771 = vmax.f32 %v9739, 0.0
        %v9772 = vmax.f32 %v9740, 0.0
        %v9773 = vmax.f32 %v9741, 0.0
        %v9774 = vmax.f32 %v9742, 0.0
        %v9775 = vmax.f32 %v9743, 0.0
        %v9776 = vmax.f32 %v9744, 0.0
        %v9777 = vmax.f32 %v9745, 0.0
        %v9778 = vmax.f32 %v9746, 0.0
        %v9779 = vmax.f32 %v9747, 0.0
        %v9780 = vmax.f32 %v393, %v395
        %v9781 = vmax.f32 %v394, %v396
        %v9782 = vmax.f32 %v395, %v397
        %v9783 = vmax.f32 %v396, %v398
        %v9784 = vmax.f32 %v397, %v399
        %v9785 = vmax.f32 %v398, %v400
        %v9786 = vmax.f32 %v399, %v401
        %v9787 = vmax.f32 %v400, %v402
        %v9788 = vmax.f32 %v401, %v403
        %v9789 = vmax.f32 %v402, %v404
        %v9790 = vmax.f32 %v403, %v405
        %v9791 = vmax.f32 %v404, %v406
        %v9792 = vmax.f32 %v405, %v407
        %v9793 = vmax.f32 %v406, %v408
        %v9794 = vmax.f32 %v407, %v409
        %v9795 = vmax.f32 %v408, %v410
        %v9796 = vmax.f32 %v409, %v411
        %v9797 = vmax.f32 %v410, %v412
        %v9798 = vmax.f32 %v411, %v413
        %v9799 = vmax.f32 %v412, %v414
        %v9800 = vmax.f32 %v413, %v415
        %v9801 = vmax.f32 %v414, %v416
        %v9802 = vmax.f32 %v415, %v417
        %v9803 = vmax.f32 %v416, %v418
        %v9804 = vmax.f32 %v417, %v419
        %v9805 = vmax.f32 %v418, %v420
        %v9806 = vmax.f32 %v419, %v421
        %v9807 = vmax.f32 %v420, %v422
        %v9808 = vmax.f32 %v421, %v423
        %v9809 = vmax.f32 %v422, %v424
        %v9810 = vmax.f32 %v423, -1e+30
        %v9811 = vmax.f32 %v424, -1e+30
        %v9812 = vmax.f32 %v9780, -1e+30
        %v9813 = vmax.f32 %v9781, -1e+30
        %v9814 = vmax.f32 %v9782, %v393
        %v9815 = vmax.f32 %v9783, %v394
        %v9816 = vmax.f32 %v9784, %v395
        %v9817 = vmax.f32 %v9785, %v396
        %v9818 = vmax.f32 %v9786, %v397
        %v9819 = vmax.f32 %v9787, %v398
        %v9820 = vmax.f32 %v9788, %v399
        %v9821 = vmax.f32 %v9789, %v400
        %v9822 = vmax.f32 %v9790, %v401
        %v9823 = vmax.f32 %v9791, %v402
        %v9824 = vmax.f32 %v9792, %v403
        %v9825 = vmax.f32 %v9793, %v404
        %v9826 = vmax.f32 %v9794, %v405
        %v9827 = vmax.f32 %v9795, %v406
        %v9828 = vmax.f32 %v9796, %v407
        %v9829 = vmax.f32 %v9797, %v408
        %v9830 = vmax.f32 %v9798, %v409
        %v9831 = vmax.f32 %v9799, %v410
        %v9832 = vmax.f32 %v9800, %v411
        %v9833 = vmax.f32 %v9801, %v412
        %v9834 = vmax.f32 %v9802, %v413
        %v9835 = vmax.f32 %v9803, %v414
        %v9836 = vmax.f32 %v9804, %v415
        %v9837 = vmax.f32 %v9805, %v416
        %v9838 = vmax.f32 %v9806, %v417
        %v9839 = vmax.f32 %v9807, %v418
        %v9840 = vmax.f32 %v9808, %v419
        %v9841 = vmax.f32 %v9809, %v420
        %v9842 = vmax.f32 %v9810, %v421
        %v9843 = vmax.f32 %v9811, %v422
        %vm9844 = vcmp.eq.s32.totalorder %v361, 15
        %vm9845 = vcmp.eq.s32.totalorder %v362, 15
        %vm9846 = vcmp.eq.s32.totalorder %v363, 15
        %vm9847 = vcmp.eq.s32.totalorder %v364, 15
        %vm9848 = vcmp.eq.s32.totalorder %v365, 15
        %vm9849 = vcmp.eq.s32.totalorder %v366, 15
        %vm9850 = vcmp.eq.s32.totalorder %v367, 15
        %vm9851 = vcmp.eq.s32.totalorder %v368, 15
        %vm9852 = vcmp.eq.s32.totalorder %v369, 15
        %vm9853 = vcmp.eq.s32.totalorder %v370, 15
        %vm9854 = vcmp.eq.s32.totalorder %v371, 15
        %vm9855 = vcmp.eq.s32.totalorder %v372, 15
        %vm9856 = vcmp.eq.s32.totalorder %v373, 15
        %vm9857 = vcmp.eq.s32.totalorder %v374, 15
        %vm9858 = vcmp.eq.s32.totalorder %v375, 15
        %vm9859 = vcmp.eq.s32.totalorder %v376, 15
        %vm9860 = vcmp.eq.s32.totalorder %v377, 15
        %vm9861 = vcmp.eq.s32.totalorder %v378, 15
        %vm9862 = vcmp.eq.s32.totalorder %v379, 15
        %vm9863 = vcmp.eq.s32.totalorder %v380, 15
        %vm9864 = vcmp.eq.s32.totalorder %v381, 15
        %vm9865 = vcmp.eq.s32.totalorder %v382, 15
        %vm9866 = vcmp.eq.s32.totalorder %v383, 15
        %vm9867 = vcmp.eq.s32.totalorder %v384, 15
        %vm9868 = vcmp.eq.s32.totalorder %v385, 15
        %vm9869 = vcmp.eq.s32.totalorder %v386, 15
        %vm9870 = vcmp.eq.s32.totalorder %v387, 15
        %vm9871 = vcmp.eq.s32.totalorder %v388, 15
        %vm9872 = vcmp.eq.s32.totalorder %v389, 15
        %vm9873 = vcmp.eq.s32.totalorder %v390, 15
        %vm9874 = vcmp.eq.s32.totalorder %v391, 15
        %vm9875 = vcmp.eq.s32.totalorder %v392, 15
        %v9908 = vrot.slane %v9812, 1
        %v9909 = vrot.slane %v9813, 1
        %v9910 = vsel %vm5095, %v9908, %v9909
        %v9911 = vrot.slane %v9814, 1
        %v9912 = vsel %vm5095, %v9909, %v9911
        %v9913 = vrot.slane %v9815, 1
        %v9914 = vsel %vm5095, %v9911, %v9913
        %v9915 = vrot.slane %v9816, 1
        %v9916 = vsel %vm5095, %v9913, %v9915
        %v9917 = vrot.slane %v9817, 1
        %v9918 = vsel %vm5095, %v9915, %v9917
        %v9919 = vrot.slane %v9818, 1
        %v9920 = vsel %vm5095, %v9917, %v9919
        %v9921 = vrot.slane %v9819, 1
        %v9922 = vsel %vm5095, %v9919, %v9921
        %v9923 = vrot.slane %v9820, 1
        %v9924 = vsel %vm5095, %v9921, %v9923
        %v9925 = vrot.slane %v9821, 1
        %v9926 = vsel %vm5095, %v9923, %v9925
        %v9927 = vrot.slane %v9822, 1
        %v9928 = vsel %vm5095, %v9925, %v9927
        %v9929 = vrot.slane %v9823, 1
        %v9930 = vsel %vm5095, %v9927, %v9929
        %v9931 = vrot.slane %v9824, 1
        %v9932 = vsel %vm5095, %v9929, %v9931
        %v9933 = vrot.slane %v9825, 1
        %v9934 = vsel %vm5095, %v9931, %v9933
        %v9935 = vrot.slane %v9826, 1
        %v9936 = vsel %vm5095, %v9933, %v9935
        %v9937 = vrot.slane %v9827, 1
        %v9938 = vsel %vm5095, %v9935, %v9937
        %v9939 = vrot.slane %v9828, 1
        %v9940 = vsel %vm5095, %v9937, %v9939
        %v9941 = vrot.slane %v9829, 1
        %v9942 = vsel %vm5095, %v9939, %v9941
        %v9943 = vrot.slane %v9830, 1
        %v9944 = vsel %vm5095, %v9941, %v9943
        %v9945 = vrot.slane %v9831, 1
        %v9946 = vsel %vm5095, %v9943, %v9945
        %v9947 = vrot.slane %v9832, 1
        %v9948 = vsel %vm5095, %v9945, %v9947
        %v9949 = vrot.slane %v9833, 1
        %v9950 = vsel %vm5095, %v9947, %v9949
        %v9951 = vrot.slane %v9834, 1
        %v9952 = vsel %vm5095, %v9949, %v9951
        %v9953 = vrot.slane %v9835, 1
        %v9954 = vsel %vm5095, %v9951, %v9953
        %v9955 = vrot.slane %v9836, 1
        %v9956 = vsel %vm5095, %v9953, %v9955
        %v9957 = vrot.slane %v9837, 1
        %v9958 = vsel %vm5095, %v9955, %v9957
        %v9959 = vrot.slane %v9838, 1
        %v9960 = vsel %vm5095, %v9957, %v9959
        %v9961 = vrot.slane %v9839, 1
        %v9962 = vsel %vm5095, %v9959, %v9961
        %v9963 = vrot.slane %v9840, 1
        %v9964 = vsel %vm5095, %v9961, %v9963
        %v9965 = vrot.slane %v9841, 1
        %v9966 = vsel %vm5095, %v9963, %v9965
        %v9967 = vrot.slane %v9842, 1
        %v9968 = vsel %vm5095, %v9965, %v9967
        %v9969 = vrot.slane %v9843, 1
        %v9970 = vsel %vm5095, %v9967, %v9969
        %v10003 = vsel %vm5095, %v9969, -1e+30
        %v10004 = vsel %vm9844, 1, 0
        %v10005 = vsel %vm9845, 1, 0
        %v10006 = vsel %vm9846, 1, 0
        %v10007 = vsel %vm9847, 1, 0
        %v10008 = vsel %vm9848, 1, 0
        %v10009 = vsel %vm9849, 1, 0
        %v10010 = vsel %vm9850, 1, 0
        %v10011 = vsel %vm9851, 1, 0
        %v10012 = vsel %vm9852, 1, 0
        %v10013 = vsel %vm9853, 1, 0
        %v10014 = vsel %vm9854, 1, 0
        %v10015 = vsel %vm9855, 1, 0
        %v10016 = vsel %vm9856, 1, 0
        %v10017 = vsel %vm9857, 1, 0
        %v10018 = vsel %vm9858, 1, 0
        %v10019 = vsel %vm9859, 1, 0
        %v10020 = vsel %vm9860, 1, 0
        %v10021 = vsel %vm9861, 1, 0
        %v10022 = vsel %vm9862, 1, 0
        %v10023 = vsel %vm9863, 1, 0
        %v10024 = vsel %vm9864, 1, 0
        %v10025 = vsel %vm9865, 1, 0
        %v10026 = vsel %vm9866, 1, 0
        %v10027 = vsel %vm9867, 1, 0
        %v10028 = vsel %vm9868, 1, 0
        %v10029 = vsel %vm9869, 1, 0
        %v10030 = vsel %vm9870, 1, 0
        %v10031 = vsel %vm9871, 1, 0
        %v10032 = vsel %vm9872, 1, 0
        %v10033 = vsel %vm9873, 1, 0
        %v10034 = vsel %vm9874, 1, 0
        %v10035 = vsel %vm9875, 1, 0
        %10036 = vset.pattern.permute.xlu0 0
        %10037 = vperm.xlu0 %10036, %v10004
        %v10038 = vpop.permute.xlu0 %10037
        %10039 = vset.pattern.permute.xlu0 0
        %10040 = vperm.xlu0 %10039, %v10005
        %v10041 = vpop.permute.xlu0 %10040
        %10042 = vset.pattern.permute.xlu0 0
        %10043 = vperm.xlu0 %10042, %v10006
        %v10044 = vpop.permute.xlu0 %10043
        %10045 = vset.pattern.permute.xlu0 0
        %10046 = vperm.xlu0 %10045, %v10007
        %v10047 = vpop.permute.xlu0 %10046
        %10048 = vset.pattern.permute.xlu0 0
        %10049 = vperm.xlu0 %10048, %v10008
        %v10050 = vpop.permute.xlu0 %10049
        %10051 = vset.pattern.permute.xlu0 0
        %10052 = vperm.xlu0 %10051, %v10009
        %v10053 = vpop.permute.xlu0 %10052
        %10054 = vset.pattern.permute.xlu0 0
        %10055 = vperm.xlu0 %10054, %v10010
        %v10056 = vpop.permute.xlu0 %10055
        %10057 = vset.pattern.permute.xlu0 0
        %10058 = vperm.xlu0 %10057, %v10011
        %v10059 = vpop.permute.xlu0 %10058
        %10060 = vset.pattern.permute.xlu0 0
        %10061 = vperm.xlu0 %10060, %v10012
        %v10062 = vpop.permute.xlu0 %10061
        %10063 = vset.pattern.permute.xlu0 0
        %10064 = vperm.xlu0 %10063, %v10013
        %v10065 = vpop.permute.xlu0 %10064
        %10066 = vset.pattern.permute.xlu0 0
        %10067 = vperm.xlu0 %10066, %v10014
        %v10068 = vpop.permute.xlu0 %10067
        %10069 = vset.pattern.permute.xlu0 0
        %10070 = vperm.xlu0 %10069, %v10015
        %v10071 = vpop.permute.xlu0 %10070
        %10072 = vset.pattern.permute.xlu0 0
        %10073 = vperm.xlu0 %10072, %v10016
        %v10074 = vpop.permute.xlu0 %10073
        %10075 = vset.pattern.permute.xlu0 0
        %10076 = vperm.xlu0 %10075, %v10017
        %v10077 = vpop.permute.xlu0 %10076
        %10078 = vset.pattern.permute.xlu0 0
        %10079 = vperm.xlu0 %10078, %v10018
        %v10080 = vpop.permute.xlu0 %10079
        %10081 = vset.pattern.permute.xlu0 0
        %10082 = vperm.xlu0 %10081, %v10019
        %v10083 = vpop.permute.xlu0 %10082
        %10084 = vset.pattern.permute.xlu0 0
        %10085 = vperm.xlu0 %10084, %v10020
        %v10086 = vpop.permute.xlu0 %10085
        %10087 = vset.pattern.permute.xlu0 0
        %10088 = vperm.xlu0 %10087, %v10021
        %v10089 = vpop.permute.xlu0 %10088
        %10090 = vset.pattern.permute.xlu0 0
        %10091 = vperm.xlu0 %10090, %v10022
        %v10092 = vpop.permute.xlu0 %10091
        %10093 = vset.pattern.permute.xlu0 0
        %10094 = vperm.xlu0 %10093, %v10023
        %v10095 = vpop.permute.xlu0 %10094
        %10096 = vset.pattern.permute.xlu0 0
        %10097 = vperm.xlu0 %10096, %v10024
        %v10098 = vpop.permute.xlu0 %10097
        %10099 = vset.pattern.permute.xlu0 0
        %10100 = vperm.xlu0 %10099, %v10025
        %v10101 = vpop.permute.xlu0 %10100
        %10102 = vset.pattern.permute.xlu0 0
        %10103 = vperm.xlu0 %10102, %v10026
        %v10104 = vpop.permute.xlu0 %10103
        %10105 = vset.pattern.permute.xlu0 0
        %10106 = vperm.xlu0 %10105, %v10027
        %v10107 = vpop.permute.xlu0 %10106
        %10108 = vset.pattern.permute.xlu0 0
        %10109 = vperm.xlu0 %10108, %v10028
        %v10110 = vpop.permute.xlu0 %10109
        %10111 = vset.pattern.permute.xlu0 0
        %10112 = vperm.xlu0 %10111, %v10029
        %v10113 = vpop.permute.xlu0 %10112
        %10114 = vset.pattern.permute.xlu0 0
        %10115 = vperm.xlu0 %10114, %v10030
        %v10116 = vpop.permute.xlu0 %10115
        %10117 = vset.pattern.permute.xlu0 0
        %10118 = vperm.xlu0 %10117, %v10031
        %v10119 = vpop.permute.xlu0 %10118
        %10120 = vset.pattern.permute.xlu0 0
        %10121 = vperm.xlu0 %10120, %v10032
        %v10122 = vpop.permute.xlu0 %10121
        %10123 = vset.pattern.permute.xlu0 0
        %10124 = vperm.xlu0 %10123, %v10033
        %v10125 = vpop.permute.xlu0 %10124
        %10126 = vset.pattern.permute.xlu0 0
        %10127 = vperm.xlu0 %10126, %v10034
        %v10128 = vpop.permute.xlu0 %10127
        %10129 = vset.pattern.permute.xlu0 0
        %10130 = vperm.xlu0 %10129, %v10035
        %v10131 = vpop.permute.xlu0 %10130
        %vm10132 = vcmp.eq.s32.totalorder %v10038, 1
        %vm10133 = vcmp.eq.s32.totalorder %v10041, 1
        %vm10134 = vcmp.eq.s32.totalorder %v10044, 1
        %vm10135 = vcmp.eq.s32.totalorder %v10047, 1
        %vm10136 = vcmp.eq.s32.totalorder %v10050, 1
        %vm10137 = vcmp.eq.s32.totalorder %v10053, 1
        %vm10138 = vcmp.eq.s32.totalorder %v10056, 1
        %vm10139 = vcmp.eq.s32.totalorder %v10059, 1
        %vm10140 = vcmp.eq.s32.totalorder %v10062, 1
        %vm10141 = vcmp.eq.s32.totalorder %v10065, 1
        %vm10142 = vcmp.eq.s32.totalorder %v10068, 1
        %vm10143 = vcmp.eq.s32.totalorder %v10071, 1
        %vm10144 = vcmp.eq.s32.totalorder %v10074, 1
        %vm10145 = vcmp.eq.s32.totalorder %v10077, 1
        %vm10146 = vcmp.eq.s32.totalorder %v10080, 1
        %vm10147 = vcmp.eq.s32.totalorder %v10083, 1
        %vm10148 = vcmp.eq.s32.totalorder %v10086, 1
        %vm10149 = vcmp.eq.s32.totalorder %v10089, 1
        %vm10150 = vcmp.eq.s32.totalorder %v10092, 1
        %vm10151 = vcmp.eq.s32.totalorder %v10095, 1
        %vm10152 = vcmp.eq.s32.totalorder %v10098, 1
        %vm10153 = vcmp.eq.s32.totalorder %v10101, 1
        %vm10154 = vcmp.eq.s32.totalorder %v10104, 1
        %vm10155 = vcmp.eq.s32.totalorder %v10107, 1
        %vm10156 = vcmp.eq.s32.totalorder %v10110, 1
        %vm10157 = vcmp.eq.s32.totalorder %v10113, 1
        %vm10158 = vcmp.eq.s32.totalorder %v10116, 1
        %vm10159 = vcmp.eq.s32.totalorder %v10119, 1
        %vm10160 = vcmp.eq.s32.totalorder %v10122, 1
        %vm10161 = vcmp.eq.s32.totalorder %v10125, 1
        %vm10162 = vcmp.eq.s32.totalorder %v10128, 1
        %vm10163 = vcmp.eq.s32.totalorder %v10131, 1
        %v10164 = vsel %vm10132, -1e+30, %v9910
        %v10165 = vsel %vm10133, -1e+30, %v9912
        %v10166 = vsel %vm10134, -1e+30, %v9914
        %v10167 = vsel %vm10135, -1e+30, %v9916
        %v10168 = vsel %vm10136, -1e+30, %v9918
        %v10169 = vsel %vm10137, -1e+30, %v9920
        %v10170 = vsel %vm10138, -1e+30, %v9922
        %v10171 = vsel %vm10139, -1e+30, %v9924
        %v10172 = vsel %vm10140, -1e+30, %v9926
        %v10173 = vsel %vm10141, -1e+30, %v9928
        %v10174 = vsel %vm10142, -1e+30, %v9930
        %v10175 = vsel %vm10143, -1e+30, %v9932
        %v10176 = vsel %vm10144, -1e+30, %v9934
        %v10177 = vsel %vm10145, -1e+30, %v9936
        %v10178 = vsel %vm10146, -1e+30, %v9938
        %v10179 = vsel %vm10147, -1e+30, %v9940
        %v10180 = vsel %vm10148, -1e+30, %v9942
        %v10181 = vsel %vm10149, -1e+30, %v9944
        %v10182 = vsel %vm10150, -1e+30, %v9946
        %v10183 = vsel %vm10151, -1e+30, %v9948
        %v10184 = vsel %vm10152, -1e+30, %v9950
        %v10185 = vsel %vm10153, -1e+30, %v9952
        %v10186 = vsel %vm10154, -1e+30, %v9954
        %v10187 = vsel %vm10155, -1e+30, %v9956
        %v10188 = vsel %vm10156, -1e+30, %v9958
        %v10189 = vsel %vm10157, -1e+30, %v9960
        %v10190 = vsel %vm10158, -1e+30, %v9962
        %v10191 = vsel %vm10159, -1e+30, %v9964
        %v10192 = vsel %vm10160, -1e+30, %v9966
        %v10193 = vsel %vm10161, -1e+30, %v9968
        %v10194 = vsel %vm10162, -1e+30, %v9970
        %v10195 = vsel %vm10163, -1e+30, %v10003
        %vm10196 = vcmp.eq.s32.totalorder %v361, 0
        %vm10197 = vcmp.eq.s32.totalorder %v362, 0
        %vm10198 = vcmp.eq.s32.totalorder %v363, 0
        %vm10199 = vcmp.eq.s32.totalorder %v364, 0
        %vm10200 = vcmp.eq.s32.totalorder %v365, 0
        %vm10201 = vcmp.eq.s32.totalorder %v366, 0
        %vm10202 = vcmp.eq.s32.totalorder %v367, 0
        %vm10203 = vcmp.eq.s32.totalorder %v368, 0
        %vm10204 = vcmp.eq.s32.totalorder %v369, 0
        %vm10205 = vcmp.eq.s32.totalorder %v370, 0
        %vm10206 = vcmp.eq.s32.totalorder %v371, 0
        %vm10207 = vcmp.eq.s32.totalorder %v372, 0
        %vm10208 = vcmp.eq.s32.totalorder %v373, 0
        %vm10209 = vcmp.eq.s32.totalorder %v374, 0
        %vm10210 = vcmp.eq.s32.totalorder %v375, 0
        %vm10211 = vcmp.eq.s32.totalorder %v376, 0
        %vm10212 = vcmp.eq.s32.totalorder %v377, 0
        %vm10213 = vcmp.eq.s32.totalorder %v378, 0
        %vm10214 = vcmp.eq.s32.totalorder %v379, 0
        %vm10215 = vcmp.eq.s32.totalorder %v380, 0
        %vm10216 = vcmp.eq.s32.totalorder %v381, 0
        %vm10217 = vcmp.eq.s32.totalorder %v382, 0
        %vm10218 = vcmp.eq.s32.totalorder %v383, 0
        %vm10219 = vcmp.eq.s32.totalorder %v384, 0
        %vm10220 = vcmp.eq.s32.totalorder %v385, 0
        %vm10221 = vcmp.eq.s32.totalorder %v386, 0
        %vm10222 = vcmp.eq.s32.totalorder %v387, 0
        %vm10223 = vcmp.eq.s32.totalorder %v388, 0
        %vm10224 = vcmp.eq.s32.totalorder %v389, 0
        %vm10225 = vcmp.eq.s32.totalorder %v390, 0
        %vm10226 = vcmp.eq.s32.totalorder %v391, 0
        %vm10227 = vcmp.eq.s32.totalorder %v392, 0
        %v10228 = vrot.slane %v9812, 7
        %v10229 = vrot.slane %v9813, 7
        %v10230 = vsel %vm3853, %v10228, %v10229
        %v10231 = vrot.slane %v9814, 7
        %v10232 = vsel %vm3853, %v10229, %v10231
        %v10233 = vrot.slane %v9815, 7
        %v10234 = vsel %vm3853, %v10231, %v10233
        %v10235 = vrot.slane %v9816, 7
        %v10236 = vsel %vm3853, %v10233, %v10235
        %v10237 = vrot.slane %v9817, 7
        %v10238 = vsel %vm3853, %v10235, %v10237
        %v10239 = vrot.slane %v9818, 7
        %v10240 = vsel %vm3853, %v10237, %v10239
        %v10241 = vrot.slane %v9819, 7
        %v10242 = vsel %vm3853, %v10239, %v10241
        %v10243 = vrot.slane %v9820, 7
        %v10244 = vsel %vm3853, %v10241, %v10243
        %v10245 = vrot.slane %v9821, 7
        %v10246 = vsel %vm3853, %v10243, %v10245
        %v10247 = vrot.slane %v9822, 7
        %v10248 = vsel %vm3853, %v10245, %v10247
        %v10249 = vrot.slane %v9823, 7
        %v10250 = vsel %vm3853, %v10247, %v10249
        %v10251 = vrot.slane %v9824, 7
        %v10252 = vsel %vm3853, %v10249, %v10251
        %v10253 = vrot.slane %v9825, 7
        %v10254 = vsel %vm3853, %v10251, %v10253
        %v10255 = vrot.slane %v9826, 7
        %v10256 = vsel %vm3853, %v10253, %v10255
        %v10257 = vrot.slane %v9827, 7
        %v10258 = vsel %vm3853, %v10255, %v10257
        %v10259 = vrot.slane %v9828, 7
        %v10260 = vsel %vm3853, %v10257, %v10259
        %v10261 = vrot.slane %v9829, 7
        %v10262 = vsel %vm3853, %v10259, %v10261
        %v10263 = vrot.slane %v9830, 7
        %v10264 = vsel %vm3853, %v10261, %v10263
        %v10265 = vrot.slane %v9831, 7
        %v10266 = vsel %vm3853, %v10263, %v10265
        %v10267 = vrot.slane %v9832, 7
        %v10268 = vsel %vm3853, %v10265, %v10267
        %v10269 = vrot.slane %v9833, 7
        %v10270 = vsel %vm3853, %v10267, %v10269
        %v10271 = vrot.slane %v9834, 7
        %v10272 = vsel %vm3853, %v10269, %v10271
        %v10273 = vrot.slane %v9835, 7
        %v10274 = vsel %vm3853, %v10271, %v10273
        %v10275 = vrot.slane %v9836, 7
        %v10276 = vsel %vm3853, %v10273, %v10275
        %v10277 = vrot.slane %v9837, 7
        %v10278 = vsel %vm3853, %v10275, %v10277
        %v10279 = vrot.slane %v9838, 7
        %v10280 = vsel %vm3853, %v10277, %v10279
        %v10281 = vrot.slane %v9839, 7
        %v10282 = vsel %vm3853, %v10279, %v10281
        %v10283 = vrot.slane %v9840, 7
        %v10284 = vsel %vm3853, %v10281, %v10283
        %v10285 = vrot.slane %v9841, 7
        %v10286 = vsel %vm3853, %v10283, %v10285
        %v10287 = vrot.slane %v9842, 7
        %v10288 = vsel %vm3853, %v10285, %v10287
        %v10289 = vrot.slane %v9843, 7
        %v10290 = vsel %vm3853, %v10287, %v10289
        %v10323 = vsel %vm3853, -1e+30, %v10228
        %v10324 = vsel %vm10196, 1, 0
        %v10325 = vsel %vm10197, 1, 0
        %v10326 = vsel %vm10198, 1, 0
        %v10327 = vsel %vm10199, 1, 0
        %v10328 = vsel %vm10200, 1, 0
        %v10329 = vsel %vm10201, 1, 0
        %v10330 = vsel %vm10202, 1, 0
        %v10331 = vsel %vm10203, 1, 0
        %v10332 = vsel %vm10204, 1, 0
        %v10333 = vsel %vm10205, 1, 0
        %v10334 = vsel %vm10206, 1, 0
        %v10335 = vsel %vm10207, 1, 0
        %v10336 = vsel %vm10208, 1, 0
        %v10337 = vsel %vm10209, 1, 0
        %v10338 = vsel %vm10210, 1, 0
        %v10339 = vsel %vm10211, 1, 0
        %v10340 = vsel %vm10212, 1, 0
        %v10341 = vsel %vm10213, 1, 0
        %v10342 = vsel %vm10214, 1, 0
        %v10343 = vsel %vm10215, 1, 0
        %v10344 = vsel %vm10216, 1, 0
        %v10345 = vsel %vm10217, 1, 0
        %v10346 = vsel %vm10218, 1, 0
        %v10347 = vsel %vm10219, 1, 0
        %v10348 = vsel %vm10220, 1, 0
        %v10349 = vsel %vm10221, 1, 0
        %v10350 = vsel %vm10222, 1, 0
        %v10351 = vsel %vm10223, 1, 0
        %v10352 = vsel %vm10224, 1, 0
        %v10353 = vsel %vm10225, 1, 0
        %v10354 = vsel %vm10226, 1, 0
        %v10355 = vsel %vm10227, 1, 0
        %10356 = vset.pattern.permute.xlu0 0
        %10357 = vperm.xlu0 %10356, %v10324
        %v10358 = vpop.permute.xlu0 %10357
        %10359 = vset.pattern.permute.xlu0 0
        %10360 = vperm.xlu0 %10359, %v10325
        %v10361 = vpop.permute.xlu0 %10360
        %10362 = vset.pattern.permute.xlu0 0
        %10363 = vperm.xlu0 %10362, %v10326
        %v10364 = vpop.permute.xlu0 %10363
        %10365 = vset.pattern.permute.xlu0 0
        %10366 = vperm.xlu0 %10365, %v10327
        %v10367 = vpop.permute.xlu0 %10366
        %10368 = vset.pattern.permute.xlu0 0
        %10369 = vperm.xlu0 %10368, %v10328
        %v10370 = vpop.permute.xlu0 %10369
        %10371 = vset.pattern.permute.xlu0 0
        %10372 = vperm.xlu0 %10371, %v10329
        %v10373 = vpop.permute.xlu0 %10372
        %10374 = vset.pattern.permute.xlu0 0
        %10375 = vperm.xlu0 %10374, %v10330
        %v10376 = vpop.permute.xlu0 %10375
        %10377 = vset.pattern.permute.xlu0 0
        %10378 = vperm.xlu0 %10377, %v10331
        %v10379 = vpop.permute.xlu0 %10378
        %10380 = vset.pattern.permute.xlu0 0
        %10381 = vperm.xlu0 %10380, %v10332
        %v10382 = vpop.permute.xlu0 %10381
        %10383 = vset.pattern.permute.xlu0 0
        %10384 = vperm.xlu0 %10383, %v10333
        %v10385 = vpop.permute.xlu0 %10384
        %10386 = vset.pattern.permute.xlu0 0
        %10387 = vperm.xlu0 %10386, %v10334
        %v10388 = vpop.permute.xlu0 %10387
        %10389 = vset.pattern.permute.xlu0 0
        %10390 = vperm.xlu0 %10389, %v10335
        %v10391 = vpop.permute.xlu0 %10390
        %10392 = vset.pattern.permute.xlu0 0
        %10393 = vperm.xlu0 %10392, %v10336
        %v10394 = vpop.permute.xlu0 %10393
        %10395 = vset.pattern.permute.xlu0 0
        %10396 = vperm.xlu0 %10395, %v10337
        %v10397 = vpop.permute.xlu0 %10396
        %10398 = vset.pattern.permute.xlu0 0
        %10399 = vperm.xlu0 %10398, %v10338
        %v10400 = vpop.permute.xlu0 %10399
        %10401 = vset.pattern.permute.xlu0 0
        %10402 = vperm.xlu0 %10401, %v10339
        %v10403 = vpop.permute.xlu0 %10402
        %10404 = vset.pattern.permute.xlu0 0
        %10405 = vperm.xlu0 %10404, %v10340
        %v10406 = vpop.permute.xlu0 %10405
        %10407 = vset.pattern.permute.xlu0 0
        %10408 = vperm.xlu0 %10407, %v10341
        %v10409 = vpop.permute.xlu0 %10408
        %10410 = vset.pattern.permute.xlu0 0
        %10411 = vperm.xlu0 %10410, %v10342
        %v10412 = vpop.permute.xlu0 %10411
        %10413 = vset.pattern.permute.xlu0 0
        %10414 = vperm.xlu0 %10413, %v10343
        %v10415 = vpop.permute.xlu0 %10414
        %10416 = vset.pattern.permute.xlu0 0
        %10417 = vperm.xlu0 %10416, %v10344
        %v10418 = vpop.permute.xlu0 %10417
        %10419 = vset.pattern.permute.xlu0 0
        %10420 = vperm.xlu0 %10419, %v10345
        %v10421 = vpop.permute.xlu0 %10420
        %10422 = vset.pattern.permute.xlu0 0
        %10423 = vperm.xlu0 %10422, %v10346
        %v10424 = vpop.permute.xlu0 %10423
        %10425 = vset.pattern.permute.xlu0 0
        %10426 = vperm.xlu0 %10425, %v10347
        %v10427 = vpop.permute.xlu0 %10426
        %10428 = vset.pattern.permute.xlu0 0
        %10429 = vperm.xlu0 %10428, %v10348
        %v10430 = vpop.permute.xlu0 %10429
        %10431 = vset.pattern.permute.xlu0 0
        %10432 = vperm.xlu0 %10431, %v10349
        %v10433 = vpop.permute.xlu0 %10432
        %10434 = vset.pattern.permute.xlu0 0
        %10435 = vperm.xlu0 %10434, %v10350
        %v10436 = vpop.permute.xlu0 %10435
        %10437 = vset.pattern.permute.xlu0 0
        %10438 = vperm.xlu0 %10437, %v10351
        %v10439 = vpop.permute.xlu0 %10438
        %10440 = vset.pattern.permute.xlu0 0
        %10441 = vperm.xlu0 %10440, %v10352
        %v10442 = vpop.permute.xlu0 %10441
        %10443 = vset.pattern.permute.xlu0 0
        %10444 = vperm.xlu0 %10443, %v10353
        %v10445 = vpop.permute.xlu0 %10444
        %10446 = vset.pattern.permute.xlu0 0
        %10447 = vperm.xlu0 %10446, %v10354
        %v10448 = vpop.permute.xlu0 %10447
        %10449 = vset.pattern.permute.xlu0 0
        %10450 = vperm.xlu0 %10449, %v10355
        %v10451 = vpop.permute.xlu0 %10450
        %vm10452 = vcmp.eq.s32.totalorder %v10358, 1
        %vm10453 = vcmp.eq.s32.totalorder %v10361, 1
        %vm10454 = vcmp.eq.s32.totalorder %v10364, 1
        %vm10455 = vcmp.eq.s32.totalorder %v10367, 1
        %vm10456 = vcmp.eq.s32.totalorder %v10370, 1
        %vm10457 = vcmp.eq.s32.totalorder %v10373, 1
        %vm10458 = vcmp.eq.s32.totalorder %v10376, 1
        %vm10459 = vcmp.eq.s32.totalorder %v10379, 1
        %vm10460 = vcmp.eq.s32.totalorder %v10382, 1
        %vm10461 = vcmp.eq.s32.totalorder %v10385, 1
        %vm10462 = vcmp.eq.s32.totalorder %v10388, 1
        %vm10463 = vcmp.eq.s32.totalorder %v10391, 1
        %vm10464 = vcmp.eq.s32.totalorder %v10394, 1
        %vm10465 = vcmp.eq.s32.totalorder %v10397, 1
        %vm10466 = vcmp.eq.s32.totalorder %v10400, 1
        %vm10467 = vcmp.eq.s32.totalorder %v10403, 1
        %vm10468 = vcmp.eq.s32.totalorder %v10406, 1
        %vm10469 = vcmp.eq.s32.totalorder %v10409, 1
        %vm10470 = vcmp.eq.s32.totalorder %v10412, 1
        %vm10471 = vcmp.eq.s32.totalorder %v10415, 1
        %vm10472 = vcmp.eq.s32.totalorder %v10418, 1
        %vm10473 = vcmp.eq.s32.totalorder %v10421, 1
        %vm10474 = vcmp.eq.s32.totalorder %v10424, 1
        %vm10475 = vcmp.eq.s32.totalorder %v10427, 1
        %vm10476 = vcmp.eq.s32.totalorder %v10430, 1
        %vm10477 = vcmp.eq.s32.totalorder %v10433, 1
        %vm10478 = vcmp.eq.s32.totalorder %v10436, 1
        %vm10479 = vcmp.eq.s32.totalorder %v10439, 1
        %vm10480 = vcmp.eq.s32.totalorder %v10442, 1
        %vm10481 = vcmp.eq.s32.totalorder %v10445, 1
        %vm10482 = vcmp.eq.s32.totalorder %v10448, 1
        %vm10483 = vcmp.eq.s32.totalorder %v10451, 1
        %v10484 = vsel %vm10452, -1e+30, %v10323
        %v10485 = vsel %vm10453, -1e+30, %v10230
        %v10486 = vsel %vm10454, -1e+30, %v10232
        %v10487 = vsel %vm10455, -1e+30, %v10234
        %v10488 = vsel %vm10456, -1e+30, %v10236
        %v10489 = vsel %vm10457, -1e+30, %v10238
        %v10490 = vsel %vm10458, -1e+30, %v10240
        %v10491 = vsel %vm10459, -1e+30, %v10242
        %v10492 = vsel %vm10460, -1e+30, %v10244
        %v10493 = vsel %vm10461, -1e+30, %v10246
        %v10494 = vsel %vm10462, -1e+30, %v10248
        %v10495 = vsel %vm10463, -1e+30, %v10250
        %v10496 = vsel %vm10464, -1e+30, %v10252
        %v10497 = vsel %vm10465, -1e+30, %v10254
        %v10498 = vsel %vm10466, -1e+30, %v10256
        %v10499 = vsel %vm10467, -1e+30, %v10258
        %v10500 = vsel %vm10468, -1e+30, %v10260
        %v10501 = vsel %vm10469, -1e+30, %v10262
        %v10502 = vsel %vm10470, -1e+30, %v10264
        %v10503 = vsel %vm10471, -1e+30, %v10266
        %v10504 = vsel %vm10472, -1e+30, %v10268
        %v10505 = vsel %vm10473, -1e+30, %v10270
        %v10506 = vsel %vm10474, -1e+30, %v10272
        %v10507 = vsel %vm10475, -1e+30, %v10274
        %v10508 = vsel %vm10476, -1e+30, %v10276
        %v10509 = vsel %vm10477, -1e+30, %v10278
        %v10510 = vsel %vm10478, -1e+30, %v10280
        %v10511 = vsel %vm10479, -1e+30, %v10282
        %v10512 = vsel %vm10480, -1e+30, %v10284
        %v10513 = vsel %vm10481, -1e+30, %v10286
        %v10514 = vsel %vm10482, -1e+30, %v10288
        %v10515 = vsel %vm10483, -1e+30, %v10290
        %v10516 = vmax.f32 %v9812, %v10164
        %v10517 = vmax.f32 %v9813, %v10165
        %v10518 = vmax.f32 %v9814, %v10166
        %v10519 = vmax.f32 %v9815, %v10167
        %v10520 = vmax.f32 %v9816, %v10168
        %v10521 = vmax.f32 %v9817, %v10169
        %v10522 = vmax.f32 %v9818, %v10170
        %v10523 = vmax.f32 %v9819, %v10171
        %v10524 = vmax.f32 %v9820, %v10172
        %v10525 = vmax.f32 %v9821, %v10173
        %v10526 = vmax.f32 %v9822, %v10174
        %v10527 = vmax.f32 %v9823, %v10175
        %v10528 = vmax.f32 %v9824, %v10176
        %v10529 = vmax.f32 %v9825, %v10177
        %v10530 = vmax.f32 %v9826, %v10178
        %v10531 = vmax.f32 %v9827, %v10179
        %v10532 = vmax.f32 %v9828, %v10180
        %v10533 = vmax.f32 %v9829, %v10181
        %v10534 = vmax.f32 %v9830, %v10182
        %v10535 = vmax.f32 %v9831, %v10183
        %v10536 = vmax.f32 %v9832, %v10184
        %v10537 = vmax.f32 %v9833, %v10185
        %v10538 = vmax.f32 %v9834, %v10186
        %v10539 = vmax.f32 %v9835, %v10187
        %v10540 = vmax.f32 %v9836, %v10188
        %v10541 = vmax.f32 %v9837, %v10189
        %v10542 = vmax.f32 %v9838, %v10190
        %v10543 = vmax.f32 %v9839, %v10191
        %v10544 = vmax.f32 %v9840, %v10192
        %v10545 = vmax.f32 %v9841, %v10193
        %v10546 = vmax.f32 %v9842, %v10194
        %v10547 = vmax.f32 %v9843, %v10195
        %v10548 = vmax.f32 %v10516, %v10484
        %v10549 = vmax.f32 %v10517, %v10485
        %v10550 = vmax.f32 %v10518, %v10486
        %v10551 = vmax.f32 %v10519, %v10487
        %v10552 = vmax.f32 %v10520, %v10488
        %v10553 = vmax.f32 %v10521, %v10489
        %v10554 = vmax.f32 %v10522, %v10490
        %v10555 = vmax.f32 %v10523, %v10491
        %v10556 = vmax.f32 %v10524, %v10492
        %v10557 = vmax.f32 %v10525, %v10493
        %v10558 = vmax.f32 %v10526, %v10494
        %v10559 = vmax.f32 %v10527, %v10495
        %v10560 = vmax.f32 %v10528, %v10496
        %v10561 = vmax.f32 %v10529, %v10497
        %v10562 = vmax.f32 %v10530, %v10498
        %v10563 = vmax.f32 %v10531, %v10499
        %v10564 = vmax.f32 %v10532, %v10500
        %v10565 = vmax.f32 %v10533, %v10501
        %v10566 = vmax.f32 %v10534, %v10502
        %v10567 = vmax.f32 %v10535, %v10503
        %v10568 = vmax.f32 %v10536, %v10504
        %v10569 = vmax.f32 %v10537, %v10505
        %v10570 = vmax.f32 %v10538, %v10506
        %v10571 = vmax.f32 %v10539, %v10507
        %v10572 = vmax.f32 %v10540, %v10508
        %v10573 = vmax.f32 %v10541, %v10509
        %v10574 = vmax.f32 %v10542, %v10510
        %v10575 = vmax.f32 %v10543, %v10511
        %v10576 = vmax.f32 %v10544, %v10512
        %v10577 = vmax.f32 %v10545, %v10513
        %v10578 = vmax.f32 %v10546, %v10514
        %v10579 = vmax.f32 %v10547, %v10515
        %v10580 = vpack.c.bf16 %v10549, %v10548
        %v10581 = vpack.c.bf16 %v10551, %v10550
        %v10582 = vpack.c.bf16 %v10553, %v10552
        %v10583 = vpack.c.bf16 %v10555, %v10554
        %v10584 = vpack.c.bf16 %v10557, %v10556
        %v10585 = vpack.c.bf16 %v10559, %v10558
        %v10586 = vpack.c.bf16 %v10561, %v10560
        %v10587 = vpack.c.bf16 %v10563, %v10562
        %v10588 = vpack.c.bf16 %v10565, %v10564
        %v10589 = vpack.c.bf16 %v10567, %v10566
        %v10590 = vpack.c.bf16 %v10569, %v10568
        %v10591 = vpack.c.bf16 %v10571, %v10570
        %v10592 = vpack.c.bf16 %v10573, %v10572
        %v10593 = vpack.c.bf16 %v10575, %v10574
        %v10594 = vpack.c.bf16 %v10577, %v10576
        %v10595 = vpack.c.bf16 %v10579, %v10578
        %v10596 = vld [vmem:[%s8] sm:$0x3]
        %v10597 = vld [vmem:[%s9] sm:$0x1]
        %v10599 = vperm.slane %v10597, 0
        %v10602 = vsel %vm446, %v10580, 0
        %v10605 = vsel %vm446, %v10581, 0
        %v10608 = vsel %vm446, %v10582, 0
        %v10611 = vsel %vm446, %v10583, 0
        %v10614 = vsel %vm446, %v10584, 0
        %v10617 = vsel %vm446, %v10585, 0
        %v10620 = vsel %vm446, %v10586, 0
        %v10623 = vsel %vm446, %v10587, 0
        %v10626 = vsel %vm446, %v10588, 0
        %v10629 = vsel %vm446, %v10589, 0
        %v10632 = vsel %vm446, %v10590, 0
        %v10635 = vsel %vm446, %v10591, 0
        %v10638 = vsel %vm446, %v10592, 0
        %v10641 = vsel %vm446, %v10593, 0
        %v10644 = vsel %vm446, %v10594, 0
        %v10647 = vsel %vm446, %v10595, 0
        %v10650 = vsel %vm495, %v10596, 0
        %10652 = vmatpush.bf16.msra.mxu0 0
        %10653 = vmatpush.bf16.msra.mxu0 0
        %10654 = vmatpush.bf16.msra.mxu0 0
        %10655 = vmatpush.bf16.msra.mxu0 0
        %10656 = vmatpush.bf16.msra.mxu0 0
        %10657 = vmatpush.bf16.msra.mxu0 0
        %10658 = vmatpush.bf16.msra.mxu0 0
        %10659 = vmatpush.bf16.msra.mxu0 %v10650
        %10660 = vmatmul.bf16.gmra.mxu0 %v10602
        %v10661 = vpop.f32.mrf.mxu0
        %v10662 = vadd.f32 %v10599, %v10661
        %v10663 = vpop.f32.mrf.mxu0
        %v10664 = vadd.f32 %v10599, %v10663
        %10665 = vmatmul.bf16.gmra.mxu0 %v10605
        %v10666 = vpop.f32.mrf.mxu0
        %v10667 = vadd.f32 %v10599, %v10666
        %v10668 = vpop.f32.mrf.mxu0
        %v10669 = vadd.f32 %v10599, %v10668
        %10670 = vmatmul.bf16.gmra.mxu0 %v10608
        %v10671 = vpop.f32.mrf.mxu0
        %v10672 = vadd.f32 %v10599, %v10671
        %v10673 = vpop.f32.mrf.mxu0
        %v10674 = vadd.f32 %v10599, %v10673
        %10675 = vmatmul.bf16.gmra.mxu0 %v10611
        %v10676 = vpop.f32.mrf.mxu0
        %v10677 = vadd.f32 %v10599, %v10676
        %v10678 = vpop.f32.mrf.mxu0
        %v10679 = vadd.f32 %v10599, %v10678
        %10680 = vmatmul.bf16.gmra.mxu0 %v10614
        %v10681 = vpop.f32.mrf.mxu0
        %v10682 = vadd.f32 %v10599, %v10681
        %v10683 = vpop.f32.mrf.mxu0
        %v10684 = vadd.f32 %v10599, %v10683
        %10685 = vmatmul.bf16.gmra.mxu0 %v10617
        %v10686 = vpop.f32.mrf.mxu0
        %v10687 = vadd.f32 %v10599, %v10686
        %v10688 = vpop.f32.mrf.mxu0
        %v10689 = vadd.f32 %v10599, %v10688
        %10690 = vmatmul.bf16.gmra.mxu0 %v10620
        %v10691 = vpop.f32.mrf.mxu0
        %v10692 = vadd.f32 %v10599, %v10691
        %v10693 = vpop.f32.mrf.mxu0
        %v10694 = vadd.f32 %v10599, %v10693
        %10695 = vmatmul.bf16.gmra.mxu0 %v10623
        %v10696 = vpop.f32.mrf.mxu0
        %v10697 = vadd.f32 %v10599, %v10696
        %v10698 = vpop.f32.mrf.mxu0
        %v10699 = vadd.f32 %v10599, %v10698
        %10700 = vmatmul.bf16.gmra.mxu0 %v10626
        %v10701 = vpop.f32.mrf.mxu0
        %v10702 = vadd.f32 %v10599, %v10701
        %v10703 = vpop.f32.mrf.mxu0
        %v10704 = vadd.f32 %v10599, %v10703
        %10705 = vmatmul.bf16.gmra.mxu0 %v10629
        %v10706 = vpop.f32.mrf.mxu0
        %v10707 = vadd.f32 %v10599, %v10706
        %v10708 = vpop.f32.mrf.mxu0
        %v10709 = vadd.f32 %v10599, %v10708
        %10710 = vmatmul.bf16.gmra.mxu0 %v10632
        %v10711 = vpop.f32.mrf.mxu0
        %v10712 = vadd.f32 %v10599, %v10711
        %v10713 = vpop.f32.mrf.mxu0
        %v10714 = vadd.f32 %v10599, %v10713
        %10715 = vmatmul.bf16.gmra.mxu0 %v10635
        %v10716 = vpop.f32.mrf.mxu0
        %v10717 = vadd.f32 %v10599, %v10716
        %v10718 = vpop.f32.mrf.mxu0
        %v10719 = vadd.f32 %v10599, %v10718
        %10720 = vmatmul.bf16.gmra.mxu0 %v10638
        %v10721 = vpop.f32.mrf.mxu0
        %v10722 = vadd.f32 %v10599, %v10721
        %v10723 = vpop.f32.mrf.mxu0
        %v10724 = vadd.f32 %v10599, %v10723
        %10725 = vmatmul.bf16.gmra.mxu0 %v10641
        %v10726 = vpop.f32.mrf.mxu0
        %v10727 = vadd.f32 %v10599, %v10726
        %v10728 = vpop.f32.mrf.mxu0
        %v10729 = vadd.f32 %v10599, %v10728
        %10730 = vmatmul.bf16.gmra.mxu0 %v10644
        %v10731 = vpop.f32.mrf.mxu0
        %v10732 = vadd.f32 %v10599, %v10731
        %v10733 = vpop.f32.mrf.mxu0
        %v10734 = vadd.f32 %v10599, %v10733
        %10735 = vmatmul.bf16.gmra.mxu0 %v10647
        %v10736 = vpop.f32.mrf.mxu0
        %v10737 = vadd.f32 %v10599, %v10736
        %v10738 = vpop.f32.mrf.mxu0
        %v10739 = vadd.f32 %v10599, %v10738
        %10740 = vdwg.mxu0
        %v10741 = vmax.f32 %v10662, 0.0
        %v10742 = vmax.f32 %v10664, 0.0
        %v10743 = vmax.f32 %v10667, 0.0
        %v10744 = vmax.f32 %v10669, 0.0
        %v10745 = vmax.f32 %v10672, 0.0
        %v10746 = vmax.f32 %v10674, 0.0
        %v10747 = vmax.f32 %v10677, 0.0
        %v10748 = vmax.f32 %v10679, 0.0
        %v10749 = vmax.f32 %v10682, 0.0
        %v10750 = vmax.f32 %v10684, 0.0
        %v10751 = vmax.f32 %v10687, 0.0
        %v10752 = vmax.f32 %v10689, 0.0
        %v10753 = vmax.f32 %v10692, 0.0
        %v10754 = vmax.f32 %v10694, 0.0
        %v10755 = vmax.f32 %v10697, 0.0
        %v10756 = vmax.f32 %v10699, 0.0
        %v10757 = vmax.f32 %v10702, 0.0
        %v10758 = vmax.f32 %v10704, 0.0
        %v10759 = vmax.f32 %v10707, 0.0
        %v10760 = vmax.f32 %v10709, 0.0
        %v10761 = vmax.f32 %v10712, 0.0
        %v10762 = vmax.f32 %v10714, 0.0
        %v10763 = vmax.f32 %v10717, 0.0
        %v10764 = vmax.f32 %v10719, 0.0
        %v10765 = vmax.f32 %v10722, 0.0
        %v10766 = vmax.f32 %v10724, 0.0
        %v10767 = vmax.f32 %v10727, 0.0
        %v10768 = vmax.f32 %v10729, 0.0
        %v10769 = vmax.f32 %v10732, 0.0
        %v10770 = vmax.f32 %v10734, 0.0
        %v10771 = vmax.f32 %v10737, 0.0
        %v10772 = vmax.f32 %v10739, 0.0
        %10805 = vrot.lane.b32.xlu0 %v3753, 8
        %v10806 = vpop.permute.xlu0 %10805
        %10807 = vrot.lane.b32.xlu0 %v3754, 8
        %v10808 = vpop.permute.xlu0 %10807
        %10809 = vrot.lane.b32.xlu0 %v3755, 8
        %v10810 = vpop.permute.xlu0 %10809
        %10811 = vrot.lane.b32.xlu0 %v3756, 8
        %v10812 = vpop.permute.xlu0 %10811
        %10813 = vrot.lane.b32.xlu0 %v3757, 8
        %v10814 = vpop.permute.xlu0 %10813
        %10815 = vrot.lane.b32.xlu0 %v3758, 8
        %v10816 = vpop.permute.xlu0 %10815
        %10817 = vrot.lane.b32.xlu0 %v3759, 8
        %v10818 = vpop.permute.xlu0 %10817
        %10819 = vrot.lane.b32.xlu0 %v3760, 8
        %v10820 = vpop.permute.xlu0 %10819
        %10821 = vrot.lane.b32.xlu0 %v3761, 8
        %v10822 = vpop.permute.xlu0 %10821
        %10823 = vrot.lane.b32.xlu0 %v3762, 8
        %v10824 = vpop.permute.xlu0 %10823
        %10825 = vrot.lane.b32.xlu0 %v3763, 8
        %v10826 = vpop.permute.xlu0 %10825
        %10827 = vrot.lane.b32.xlu0 %v3764, 8
        %v10828 = vpop.permute.xlu0 %10827
        %10829 = vrot.lane.b32.xlu0 %v3765, 8
        %v10830 = vpop.permute.xlu0 %10829
        %10831 = vrot.lane.b32.xlu0 %v3766, 8
        %v10832 = vpop.permute.xlu0 %10831
        %10833 = vrot.lane.b32.xlu0 %v3767, 8
        %v10834 = vpop.permute.xlu0 %10833
        %10835 = vrot.lane.b32.xlu0 %v3768, 8
        %v10836 = vpop.permute.xlu0 %10835
        %10837 = vrot.lane.b32.xlu0 %v3769, 8
        %v10838 = vpop.permute.xlu0 %10837
        %10839 = vrot.lane.b32.xlu0 %v3770, 8
        %v10840 = vpop.permute.xlu0 %10839
        %10841 = vrot.lane.b32.xlu0 %v3771, 8
        %v10842 = vpop.permute.xlu0 %10841
        %10843 = vrot.lane.b32.xlu0 %v3772, 8
        %v10844 = vpop.permute.xlu0 %10843
        %10845 = vrot.lane.b32.xlu0 %v3773, 8
        %v10846 = vpop.permute.xlu0 %10845
        %10847 = vrot.lane.b32.xlu0 %v3774, 8
        %v10848 = vpop.permute.xlu0 %10847
        %10849 = vrot.lane.b32.xlu0 %v3775, 8
        %v10850 = vpop.permute.xlu0 %10849
        %10851 = vrot.lane.b32.xlu0 %v3776, 8
        %v10852 = vpop.permute.xlu0 %10851
        %10853 = vrot.lane.b32.xlu0 %v3777, 8
        %v10854 = vpop.permute.xlu0 %10853
        %10855 = vrot.lane.b32.xlu0 %v3778, 8
        %v10856 = vpop.permute.xlu0 %10855
        %10857 = vrot.lane.b32.xlu0 %v3779, 8
        %v10858 = vpop.permute.xlu0 %10857
        %10859 = vrot.lane.b32.xlu0 %v3780, 8
        %v10860 = vpop.permute.xlu0 %10859
        %10861 = vrot.lane.b32.xlu0 %v3781, 8
        %v10862 = vpop.permute.xlu0 %10861
        %10863 = vrot.lane.b32.xlu0 %v3782, 8
        %v10864 = vpop.permute.xlu0 %10863
        %10865 = vrot.lane.b32.xlu0 %v3783, 8
        %v10866 = vpop.permute.xlu0 %10865
        %10867 = vrot.lane.b32.xlu0 %v3784, 8
        %v10868 = vpop.permute.xlu0 %10867
        %10933 = vrot.lane.b32.xlu0 %v9748, 16
        %v10934 = vpop.permute.xlu0 %10933
        %10935 = vrot.lane.b32.xlu0 %v9749, 16
        %v10936 = vpop.permute.xlu0 %10935
        %10937 = vrot.lane.b32.xlu0 %v9750, 16
        %v10938 = vpop.permute.xlu0 %10937
        %10939 = vrot.lane.b32.xlu0 %v9751, 16
        %v10940 = vpop.permute.xlu0 %10939
        %10941 = vrot.lane.b32.xlu0 %v9752, 16
        %v10942 = vpop.permute.xlu0 %10941
        %10943 = vrot.lane.b32.xlu0 %v9753, 16
        %v10944 = vpop.permute.xlu0 %10943
        %10945 = vrot.lane.b32.xlu0 %v9754, 16
        %v10946 = vpop.permute.xlu0 %10945
        %10947 = vrot.lane.b32.xlu0 %v9755, 16
        %v10948 = vpop.permute.xlu0 %10947
        %10949 = vrot.lane.b32.xlu0 %v9756, 16
        %v10950 = vpop.permute.xlu0 %10949
        %10951 = vrot.lane.b32.xlu0 %v9757, 16
        %v10952 = vpop.permute.xlu0 %10951
        %10953 = vrot.lane.b32.xlu0 %v9758, 16
        %v10954 = vpop.permute.xlu0 %10953
        %10955 = vrot.lane.b32.xlu0 %v9759, 16
        %v10956 = vpop.permute.xlu0 %10955
        %10957 = vrot.lane.b32.xlu0 %v9760, 16
        %v10958 = vpop.permute.xlu0 %10957
        %10959 = vrot.lane.b32.xlu0 %v9761, 16
        %v10960 = vpop.permute.xlu0 %10959
        %10961 = vrot.lane.b32.xlu0 %v9762, 16
        %v10962 = vpop.permute.xlu0 %10961
        %10963 = vrot.lane.b32.xlu0 %v9763, 16
        %v10964 = vpop.permute.xlu0 %10963
        %10965 = vrot.lane.b32.xlu0 %v9764, 16
        %v10966 = vpop.permute.xlu0 %10965
        %10967 = vrot.lane.b32.xlu0 %v9765, 16
        %v10968 = vpop.permute.xlu0 %10967
        %10969 = vrot.lane.b32.xlu0 %v9766, 16
        %v10970 = vpop.permute.xlu0 %10969
        %10971 = vrot.lane.b32.xlu0 %v9767, 16
        %v10972 = vpop.permute.xlu0 %10971
        %10973 = vrot.lane.b32.xlu0 %v9768, 16
        %v10974 = vpop.permute.xlu0 %10973
        %10975 = vrot.lane.b32.xlu0 %v9769, 16
        %v10976 = vpop.permute.xlu0 %10975
        %10977 = vrot.lane.b32.xlu0 %v9770, 16
        %v10978 = vpop.permute.xlu0 %10977
        %10979 = vrot.lane.b32.xlu0 %v9771, 16
        %v10980 = vpop.permute.xlu0 %10979
        %10981 = vrot.lane.b32.xlu0 %v9772, 16
        %v10982 = vpop.permute.xlu0 %10981
        %10983 = vrot.lane.b32.xlu0 %v9773, 16
        %v10984 = vpop.permute.xlu0 %10983
        %10985 = vrot.lane.b32.xlu0 %v9774, 16
        %v10986 = vpop.permute.xlu0 %10985
        %10987 = vrot.lane.b32.xlu0 %v9775, 16
        %v10988 = vpop.permute.xlu0 %10987
        %10989 = vrot.lane.b32.xlu0 %v9776, 16
        %v10990 = vpop.permute.xlu0 %10989
        %10991 = vrot.lane.b32.xlu0 %v9777, 16
        %v10992 = vpop.permute.xlu0 %10991
        %10993 = vrot.lane.b32.xlu0 %v9778, 16
        %v10994 = vpop.permute.xlu0 %10993
        %10995 = vrot.lane.b32.xlu0 %v9779, 16
        %v10996 = vpop.permute.xlu0 %10995
        %11061 = vrot.lane.b32.xlu0 %v10741, 24
        %v11062 = vpop.permute.xlu0 %11061
        %11063 = vrot.lane.b32.xlu0 %v10742, 24
        %v11064 = vpop.permute.xlu0 %11063
        %11065 = vrot.lane.b32.xlu0 %v10743, 24
        %v11066 = vpop.permute.xlu0 %11065
        %11067 = vrot.lane.b32.xlu0 %v10744, 24
        %v11068 = vpop.permute.xlu0 %11067
        %11069 = vrot.lane.b32.xlu0 %v10745, 24
        %v11070 = vpop.permute.xlu0 %11069
        %11071 = vrot.lane.b32.xlu0 %v10746, 24
        %v11072 = vpop.permute.xlu0 %11071
        %11073 = vrot.lane.b32.xlu0 %v10747, 24
        %v11074 = vpop.permute.xlu0 %11073
        %11075 = vrot.lane.b32.xlu0 %v10748, 24
        %v11076 = vpop.permute.xlu0 %11075
        %11077 = vrot.lane.b32.xlu0 %v10749, 24
        %v11078 = vpop.permute.xlu0 %11077
        %11079 = vrot.lane.b32.xlu0 %v10750, 24
        %v11080 = vpop.permute.xlu0 %11079
        %11081 = vrot.lane.b32.xlu0 %v10751, 24
        %v11082 = vpop.permute.xlu0 %11081
        %11083 = vrot.lane.b32.xlu0 %v10752, 24
        %v11084 = vpop.permute.xlu0 %11083
        %11085 = vrot.lane.b32.xlu0 %v10753, 24
        %v11086 = vpop.permute.xlu0 %11085
        %11087 = vrot.lane.b32.xlu0 %v10754, 24
        %v11088 = vpop.permute.xlu0 %11087
        %11089 = vrot.lane.b32.xlu0 %v10755, 24
        %v11090 = vpop.permute.xlu0 %11089
        %11091 = vrot.lane.b32.xlu0 %v10756, 24
        %v11092 = vpop.permute.xlu0 %11091
        %11093 = vrot.lane.b32.xlu0 %v10757, 24
        %v11094 = vpop.permute.xlu0 %11093
        %11095 = vrot.lane.b32.xlu0 %v10758, 24
        %v11096 = vpop.permute.xlu0 %11095
        %11097 = vrot.lane.b32.xlu0 %v10759, 24
        %v11098 = vpop.permute.xlu0 %11097
        %11099 = vrot.lane.b32.xlu0 %v10760, 24
        %v11100 = vpop.permute.xlu0 %11099
        %11101 = vrot.lane.b32.xlu0 %v10761, 24
        %v11102 = vpop.permute.xlu0 %11101
        %11103 = vrot.lane.b32.xlu0 %v10762, 24
        %v11104 = vpop.permute.xlu0 %11103
        %11105 = vrot.lane.b32.xlu0 %v10763, 24
        %v11106 = vpop.permute.xlu0 %11105
        %11107 = vrot.lane.b32.xlu0 %v10764, 24
        %v11108 = vpop.permute.xlu0 %11107
        %11109 = vrot.lane.b32.xlu0 %v10765, 24
        %v11110 = vpop.permute.xlu0 %11109
        %11111 = vrot.lane.b32.xlu0 %v10766, 24
        %v11112 = vpop.permute.xlu0 %11111
        %11113 = vrot.lane.b32.xlu0 %v10767, 24
        %v11114 = vpop.permute.xlu0 %11113
        %11115 = vrot.lane.b32.xlu0 %v10768, 24
        %v11116 = vpop.permute.xlu0 %11115
        %11117 = vrot.lane.b32.xlu0 %v10769, 24
        %v11118 = vpop.permute.xlu0 %11117
        %11119 = vrot.lane.b32.xlu0 %v10770, 24
        %v11120 = vpop.permute.xlu0 %11119
        %11121 = vrot.lane.b32.xlu0 %v10771, 24
        %v11122 = vpop.permute.xlu0 %11121
        %11123 = vrot.lane.b32.xlu0 %v10772, 24
        %v11124 = vpop.permute.xlu0 %11123
        %vm11157 = vcmask 64512
        %v11158 = vsel %vm11157, %v588, %v10806
        %v11159 = vsel %vm11157, %v589, %v10808
        %v11160 = vsel %vm11157, %v590, %v10810
        %v11161 = vsel %vm11157, %v591, %v10812
        %v11162 = vsel %vm11157, %v592, %v10814
        %v11163 = vsel %vm11157, %v593, %v10816
        %v11164 = vsel %vm11157, %v594, %v10818
        %v11165 = vsel %vm11157, %v595, %v10820
        %v11166 = vsel %vm11157, %v596, %v10822
        %v11167 = vsel %vm11157, %v597, %v10824
        %v11168 = vsel %vm11157, %v598, %v10826
        %v11169 = vsel %vm11157, %v599, %v10828
        %v11170 = vsel %vm11157, %v600, %v10830
        %v11171 = vsel %vm11157, %v601, %v10832
        %v11172 = vsel %vm11157, %v602, %v10834
        %v11173 = vsel %vm11157, %v603, %v10836
        %v11174 = vsel %vm11157, %v604, %v10838
        %v11175 = vsel %vm11157, %v605, %v10840
        %v11176 = vsel %vm11157, %v606, %v10842
        %v11177 = vsel %vm11157, %v607, %v10844
        %v11178 = vsel %vm11157, %v608, %v10846
        %v11179 = vsel %vm11157, %v609, %v10848
        %v11180 = vsel %vm11157, %v610, %v10850
        %v11181 = vsel %vm11157, %v611, %v10852
        %v11182 = vsel %vm11157, %v612, %v10854
        %v11183 = vsel %vm11157, %v613, %v10856
        %v11184 = vsel %vm11157, %v614, %v10858
        %v11185 = vsel %vm11157, %v615, %v10860
        %v11186 = vsel %vm11157, %v616, %v10862
        %v11187 = vsel %vm11157, %v617, %v10864
        %v11188 = vsel %vm11157, %v618, %v10866
        %v11189 = vsel %vm11157, %v619, %v10868
        %vm11190 = vcmask 130048
        %v11191 = vsel %vm11190, %v11158, %v10934
        %v11192 = vsel %vm11190, %v11159, %v10936
        %v11193 = vsel %vm11190, %v11160, %v10938
        %v11194 = vsel %vm11190, %v11161, %v10940
        %v11195 = vsel %vm11190, %v11162, %v10942
        %v11196 = vsel %vm11190, %v11163, %v10944
        %v11197 = vsel %vm11190, %v11164, %v10946
        %v11198 = vsel %vm11190, %v11165, %v10948
        %v11199 = vsel %vm11190, %v11166, %v10950
        %v11200 = vsel %vm11190, %v11167, %v10952
        %v11201 = vsel %vm11190, %v11168, %v10954
        %v11202 = vsel %vm11190, %v11169, %v10956
        %v11203 = vsel %vm11190, %v11170, %v10958
        %v11204 = vsel %vm11190, %v11171, %v10960
        %v11205 = vsel %vm11190, %v11172, %v10962
        %v11206 = vsel %vm11190, %v11173, %v10964
        %v11207 = vsel %vm11190, %v11174, %v10966
        %v11208 = vsel %vm11190, %v11175, %v10968
        %v11209 = vsel %vm11190, %v11176, %v10970
        %v11210 = vsel %vm11190, %v11177, %v10972
        %v11211 = vsel %vm11190, %v11178, %v10974
        %v11212 = vsel %vm11190, %v11179, %v10976
        %v11213 = vsel %vm11190, %v11180, %v10978
        %v11214 = vsel %vm11190, %v11181, %v10980
        %v11215 = vsel %vm11190, %v11182, %v10982
        %v11216 = vsel %vm11190, %v11183, %v10984
        %v11217 = vsel %vm11190, %v11184, %v10986
        %v11218 = vsel %vm11190, %v11185, %v10988
        %v11219 = vsel %vm11190, %v11186, %v10990
        %v11220 = vsel %vm11190, %v11187, %v10992
        %v11221 = vsel %vm11190, %v11188, %v10994
        %v11222 = vsel %vm11190, %v11189, %v10996
        %vm11223 = vcmask 195584
        %v11224 = vsel %vm11223, %v11191, %v11062
        %v11225 = vsel %vm11223, %v11192, %v11064
        %v11226 = vsel %vm11223, %v11193, %v11066
        %v11227 = vsel %vm11223, %v11194, %v11068
        %v11228 = vsel %vm11223, %v11195, %v11070
        %v11229 = vsel %vm11223, %v11196, %v11072
        %v11230 = vsel %vm11223, %v11197, %v11074
        %v11231 = vsel %vm11223, %v11198, %v11076
        %v11232 = vsel %vm11223, %v11199, %v11078
        %v11233 = vsel %vm11223, %v11200, %v11080
        %v11234 = vsel %vm11223, %v11201, %v11082
        %v11235 = vsel %vm11223, %v11202, %v11084
        %v11236 = vsel %vm11223, %v11203, %v11086
        %v11237 = vsel %vm11223, %v11204, %v11088
        %v11238 = vsel %vm11223, %v11205, %v11090
        %v11239 = vsel %vm11223, %v11206, %v11092
        %v11240 = vsel %vm11223, %v11207, %v11094
        %v11241 = vsel %vm11223, %v11208, %v11096
        %v11242 = vsel %vm11223, %v11209, %v11098
        %v11243 = vsel %vm11223, %v11210, %v11100
        %v11244 = vsel %vm11223, %v11211, %v11102
        %v11245 = vsel %vm11223, %v11212, %v11104
        %v11246 = vsel %vm11223, %v11213, %v11106
        %v11247 = vsel %vm11223, %v11214, %v11108
        %v11248 = vsel %vm11223, %v11215, %v11110
        %v11249 = vsel %vm11223, %v11216, %v11112
        %v11250 = vsel %vm11223, %v11217, %v11114
        %v11251 = vsel %vm11223, %v11218, %v11116
        %v11252 = vsel %vm11223, %v11219, %v11118
        %v11253 = vsel %vm11223, %v11220, %v11120
        %v11254 = vsel %vm11223, %v11221, %v11122
        %v11255 = vsel %vm11223, %v11222, %v11124
        %vm11256 = vcmask 261120
        %11257 = vst.msk [vmem:[%s352] sm:$0xff] %vm11256, %v11224
        %11258 = vst.msk [vmem:[%s352 + $0x8] sm:$0xff] %vm11256, %v11225
        %11259 = vst.msk [vmem:[%s352 + $0x10] sm:$0xff] %vm11256, %v11226
        %11260 = vst.msk [vmem:[%s352 + $0x18] sm:$0xff] %vm11256, %v11227
        %11261 = vst.msk [vmem:[%s352 + $0x20] sm:$0xff] %vm11256, %v11228
        %11262 = vst.msk [vmem:[%s352 + $0x28] sm:$0xff] %vm11256, %v11229
        %11263 = vst.msk [vmem:[%s352 + $0x30] sm:$0xff] %vm11256, %v11230
        %11264 = vst.msk [vmem:[%s352 + $0x38] sm:$0xff] %vm11256, %v11231
        %11265 = vst.msk [vmem:[%s352 + $0x40] sm:$0xff] %vm11256, %v11232
        %11266 = vst.msk [vmem:[%s352 + $0x48] sm:$0xff] %vm11256, %v11233
        %11267 = vst.msk [vmem:[%s352 + $0x50] sm:$0xff] %vm11256, %v11234
        %11268 = vst.msk [vmem:[%s352 + $0x58] sm:$0xff] %vm11256, %v11235
        %11269 = vst.msk [vmem:[%s352 + $0x60] sm:$0xff] %vm11256, %v11236
        %11270 = vst.msk [vmem:[%s352 + $0x68] sm:$0xff] %vm11256, %v11237
        %11271 = vst.msk [vmem:[%s352 + $0x70] sm:$0xff] %vm11256, %v11238
        %11272 = vst.msk [vmem:[%s352 + $0x78] sm:$0xff] %vm11256, %v11239
        %11273 = vst.msk [vmem:[%s352 + $0x80] sm:$0xff] %vm11256, %v11240
        %11274 = vst.msk [vmem:[%s352 + $0x88] sm:$0xff] %vm11256, %v11241
        %11275 = vst.msk [vmem:[%s352 + $0x90] sm:$0xff] %vm11256, %v11242
        %11276 = vst.msk [vmem:[%s352 + $0x98] sm:$0xff] %vm11256, %v11243
        %11277 = vst.msk [vmem:[%s352 + $0xa0] sm:$0xff] %vm11256, %v11244
        %11278 = vst.msk [vmem:[%s352 + $0xa8] sm:$0xff] %vm11256, %v11245
        %11279 = vst.msk [vmem:[%s352 + $0xb0] sm:$0xff] %vm11256, %v11246
        %11280 = vst.msk [vmem:[%s352 + $0xb8] sm:$0xff] %vm11256, %v11247
        %11281 = vst.msk [vmem:[%s352 + $0xc0] sm:$0xff] %vm11256, %v11248
        %11282 = vst.msk [vmem:[%s352 + $0xc8] sm:$0xff] %vm11256, %v11249
        %11283 = vst.msk [vmem:[%s352 + $0xd0] sm:$0xff] %vm11256, %v11250
        %11284 = vst.msk [vmem:[%s352 + $0xd8] sm:$0xff] %vm11256, %v11251
        %11285 = vst.msk [vmem:[%s352 + $0xe0] sm:$0xff] %vm11256, %v11252
        %11286 = vst.msk [vmem:[%s352 + $0xe8] sm:$0xff] %vm11256, %v11253
        %11287 = vst.msk [vmem:[%s352 + $0xf0] sm:$0xff] %vm11256, %v11254
        %11288 = vst.msk [vmem:[%s352 + $0xf8] sm:$0xff] %vm11256, %v11255
        %s11289 = sand.u32 %s247, 1
        %s11290 = scalar_lea.sflag [#allocation3], %s11289
        %s11291 = sand.u32 %s247, 1
        %s11292 = smul.addr %s11291, 256
        %s11293 = scalar_lea.vmem [#allocation2], %s11292
        // Predicated region
        $region61: #{inception_forward.1} parent=59 // pred_check
          %p11294 = pneg %p257
        $region62: #{inception_forward.1} parent=59 // pred_check_branch
          %11296 = sbr.rel (%p11294) target = $region64
        $region63: #{inception_forward.1} parent=59 // pred_region
          %11298 = vsyncadd %s11290, 0
          %s11299 = smul.addr %s24, 32
          %s11300 = smul.addr %s11299, 8
          %s11301 = scalar_lea.hbm %s10, %s11300
          %s11302 = sshll.u32 %s11293, 4
          %s11303 = int_to_ptr.vmem [resolvable:$true] %s11302
          %s11304 = sshll.u32 %s11301, 4
          %s11305 = int_to_ptr.hbm [resolvable:$true] %s11304
          %11310 = dma.vmem_to_hbm [thread:$0]  %s11303, 4096, %s11305, %s11290, 128, 128, 8
        $region64: #{inception_forward.1} parent=59 // pred_fallthru
          _
      $region60: #{inception_forward.1} parent=5 // pred_fallthru
        _
      %p11311 = scmp.le.s32.totalorder 2, %s19
      // Predicated region
      $region65: #{inception_forward.1} parent=5 // pred_check
        %p11312 = pneg %p11311
      $region66: #{inception_forward.1} parent=5 // pred_check_branch
        %11314 = sbr.rel (%p11312) target = $region68
      $region67: #{inception_forward.1} parent=5 // pred_region
        %s11315 = ssub.s32 %s19, 2
        // Predicated region
        $region69: #{inception_forward.1} parent=67 // pred_check
          %p11316 = pneg %p263
        $region70: #{inception_forward.1} parent=67 // pred_check_branch
          %11318 = sbr.rel (%p11316) target = $region72
        $region71: #{inception_forward.1} parent=67 // pred_region
          %s11319 = sand.u32 %s248, 1
          %s11320 = scalar_lea.sflag [#allocation3], %s11319
          %s11321 = sand.u32 %s248, 1
          %s11322 = smul.addr %s11321, 256
          %s11323 = scalar_lea.vmem [#allocation2], %s11322
          %11325 = dma.done %s11320, 4096
        $region72: #{inception_forward.1} parent=67 // pred_fallthru
          _
      $region68: #{inception_forward.1} parent=5 // pred_fallthru
        _
    $region6: #{inception_forward.1} parent=1 // loop_footer
      %s23 = sadd.s32 1, %s19
    $region7: #{inception_forward.1} parent=1 // loop_footer_branch
      %18 = sbr.rel target = $region3
    $region8: #{inception_forward.1} parent=1 // loop_exit
      _
    %11326 = vsyncpa [#allocation3], 1
    %s11327 = scalar_lea.sflag [#allocation3], 1
    %11328 = vsyncpa %s11327, 1

</llo_original>
